<compile_context>
chip_gen: v7x
topology: tpu7x:2x2x1
jax: 0.10.0
libtpu: 0.0.40
codegen_flags: <defaults>
</compile_context>

<pallas_src>
import functools

import numpy as np
import jax
import jax.numpy as jnp
from jax.experimental import pallas as pl
from jax.experimental.pallas import tpu as pltpu

# ----------------------- small, forward-consistent config ---------------------
B = 2
IN_CHANS = 4
SIZE = 64            # T
PATCH = 16
EMBED = 128
DEPTH = 2
HEADS = 4
MLP_RATIO = 1.0
DEC_EMBED = 128
DEC_DEPTH = 1
DEC_HEADS = 4
MASK_RATIO = 0.75
NUM_PATCHES = SIZE // PATCH          # L
LN_EPS = 1e-5                        # nn.LayerNorm default

BLOCK_KEYS = ("ln1_g", "ln1_b", "qkv_w", "qkv_b", "proj_w", "proj_b",
              "ln2_g", "ln2_b", "fc1_w", "fc1_b", "fc2_w", "fc2_b")


# ----------------------- deterministic sincos pos embed (host-side) -----------
def get_1d_sincos_pos_embed(embed_dim, length, cls_token=False):
    assert embed_dim % 2 == 0
    omega = np.arange(embed_dim // 2, dtype=np.float64)
    omega /= embed_dim / 2.0
    omega = 1.0 / 10000 ** omega
    pos = np.arange(length, dtype=np.float64).reshape(-1)
    out = np.einsum("m,d->md", pos, omega)
    emb = np.concatenate([np.sin(out), np.cos(out)], axis=1)
    if cls_token:
        emb = np.concatenate([np.zeros([1, embed_dim]), emb], axis=0)
    return jnp.asarray(emb, dtype=jnp.float32)


# ----------------------- in-kernel building blocks -----------------------------
def _layernorm(x, g, b, eps=LN_EPS):
    mean = jnp.mean(x, axis=-1, keepdims=True)
    var = jnp.mean(jnp.square(x - mean), axis=-1, keepdims=True)
    return (x - mean) * jax.lax.rsqrt(var + eps) * g + b


def _gelu_exact(x):
    # exact (erf-based) GELU, matching torch.nn.GELU default
    return 0.5 * x * (1.0 + jax.lax.erf(x * 0.7071067811865476))


def _transformer_block(x, heads,
                       ln1_g, ln1_b, qkv_w, qkv_b, proj_w, proj_b,
                       ln2_g, ln2_b, fc1_w, fc1_b, fc2_w, fc2_b):
    """Pre-norm ViT block on a batched (B, S, D) slab, fully resident in VMEM.

    Weights arrive in bf16; activations are cast to bf16 at each MXU push and
    accumulated in f32.  Heads are computed with batched (tiny) score matmuls
    and merged into ONE full 128-lane projection matmul.
    """
    Bv, S, D = x.shape
    Dh = D // heads
    scale = Dh ** -0.5

    # --- attention ---
    xn = _layernorm(x, ln1_g, ln1_b)
    qkv = (jnp.dot(xn.reshape(Bv * S, D).astype(jnp.bfloat16), qkv_w,
                   preferred_element_type=jnp.float32) + qkv_b)           # (B*S, 3D)
    qkv = qkv.reshape(Bv, S, 3 * D)
    head_outs = []
    for h in range(heads):
        q = qkv[:, :, h * Dh:(h + 1) * Dh].astype(jnp.bfloat16)
        k = qkv[:, :, D + h * Dh:D + (h + 1) * Dh].astype(jnp.bfloat16)
        v = qkv[:, :, 2 * D + h * Dh:2 * D + (h + 1) * Dh].astype(jnp.bfloat16)
        s = jnp.einsum("bqd,bkd->bqk", q, k,
                       preferred_element_type=jnp.float32) * scale        # (B, S, S)
        s = s - jnp.max(s, axis=-1, keepdims=True)
        p = jnp.exp(s)
        p = p * pl.reciprocal(jnp.sum(p, axis=-1, keepdims=True), approx=True)
        head_outs.append(jnp.einsum("bqk,bkd->bqd", p.astype(jnp.bfloat16), v,
                                    preferred_element_type=jnp.float32))  # (B, S, Dh)
    attn = jnp.concatenate(head_outs, axis=-1)                            # (B, S, D)
    proj = (jnp.dot(attn.reshape(Bv * S, D).astype(jnp.bfloat16), proj_w,
                    preferred_element_type=jnp.float32) + proj_b).reshape(Bv, S, D)
    x = x + proj

    # --- MLP ---
    xn = _layernorm(x, ln2_g, ln2_b)
    h1 = _gelu_exact(jnp.dot(xn.reshape(Bv * S, D).astype(jnp.bfloat16), fc1_w,
                             preferred_element_type=jnp.float32) + fc1_b)
    h2 = (jnp.dot(h1.astype(jnp.bfloat16), fc2_w,
                  preferred_element_type=jnp.float32) + fc2_b).reshape(Bv, S, D)
    return x + h2


# ----------------------- the single fused Pallas kernel ------------------------
def _ae_forward_kernel(ids_ref,                       # scalar-prefetch: (B, L) int32
                       tok_ref, lmask_ref, tgt_ref,   # (B,S,E) (B,Sd) (B,Sd,PC)
                       e_ln1g, e_ln1b, e_qkvw, e_qkvb, e_projw, e_projb,
                       e_ln2g, e_ln2b, e_fc1w, e_fc1b, e_fc2w, e_fc2b,
                       norm_g, norm_b, dec_w, dec_b, mtok_ref, dpos_ref,
                       d_ln1g, d_ln1b, d_qkvw, d_qkvb, d_projw, d_projb,
                       d_ln2g, d_ln2b, d_fc1w, d_fc1b, d_fc2w, d_fc2b,
                       dnorm_g, dnorm_b, pred_w, pred_b,
                       pred_ref, loss_ref,
                       xdec_scr,
                       *, depth, heads, dec_depth, dec_heads, len_keep):
    Bv, S, E = tok_ref.shape
    Sd = xdec_scr.shape[1]
    L = Sd - 1

    # ---------------- encoder blocks + final LayerNorm + decoder_embed --------
    x = tok_ref[...].astype(jnp.float32)
    for d in range(depth):
        x = _transformer_block(
            x, heads,
            e_ln1g[d], e_ln1b[d], e_qkvw[d], e_qkvb[d], e_projw[d], e_projb[d],
            e_ln2g[d], e_ln2b[d], e_fc1w[d], e_fc1b[d], e_fc2w[d], e_fc2b[d])
    x = _layernorm(x, norm_g[...], norm_b[...])
    xe = (jnp.dot(x.reshape(Bv * S, E).astype(jnp.bfloat16), dec_w[...],
                  preferred_element_type=jnp.float32) + dec_b[...])
    Dd = xe.shape[-1]
    xe = xe.reshape(Bv, S, Dd)

    # ---------------- token un-shuffle + mask-token fill + dec pos add --------
    # ids_restore lives in SMEM (scalar prefetch).  For restored position l:
    #   row = kept_token[r]  if r = ids_restore[b,l] < len_keep   else mask_token
    # Implemented as an arithmetic select over the (tiny) set of kept rows.
    # TODO(synk): for large len_keep switch to a true dynamic gather
    #             (ref[pl.ds(idx,1), :]) instead of the O(L*len_keep) select.
    mtok = mtok_ref[...]                       # (1, Dd)
    dpos = dpos_ref[...]                       # (Sd, Dd)
    for b in range(Bv):
        xdec_scr[b, 0:1, :] = xe[b, 0:1, :] + dpos[0:1, :]          # cls row
        for l in range(L):
            r = ids_ref[b, l]                                        # scalar int32
            row = mtok
            for j in range(len_keep):
                c = (r == j).astype(jnp.float32)
                row = c * xe[b, 1 + j:2 + j, :] + (1.0 - c) * row
            xdec_scr[b, l + 1:l + 2, :] = row + dpos[l + 1:l + 2, :]
    xd = xdec_scr[...]                                               # (B, Sd, Dd)

    # ---------------- decoder blocks + LN + prediction head -------------------
    for d in range(dec_depth):
        xd = _transformer_block(
            xd, dec_heads,
            d_ln1g[d], d_ln1b[d], d_qkvw[d], d_qkvb[d], d_projw[d], d_projb[d],
            d_ln2g[d], d_ln2b[d], d_fc1w[d], d_fc1b[d], d_fc2w[d], d_fc2b[d])
    xd = _layernorm(xd, dnorm_g[...], dnorm_b[...])
    full_pred = (jnp.dot(xd.reshape(Bv * Sd, Dd).astype(jnp.bfloat16), pred_w[...],
                         preferred_element_type=jnp.float32) + pred_b[...])
    PC = full_pred.shape[-1]
    full_pred = full_pred.reshape(Bv, Sd, PC)
    # full (sublane-aligned) slab store; cls row is dropped in the wrapper.
    pred_ref[...] = full_pred.astype(pred_ref.dtype)

    # ---------------- masked MSE loss (norm_pix_loss=False) -------------------
    diff = full_pred - tgt_ref[...].astype(jnp.float32)
    per = jnp.mean(diff * diff, axis=-1)                 # (B, Sd)
    m = lmask_ref[...]                                   # (B, Sd); cls row is 0
    num = jnp.sum(per * m, axis=(0, 1), keepdims=True)   # (1, 1)
    den = jnp.sum(m, axis=(0, 1), keepdims=True)         # (1, 1)
    loss_ref[...] = num / den


# ----------------------- pallas_call wrapper -----------------------------------
def _fs(a):
    """Full-array block spec (index_map also receives the scalar-prefetch ref)."""
    nd = a.ndim
    return pl.BlockSpec(a.shape, lambda i, ids, _nd=nd: (0,) * _nd)


def pallas_autoencoder(tok_seq, mask_pad, target_pad, ids_restore, params):
    Bx, S, E = tok_seq.shape
    Sd = NUM_PATCHES + 1
    PC = PATCH * IN_CHANS
    len_keep = S - 1

    enc = [params["enc_stack"][k] for k in BLOCK_KEYS]
    dec = [params["dec_stack"][k] for k in BLOCK_KEYS]
    mid = [params["norm_g"], params["norm_b"],
           params["dec_embed_w"], params["dec_embed_b"],
           params["mask_token"], params["dec_pos_embed"]]
    tail = [params["dec_norm_g"], params["dec_norm_b"],
            params["pred_w"], params["pred_b"]]
    tensors = [tok_seq, mask_pad, target_pad] + enc + mid + dec + tail

    grid_spec = pltpu.PrefetchScalarGridSpec(
        num_scalar_prefetch=1,
        grid=(1,),                       # batch folded into sublanes (single TC step)
        in_specs=[_fs(a) for a in tensors],
        out_specs=(pl.BlockSpec((Bx, Sd, PC), lambda i, ids: (0, 0, 0)),
                   pl.BlockSpec((1, 1), lambda i, ids: (0, 0))),
        scratch_shapes=[pltpu.VMEM((Bx, Sd, DEC_EMBED), jnp.float32)],
    )
    # NOTE(v7x): with 2 TCs per chip a grid=(B,) "parallel" split over batch is an
    # alternative; at this size the single fused step already fits the latency budget.
    pred_full, loss = pl.pallas_call(
        functools.partial(_ae_forward_kernel, depth=DEPTH, heads=HEADS,
                          dec_depth=DEC_DEPTH, dec_heads=DEC_HEADS,
                          len_keep=len_keep),
        out_shape=(jax.ShapeDtypeStruct((Bx, Sd, PC), jnp.float32),
                   jax.ShapeDtypeStruct((1, 1), jnp.float32)),
        grid_spec=grid_spec,
        compiler_params=pltpu.CompilerParams(dimension_semantics=("arbitrary",)),
    )(ids_restore, *tensors)
    return pred_full, loss


# ----------------------- parameter init (deterministic, synthetic) ------------
def xavier_uniform(key, n_in, n_out, dtype=jnp.bfloat16):
    # stored pre-transposed as (K, N) so kernels do x @ w (no in-kernel .T);
    # matmul weights are kept in bf16 (halves weight DMA, f32 accumulation).
    limit = float(np.sqrt(6.0 / (n_in + n_out)))
    w = jax.random.uniform(key, (n_in, n_out), jnp.float32, -limit, limit)
    return w.astype(dtype)


def init_block_params(key, dim, mlp_ratio):
    k0, k1, k2, k3 = jax.random.split(key, 4)
    hidden = int(dim * mlp_ratio)
    return dict(
        ln1_g=jnp.ones((1, dim), jnp.float32), ln1_b=jnp.zeros((1, dim), jnp.float32),
        qkv_w=xavier_uniform(k0, dim, 3 * dim), qkv_b=jnp.zeros((1, 3 * dim), jnp.float32),
        proj_w=xavier_uniform(k1, dim, dim), proj_b=jnp.zeros((1, dim), jnp.float32),
        ln2_g=jnp.ones((1, dim), jnp.float32), ln2_b=jnp.zeros((1, dim), jnp.float32),
        fc1_w=xavier_uniform(k2, dim, hidden), fc1_b=jnp.zeros((1, hidden), jnp.float32),
        fc2_w=xavier_uniform(k3, hidden, dim), fc2_b=jnp.zeros((1, dim), jnp.float32),
    )


def stack_blocks(blocks):
    return {k: jnp.stack([blk[k] for blk in blocks], axis=0) for k in BLOCK_KEYS}


def init_params(key):
    keys = jax.random.split(key, 8 + DEPTH + DEC_DEPTH)
    enc_blocks = [init_block_params(keys[8 + i], EMBED, MLP_RATIO) for i in range(DEPTH)]
    dec_blocks = [init_block_params(keys[8 + DEPTH + i], DEC_EMBED, MLP_RATIO)
                  for i in range(DEC_DEPTH)]
    return dict(
        patch_w=xavier_uniform(keys[0], IN_CHANS * PATCH, EMBED),      # Conv1d weight (C*P, E)
        patch_b=jnp.zeros((1, EMBED), jnp.float32),
        cls_token=0.02 * jax.random.normal(keys[1], (1, EMBED), jnp.float32),
        mask_token=0.02 * jax.random.normal(keys[2], (1, DEC_EMBED), jnp.float32),
        pos_embed=get_1d_sincos_pos_embed(EMBED, NUM_PATCHES, cls_token=True),
        dec_pos_embed=get_1d_sincos_pos_embed(DEC_EMBED, NUM_PATCHES, cls_token=True),
        norm_g=jnp.ones((1, EMBED), jnp.float32), norm_b=jnp.zeros((1, EMBED), jnp.float32),
        dec_embed_w=xavier_uniform(keys[3], EMBED, DEC_EMBED),
        dec_embed_b=jnp.zeros((1, DEC_EMBED), jnp.float32),
        dec_norm_g=jnp.ones((1, DEC_EMBED), jnp.float32),
        dec_norm_b=jnp.zeros((1, DEC_EMBED), jnp.float32),
        pred_w=xavier_uniform(keys[4], DEC_EMBED, PATCH * IN_CHANS),
        pred_b=jnp.zeros((1, PATCH * IN_CHANS), jnp.float32),
        enc_stack=stack_blocks(enc_blocks),
        dec_stack=stack_blocks(dec_blocks),
    )


# ----------------------- model forward -----------------------------------------
def random_masking(x, mask_ratio, key):
    # TODO(synk): the argsort-based per-sample shuffle has no clean Pallas
    # equivalent; it stays in XLA (fused under jit, negligible at this size).
    N, L, D = x.shape
    len_keep = int(L * (1 - mask_ratio))
    noise = jax.random.uniform(key, (N, L), jnp.float32)
    ids_shuffle = jnp.argsort(noise, axis=1)
    ids_restore = jnp.argsort(ids_shuffle, axis=1)
    ids_keep = ids_shuffle[:, :len_keep]
    x_masked = jnp.take_along_axis(x, ids_keep[:, :, None], axis=1)
    mask = jnp.ones((N, L), jnp.float32).at[:, :len_keep].set(0.0)
    mask = jnp.take_along_axis(mask, ids_restore, axis=1)
    return x_masked, mask, ids_restore


@functools.partial(jax.jit, static_argnames=("mask_ratio",))
def autoencoder_forward(params, x, mask_key, mask_ratio=MASK_RATIO):
    Bx, C, T = x.shape
    L = T // PATCH

    # ---- patch embed (Conv1d k=stride=PATCH == per-patch linear) + pos add ----
    # Tiny; stays in XLA where it fuses with the reshape/transpose (a dedicated
    # Pallas call cost more in launch overhead than the compute).
    patches = x.reshape(Bx, C, L, PATCH).transpose(0, 2, 1, 3).reshape(Bx, L, C * PATCH)
    tok = (jnp.dot(patches.astype(jnp.bfloat16), params["patch_w"],
                   preferred_element_type=jnp.float32)
           + params["patch_b"] + params["pos_embed"][1:, :])           # (B, L, E) f32

    # ---- random masking (XLA) + cls prepend ----
    tok_keep, mask, ids_restore = random_masking(tok, mask_ratio, mask_key)
    cls = params["cls_token"] + params["pos_embed"][:1, :]             # (1, E)
    cls = jnp.broadcast_to(cls[None, :, :], (Bx, 1, EMBED))
    tok_seq = jnp.concatenate([cls, tok_keep], axis=1)                 # (B, S, E)

    # ---- targets / loss mask padded with a zero cls row so the kernel can emit
    #      the full sublane-aligned prediction slab and mask the cls row out ----
    target = x.reshape(Bx, L, PATCH * C)
    target_pad = jnp.concatenate(
        [jnp.zeros((Bx, 1, PATCH * C), jnp.float32), target], axis=1)  # (B, Sd, PC)
    mask_pad = jnp.concatenate(
        [jnp.zeros((Bx, 1), jnp.float32), mask], axis=1)               # (B, Sd)

    # ---- single fused kernel: encoder -> un-shuffle -> decoder -> pred -> loss ----
    pred_full, loss = pallas_autoencoder(tok_seq, mask_pad, target_pad,
                                         ids_restore.astype(jnp.int32), params)
    pred = pred_full[:, 1:, :]                                         # drop cls row
    return loss[0, 0], pred, mask


# ----------------------- main ---------------------------------------------------
if __name__ == "__main__":
    root = jax.random.PRNGKey(0)
    k_param, k_input, k_mask = jax.random.split(root, 3)
    params = init_params(k_param)
    x = jax.random.normal(k_input, (B, IN_CHANS, SIZE), jnp.float32)

    loss, pred, mask = autoencoder_forward(params, x, k_mask)
    loss = jax.block_until_ready(loss)
    pred = jax.block_until_ready(pred)
    mask = jax.block_until_ready(mask)

    assert pred.shape == (B, NUM_PATCHES, PATCH * IN_CHANS)
    assert mask.shape == (B, NUM_PATCHES)
    assert bool(jnp.isfinite(loss))
    print("KERNEL_OK")
</pallas_src>

<mosaic_0001>
module attributes {stable_mosaic.version = 11 : i64} {
  func.func @_ae_forward_kernel(%arg0: i32, %arg1: memref<2x4xi32, #tpu.memory_space<smem>>, %arg2: memref<2x2x128xf32, #tpu.memory_space<vmem>>, %arg3: memref<2x5xf32, #tpu.memory_space<vmem>>, %arg4: memref<2x5x64xf32, #tpu.memory_space<vmem>>, %arg5: memref<2x1x128xf32, #tpu.memory_space<vmem>>, %arg6: memref<2x1x128xf32, #tpu.memory_space<vmem>>, %arg7: memref<2x128x384xbf16, #tpu.memory_space<vmem>>, %arg8: memref<2x1x384xf32, #tpu.memory_space<vmem>>, %arg9: memref<2x128x128xbf16, #tpu.memory_space<vmem>>, %arg10: memref<2x1x128xf32, #tpu.memory_space<vmem>>, %arg11: memref<2x1x128xf32, #tpu.memory_space<vmem>>, %arg12: memref<2x1x128xf32, #tpu.memory_space<vmem>>, %arg13: memref<2x128x128xbf16, #tpu.memory_space<vmem>>, %arg14: memref<2x1x128xf32, #tpu.memory_space<vmem>>, %arg15: memref<2x128x128xbf16, #tpu.memory_space<vmem>>, %arg16: memref<2x1x128xf32, #tpu.memory_space<vmem>>, %arg17: memref<1x128xf32, #tpu.memory_space<vmem>>, %arg18: memref<1x128xf32, #tpu.memory_space<vmem>>, %arg19: memref<128x128xbf16, #tpu.memory_space<vmem>>, %arg20: memref<1x128xf32, #tpu.memory_space<vmem>>, %arg21: memref<1x128xf32, #tpu.memory_space<vmem>>, %arg22: memref<5x128xf32, #tpu.memory_space<vmem>>, %arg23: memref<1x1x128xf32, #tpu.memory_space<vmem>>, %arg24: memref<1x1x128xf32, #tpu.memory_space<vmem>>, %arg25: memref<1x128x384xbf16, #tpu.memory_space<vmem>>, %arg26: memref<1x1x384xf32, #tpu.memory_space<vmem>>, %arg27: memref<1x128x128xbf16, #tpu.memory_space<vmem>>, %arg28: memref<1x1x128xf32, #tpu.memory_space<vmem>>, %arg29: memref<1x1x128xf32, #tpu.memory_space<vmem>>, %arg30: memref<1x1x128xf32, #tpu.memory_space<vmem>>, %arg31: memref<1x128x128xbf16, #tpu.memory_space<vmem>>, %arg32: memref<1x1x128xf32, #tpu.memory_space<vmem>>, %arg33: memref<1x128x128xbf16, #tpu.memory_space<vmem>>, %arg34: memref<1x1x128xf32, #tpu.memory_space<vmem>>, %arg35: memref<1x128xf32, #tpu.memory_space<vmem>>, %arg36: memref<1x128xf32, #tpu.memory_space<vmem>>, %arg37: memref<128x64xbf16, #tpu.memory_space<vmem>>, %arg38: memref<1x64xf32, #tpu.memory_space<vmem>>, %arg39: memref<2x5x64xf32, #tpu.memory_space<vmem>>, %arg40: memref<1x1xf32, #tpu.memory_space<vmem>>, %arg41: memref<2x5x128xf32, #tpu.memory_space<vmem>>) attributes {dimension_semantics = [#tpu.dimension_semantics<arbitrary>], iteration_bounds = array<i64: 1>, scalar_prefetch = 1 : i64, scratch_operands = 1 : i64, tpu.core_type = #tpu.core_type<tc>, window_params = [{pipeline_mode = #tpu.pipeline_mode<synchronous>, transform_indices = @transform_0, window_bounds = array<i64: 2, 2, 128>}, {pipeline_mode = #tpu.pipeline_mode<synchronous>, transform_indices = @transform_1, window_bounds = array<i64: 2, 5>}, {pipeline_mode = #tpu.pipeline_mode<synchronous>, transform_indices = @transform_2, window_bounds = array<i64: 2, 5, 64>}, {pipeline_mode = #tpu.pipeline_mode<synchronous>, transform_indices = @transform_3, window_bounds = array<i64: 2, 1, 128>}, {pipeline_mode = #tpu.pipeline_mode<synchronous>, transform_indices = @transform_4, window_bounds = array<i64: 2, 1, 128>}, {pipeline_mode = #tpu.pipeline_mode<synchronous>, transform_indices = @transform_5, window_bounds = array<i64: 2, 128, 384>}, {pipeline_mode = #tpu.pipeline_mode<synchronous>, transform_indices = @transform_6, window_bounds = array<i64: 2, 1, 384>}, {pipeline_mode = #tpu.pipeline_mode<synchronous>, transform_indices = @transform_7, window_bounds = array<i64: 2, 128, 128>}, {pipeline_mode = #tpu.pipeline_mode<synchronous>, transform_indices = @transform_8, window_bounds = array<i64: 2, 1, 128>}, {pipeline_mode = #tpu.pipeline_mode<synchronous>, transform_indices = @transform_9, window_bounds = array<i64: 2, 1, 128>}, {pipeline_mode = #tpu.pipeline_mode<synchronous>, transform_indices = @transform_10, window_bounds = array<i64: 2, 1, 128>}, {pipeline_mode = #tpu.pipeline_mode<synchronous>, transform_indices = @transform_11, window_bounds = array<i64: 2, 128, 128>}, {pipeline_mode = #tpu.pipeline_mode<synchronous>, transform_indices = @transform_12, window_bounds = array<i64: 2, 1, 128>}, {pipeline_mode = #tpu.pipeline_mode<synchronous>, transform_indices = @transform_13, window_bounds = array<i64: 2, 128, 128>}, {pipeline_mode = #tpu.pipeline_mode<synchronous>, transform_indices = @transform_14, window_bounds = array<i64: 2, 1, 128>}, {pipeline_mode = #tpu.pipeline_mode<synchronous>, transform_indices = @transform_15, window_bounds = array<i64: 1, 128>}, {pipeline_mode = #tpu.pipeline_mode<synchronous>, transform_indices = @transform_16, window_bounds = array<i64: 1, 128>}, {pipeline_mode = #tpu.pipeline_mode<synchronous>, transform_indices = @transform_17, window_bounds = array<i64: 128, 128>}, {pipeline_mode = #tpu.pipeline_mode<synchronous>, transform_indices = @transform_18, window_bounds = array<i64: 1, 128>}, {pipeline_mode = #tpu.pipeline_mode<synchronous>, transform_indices = @transform_19, window_bounds = array<i64: 1, 128>}, {pipeline_mode = #tpu.pipeline_mode<synchronous>, transform_indices = @transform_20, window_bounds = array<i64: 5, 128>}, {pipeline_mode = #tpu.pipeline_mode<synchronous>, transform_indices = @transform_21, window_bounds = array<i64: 1, 1, 128>}, {pipeline_mode = #tpu.pipeline_mode<synchronous>, transform_indices = @transform_22, window_bounds = array<i64: 1, 1, 128>}, {pipeline_mode = #tpu.pipeline_mode<synchronous>, transform_indices = @transform_23, window_bounds = array<i64: 1, 128, 384>}, {pipeline_mode = #tpu.pipeline_mode<synchronous>, transform_indices = @transform_24, window_bounds = array<i64: 1, 1, 384>}, {pipeline_mode = #tpu.pipeline_mode<synchronous>, transform_indices = @transform_25, window_bounds = array<i64: 1, 128, 128>}, {pipeline_mode = #tpu.pipeline_mode<synchronous>, transform_indices = @transform_26, window_bounds = array<i64: 1, 1, 128>}, {pipeline_mode = #tpu.pipeline_mode<synchronous>, transform_indices = @transform_27, window_bounds = array<i64: 1, 1, 128>}, {pipeline_mode = #tpu.pipeline_mode<synchronous>, transform_indices = @transform_28, window_bounds = array<i64: 1, 1, 128>}, {pipeline_mode = #tpu.pipeline_mode<synchronous>, transform_indices = @transform_29, window_bounds = array<i64: 1, 128, 128>}, {pipeline_mode = #tpu.pipeline_mode<synchronous>, transform_indices = @transform_30, window_bounds = array<i64: 1, 1, 128>}, {pipeline_mode = #tpu.pipeline_mode<synchronous>, transform_indices = @transform_31, window_bounds = array<i64: 1, 128, 128>}, {pipeline_mode = #tpu.pipeline_mode<synchronous>, transform_indices = @transform_32, window_bounds = array<i64: 1, 1, 128>}, {pipeline_mode = #tpu.pipeline_mode<synchronous>, transform_indices = @transform_33, window_bounds = array<i64: 1, 128>}, {pipeline_mode = #tpu.pipeline_mode<synchronous>, transform_indices = @transform_34, window_bounds = array<i64: 1, 128>}, {pipeline_mode = #tpu.pipeline_mode<synchronous>, transform_indices = @transform_35, window_bounds = array<i64: 128, 64>}, {pipeline_mode = #tpu.pipeline_mode<synchronous>, transform_indices = @transform_36, window_bounds = array<i64: 1, 64>}, {pipeline_mode = #tpu.pipeline_mode<synchronous>, transform_indices = @transform_37, window_bounds = array<i64: 2, 5, 64>}, {pipeline_mode = #tpu.pipeline_mode<synchronous>, transform_indices = @transform_38, window_bounds = array<i64: 1, 1>}]} {
    %c0 = arith.constant 0 : index
    %c0_0 = arith.constant 0 : index
    %c0_1 = arith.constant 0 : index
    %0 = vector.load %arg2[%c0, %c0_0, %c0_1] : memref<2x2x128xf32, #tpu.memory_space<vmem>>, vector<2x2x128xf32>
    %c0_2 = arith.constant 0 : index
    %c0_3 = arith.constant 0 : index
    %c0_4 = arith.constant 0 : index
    %1 = vector.load %arg5[%c0_2, %c0_3, %c0_4] : memref<2x1x128xf32, #tpu.memory_space<vmem>>, vector<1x1x128xf32>
    %2 = vector.shape_cast %1 : vector<1x1x128xf32> to vector<1x128xf32>
    %c0_5 = arith.constant 0 : index
    %c0_6 = arith.constant 0 : index
    %c0_7 = arith.constant 0 : index
    %3 = vector.load %arg6[%c0_5, %c0_6, %c0_7] : memref<2x1x128xf32, #tpu.memory_space<vmem>>, vector<1x1x128xf32>
    %4 = vector.shape_cast %3 : vector<1x1x128xf32> to vector<1x128xf32>
    %c0_8 = arith.constant 0 : index
    %c0_9 = arith.constant 0 : index
    %c0_10 = arith.constant 0 : index
    %5 = vector.load %arg7[%c0_8, %c0_9, %c0_10] : memref<2x128x384xbf16, #tpu.memory_space<vmem>>, vector<1x128x384xbf16>
    %6 = vector.shape_cast %5 : vector<1x128x384xbf16> to vector<128x384xbf16>
    %c0_11 = arith.constant 0 : index
    %c0_12 = arith.constant 0 : index
    %c0_13 = arith.constant 0 : index
    %7 = vector.load %arg8[%c0_11, %c0_12, %c0_13] : memref<2x1x384xf32, #tpu.memory_space<vmem>>, vector<1x1x384xf32>
    %8 = vector.shape_cast %7 : vector<1x1x384xf32> to vector<1x384xf32>
    %c0_14 = arith.constant 0 : index
    %c0_15 = arith.constant 0 : index
    %c0_16 = arith.constant 0 : index
    %9 = vector.load %arg9[%c0_14, %c0_15, %c0_16] : memref<2x128x128xbf16, #tpu.memory_space<vmem>>, vector<1x128x128xbf16>
    %10 = vector.shape_cast %9 : vector<1x128x128xbf16> to vector<128x128xbf16>
    %c0_17 = arith.constant 0 : index
    %c0_18 = arith.constant 0 : index
    %c0_19 = arith.constant 0 : index
    %11 = vector.load %arg10[%c0_17, %c0_18, %c0_19] : memref<2x1x128xf32, #tpu.memory_space<vmem>>, vector<1x1x128xf32>
    %12 = vector.shape_cast %11 : vector<1x1x128xf32> to vector<1x128xf32>
    %c0_20 = arith.constant 0 : index
    %c0_21 = arith.constant 0 : index
    %c0_22 = arith.constant 0 : index
    %13 = vector.load %arg11[%c0_20, %c0_21, %c0_22] : memref<2x1x128xf32, #tpu.memory_space<vmem>>, vector<1x1x128xf32>
    %14 = vector.shape_cast %13 : vector<1x1x128xf32> to vector<1x128xf32>
    %c0_23 = arith.constant 0 : index
    %c0_24 = arith.constant 0 : index
    %c0_25 = arith.constant 0 : index
    %15 = vector.load %arg12[%c0_23, %c0_24, %c0_25] : memref<2x1x128xf32, #tpu.memory_space<vmem>>, vector<1x1x128xf32>
    %16 = vector.shape_cast %15 : vector<1x1x128xf32> to vector<1x128xf32>
    %c0_26 = arith.constant 0 : index
    %c0_27 = arith.constant 0 : index
    %c0_28 = arith.constant 0 : index
    %17 = vector.load %arg13[%c0_26, %c0_27, %c0_28] : memref<2x128x128xbf16, #tpu.memory_space<vmem>>, vector<1x128x128xbf16>
    %18 = vector.shape_cast %17 : vector<1x128x128xbf16> to vector<128x128xbf16>
    %c0_29 = arith.constant 0 : index
    %c0_30 = arith.constant 0 : index
    %c0_31 = arith.constant 0 : index
    %19 = vector.load %arg14[%c0_29, %c0_30, %c0_31] : memref<2x1x128xf32, #tpu.memory_space<vmem>>, vector<1x1x128xf32>
    %20 = vector.shape_cast %19 : vector<1x1x128xf32> to vector<1x128xf32>
    %c0_32 = arith.constant 0 : index
    %c0_33 = arith.constant 0 : index
    %c0_34 = arith.constant 0 : index
    %21 = vector.load %arg15[%c0_32, %c0_33, %c0_34] : memref<2x128x128xbf16, #tpu.memory_space<vmem>>, vector<1x128x128xbf16>
    %22 = vector.shape_cast %21 : vector<1x128x128xbf16> to vector<128x128xbf16>
    %c0_35 = arith.constant 0 : index
    %c0_36 = arith.constant 0 : index
    %c0_37 = arith.constant 0 : index
    %23 = vector.load %arg16[%c0_35, %c0_36, %c0_37] : memref<2x1x128xf32, #tpu.memory_space<vmem>>, vector<1x1x128xf32>
    %24 = vector.shape_cast %23 : vector<1x1x128xf32> to vector<1x128xf32>
    %cst = arith.constant dense<0.000000e+00> : vector<2x2xf32>
    %25 = vector.multi_reduction <add>, %0, %cst [2] : vector<2x2x128xf32> to vector<2x2xf32>
    %26 = vector.shape_cast %25 : vector<2x2xf32> to vector<2x2x1xf32>
    %cst_38 = arith.constant 1.280000e+02 : f32
    %27 = vector.broadcast %cst_38 : f32 to vector<2x2x1xf32>
    %28 = arith.divf %26, %27 : vector<2x2x1xf32>
    %29 = vector.broadcast %28 : vector<2x2x1xf32> to vector<2x2x128xf32>
    %30 = arith.subf %0, %29 : vector<2x2x128xf32>
    %31 = arith.mulf %30, %30 : vector<2x2x128xf32>
    %cst_39 = arith.constant dense<0.000000e+00> : vector<2x2xf32>
    %32 = vector.multi_reduction <add>, %31, %cst_39 [2] : vector<2x2x128xf32> to vector<2x2xf32>
    %33 = vector.shape_cast %32 : vector<2x2xf32> to vector<2x2x1xf32>
    %cst_40 = arith.constant 1.280000e+02 : f32
    %34 = vector.broadcast %cst_40 : f32 to vector<2x2x1xf32>
    %35 = arith.divf %33, %34 : vector<2x2x1xf32>
    %36 = vector.broadcast %28 : vector<2x2x1xf32> to vector<2x2x128xf32>
    %37 = arith.subf %0, %36 : vector<2x2x128xf32>
    %cst_41 = arith.constant 9.99999974E-6 : f32
    %38 = vector.broadcast %cst_41 : f32 to vector<2x2x1xf32>
    %39 = arith.addf %35, %38 : vector<2x2x1xf32>
    %40 = math.rsqrt %39 : vector<2x2x1xf32>
    %41 = vector.broadcast %40 : vector<2x2x1xf32> to vector<2x2x128xf32>
    %42 = arith.mulf %37, %41 : vector<2x2x128xf32>
    %43 = vector.shape_cast %2 : vector<1x128xf32> to vector<1x1x128xf32>
    %44 = vector.broadcast %43 : vector<1x1x128xf32> to vector<2x2x128xf32>
    %45 = arith.mulf %42, %44 : vector<2x2x128xf32>
    %46 = vector.shape_cast %4 : vector<1x128xf32> to vector<1x1x128xf32>
    %47 = vector.broadcast %46 : vector<1x1x128xf32> to vector<2x2x128xf32>
    %48 = arith.addf %45, %47 : vector<2x2x128xf32>
    %49 = vector.shape_cast %48 : vector<2x2x128xf32> to vector<4x128xf32>
    %50 = arith.truncf %49 : vector<4x128xf32> to vector<4x128xbf16>
    %cst_42 = arith.constant dense<0.000000e+00> : vector<4x384xf32>
    %51 = tpu.matmul %50, %6, %cst_42 {dimension_numbers = #tpu.dot_dimension_numbers<[1], [0], [0], [1], [0, 0, 1, 1], [], []>} : vector<4x128xbf16>, vector<128x384xbf16>, vector<4x384xf32> -> vector<4x384xf32>
    %52 = vector.broadcast %8 : vector<1x384xf32> to vector<4x384xf32>
    %53 = arith.addf %51, %52 : vector<4x384xf32>
    %54 = vector.shape_cast %53 : vector<4x384xf32> to vector<2x2x384xf32>
    %55 = vector.extract_strided_slice %54 {offsets = [0, 0, 0], sizes = [2, 2, 32], strides = [1, 1, 1]} : vector<2x2x384xf32> to vector<2x2x32xf32>
    %56 = arith.truncf %55 : vector<2x2x32xf32> to vector<2x2x32xbf16>
    %57 = vector.extract_strided_slice %54 {offsets = [0, 0, 128], sizes = [2, 2, 32], strides = [1, 1, 1]} : vector<2x2x384xf32> to vector<2x2x32xf32>
    %58 = arith.truncf %57 : vector<2x2x32xf32> to vector<2x2x32xbf16>
    %59 = vector.extract_strided_slice %54 {offsets = [0, 0, 256], sizes = [2, 2, 32], strides = [1, 1, 1]} : vector<2x2x384xf32> to vector<2x2x32xf32>
    %60 = arith.truncf %59 : vector<2x2x32xf32> to vector<2x2x32xbf16>
    "tpu.trace_start"() <{level = 10 : i32, message = "bqd,bkd->bqk"}> : () -> ()
    %cst_43 = arith.constant dense<0.000000e+00> : vector<2x2x2xf32>
    %61 = tpu.matmul %56, %58, %cst_43 {dimension_numbers = #tpu.dot_dimension_numbers<[2], [2], [1], [1], [0, 0, 0, 1, 1, 1], [0], [0]>} : vector<2x2x32xbf16>, vector<2x2x32xbf16>, vector<2x2x2xf32> -> vector<2x2x2xf32>
    "tpu.trace_stop"() : () -> ()
    %cst_44 = arith.constant 0.176776692 : f32
    %62 = vector.broadcast %cst_44 : f32 to vector<2x2x2xf32>
    %63 = arith.mulf %61, %62 : vector<2x2x2xf32>
    %cst_45 = arith.constant dense<0xFF800000> : vector<2x2xf32>
    %64 = vector.multi_reduction <maximumf>, %63, %cst_45 [2] : vector<2x2x2xf32> to vector<2x2xf32>
    %65 = vector.shape_cast %64 : vector<2x2xf32> to vector<2x2x1xf32>
    %66 = vector.broadcast %65 : vector<2x2x1xf32> to vector<2x2x2xf32>
    %67 = arith.subf %63, %66 : vector<2x2x2xf32>
    %68 = math.exp %67 : vector<2x2x2xf32>
    %cst_46 = arith.constant dense<0.000000e+00> : vector<2x2xf32>
    %69 = vector.multi_reduction <add>, %68, %cst_46 [2] : vector<2x2x2xf32> to vector<2x2xf32>
    %70 = vector.shape_cast %69 : vector<2x2xf32> to vector<2x2x1xf32>
    %71 = tpu.reciprocal %70 {approx = true} : vector<2x2x1xf32> -> vector<2x2x1xf32>
    %72 = vector.broadcast %71 : vector<2x2x1xf32> to vector<2x2x2xf32>
    %73 = arith.mulf %68, %72 : vector<2x2x2xf32>
    %74 = arith.truncf %73 : vector<2x2x2xf32> to vector<2x2x2xbf16>
    "tpu.trace_start"() <{level = 10 : i32, message = "bqk,bkd->bqd"}> : () -> ()
    %cst_47 = arith.constant dense<0.000000e+00> : vector<2x2x32xf32>
    %75 = tpu.matmul %74, %60, %cst_47 {dimension_numbers = #tpu.dot_dimension_numbers<[2], [1], [1], [2], [0, 0, 0, 1, 1, 2], [0], [0]>} : vector<2x2x2xbf16>, vector<2x2x32xbf16>, vector<2x2x32xf32> -> vector<2x2x32xf32>
    "tpu.trace_stop"() : () -> ()
    %76 = vector.extract_strided_slice %54 {offsets = [0, 0, 32], sizes = [2, 2, 32], strides = [1, 1, 1]} : vector<2x2x384xf32> to vector<2x2x32xf32>
    %77 = arith.truncf %76 : vector<2x2x32xf32> to vector<2x2x32xbf16>
    %78 = vector.extract_strided_slice %54 {offsets = [0, 0, 160], sizes = [2, 2, 32], strides = [1, 1, 1]} : vector<2x2x384xf32> to vector<2x2x32xf32>
    %79 = arith.truncf %78 : vector<2x2x32xf32> to vector<2x2x32xbf16>
    %80 = vector.extract_strided_slice %54 {offsets = [0, 0, 288], sizes = [2, 2, 32], strides = [1, 1, 1]} : vector<2x2x384xf32> to vector<2x2x32xf32>
    %81 = arith.truncf %80 : vector<2x2x32xf32> to vector<2x2x32xbf16>
    "tpu.trace_start"() <{level = 10 : i32, message = "bqd,bkd->bqk"}> : () -> ()
    %cst_48 = arith.constant dense<0.000000e+00> : vector<2x2x2xf32>
    %82 = tpu.matmul %77, %79, %cst_48 {dimension_numbers = #tpu.dot_dimension_numbers<[2], [2], [1], [1], [0, 0, 0, 1, 1, 1], [0], [0]>} : vector<2x2x32xbf16>, vector<2x2x32xbf16>, vector<2x2x2xf32> -> vector<2x2x2xf32>
    "tpu.trace_stop"() : () -> ()
    %cst_49 = arith.constant 0.176776692 : f32
    %83 = vector.broadcast %cst_49 : f32 to vector<2x2x2xf32>
    %84 = arith.mulf %82, %83 : vector<2x2x2xf32>
    %cst_50 = arith.constant dense<0xFF800000> : vector<2x2xf32>
    %85 = vector.multi_reduction <maximumf>, %84, %cst_50 [2] : vector<2x2x2xf32> to vector<2x2xf32>
    %86 = vector.shape_cast %85 : vector<2x2xf32> to vector<2x2x1xf32>
    %87 = vector.broadcast %86 : vector<2x2x1xf32> to vector<2x2x2xf32>
    %88 = arith.subf %84, %87 : vector<2x2x2xf32>
    %89 = math.exp %88 : vector<2x2x2xf32>
    %cst_51 = arith.constant dense<0.000000e+00> : vector<2x2xf32>
    %90 = vector.multi_reduction <add>, %89, %cst_51 [2] : vector<2x2x2xf32> to vector<2x2xf32>
    %91 = vector.shape_cast %90 : vector<2x2xf32> to vector<2x2x1xf32>
    %92 = tpu.reciprocal %91 {approx = true} : vector<2x2x1xf32> -> vector<2x2x1xf32>
    %93 = vector.broadcast %92 : vector<2x2x1xf32> to vector<2x2x2xf32>
    %94 = arith.mulf %89, %93 : vector<2x2x2xf32>
    %95 = arith.truncf %94 : vector<2x2x2xf32> to vector<2x2x2xbf16>
    "tpu.trace_start"() <{level = 10 : i32, message = "bqk,bkd->bqd"}> : () -> ()
    %cst_52 = arith.constant dense<0.000000e+00> : vector<2x2x32xf32>
    %96 = tpu.matmul %95, %81, %cst_52 {dimension_numbers = #tpu.dot_dimension_numbers<[2], [1], [1], [2], [0, 0, 0, 1, 1, 2], [0], [0]>} : vector<2x2x2xbf16>, vector<2x2x32xbf16>, vector<2x2x32xf32> -> vector<2x2x32xf32>
    "tpu.trace_stop"() : () -> ()
    %97 = vector.extract_strided_slice %54 {offsets = [0, 0, 64], sizes = [2, 2, 32], strides = [1, 1, 1]} : vector<2x2x384xf32> to vector<2x2x32xf32>
    %98 = arith.truncf %97 : vector<2x2x32xf32> to vector<2x2x32xbf16>
    %99 = vector.extract_strided_slice %54 {offsets = [0, 0, 192], sizes = [2, 2, 32], strides = [1, 1, 1]} : vector<2x2x384xf32> to vector<2x2x32xf32>
    %100 = arith.truncf %99 : vector<2x2x32xf32> to vector<2x2x32xbf16>
    %101 = vector.extract_strided_slice %54 {offsets = [0, 0, 320], sizes = [2, 2, 32], strides = [1, 1, 1]} : vector<2x2x384xf32> to vector<2x2x32xf32>
    %102 = arith.truncf %101 : vector<2x2x32xf32> to vector<2x2x32xbf16>
    "tpu.trace_start"() <{level = 10 : i32, message = "bqd,bkd->bqk"}> : () -> ()
    %cst_53 = arith.constant dense<0.000000e+00> : vector<2x2x2xf32>
    %103 = tpu.matmul %98, %100, %cst_53 {dimension_numbers = #tpu.dot_dimension_numbers<[2], [2], [1], [1], [0, 0, 0, 1, 1, 1], [0], [0]>} : vector<2x2x32xbf16>, vector<2x2x32xbf16>, vector<2x2x2xf32> -> vector<2x2x2xf32>
    "tpu.trace_stop"() : () -> ()
    %cst_54 = arith.constant 0.176776692 : f32
    %104 = vector.broadcast %cst_54 : f32 to vector<2x2x2xf32>
    %105 = arith.mulf %103, %104 : vector<2x2x2xf32>
    %cst_55 = arith.constant dense<0xFF800000> : vector<2x2xf32>
    %106 = vector.multi_reduction <maximumf>, %105, %cst_55 [2] : vector<2x2x2xf32> to vector<2x2xf32>
    %107 = vector.shape_cast %106 : vector<2x2xf32> to vector<2x2x1xf32>
    %108 = vector.broadcast %107 : vector<2x2x1xf32> to vector<2x2x2xf32>
    %109 = arith.subf %105, %108 : vector<2x2x2xf32>
    %110 = math.exp %109 : vector<2x2x2xf32>
    %cst_56 = arith.constant dense<0.000000e+00> : vector<2x2xf32>
    %111 = vector.multi_reduction <add>, %110, %cst_56 [2] : vector<2x2x2xf32> to vector<2x2xf32>
    %112 = vector.shape_cast %111 : vector<2x2xf32> to vector<2x2x1xf32>
    %113 = tpu.reciprocal %112 {approx = true} : vector<2x2x1xf32> -> vector<2x2x1xf32>
    %114 = vector.broadcast %113 : vector<2x2x1xf32> to vector<2x2x2xf32>
    %115 = arith.mulf %110, %114 : vector<2x2x2xf32>
    %116 = arith.truncf %115 : vector<2x2x2xf32> to vector<2x2x2xbf16>
    "tpu.trace_start"() <{level = 10 : i32, message = "bqk,bkd->bqd"}> : () -> ()
    %cst_57 = arith.constant dense<0.000000e+00> : vector<2x2x32xf32>
    %117 = tpu.matmul %116, %102, %cst_57 {dimension_numbers = #tpu.dot_dimension_numbers<[2], [1], [1], [2], [0, 0, 0, 1, 1, 2], [0], [0]>} : vector<2x2x2xbf16>, vector<2x2x32xbf16>, vector<2x2x32xf32> -> vector<2x2x32xf32>
    "tpu.trace_stop"() : () -> ()
    %118 = vector.extract_strided_slice %54 {offsets = [0, 0, 96], sizes = [2, 2, 32], strides = [1, 1, 1]} : vector<2x2x384xf32> to vector<2x2x32xf32>
    %119 = arith.truncf %118 : vector<2x2x32xf32> to vector<2x2x32xbf16>
    %120 = vector.extract_strided_slice %54 {offsets = [0, 0, 224], sizes = [2, 2, 32], strides = [1, 1, 1]} : vector<2x2x384xf32> to vector<2x2x32xf32>
    %121 = arith.truncf %120 : vector<2x2x32xf32> to vector<2x2x32xbf16>
    %122 = vector.extract_strided_slice %54 {offsets = [0, 0, 352], sizes = [2, 2, 32], strides = [1, 1, 1]} : vector<2x2x384xf32> to vector<2x2x32xf32>
    %123 = arith.truncf %122 : vector<2x2x32xf32> to vector<2x2x32xbf16>
    "tpu.trace_start"() <{level = 10 : i32, message = "bqd,bkd->bqk"}> : () -> ()
    %cst_58 = arith.constant dense<0.000000e+00> : vector<2x2x2xf32>
    %124 = tpu.matmul %119, %121, %cst_58 {dimension_numbers = #tpu.dot_dimension_numbers<[2], [2], [1], [1], [0, 0, 0, 1, 1, 1], [0], [0]>} : vector<2x2x32xbf16>, vector<2x2x32xbf16>, vector<2x2x2xf32> -> vector<2x2x2xf32>
    "tpu.trace_stop"() : () -> ()
    %cst_59 = arith.constant 0.176776692 : f32
    %125 = vector.broadcast %cst_59 : f32 to vector<2x2x2xf32>
    %126 = arith.mulf %124, %125 : vector<2x2x2xf32>
    %cst_60 = arith.constant dense<0xFF800000> : vector<2x2xf32>
    %127 = vector.multi_reduction <maximumf>, %126, %cst_60 [2] : vector<2x2x2xf32> to vector<2x2xf32>
    %128 = vector.shape_cast %127 : vector<2x2xf32> to vector<2x2x1xf32>
    %129 = vector.broadcast %128 : vector<2x2x1xf32> to vector<2x2x2xf32>
    %130 = arith.subf %126, %129 : vector<2x2x2xf32>
    %131 = math.exp %130 : vector<2x2x2xf32>
    %cst_61 = arith.constant dense<0.000000e+00> : vector<2x2xf32>
    %132 = vector.multi_reduction <add>, %131, %cst_61 [2] : vector<2x2x2xf32> to vector<2x2xf32>
    %133 = vector.shape_cast %132 : vector<2x2xf32> to vector<2x2x1xf32>
    %134 = tpu.reciprocal %133 {approx = true} : vector<2x2x1xf32> -> vector<2x2x1xf32>
    %135 = vector.broadcast %134 : vector<2x2x1xf32> to vector<2x2x2xf32>
    %136 = arith.mulf %131, %135 : vector<2x2x2xf32>
    %137 = arith.truncf %136 : vector<2x2x2xf32> to vector<2x2x2xbf16>
    "tpu.trace_start"() <{level = 10 : i32, message = "bqk,bkd->bqd"}> : () -> ()
    %cst_62 = arith.constant dense<0.000000e+00> : vector<2x2x32xf32>
    %138 = tpu.matmul %137, %123, %cst_62 {dimension_numbers = #tpu.dot_dimension_numbers<[2], [1], [1], [2], [0, 0, 0, 1, 1, 2], [0], [0]>} : vector<2x2x2xbf16>, vector<2x2x32xbf16>, vector<2x2x32xf32> -> vector<2x2x32xf32>
    "tpu.trace_stop"() : () -> ()
    %139 = tpu.concatenate %75, %96, %117, %138 in 2 : vector<2x2x32xf32>, vector<2x2x32xf32>, vector<2x2x32xf32>, vector<2x2x32xf32> -> vector<2x2x128xf32>
    %140 = vector.shape_cast %139 : vector<2x2x128xf32> to vector<4x128xf32>
    %141 = arith.truncf %140 : vector<4x128xf32> to vector<4x128xbf16>
    %cst_63 = arith.constant dense<0.000000e+00> : vector<4x128xf32>
    %142 = tpu.matmul %141, %10, %cst_63 {dimension_numbers = #tpu.dot_dimension_numbers<[1], [0], [0], [1], [0, 0, 1, 1], [], []>} : vector<4x128xbf16>, vector<128x128xbf16>, vector<4x128xf32> -> vector<4x128xf32>
    %143 = vector.broadcast %12 : vector<1x128xf32> to vector<4x128xf32>
    %144 = arith.addf %142, %143 : vector<4x128xf32>
    %145 = vector.shape_cast %144 : vector<4x128xf32> to vector<2x2x128xf32>
    %146 = arith.addf %0, %145 : vector<2x2x128xf32>
    %cst_64 = arith.constant dense<0.000000e+00> : vector<2x2xf32>
    %147 = vector.multi_reduction <add>, %146, %cst_64 [2] : vector<2x2x128xf32> to vector<2x2xf32>
    %148 = vector.shape_cast %147 : vector<2x2xf32> to vector<2x2x1xf32>
    %cst_65 = arith.constant 1.280000e+02 : f32
    %149 = vector.broadcast %cst_65 : f32 to vector<2x2x1xf32>
    %150 = arith.divf %148, %149 : vector<2x2x1xf32>
    %151 = vector.broadcast %150 : vector<2x2x1xf32> to vector<2x2x128xf32>
    %152 = arith.subf %146, %151 : vector<2x2x128xf32>
    %153 = arith.mulf %152, %152 : vector<2x2x128xf32>
    %cst_66 = arith.constant dense<0.000000e+00> : vector<2x2xf32>
    %154 = vector.multi_reduction <add>, %153, %cst_66 [2] : vector<2x2x128xf32> to vector<2x2xf32>
    %155 = vector.shape_cast %154 : vector<2x2xf32> to vector<2x2x1xf32>
    %cst_67 = arith.constant 1.280000e+02 : f32
    %156 = vector.broadcast %cst_67 : f32 to vector<2x2x1xf32>
    %157 = arith.divf %155, %156 : vector<2x2x1xf32>
    %158 = vector.broadcast %150 : vector<2x2x1xf32> to vector<2x2x128xf32>
    %159 = arith.subf %146, %158 : vector<2x2x128xf32>
    %cst_68 = arith.constant 9.99999974E-6 : f32
    %160 = vector.broadcast %cst_68 : f32 to vector<2x2x1xf32>
    %161 = arith.addf %157, %160 : vector<2x2x1xf32>
    %162 = math.rsqrt %161 : vector<2x2x1xf32>
    %163 = vector.broadcast %162 : vector<2x2x1xf32> to vector<2x2x128xf32>
    %164 = arith.mulf %159, %163 : vector<2x2x128xf32>
    %165 = vector.shape_cast %14 : vector<1x128xf32> to vector<1x1x128xf32>
    %166 = vector.broadcast %165 : vector<1x1x128xf32> to vector<2x2x128xf32>
    %167 = arith.mulf %164, %166 : vector<2x2x128xf32>
    %168 = vector.shape_cast %16 : vector<1x128xf32> to vector<1x1x128xf32>
    %169 = vector.broadcast %168 : vector<1x1x128xf32> to vector<2x2x128xf32>
    %170 = arith.addf %167, %169 : vector<2x2x128xf32>
    %171 = vector.shape_cast %170 : vector<2x2x128xf32> to vector<4x128xf32>
    %172 = arith.truncf %171 : vector<4x128xf32> to vector<4x128xbf16>
    %cst_69 = arith.constant dense<0.000000e+00> : vector<4x128xf32>
    %173 = tpu.matmul %172, %18, %cst_69 {dimension_numbers = #tpu.dot_dimension_numbers<[1], [0], [0], [1], [0, 0, 1, 1], [], []>} : vector<4x128xbf16>, vector<128x128xbf16>, vector<4x128xf32> -> vector<4x128xf32>
    %174 = vector.broadcast %20 : vector<1x128xf32> to vector<4x128xf32>
    %175 = arith.addf %173, %174 : vector<4x128xf32>
    %cst_70 = arith.constant 5.000000e-01 : f32
    %176 = vector.broadcast %cst_70 : f32 to vector<4x128xf32>
    %177 = arith.mulf %176, %175 : vector<4x128xf32>
    %cst_71 = arith.constant 0.707106769 : f32
    %178 = vector.broadcast %cst_71 : f32 to vector<4x128xf32>
    %179 = arith.mulf %175, %178 : vector<4x128xf32>
    %180 = math.erf %179 : vector<4x128xf32>
    %cst_72 = arith.constant 1.000000e+00 : f32
    %181 = vector.broadcast %cst_72 : f32 to vector<4x128xf32>
    %182 = arith.addf %181, %180 : vector<4x128xf32>
    %183 = arith.mulf %177, %182 : vector<4x128xf32>
    %184 = arith.truncf %183 : vector<4x128xf32> to vector<4x128xbf16>
    %cst_73 = arith.constant dense<0.000000e+00> : vector<4x128xf32>
    %185 = tpu.matmul %184, %22, %cst_73 {dimension_numbers = #tpu.dot_dimension_numbers<[1], [0], [0], [1], [0, 0, 1, 1], [], []>} : vector<4x128xbf16>, vector<128x128xbf16>, vector<4x128xf32> -> vector<4x128xf32>
    %186 = vector.broadcast %24 : vector<1x128xf32> to vector<4x128xf32>
    %187 = arith.addf %185, %186 : vector<4x128xf32>
    %188 = vector.shape_cast %187 : vector<4x128xf32> to vector<2x2x128xf32>
    %189 = arith.addf %146, %188 : vector<2x2x128xf32>
    %c1 = arith.constant 1 : index
    %c0_74 = arith.constant 0 : index
    %c0_75 = arith.constant 0 : index
    %190 = vector.load %arg5[%c1, %c0_74, %c0_75] : memref<2x1x128xf32, #tpu.memory_space<vmem>>, vector<1x1x128xf32>
    %191 = vector.shape_cast %190 : vector<1x1x128xf32> to vector<1x128xf32>
    %c1_76 = arith.constant 1 : index
    %c0_77 = arith.constant 0 : index
    %c0_78 = arith.constant 0 : index
    %192 = vector.load %arg6[%c1_76, %c0_77, %c0_78] : memref<2x1x128xf32, #tpu.memory_space<vmem>>, vector<1x1x128xf32>
    %193 = vector.shape_cast %192 : vector<1x1x128xf32> to vector<1x128xf32>
    %c1_79 = arith.constant 1 : index
    %c0_80 = arith.constant 0 : index
    %c0_81 = arith.constant 0 : index
    %194 = vector.load %arg7[%c1_79, %c0_80, %c0_81] : memref<2x128x384xbf16, #tpu.memory_space<vmem>>, vector<1x128x384xbf16>
    %195 = vector.shape_cast %194 : vector<1x128x384xbf16> to vector<128x384xbf16>
    %c1_82 = arith.constant 1 : index
    %c0_83 = arith.constant 0 : index
    %c0_84 = arith.constant 0 : index
    %196 = vector.load %arg8[%c1_82, %c0_83, %c0_84] : memref<2x1x384xf32, #tpu.memory_space<vmem>>, vector<1x1x384xf32>
    %197 = vector.shape_cast %196 : vector<1x1x384xf32> to vector<1x384xf32>
    %c1_85 = arith.constant 1 : index
    %c0_86 = arith.constant 0 : index
    %c0_87 = arith.constant 0 : index
    %198 = vector.load %arg9[%c1_85, %c0_86, %c0_87] : memref<2x128x128xbf16, #tpu.memory_space<vmem>>, vector<1x128x128xbf16>
    %199 = vector.shape_cast %198 : vector<1x128x128xbf16> to vector<128x128xbf16>
    %c1_88 = arith.constant 1 : index
    %c0_89 = arith.constant 0 : index
    %c0_90 = arith.constant 0 : index
    %200 = vector.load %arg10[%c1_88, %c0_89, %c0_90] : memref<2x1x128xf32, #tpu.memory_space<vmem>>, vector<1x1x128xf32>
    %201 = vector.shape_cast %200 : vector<1x1x128xf32> to vector<1x128xf32>
    %c1_91 = arith.constant 1 : index
    %c0_92 = arith.constant 0 : index
    %c0_93 = arith.constant 0 : index
    %202 = vector.load %arg11[%c1_91, %c0_92, %c0_93] : memref<2x1x128xf32, #tpu.memory_space<vmem>>, vector<1x1x128xf32>
    %203 = vector.shape_cast %202 : vector<1x1x128xf32> to vector<1x128xf32>
    %c1_94 = arith.constant 1 : index
    %c0_95 = arith.constant 0 : index
    %c0_96 = arith.constant 0 : index
    %204 = vector.load %arg12[%c1_94, %c0_95, %c0_96] : memref<2x1x128xf32, #tpu.memory_space<vmem>>, vector<1x1x128xf32>
    %205 = vector.shape_cast %204 : vector<1x1x128xf32> to vector<1x128xf32>
    %c1_97 = arith.constant 1 : index
    %c0_98 = arith.constant 0 : index
    %c0_99 = arith.constant 0 : index
    %206 = vector.load %arg13[%c1_97, %c0_98, %c0_99] : memref<2x128x128xbf16, #tpu.memory_space<vmem>>, vector<1x128x128xbf16>
    %207 = vector.shape_cast %206 : vector<1x128x128xbf16> to vector<128x128xbf16>
    %c1_100 = arith.constant 1 : index
    %c0_101 = arith.constant 0 : index
    %c0_102 = arith.constant 0 : index
    %208 = vector.load %arg14[%c1_100, %c0_101, %c0_102] : memref<2x1x128xf32, #tpu.memory_space<vmem>>, vector<1x1x128xf32>
    %209 = vector.shape_cast %208 : vector<1x1x128xf32> to vector<1x128xf32>
    %c1_103 = arith.constant 1 : index
    %c0_104 = arith.constant 0 : index
    %c0_105 = arith.constant 0 : index
    %210 = vector.load %arg15[%c1_103, %c0_104, %c0_105] : memref<2x128x128xbf16, #tpu.memory_space<vmem>>, vector<1x128x128xbf16>
    %211 = vector.shape_cast %210 : vector<1x128x128xbf16> to vector<128x128xbf16>
    %c1_106 = arith.constant 1 : index
    %c0_107 = arith.constant 0 : index
    %c0_108 = arith.constant 0 : index
    %212 = vector.load %arg16[%c1_106, %c0_107, %c0_108] : memref<2x1x128xf32, #tpu.memory_space<vmem>>, vector<1x1x128xf32>
    %213 = vector.shape_cast %212 : vector<1x1x128xf32> to vector<1x128xf32>
    %cst_109 = arith.constant dense<0.000000e+00> : vector<2x2xf32>
    %214 = vector.multi_reduction <add>, %189, %cst_109 [2] : vector<2x2x128xf32> to vector<2x2xf32>
    %215 = vector.shape_cast %214 : vector<2x2xf32> to vector<2x2x1xf32>
    %cst_110 = arith.constant 1.280000e+02 : f32
    %216 = vector.broadcast %cst_110 : f32 to vector<2x2x1xf32>
    %217 = arith.divf %215, %216 : vector<2x2x1xf32>
    %218 = vector.broadcast %217 : vector<2x2x1xf32> to vector<2x2x128xf32>
    %219 = arith.subf %189, %218 : vector<2x2x128xf32>
    %220 = arith.mulf %219, %219 : vector<2x2x128xf32>
    %cst_111 = arith.constant dense<0.000000e+00> : vector<2x2xf32>
    %221 = vector.multi_reduction <add>, %220, %cst_111 [2] : vector<2x2x128xf32> to vector<2x2xf32>
    %222 = vector.shape_cast %221 : vector<2x2xf32> to vector<2x2x1xf32>
    %cst_112 = arith.constant 1.280000e+02 : f32
    %223 = vector.broadcast %cst_112 : f32 to vector<2x2x1xf32>
    %224 = arith.divf %222, %223 : vector<2x2x1xf32>
    %225 = vector.broadcast %217 : vector<2x2x1xf32> to vector<2x2x128xf32>
    %226 = arith.subf %189, %225 : vector<2x2x128xf32>
    %cst_113 = arith.constant 9.99999974E-6 : f32
    %227 = vector.broadcast %cst_113 : f32 to vector<2x2x1xf32>
    %228 = arith.addf %224, %227 : vector<2x2x1xf32>
    %229 = math.rsqrt %228 : vector<2x2x1xf32>
    %230 = vector.broadcast %229 : vector<2x2x1xf32> to vector<2x2x128xf32>
    %231 = arith.mulf %226, %230 : vector<2x2x128xf32>
    %232 = vector.shape_cast %191 : vector<1x128xf32> to vector<1x1x128xf32>
    %233 = vector.broadcast %232 : vector<1x1x128xf32> to vector<2x2x128xf32>
    %234 = arith.mulf %231, %233 : vector<2x2x128xf32>
    %235 = vector.shape_cast %193 : vector<1x128xf32> to vector<1x1x128xf32>
    %236 = vector.broadcast %235 : vector<1x1x128xf32> to vector<2x2x128xf32>
    %237 = arith.addf %234, %236 : vector<2x2x128xf32>
    %238 = vector.shape_cast %237 : vector<2x2x128xf32> to vector<4x128xf32>
    %239 = arith.truncf %238 : vector<4x128xf32> to vector<4x128xbf16>
    %cst_114 = arith.constant dense<0.000000e+00> : vector<4x384xf32>
    %240 = tpu.matmul %239, %195, %cst_114 {dimension_numbers = #tpu.dot_dimension_numbers<[1], [0], [0], [1], [0, 0, 1, 1], [], []>} : vector<4x128xbf16>, vector<128x384xbf16>, vector<4x384xf32> -> vector<4x384xf32>
    %241 = vector.broadcast %197 : vector<1x384xf32> to vector<4x384xf32>
    %242 = arith.addf %240, %241 : vector<4x384xf32>
    %243 = vector.shape_cast %242 : vector<4x384xf32> to vector<2x2x384xf32>
    %244 = vector.extract_strided_slice %243 {offsets = [0, 0, 0], sizes = [2, 2, 32], strides = [1, 1, 1]} : vector<2x2x384xf32> to vector<2x2x32xf32>
    %245 = arith.truncf %244 : vector<2x2x32xf32> to vector<2x2x32xbf16>
    %246 = vector.extract_strided_slice %243 {offsets = [0, 0, 128], sizes = [2, 2, 32], strides = [1, 1, 1]} : vector<2x2x384xf32> to vector<2x2x32xf32>
    %247 = arith.truncf %246 : vector<2x2x32xf32> to vector<2x2x32xbf16>
    %248 = vector.extract_strided_slice %243 {offsets = [0, 0, 256], sizes = [2, 2, 32], strides = [1, 1, 1]} : vector<2x2x384xf32> to vector<2x2x32xf32>
    %249 = arith.truncf %248 : vector<2x2x32xf32> to vector<2x2x32xbf16>
    "tpu.trace_start"() <{level = 10 : i32, message = "bqd,bkd->bqk"}> : () -> ()
    %cst_115 = arith.constant dense<0.000000e+00> : vector<2x2x2xf32>
    %250 = tpu.matmul %245, %247, %cst_115 {dimension_numbers = #tpu.dot_dimension_numbers<[2], [2], [1], [1], [0, 0, 0, 1, 1, 1], [0], [0]>} : vector<2x2x32xbf16>, vector<2x2x32xbf16>, vector<2x2x2xf32> -> vector<2x2x2xf32>
    "tpu.trace_stop"() : () -> ()
    %cst_116 = arith.constant 0.176776692 : f32
    %251 = vector.broadcast %cst_116 : f32 to vector<2x2x2xf32>
    %252 = arith.mulf %250, %251 : vector<2x2x2xf32>
    %cst_117 = arith.constant dense<0xFF800000> : vector<2x2xf32>
    %253 = vector.multi_reduction <maximumf>, %252, %cst_117 [2] : vector<2x2x2xf32> to vector<2x2xf32>
    %254 = vector.shape_cast %253 : vector<2x2xf32> to vector<2x2x1xf32>
    %255 = vector.broadcast %254 : vector<2x2x1xf32> to vector<2x2x2xf32>
    %256 = arith.subf %252, %255 : vector<2x2x2xf32>
    %257 = math.exp %256 : vector<2x2x2xf32>
    %cst_118 = arith.constant dense<0.000000e+00> : vector<2x2xf32>
    %258 = vector.multi_reduction <add>, %257, %cst_118 [2] : vector<2x2x2xf32> to vector<2x2xf32>
    %259 = vector.shape_cast %258 : vector<2x2xf32> to vector<2x2x1xf32>
    %260 = tpu.reciprocal %259 {approx = true} : vector<2x2x1xf32> -> vector<2x2x1xf32>
    %261 = vector.broadcast %260 : vector<2x2x1xf32> to vector<2x2x2xf32>
    %262 = arith.mulf %257, %261 : vector<2x2x2xf32>
    %263 = arith.truncf %262 : vector<2x2x2xf32> to vector<2x2x2xbf16>
    "tpu.trace_start"() <{level = 10 : i32, message = "bqk,bkd->bqd"}> : () -> ()
    %cst_119 = arith.constant dense<0.000000e+00> : vector<2x2x32xf32>
    %264 = tpu.matmul %263, %249, %cst_119 {dimension_numbers = #tpu.dot_dimension_numbers<[2], [1], [1], [2], [0, 0, 0, 1, 1, 2], [0], [0]>} : vector<2x2x2xbf16>, vector<2x2x32xbf16>, vector<2x2x32xf32> -> vector<2x2x32xf32>
    "tpu.trace_stop"() : () -> ()
    %265 = vector.extract_strided_slice %243 {offsets = [0, 0, 32], sizes = [2, 2, 32], strides = [1, 1, 1]} : vector<2x2x384xf32> to vector<2x2x32xf32>
    %266 = arith.truncf %265 : vector<2x2x32xf32> to vector<2x2x32xbf16>
    %267 = vector.extract_strided_slice %243 {offsets = [0, 0, 160], sizes = [2, 2, 32], strides = [1, 1, 1]} : vector<2x2x384xf32> to vector<2x2x32xf32>
    %268 = arith.truncf %267 : vector<2x2x32xf32> to vector<2x2x32xbf16>
    %269 = vector.extract_strided_slice %243 {offsets = [0, 0, 288], sizes = [2, 2, 32], strides = [1, 1, 1]} : vector<2x2x384xf32> to vector<2x2x32xf32>
    %270 = arith.truncf %269 : vector<2x2x32xf32> to vector<2x2x32xbf16>
    "tpu.trace_start"() <{level = 10 : i32, message = "bqd,bkd->bqk"}> : () -> ()
    %cst_120 = arith.constant dense<0.000000e+00> : vector<2x2x2xf32>
    %271 = tpu.matmul %266, %268, %cst_120 {dimension_numbers = #tpu.dot_dimension_numbers<[2], [2], [1], [1], [0, 0, 0, 1, 1, 1], [0], [0]>} : vector<2x2x32xbf16>, vector<2x2x32xbf16>, vector<2x2x2xf32> -> vector<2x2x2xf32>
    "tpu.trace_stop"() : () -> ()
    %cst_121 = arith.constant 0.176776692 : f32
    %272 = vector.broadcast %cst_121 : f32 to vector<2x2x2xf32>
    %273 = arith.mulf %271, %272 : vector<2x2x2xf32>
    %cst_122 = arith.constant dense<0xFF800000> : vector<2x2xf32>
    %274 = vector.multi_reduction <maximumf>, %273, %cst_122 [2] : vector<2x2x2xf32> to vector<2x2xf32>
    %275 = vector.shape_cast %274 : vector<2x2xf32> to vector<2x2x1xf32>
    %276 = vector.broadcast %275 : vector<2x2x1xf32> to vector<2x2x2xf32>
    %277 = arith.subf %273, %276 : vector<2x2x2xf32>
    %278 = math.exp %277 : vector<2x2x2xf32>
    %cst_123 = arith.constant dense<0.000000e+00> : vector<2x2xf32>
    %279 = vector.multi_reduction <add>, %278, %cst_123 [2] : vector<2x2x2xf32> to vector<2x2xf32>
    %280 = vector.shape_cast %279 : vector<2x2xf32> to vector<2x2x1xf32>
    %281 = tpu.reciprocal %280 {approx = true} : vector<2x2x1xf32> -> vector<2x2x1xf32>
    %282 = vector.broadcast %281 : vector<2x2x1xf32> to vector<2x2x2xf32>
    %283 = arith.mulf %278, %282 : vector<2x2x2xf32>
    %284 = arith.truncf %283 : vector<2x2x2xf32> to vector<2x2x2xbf16>
    "tpu.trace_start"() <{level = 10 : i32, message = "bqk,bkd->bqd"}> : () -> ()
    %cst_124 = arith.constant dense<0.000000e+00> : vector<2x2x32xf32>
    %285 = tpu.matmul %284, %270, %cst_124 {dimension_numbers = #tpu.dot_dimension_numbers<[2], [1], [1], [2], [0, 0, 0, 1, 1, 2], [0], [0]>} : vector<2x2x2xbf16>, vector<2x2x32xbf16>, vector<2x2x32xf32> -> vector<2x2x32xf32>
    "tpu.trace_stop"() : () -> ()
    %286 = vector.extract_strided_slice %243 {offsets = [0, 0, 64], sizes = [2, 2, 32], strides = [1, 1, 1]} : vector<2x2x384xf32> to vector<2x2x32xf32>
    %287 = arith.truncf %286 : vector<2x2x32xf32> to vector<2x2x32xbf16>
    %288 = vector.extract_strided_slice %243 {offsets = [0, 0, 192], sizes = [2, 2, 32], strides = [1, 1, 1]} : vector<2x2x384xf32> to vector<2x2x32xf32>
    %289 = arith.truncf %288 : vector<2x2x32xf32> to vector<2x2x32xbf16>
    %290 = vector.extract_strided_slice %243 {offsets = [0, 0, 320], sizes = [2, 2, 32], strides = [1, 1, 1]} : vector<2x2x384xf32> to vector<2x2x32xf32>
    %291 = arith.truncf %290 : vector<2x2x32xf32> to vector<2x2x32xbf16>
    "tpu.trace_start"() <{level = 10 : i32, message = "bqd,bkd->bqk"}> : () -> ()
    %cst_125 = arith.constant dense<0.000000e+00> : vector<2x2x2xf32>
    %292 = tpu.matmul %287, %289, %cst_125 {dimension_numbers = #tpu.dot_dimension_numbers<[2], [2], [1], [1], [0, 0, 0, 1, 1, 1], [0], [0]>} : vector<2x2x32xbf16>, vector<2x2x32xbf16>, vector<2x2x2xf32> -> vector<2x2x2xf32>
    "tpu.trace_stop"() : () -> ()
    %cst_126 = arith.constant 0.176776692 : f32
    %293 = vector.broadcast %cst_126 : f32 to vector<2x2x2xf32>
    %294 = arith.mulf %292, %293 : vector<2x2x2xf32>
    %cst_127 = arith.constant dense<0xFF800000> : vector<2x2xf32>
    %295 = vector.multi_reduction <maximumf>, %294, %cst_127 [2] : vector<2x2x2xf32> to vector<2x2xf32>
    %296 = vector.shape_cast %295 : vector<2x2xf32> to vector<2x2x1xf32>
    %297 = vector.broadcast %296 : vector<2x2x1xf32> to vector<2x2x2xf32>
    %298 = arith.subf %294, %297 : vector<2x2x2xf32>
    %299 = math.exp %298 : vector<2x2x2xf32>
    %cst_128 = arith.constant dense<0.000000e+00> : vector<2x2xf32>
    %300 = vector.multi_reduction <add>, %299, %cst_128 [2] : vector<2x2x2xf32> to vector<2x2xf32>
    %301 = vector.shape_cast %300 : vector<2x2xf32> to vector<2x2x1xf32>
    %302 = tpu.reciprocal %301 {approx = true} : vector<2x2x1xf32> -> vector<2x2x1xf32>
    %303 = vector.broadcast %302 : vector<2x2x1xf32> to vector<2x2x2xf32>
    %304 = arith.mulf %299, %303 : vector<2x2x2xf32>
    %305 = arith.truncf %304 : vector<2x2x2xf32> to vector<2x2x2xbf16>
    "tpu.trace_start"() <{level = 10 : i32, message = "bqk,bkd->bqd"}> : () -> ()
    %cst_129 = arith.constant dense<0.000000e+00> : vector<2x2x32xf32>
    %306 = tpu.matmul %305, %291, %cst_129 {dimension_numbers = #tpu.dot_dimension_numbers<[2], [1], [1], [2], [0, 0, 0, 1, 1, 2], [0], [0]>} : vector<2x2x2xbf16>, vector<2x2x32xbf16>, vector<2x2x32xf32> -> vector<2x2x32xf32>
    "tpu.trace_stop"() : () -> ()
    %307 = vector.extract_strided_slice %243 {offsets = [0, 0, 96], sizes = [2, 2, 32], strides = [1, 1, 1]} : vector<2x2x384xf32> to vector<2x2x32xf32>
    %308 = arith.truncf %307 : vector<2x2x32xf32> to vector<2x2x32xbf16>
    %309 = vector.extract_strided_slice %243 {offsets = [0, 0, 224], sizes = [2, 2, 32], strides = [1, 1, 1]} : vector<2x2x384xf32> to vector<2x2x32xf32>
    %310 = arith.truncf %309 : vector<2x2x32xf32> to vector<2x2x32xbf16>
    %311 = vector.extract_strided_slice %243 {offsets = [0, 0, 352], sizes = [2, 2, 32], strides = [1, 1, 1]} : vector<2x2x384xf32> to vector<2x2x32xf32>
    %312 = arith.truncf %311 : vector<2x2x32xf32> to vector<2x2x32xbf16>
    "tpu.trace_start"() <{level = 10 : i32, message = "bqd,bkd->bqk"}> : () -> ()
    %cst_130 = arith.constant dense<0.000000e+00> : vector<2x2x2xf32>
    %313 = tpu.matmul %308, %310, %cst_130 {dimension_numbers = #tpu.dot_dimension_numbers<[2], [2], [1], [1], [0, 0, 0, 1, 1, 1], [0], [0]>} : vector<2x2x32xbf16>, vector<2x2x32xbf16>, vector<2x2x2xf32> -> vector<2x2x2xf32>
    "tpu.trace_stop"() : () -> ()
    %cst_131 = arith.constant 0.176776692 : f32
    %314 = vector.broadcast %cst_131 : f32 to vector<2x2x2xf32>
    %315 = arith.mulf %313, %314 : vector<2x2x2xf32>
    %cst_132 = arith.constant dense<0xFF800000> : vector<2x2xf32>
    %316 = vector.multi_reduction <maximumf>, %315, %cst_132 [2] : vector<2x2x2xf32> to vector<2x2xf32>
    %317 = vector.shape_cast %316 : vector<2x2xf32> to vector<2x2x1xf32>
    %318 = vector.broadcast %317 : vector<2x2x1xf32> to vector<2x2x2xf32>
    %319 = arith.subf %315, %318 : vector<2x2x2xf32>
    %320 = math.exp %319 : vector<2x2x2xf32>
    %cst_133 = arith.constant dense<0.000000e+00> : vector<2x2xf32>
    %321 = vector.multi_reduction <add>, %320, %cst_133 [2] : vector<2x2x2xf32> to vector<2x2xf32>
    %322 = vector.shape_cast %321 : vector<2x2xf32> to vector<2x2x1xf32>
    %323 = tpu.reciprocal %322 {approx = true} : vector<2x2x1xf32> -> vector<2x2x1xf32>
    %324 = vector.broadcast %323 : vector<2x2x1xf32> to vector<2x2x2xf32>
    %325 = arith.mulf %320, %324 : vector<2x2x2xf32>
    %326 = arith.truncf %325 : vector<2x2x2xf32> to vector<2x2x2xbf16>
    "tpu.trace_start"() <{level = 10 : i32, message = "bqk,bkd->bqd"}> : () -> ()
    %cst_134 = arith.constant dense<0.000000e+00> : vector<2x2x32xf32>
    %327 = tpu.matmul %326, %312, %cst_134 {dimension_numbers = #tpu.dot_dimension_numbers<[2], [1], [1], [2], [0, 0, 0, 1, 1, 2], [0], [0]>} : vector<2x2x2xbf16>, vector<2x2x32xbf16>, vector<2x2x32xf32> -> vector<2x2x32xf32>
    "tpu.trace_stop"() : () -> ()
    %328 = tpu.concatenate %264, %285, %306, %327 in 2 : vector<2x2x32xf32>, vector<2x2x32xf32>, vector<2x2x32xf32>, vector<2x2x32xf32> -> vector<2x2x128xf32>
    %329 = vector.shape_cast %328 : vector<2x2x128xf32> to vector<4x128xf32>
    %330 = arith.truncf %329 : vector<4x128xf32> to vector<4x128xbf16>
    %cst_135 = arith.constant dense<0.000000e+00> : vector<4x128xf32>
    %331 = tpu.matmul %330, %199, %cst_135 {dimension_numbers = #tpu.dot_dimension_numbers<[1], [0], [0], [1], [0, 0, 1, 1], [], []>} : vector<4x128xbf16>, vector<128x128xbf16>, vector<4x128xf32> -> vector<4x128xf32>
    %332 = vector.broadcast %201 : vector<1x128xf32> to vector<4x128xf32>
    %333 = arith.addf %331, %332 : vector<4x128xf32>
    %334 = vector.shape_cast %333 : vector<4x128xf32> to vector<2x2x128xf32>
    %335 = arith.addf %189, %334 : vector<2x2x128xf32>
    %cst_136 = arith.constant dense<0.000000e+00> : vector<2x2xf32>
    %336 = vector.multi_reduction <add>, %335, %cst_136 [2] : vector<2x2x128xf32> to vector<2x2xf32>
    %337 = vector.shape_cast %336 : vector<2x2xf32> to vector<2x2x1xf32>
    %cst_137 = arith.constant 1.280000e+02 : f32
    %338 = vector.broadcast %cst_137 : f32 to vector<2x2x1xf32>
    %339 = arith.divf %337, %338 : vector<2x2x1xf32>
    %340 = vector.broadcast %339 : vector<2x2x1xf32> to vector<2x2x128xf32>
    %341 = arith.subf %335, %340 : vector<2x2x128xf32>
    %342 = arith.mulf %341, %341 : vector<2x2x128xf32>
    %cst_138 = arith.constant dense<0.000000e+00> : vector<2x2xf32>
    %343 = vector.multi_reduction <add>, %342, %cst_138 [2] : vector<2x2x128xf32> to vector<2x2xf32>
    %344 = vector.shape_cast %343 : vector<2x2xf32> to vector<2x2x1xf32>
    %cst_139 = arith.constant 1.280000e+02 : f32
    %345 = vector.broadcast %cst_139 : f32 to vector<2x2x1xf32>
    %346 = arith.divf %344, %345 : vector<2x2x1xf32>
    %347 = vector.broadcast %339 : vector<2x2x1xf32> to vector<2x2x128xf32>
    %348 = arith.subf %335, %347 : vector<2x2x128xf32>
    %cst_140 = arith.constant 9.99999974E-6 : f32
    %349 = vector.broadcast %cst_140 : f32 to vector<2x2x1xf32>
    %350 = arith.addf %346, %349 : vector<2x2x1xf32>
    %351 = math.rsqrt %350 : vector<2x2x1xf32>
    %352 = vector.broadcast %351 : vector<2x2x1xf32> to vector<2x2x128xf32>
    %353 = arith.mulf %348, %352 : vector<2x2x128xf32>
    %354 = vector.shape_cast %203 : vector<1x128xf32> to vector<1x1x128xf32>
    %355 = vector.broadcast %354 : vector<1x1x128xf32> to vector<2x2x128xf32>
    %356 = arith.mulf %353, %355 : vector<2x2x128xf32>
    %357 = vector.shape_cast %205 : vector<1x128xf32> to vector<1x1x128xf32>
    %358 = vector.broadcast %357 : vector<1x1x128xf32> to vector<2x2x128xf32>
    %359 = arith.addf %356, %358 : vector<2x2x128xf32>
    %360 = vector.shape_cast %359 : vector<2x2x128xf32> to vector<4x128xf32>
    %361 = arith.truncf %360 : vector<4x128xf32> to vector<4x128xbf16>
    %cst_141 = arith.constant dense<0.000000e+00> : vector<4x128xf32>
    %362 = tpu.matmul %361, %207, %cst_141 {dimension_numbers = #tpu.dot_dimension_numbers<[1], [0], [0], [1], [0, 0, 1, 1], [], []>} : vector<4x128xbf16>, vector<128x128xbf16>, vector<4x128xf32> -> vector<4x128xf32>
    %363 = vector.broadcast %209 : vector<1x128xf32> to vector<4x128xf32>
    %364 = arith.addf %362, %363 : vector<4x128xf32>
    %cst_142 = arith.constant 5.000000e-01 : f32
    %365 = vector.broadcast %cst_142 : f32 to vector<4x128xf32>
    %366 = arith.mulf %365, %364 : vector<4x128xf32>
    %cst_143 = arith.constant 0.707106769 : f32
    %367 = vector.broadcast %cst_143 : f32 to vector<4x128xf32>
    %368 = arith.mulf %364, %367 : vector<4x128xf32>
    %369 = math.erf %368 : vector<4x128xf32>
    %cst_144 = arith.constant 1.000000e+00 : f32
    %370 = vector.broadcast %cst_144 : f32 to vector<4x128xf32>
    %371 = arith.addf %370, %369 : vector<4x128xf32>
    %372 = arith.mulf %366, %371 : vector<4x128xf32>
    %373 = arith.truncf %372 : vector<4x128xf32> to vector<4x128xbf16>
    %cst_145 = arith.constant dense<0.000000e+00> : vector<4x128xf32>
    %374 = tpu.matmul %373, %211, %cst_145 {dimension_numbers = #tpu.dot_dimension_numbers<[1], [0], [0], [1], [0, 0, 1, 1], [], []>} : vector<4x128xbf16>, vector<128x128xbf16>, vector<4x128xf32> -> vector<4x128xf32>
    %375 = vector.broadcast %213 : vector<1x128xf32> to vector<4x128xf32>
    %376 = arith.addf %374, %375 : vector<4x128xf32>
    %377 = vector.shape_cast %376 : vector<4x128xf32> to vector<2x2x128xf32>
    %378 = arith.addf %335, %377 : vector<2x2x128xf32>
    %c0_146 = arith.constant 0 : index
    %c0_147 = arith.constant 0 : index
    %379 = vector.load %arg17[%c0_146, %c0_147] : memref<1x128xf32, #tpu.memory_space<vmem>>, vector<1x128xf32>
    %c0_148 = arith.constant 0 : index
    %c0_149 = arith.constant 0 : index
    %380 = vector.load %arg18[%c0_148, %c0_149] : memref<1x128xf32, #tpu.memory_space<vmem>>, vector<1x128xf32>
    %cst_150 = arith.constant dense<0.000000e+00> : vector<2x2xf32>
    %381 = vector.multi_reduction <add>, %378, %cst_150 [2] : vector<2x2x128xf32> to vector<2x2xf32>
    %382 = vector.shape_cast %381 : vector<2x2xf32> to vector<2x2x1xf32>
    %cst_151 = arith.constant 1.280000e+02 : f32
    %383 = vector.broadcast %cst_151 : f32 to vector<2x2x1xf32>
    %384 = arith.divf %382, %383 : vector<2x2x1xf32>
    %385 = vector.broadcast %384 : vector<2x2x1xf32> to vector<2x2x128xf32>
    %386 = arith.subf %378, %385 : vector<2x2x128xf32>
    %387 = arith.mulf %386, %386 : vector<2x2x128xf32>
    %cst_152 = arith.constant dense<0.000000e+00> : vector<2x2xf32>
    %388 = vector.multi_reduction <add>, %387, %cst_152 [2] : vector<2x2x128xf32> to vector<2x2xf32>
    %389 = vector.shape_cast %388 : vector<2x2xf32> to vector<2x2x1xf32>
    %cst_153 = arith.constant 1.280000e+02 : f32
    %390 = vector.broadcast %cst_153 : f32 to vector<2x2x1xf32>
    %391 = arith.divf %389, %390 : vector<2x2x1xf32>
    %392 = vector.broadcast %384 : vector<2x2x1xf32> to vector<2x2x128xf32>
    %393 = arith.subf %378, %392 : vector<2x2x128xf32>
    %cst_154 = arith.constant 9.99999974E-6 : f32
    %394 = vector.broadcast %cst_154 : f32 to vector<2x2x1xf32>
    %395 = arith.addf %391, %394 : vector<2x2x1xf32>
    %396 = math.rsqrt %395 : vector<2x2x1xf32>
    %397 = vector.broadcast %396 : vector<2x2x1xf32> to vector<2x2x128xf32>
    %398 = arith.mulf %393, %397 : vector<2x2x128xf32>
    %399 = vector.shape_cast %379 : vector<1x128xf32> to vector<1x1x128xf32>
    %400 = vector.broadcast %399 : vector<1x1x128xf32> to vector<2x2x128xf32>
    %401 = arith.mulf %398, %400 : vector<2x2x128xf32>
    %402 = vector.shape_cast %380 : vector<1x128xf32> to vector<1x1x128xf32>
    %403 = vector.broadcast %402 : vector<1x1x128xf32> to vector<2x2x128xf32>
    %404 = arith.addf %401, %403 : vector<2x2x128xf32>
    %405 = vector.shape_cast %404 : vector<2x2x128xf32> to vector<4x128xf32>
    %406 = arith.truncf %405 : vector<4x128xf32> to vector<4x128xbf16>
    %c0_155 = arith.constant 0 : index
    %c0_156 = arith.constant 0 : index
    %407 = vector.load %arg19[%c0_155, %c0_156] : memref<128x128xbf16, #tpu.memory_space<vmem>>, vector<128x128xbf16>
    %cst_157 = arith.constant dense<0.000000e+00> : vector<4x128xf32>
    %408 = tpu.matmul %406, %407, %cst_157 {dimension_numbers = #tpu.dot_dimension_numbers<[1], [0], [0], [1], [0, 0, 1, 1], [], []>} : vector<4x128xbf16>, vector<128x128xbf16>, vector<4x128xf32> -> vector<4x128xf32>
    %c0_158 = arith.constant 0 : index
    %c0_159 = arith.constant 0 : index
    %409 = vector.load %arg20[%c0_158, %c0_159] : memref<1x128xf32, #tpu.memory_space<vmem>>, vector<1x128xf32>
    %410 = vector.broadcast %409 : vector<1x128xf32> to vector<4x128xf32>
    %411 = arith.addf %408, %410 : vector<4x128xf32>
    %412 = vector.shape_cast %411 : vector<4x128xf32> to vector<2x2x128xf32>
    %c0_160 = arith.constant 0 : index
    %c0_161 = arith.constant 0 : index
    %413 = vector.load %arg21[%c0_160, %c0_161] : memref<1x128xf32, #tpu.memory_space<vmem>>, vector<1x128xf32>
    %c0_162 = arith.constant 0 : index
    %c0_163 = arith.constant 0 : index
    %414 = vector.load %arg22[%c0_162, %c0_163] : memref<5x128xf32, #tpu.memory_space<vmem>>, vector<5x128xf32>
    %415 = vector.extract_strided_slice %412 {offsets = [0, 0, 0], sizes = [1, 1, 128], strides = [1, 1, 1]} : vector<2x2x128xf32> to vector<1x1x128xf32>
    %416 = vector.shape_cast %415 : vector<1x1x128xf32> to vector<1x128xf32>
    %417 = vector.extract_strided_slice %414 {offsets = [0, 0], sizes = [1, 128], strides = [1, 1]} : vector<5x128xf32> to vector<1x128xf32>
    %418 = arith.addf %416, %417 : vector<1x128xf32>
    %c0_164 = arith.constant 0 : index
    %c0_165 = arith.constant 0 : index
    %c0_166 = arith.constant 0 : index
    %419 = vector.load %arg41[%c0_164, %c0_165, %c0_166] : memref<2x5x128xf32, #tpu.memory_space<vmem>>, vector<1x1x128xf32>
    %420 = vector.shape_cast %419 : vector<1x1x128xf32> to vector<1x128xf32>
    %421 = vector.shape_cast %418 : vector<1x128xf32> to vector<1x1x128xf32>
    tpu.vector_store %arg41[%c0_164, %c0_165, %c0_166], %421 {strides = array<i32>} : memref<2x5x128xf32, #tpu.memory_space<vmem>>, vector<1x1x128xf32>,
    %c0_167 = arith.constant 0 : index
    %c0_168 = arith.constant 0 : index
    %422 = memref.load %arg1[%c0_167, %c0_168] : memref<2x4xi32, #tpu.memory_space<smem>>
    %c0_i32 = arith.constant 0 : i32
    %423 = arith.cmpi eq, %422, %c0_i32 : i32
    %424 = arith.extui %423 : i1 to i32
    %425 = arith.sitofp %424 : i32 to f32
    %426 = vector.extract_strided_slice %412 {offsets = [0, 1, 0], sizes = [1, 1, 128], strides = [1, 1, 1]} : vector<2x2x128xf32> to vector<1x1x128xf32>
    %427 = vector.shape_cast %426 : vector<1x1x128xf32> to vector<1x128xf32>
    %428 = vector.broadcast %425 : f32 to vector<1x128xf32>
    %429 = arith.mulf %428, %427 : vector<1x128xf32>
    %cst_169 = arith.constant 1.000000e+00 : f32
    %430 = arith.subf %cst_169, %425 : f32
    %431 = vector.broadcast %430 : f32 to vector<1x128xf32>
    %432 = arith.mulf %431, %413 : vector<1x128xf32>
    %433 = arith.addf %429, %432 : vector<1x128xf32>
    %434 = vector.extract_strided_slice %414 {offsets = [1, 0], sizes = [1, 128], strides = [1, 1]} : vector<5x128xf32> to vector<1x128xf32>
    %435 = arith.addf %433, %434 : vector<1x128xf32>
    %c0_170 = arith.constant 0 : index
    %c1_171 = arith.constant 1 : index
    %c0_172 = arith.constant 0 : index
    %436 = vector.load %arg41[%c0_170, %c1_171, %c0_172] : memref<2x5x128xf32, #tpu.memory_space<vmem>>, vector<1x1x128xf32>
    %437 = vector.shape_cast %436 : vector<1x1x128xf32> to vector<1x128xf32>
    %438 = vector.shape_cast %435 : vector<1x128xf32> to vector<1x1x128xf32>
    tpu.vector_store %arg41[%c0_170, %c1_171, %c0_172], %438 {strides = array<i32>} : memref<2x5x128xf32, #tpu.memory_space<vmem>>, vector<1x1x128xf32>,
    %c0_173 = arith.constant 0 : index
    %c1_174 = arith.constant 1 : index
    %439 = memref.load %arg1[%c0_173, %c1_174] : memref<2x4xi32, #tpu.memory_space<smem>>
    %c0_i32_175 = arith.constant 0 : i32
    %440 = arith.cmpi eq, %439, %c0_i32_175 : i32
    %441 = arith.extui %440 : i1 to i32
    %442 = arith.sitofp %441 : i32 to f32
    %443 = vector.extract_strided_slice %412 {offsets = [0, 1, 0], sizes = [1, 1, 128], strides = [1, 1, 1]} : vector<2x2x128xf32> to vector<1x1x128xf32>
    %444 = vector.shape_cast %443 : vector<1x1x128xf32> to vector<1x128xf32>
    %445 = vector.broadcast %442 : f32 to vector<1x128xf32>
    %446 = arith.mulf %445, %444 : vector<1x128xf32>
    %cst_176 = arith.constant 1.000000e+00 : f32
    %447 = arith.subf %cst_176, %442 : f32
    %448 = vector.broadcast %447 : f32 to vector<1x128xf32>
    %449 = arith.mulf %448, %413 : vector<1x128xf32>
    %450 = arith.addf %446, %449 : vector<1x128xf32>
    %451 = vector.extract_strided_slice %414 {offsets = [2, 0], sizes = [1, 128], strides = [1, 1]} : vector<5x128xf32> to vector<1x128xf32>
    %452 = arith.addf %450, %451 : vector<1x128xf32>
    %c0_177 = arith.constant 0 : index
    %c2 = arith.constant 2 : index
    %c0_178 = arith.constant 0 : index
    %453 = vector.load %arg41[%c0_177, %c2, %c0_178] : memref<2x5x128xf32, #tpu.memory_space<vmem>>, vector<1x1x128xf32>
    %454 = vector.shape_cast %453 : vector<1x1x128xf32> to vector<1x128xf32>
    %455 = vector.shape_cast %452 : vector<1x128xf32> to vector<1x1x128xf32>
    tpu.vector_store %arg41[%c0_177, %c2, %c0_178], %455 {strides = array<i32>} : memref<2x5x128xf32, #tpu.memory_space<vmem>>, vector<1x1x128xf32>,
    %c0_179 = arith.constant 0 : index
    %c2_180 = arith.constant 2 : index
    %456 = memref.load %arg1[%c0_179, %c2_180] : memref<2x4xi32, #tpu.memory_space<smem>>
    %c0_i32_181 = arith.constant 0 : i32
    %457 = arith.cmpi eq, %456, %c0_i32_181 : i32
    %458 = arith.extui %457 : i1 to i32
    %459 = arith.sitofp %458 : i32 to f32
    %460 = vector.extract_strided_slice %412 {offsets = [0, 1, 0], sizes = [1, 1, 128], strides = [1, 1, 1]} : vector<2x2x128xf32> to vector<1x1x128xf32>
    %461 = vector.shape_cast %460 : vector<1x1x128xf32> to vector<1x128xf32>
    %462 = vector.broadcast %459 : f32 to vector<1x128xf32>
    %463 = arith.mulf %462, %461 : vector<1x128xf32>
    %cst_182 = arith.constant 1.000000e+00 : f32
    %464 = arith.subf %cst_182, %459 : f32
    %465 = vector.broadcast %464 : f32 to vector<1x128xf32>
    %466 = arith.mulf %465, %413 : vector<1x128xf32>
    %467 = arith.addf %463, %466 : vector<1x128xf32>
    %468 = vector.extract_strided_slice %414 {offsets = [3, 0], sizes = [1, 128], strides = [1, 1]} : vector<5x128xf32> to vector<1x128xf32>
    %469 = arith.addf %467, %468 : vector<1x128xf32>
    %c0_183 = arith.constant 0 : index
    %c3 = arith.constant 3 : index
    %c0_184 = arith.constant 0 : index
    %470 = vector.load %arg41[%c0_183, %c3, %c0_184] : memref<2x5x128xf32, #tpu.memory_space<vmem>>, vector<1x1x128xf32>
    %471 = vector.shape_cast %470 : vector<1x1x128xf32> to vector<1x128xf32>
    %472 = vector.shape_cast %469 : vector<1x128xf32> to vector<1x1x128xf32>
    tpu.vector_store %arg41[%c0_183, %c3, %c0_184], %472 {strides = array<i32>} : memref<2x5x128xf32, #tpu.memory_space<vmem>>, vector<1x1x128xf32>,
    %c0_185 = arith.constant 0 : index
    %c3_186 = arith.constant 3 : index
    %473 = memref.load %arg1[%c0_185, %c3_186] : memref<2x4xi32, #tpu.memory_space<smem>>
    %c0_i32_187 = arith.constant 0 : i32
    %474 = arith.cmpi eq, %473, %c0_i32_187 : i32
    %475 = arith.extui %474 : i1 to i32
    %476 = arith.sitofp %475 : i32 to f32
    %477 = vector.extract_strided_slice %412 {offsets = [0, 1, 0], sizes = [1, 1, 128], strides = [1, 1, 1]} : vector<2x2x128xf32> to vector<1x1x128xf32>
    %478 = vector.shape_cast %477 : vector<1x1x128xf32> to vector<1x128xf32>
    %479 = vector.broadcast %476 : f32 to vector<1x128xf32>
    %480 = arith.mulf %479, %478 : vector<1x128xf32>
    %cst_188 = arith.constant 1.000000e+00 : f32
    %481 = arith.subf %cst_188, %476 : f32
    %482 = vector.broadcast %481 : f32 to vector<1x128xf32>
    %483 = arith.mulf %482, %413 : vector<1x128xf32>
    %484 = arith.addf %480, %483 : vector<1x128xf32>
    %485 = vector.extract_strided_slice %414 {offsets = [4, 0], sizes = [1, 128], strides = [1, 1]} : vector<5x128xf32> to vector<1x128xf32>
    %486 = arith.addf %484, %485 : vector<1x128xf32>
    %c0_189 = arith.constant 0 : index
    %c4 = arith.constant 4 : index
    %c0_190 = arith.constant 0 : index
    %487 = vector.load %arg41[%c0_189, %c4, %c0_190] : memref<2x5x128xf32, #tpu.memory_space<vmem>>, vector<1x1x128xf32>
    %488 = vector.shape_cast %487 : vector<1x1x128xf32> to vector<1x128xf32>
    %489 = vector.shape_cast %486 : vector<1x128xf32> to vector<1x1x128xf32>
    tpu.vector_store %arg41[%c0_189, %c4, %c0_190], %489 {strides = array<i32>} : memref<2x5x128xf32, #tpu.memory_space<vmem>>, vector<1x1x128xf32>,
    %490 = vector.extract_strided_slice %412 {offsets = [1, 0, 0], sizes = [1, 1, 128], strides = [1, 1, 1]} : vector<2x2x128xf32> to vector<1x1x128xf32>
    %491 = vector.shape_cast %490 : vector<1x1x128xf32> to vector<1x128xf32>
    %492 = vector.extract_strided_slice %414 {offsets = [0, 0], sizes = [1, 128], strides = [1, 1]} : vector<5x128xf32> to vector<1x128xf32>
    %493 = arith.addf %491, %492 : vector<1x128xf32>
    %c1_191 = arith.constant 1 : index
    %c0_192 = arith.constant 0 : index
    %c0_193 = arith.constant 0 : index
    %494 = vector.load %arg41[%c1_191, %c0_192, %c0_193] : memref<2x5x128xf32, #tpu.memory_space<vmem>>, vector<1x1x128xf32>
    %495 = vector.shape_cast %494 : vector<1x1x128xf32> to vector<1x128xf32>
    %496 = vector.shape_cast %493 : vector<1x128xf32> to vector<1x1x128xf32>
    tpu.vector_store %arg41[%c1_191, %c0_192, %c0_193], %496 {strides = array<i32>} : memref<2x5x128xf32, #tpu.memory_space<vmem>>, vector<1x1x128xf32>,
    %c1_194 = arith.constant 1 : index
    %c0_195 = arith.constant 0 : index
    %497 = memref.load %arg1[%c1_194, %c0_195] : memref<2x4xi32, #tpu.memory_space<smem>>
    %c0_i32_196 = arith.constant 0 : i32
    %498 = arith.cmpi eq, %497, %c0_i32_196 : i32
    %499 = arith.extui %498 : i1 to i32
    %500 = arith.sitofp %499 : i32 to f32
    %501 = vector.extract_strided_slice %412 {offsets = [1, 1, 0], sizes = [1, 1, 128], strides = [1, 1, 1]} : vector<2x2x128xf32> to vector<1x1x128xf32>
    %502 = vector.shape_cast %501 : vector<1x1x128xf32> to vector<1x128xf32>
    %503 = vector.broadcast %500 : f32 to vector<1x128xf32>
    %504 = arith.mulf %503, %502 : vector<1x128xf32>
    %cst_197 = arith.constant 1.000000e+00 : f32
    %505 = arith.subf %cst_197, %500 : f32
    %506 = vector.broadcast %505 : f32 to vector<1x128xf32>
    %507 = arith.mulf %506, %413 : vector<1x128xf32>
    %508 = arith.addf %504, %507 : vector<1x128xf32>
    %509 = vector.extract_strided_slice %414 {offsets = [1, 0], sizes = [1, 128], strides = [1, 1]} : vector<5x128xf32> to vector<1x128xf32>
    %510 = arith.addf %508, %509 : vector<1x128xf32>
    %c1_198 = arith.constant 1 : index
    %c1_199 = arith.constant 1 : index
    %c0_200 = arith.constant 0 : index
    %511 = vector.load %arg41[%c1_198, %c1_199, %c0_200] : memref<2x5x128xf32, #tpu.memory_space<vmem>>, vector<1x1x128xf32>
    %512 = vector.shape_cast %511 : vector<1x1x128xf32> to vector<1x128xf32>
    %513 = vector.shape_cast %510 : vector<1x128xf32> to vector<1x1x128xf32>
    tpu.vector_store %arg41[%c1_198, %c1_199, %c0_200], %513 {strides = array<i32>} : memref<2x5x128xf32, #tpu.memory_space<vmem>>, vector<1x1x128xf32>,
    %c1_201 = arith.constant 1 : index
    %c1_202 = arith.constant 1 : index
    %514 = memref.load %arg1[%c1_201, %c1_202] : memref<2x4xi32, #tpu.memory_space<smem>>
    %c0_i32_203 = arith.constant 0 : i32
    %515 = arith.cmpi eq, %514, %c0_i32_203 : i32
    %516 = arith.extui %515 : i1 to i32
    %517 = arith.sitofp %516 : i32 to f32
    %518 = vector.extract_strided_slice %412 {offsets = [1, 1, 0], sizes = [1, 1, 128], strides = [1, 1, 1]} : vector<2x2x128xf32> to vector<1x1x128xf32>
    %519 = vector.shape_cast %518 : vector<1x1x128xf32> to vector<1x128xf32>
    %520 = vector.broadcast %517 : f32 to vector<1x128xf32>
    %521 = arith.mulf %520, %519 : vector<1x128xf32>
    %cst_204 = arith.constant 1.000000e+00 : f32
    %522 = arith.subf %cst_204, %517 : f32
    %523 = vector.broadcast %522 : f32 to vector<1x128xf32>
    %524 = arith.mulf %523, %413 : vector<1x128xf32>
    %525 = arith.addf %521, %524 : vector<1x128xf32>
    %526 = vector.extract_strided_slice %414 {offsets = [2, 0], sizes = [1, 128], strides = [1, 1]} : vector<5x128xf32> to vector<1x128xf32>
    %527 = arith.addf %525, %526 : vector<1x128xf32>
    %c1_205 = arith.constant 1 : index
    %c2_206 = arith.constant 2 : index
    %c0_207 = arith.constant 0 : index
    %528 = vector.load %arg41[%c1_205, %c2_206, %c0_207] : memref<2x5x128xf32, #tpu.memory_space<vmem>>, vector<1x1x128xf32>
    %529 = vector.shape_cast %528 : vector<1x1x128xf32> to vector<1x128xf32>
    %530 = vector.shape_cast %527 : vector<1x128xf32> to vector<1x1x128xf32>
    tpu.vector_store %arg41[%c1_205, %c2_206, %c0_207], %530 {strides = array<i32>} : memref<2x5x128xf32, #tpu.memory_space<vmem>>, vector<1x1x128xf32>,
    %c1_208 = arith.constant 1 : index
    %c2_209 = arith.constant 2 : index
    %531 = memref.load %arg1[%c1_208, %c2_209] : memref<2x4xi32, #tpu.memory_space<smem>>
    %c0_i32_210 = arith.constant 0 : i32
    %532 = arith.cmpi eq, %531, %c0_i32_210 : i32
    %533 = arith.extui %532 : i1 to i32
    %534 = arith.sitofp %533 : i32 to f32
    %535 = vector.extract_strided_slice %412 {offsets = [1, 1, 0], sizes = [1, 1, 128], strides = [1, 1, 1]} : vector<2x2x128xf32> to vector<1x1x128xf32>
    %536 = vector.shape_cast %535 : vector<1x1x128xf32> to vector<1x128xf32>
    %537 = vector.broadcast %534 : f32 to vector<1x128xf32>
    %538 = arith.mulf %537, %536 : vector<1x128xf32>
    %cst_211 = arith.constant 1.000000e+00 : f32
    %539 = arith.subf %cst_211, %534 : f32
    %540 = vector.broadcast %539 : f32 to vector<1x128xf32>
    %541 = arith.mulf %540, %413 : vector<1x128xf32>
    %542 = arith.addf %538, %541 : vector<1x128xf32>
    %543 = vector.extract_strided_slice %414 {offsets = [3, 0], sizes = [1, 128], strides = [1, 1]} : vector<5x128xf32> to vector<1x128xf32>
    %544 = arith.addf %542, %543 : vector<1x128xf32>
    %c1_212 = arith.constant 1 : index
    %c3_213 = arith.constant 3 : index
    %c0_214 = arith.constant 0 : index
    %545 = vector.load %arg41[%c1_212, %c3_213, %c0_214] : memref<2x5x128xf32, #tpu.memory_space<vmem>>, vector<1x1x128xf32>
    %546 = vector.shape_cast %545 : vector<1x1x128xf32> to vector<1x128xf32>
    %547 = vector.shape_cast %544 : vector<1x128xf32> to vector<1x1x128xf32>
    tpu.vector_store %arg41[%c1_212, %c3_213, %c0_214], %547 {strides = array<i32>} : memref<2x5x128xf32, #tpu.memory_space<vmem>>, vector<1x1x128xf32>,
    %c1_215 = arith.constant 1 : index
    %c3_216 = arith.constant 3 : index
    %548 = memref.load %arg1[%c1_215, %c3_216] : memref<2x4xi32, #tpu.memory_space<smem>>
    %c0_i32_217 = arith.constant 0 : i32
    %549 = arith.cmpi eq, %548, %c0_i32_217 : i32
    %550 = arith.extui %549 : i1 to i32
    %551 = arith.sitofp %550 : i32 to f32
    %552 = vector.extract_strided_slice %412 {offsets = [1, 1, 0], sizes = [1, 1, 128], strides = [1, 1, 1]} : vector<2x2x128xf32> to vector<1x1x128xf32>
    %553 = vector.shape_cast %552 : vector<1x1x128xf32> to vector<1x128xf32>
    %554 = vector.broadcast %551 : f32 to vector<1x128xf32>
    %555 = arith.mulf %554, %553 : vector<1x128xf32>
    %cst_218 = arith.constant 1.000000e+00 : f32
    %556 = arith.subf %cst_218, %551 : f32
    %557 = vector.broadcast %556 : f32 to vector<1x128xf32>
    %558 = arith.mulf %557, %413 : vector<1x128xf32>
    %559 = arith.addf %555, %558 : vector<1x128xf32>
    %560 = vector.extract_strided_slice %414 {offsets = [4, 0], sizes = [1, 128], strides = [1, 1]} : vector<5x128xf32> to vector<1x128xf32>
    %561 = arith.addf %559, %560 : vector<1x128xf32>
    %c1_219 = arith.constant 1 : index
    %c4_220 = arith.constant 4 : index
    %c0_221 = arith.constant 0 : index
    %562 = vector.load %arg41[%c1_219, %c4_220, %c0_221] : memref<2x5x128xf32, #tpu.memory_space<vmem>>, vector<1x1x128xf32>
    %563 = vector.shape_cast %562 : vector<1x1x128xf32> to vector<1x128xf32>
    %564 = vector.shape_cast %561 : vector<1x128xf32> to vector<1x1x128xf32>
    tpu.vector_store %arg41[%c1_219, %c4_220, %c0_221], %564 {strides = array<i32>} : memref<2x5x128xf32, #tpu.memory_space<vmem>>, vector<1x1x128xf32>,
    %c0_222 = arith.constant 0 : index
    %c0_223 = arith.constant 0 : index
    %c0_224 = arith.constant 0 : index
    %565 = vector.load %arg41[%c0_222, %c0_223, %c0_224] : memref<2x5x128xf32, #tpu.memory_space<vmem>>, vector<2x5x128xf32>
    %c0_225 = arith.constant 0 : index
    %c0_226 = arith.constant 0 : index
    %c0_227 = arith.constant 0 : index
    %566 = vector.load %arg23[%c0_225, %c0_226, %c0_227] : memref<1x1x128xf32, #tpu.memory_space<vmem>>, vector<1x1x128xf32>
    %567 = vector.shape_cast %566 : vector<1x1x128xf32> to vector<1x128xf32>
    %c0_228 = arith.constant 0 : index
    %c0_229 = arith.constant 0 : index
    %c0_230 = arith.constant 0 : index
    %568 = vector.load %arg24[%c0_228, %c0_229, %c0_230] : memref<1x1x128xf32, #tpu.memory_space<vmem>>, vector<1x1x128xf32>
    %569 = vector.shape_cast %568 : vector<1x1x128xf32> to vector<1x128xf32>
    %c0_231 = arith.constant 0 : index
    %c0_232 = arith.constant 0 : index
    %c0_233 = arith.constant 0 : index
    %570 = vector.load %arg25[%c0_231, %c0_232, %c0_233] : memref<1x128x384xbf16, #tpu.memory_space<vmem>>, vector<1x128x384xbf16>
    %571 = vector.shape_cast %570 : vector<1x128x384xbf16> to vector<128x384xbf16>
    %c0_234 = arith.constant 0 : index
    %c0_235 = arith.constant 0 : index
    %c0_236 = arith.constant 0 : index
    %572 = vector.load %arg26[%c0_234, %c0_235, %c0_236] : memref<1x1x384xf32, #tpu.memory_space<vmem>>, vector<1x1x384xf32>
    %573 = vector.shape_cast %572 : vector<1x1x384xf32> to vector<1x384xf32>
    %c0_237 = arith.constant 0 : index
    %c0_238 = arith.constant 0 : index
    %c0_239 = arith.constant 0 : index
    %574 = vector.load %arg27[%c0_237, %c0_238, %c0_239] : memref<1x128x128xbf16, #tpu.memory_space<vmem>>, vector<1x128x128xbf16>
    %575 = vector.shape_cast %574 : vector<1x128x128xbf16> to vector<128x128xbf16>
    %c0_240 = arith.constant 0 : index
    %c0_241 = arith.constant 0 : index
    %c0_242 = arith.constant 0 : index
    %576 = vector.load %arg28[%c0_240, %c0_241, %c0_242] : memref<1x1x128xf32, #tpu.memory_space<vmem>>, vector<1x1x128xf32>
    %577 = vector.shape_cast %576 : vector<1x1x128xf32> to vector<1x128xf32>
    %c0_243 = arith.constant 0 : index
    %c0_244 = arith.constant 0 : index
    %c0_245 = arith.constant 0 : index
    %578 = vector.load %arg29[%c0_243, %c0_244, %c0_245] : memref<1x1x128xf32, #tpu.memory_space<vmem>>, vector<1x1x128xf32>
    %579 = vector.shape_cast %578 : vector<1x1x128xf32> to vector<1x128xf32>
    %c0_246 = arith.constant 0 : index
    %c0_247 = arith.constant 0 : index
    %c0_248 = arith.constant 0 : index
    %580 = vector.load %arg30[%c0_246, %c0_247, %c0_248] : memref<1x1x128xf32, #tpu.memory_space<vmem>>, vector<1x1x128xf32>
    %581 = vector.shape_cast %580 : vector<1x1x128xf32> to vector<1x128xf32>
    %c0_249 = arith.constant 0 : index
    %c0_250 = arith.constant 0 : index
    %c0_251 = arith.constant 0 : index
    %582 = vector.load %arg31[%c0_249, %c0_250, %c0_251] : memref<1x128x128xbf16, #tpu.memory_space<vmem>>, vector<1x128x128xbf16>
    %583 = vector.shape_cast %582 : vector<1x128x128xbf16> to vector<128x128xbf16>
    %c0_252 = arith.constant 0 : index
    %c0_253 = arith.constant 0 : index
    %c0_254 = arith.constant 0 : index
    %584 = vector.load %arg32[%c0_252, %c0_253, %c0_254] : memref<1x1x128xf32, #tpu.memory_space<vmem>>, vector<1x1x128xf32>
    %585 = vector.shape_cast %584 : vector<1x1x128xf32> to vector<1x128xf32>
    %c0_255 = arith.constant 0 : index
    %c0_256 = arith.constant 0 : index
    %c0_257 = arith.constant 0 : index
    %586 = vector.load %arg33[%c0_255, %c0_256, %c0_257] : memref<1x128x128xbf16, #tpu.memory_space<vmem>>, vector<1x128x128xbf16>
    %587 = vector.shape_cast %586 : vector<1x128x128xbf16> to vector<128x128xbf16>
    %c0_258 = arith.constant 0 : index
    %c0_259 = arith.constant 0 : index
    %c0_260 = arith.constant 0 : index
    %588 = vector.load %arg34[%c0_258, %c0_259, %c0_260] : memref<1x1x128xf32, #tpu.memory_space<vmem>>, vector<1x1x128xf32>
    %589 = vector.shape_cast %588 : vector<1x1x128xf32> to vector<1x128xf32>
    %cst_261 = arith.constant dense<0.000000e+00> : vector<2x5xf32>
    %590 = vector.multi_reduction <add>, %565, %cst_261 [2] : vector<2x5x128xf32> to vector<2x5xf32>
    %591 = vector.shape_cast %590 : vector<2x5xf32> to vector<2x5x1xf32>
    %cst_262 = arith.constant 1.280000e+02 : f32
    %592 = vector.broadcast %cst_262 : f32 to vector<2x5x1xf32>
    %593 = arith.divf %591, %592 : vector<2x5x1xf32>
    %594 = vector.broadcast %593 : vector<2x5x1xf32> to vector<2x5x128xf32>
    %595 = arith.subf %565, %594 : vector<2x5x128xf32>
    %596 = arith.mulf %595, %595 : vector<2x5x128xf32>
    %cst_263 = arith.constant dense<0.000000e+00> : vector<2x5xf32>
    %597 = vector.multi_reduction <add>, %596, %cst_263 [2] : vector<2x5x128xf32> to vector<2x5xf32>
    %598 = vector.shape_cast %597 : vector<2x5xf32> to vector<2x5x1xf32>
    %cst_264 = arith.constant 1.280000e+02 : f32
    %599 = vector.broadcast %cst_264 : f32 to vector<2x5x1xf32>
    %600 = arith.divf %598, %599 : vector<2x5x1xf32>
    %601 = vector.broadcast %593 : vector<2x5x1xf32> to vector<2x5x128xf32>
    %602 = arith.subf %565, %601 : vector<2x5x128xf32>
    %cst_265 = arith.constant 9.99999974E-6 : f32
    %603 = vector.broadcast %cst_265 : f32 to vector<2x5x1xf32>
    %604 = arith.addf %600, %603 : vector<2x5x1xf32>
    %605 = math.rsqrt %604 : vector<2x5x1xf32>
    %606 = vector.broadcast %605 : vector<2x5x1xf32> to vector<2x5x128xf32>
    %607 = arith.mulf %602, %606 : vector<2x5x128xf32>
    %608 = vector.shape_cast %567 : vector<1x128xf32> to vector<1x1x128xf32>
    %609 = vector.broadcast %608 : vector<1x1x128xf32> to vector<2x5x128xf32>
    %610 = arith.mulf %607, %609 : vector<2x5x128xf32>
    %611 = vector.shape_cast %569 : vector<1x128xf32> to vector<1x1x128xf32>
    %612 = vector.broadcast %611 : vector<1x1x128xf32> to vector<2x5x128xf32>
    %613 = arith.addf %610, %612 : vector<2x5x128xf32>
    %614 = vector.shape_cast %613 : vector<2x5x128xf32> to vector<10x128xf32>
    %615 = arith.truncf %614 : vector<10x128xf32> to vector<10x128xbf16>
    %cst_266 = arith.constant dense<0.000000e+00> : vector<10x384xf32>
    %616 = tpu.matmul %615, %571, %cst_266 {dimension_numbers = #tpu.dot_dimension_numbers<[1], [0], [0], [1], [0, 0, 1, 1], [], []>} : vector<10x128xbf16>, vector<128x384xbf16>, vector<10x384xf32> -> vector<10x384xf32>
    %617 = vector.broadcast %573 : vector<1x384xf32> to vector<10x384xf32>
    %618 = arith.addf %616, %617 : vector<10x384xf32>
    %619 = vector.shape_cast %618 : vector<10x384xf32> to vector<2x5x384xf32>
    %620 = vector.extract_strided_slice %619 {offsets = [0, 0, 0], sizes = [2, 5, 32], strides = [1, 1, 1]} : vector<2x5x384xf32> to vector<2x5x32xf32>
    %621 = arith.truncf %620 : vector<2x5x32xf32> to vector<2x5x32xbf16>
    %622 = vector.extract_strided_slice %619 {offsets = [0, 0, 128], sizes = [2, 5, 32], strides = [1, 1, 1]} : vector<2x5x384xf32> to vector<2x5x32xf32>
    %623 = arith.truncf %622 : vector<2x5x32xf32> to vector<2x5x32xbf16>
    %624 = vector.extract_strided_slice %619 {offsets = [0, 0, 256], sizes = [2, 5, 32], strides = [1, 1, 1]} : vector<2x5x384xf32> to vector<2x5x32xf32>
    %625 = arith.truncf %624 : vector<2x5x32xf32> to vector<2x5x32xbf16>
    "tpu.trace_start"() <{level = 10 : i32, message = "bqd,bkd->bqk"}> : () -> ()
    %cst_267 = arith.constant dense<0.000000e+00> : vector<2x5x5xf32>
    %626 = tpu.matmul %621, %623, %cst_267 {dimension_numbers = #tpu.dot_dimension_numbers<[2], [2], [1], [1], [0, 0, 0, 1, 1, 1], [0], [0]>} : vector<2x5x32xbf16>, vector<2x5x32xbf16>, vector<2x5x5xf32> -> vector<2x5x5xf32>
    "tpu.trace_stop"() : () -> ()
    %cst_268 = arith.constant 0.176776692 : f32
    %627 = vector.broadcast %cst_268 : f32 to vector<2x5x5xf32>
    %628 = arith.mulf %626, %627 : vector<2x5x5xf32>
    %cst_269 = arith.constant dense<0xFF800000> : vector<2x5xf32>
    %629 = vector.multi_reduction <maximumf>, %628, %cst_269 [2] : vector<2x5x5xf32> to vector<2x5xf32>
    %630 = vector.shape_cast %629 : vector<2x5xf32> to vector<2x5x1xf32>
    %631 = vector.broadcast %630 : vector<2x5x1xf32> to vector<2x5x5xf32>
    %632 = arith.subf %628, %631 : vector<2x5x5xf32>
    %633 = math.exp %632 : vector<2x5x5xf32>
    %cst_270 = arith.constant dense<0.000000e+00> : vector<2x5xf32>
    %634 = vector.multi_reduction <add>, %633, %cst_270 [2] : vector<2x5x5xf32> to vector<2x5xf32>
    %635 = vector.shape_cast %634 : vector<2x5xf32> to vector<2x5x1xf32>
    %636 = tpu.reciprocal %635 {approx = true} : vector<2x5x1xf32> -> vector<2x5x1xf32>
    %637 = vector.broadcast %636 : vector<2x5x1xf32> to vector<2x5x5xf32>
    %638 = arith.mulf %633, %637 : vector<2x5x5xf32>
    %639 = arith.truncf %638 : vector<2x5x5xf32> to vector<2x5x5xbf16>
    "tpu.trace_start"() <{level = 10 : i32, message = "bqk,bkd->bqd"}> : () -> ()
    %cst_271 = arith.constant dense<0.000000e+00> : vector<2x5x32xf32>
    %640 = tpu.matmul %639, %625, %cst_271 {dimension_numbers = #tpu.dot_dimension_numbers<[2], [1], [1], [2], [0, 0, 0, 1, 1, 2], [0], [0]>} : vector<2x5x5xbf16>, vector<2x5x32xbf16>, vector<2x5x32xf32> -> vector<2x5x32xf32>
    "tpu.trace_stop"() : () -> ()
    %641 = vector.extract_strided_slice %619 {offsets = [0, 0, 32], sizes = [2, 5, 32], strides = [1, 1, 1]} : vector<2x5x384xf32> to vector<2x5x32xf32>
    %642 = arith.truncf %641 : vector<2x5x32xf32> to vector<2x5x32xbf16>
    %643 = vector.extract_strided_slice %619 {offsets = [0, 0, 160], sizes = [2, 5, 32], strides = [1, 1, 1]} : vector<2x5x384xf32> to vector<2x5x32xf32>
    %644 = arith.truncf %643 : vector<2x5x32xf32> to vector<2x5x32xbf16>
    %645 = vector.extract_strided_slice %619 {offsets = [0, 0, 288], sizes = [2, 5, 32], strides = [1, 1, 1]} : vector<2x5x384xf32> to vector<2x5x32xf32>
    %646 = arith.truncf %645 : vector<2x5x32xf32> to vector<2x5x32xbf16>
    "tpu.trace_start"() <{level = 10 : i32, message = "bqd,bkd->bqk"}> : () -> ()
    %cst_272 = arith.constant dense<0.000000e+00> : vector<2x5x5xf32>
    %647 = tpu.matmul %642, %644, %cst_272 {dimension_numbers = #tpu.dot_dimension_numbers<[2], [2], [1], [1], [0, 0, 0, 1, 1, 1], [0], [0]>} : vector<2x5x32xbf16>, vector<2x5x32xbf16>, vector<2x5x5xf32> -> vector<2x5x5xf32>
    "tpu.trace_stop"() : () -> ()
    %cst_273 = arith.constant 0.176776692 : f32
    %648 = vector.broadcast %cst_273 : f32 to vector<2x5x5xf32>
    %649 = arith.mulf %647, %648 : vector<2x5x5xf32>
    %cst_274 = arith.constant dense<0xFF800000> : vector<2x5xf32>
    %650 = vector.multi_reduction <maximumf>, %649, %cst_274 [2] : vector<2x5x5xf32> to vector<2x5xf32>
    %651 = vector.shape_cast %650 : vector<2x5xf32> to vector<2x5x1xf32>
    %652 = vector.broadcast %651 : vector<2x5x1xf32> to vector<2x5x5xf32>
    %653 = arith.subf %649, %652 : vector<2x5x5xf32>
    %654 = math.exp %653 : vector<2x5x5xf32>
    %cst_275 = arith.constant dense<0.000000e+00> : vector<2x5xf32>
    %655 = vector.multi_reduction <add>, %654, %cst_275 [2] : vector<2x5x5xf32> to vector<2x5xf32>
    %656 = vector.shape_cast %655 : vector<2x5xf32> to vector<2x5x1xf32>
    %657 = tpu.reciprocal %656 {approx = true} : vector<2x5x1xf32> -> vector<2x5x1xf32>
    %658 = vector.broadcast %657 : vector<2x5x1xf32> to vector<2x5x5xf32>
    %659 = arith.mulf %654, %658 : vector<2x5x5xf32>
    %660 = arith.truncf %659 : vector<2x5x5xf32> to vector<2x5x5xbf16>
    "tpu.trace_start"() <{level = 10 : i32, message = "bqk,bkd->bqd"}> : () -> ()
    %cst_276 = arith.constant dense<0.000000e+00> : vector<2x5x32xf32>
    %661 = tpu.matmul %660, %646, %cst_276 {dimension_numbers = #tpu.dot_dimension_numbers<[2], [1], [1], [2], [0, 0, 0, 1, 1, 2], [0], [0]>} : vector<2x5x5xbf16>, vector<2x5x32xbf16>, vector<2x5x32xf32> -> vector<2x5x32xf32>
    "tpu.trace_stop"() : () -> ()
    %662 = vector.extract_strided_slice %619 {offsets = [0, 0, 64], sizes = [2, 5, 32], strides = [1, 1, 1]} : vector<2x5x384xf32> to vector<2x5x32xf32>
    %663 = arith.truncf %662 : vector<2x5x32xf32> to vector<2x5x32xbf16>
    %664 = vector.extract_strided_slice %619 {offsets = [0, 0, 192], sizes = [2, 5, 32], strides = [1, 1, 1]} : vector<2x5x384xf32> to vector<2x5x32xf32>
    %665 = arith.truncf %664 : vector<2x5x32xf32> to vector<2x5x32xbf16>
    %666 = vector.extract_strided_slice %619 {offsets = [0, 0, 320], sizes = [2, 5, 32], strides = [1, 1, 1]} : vector<2x5x384xf32> to vector<2x5x32xf32>
    %667 = arith.truncf %666 : vector<2x5x32xf32> to vector<2x5x32xbf16>
    "tpu.trace_start"() <{level = 10 : i32, message = "bqd,bkd->bqk"}> : () -> ()
    %cst_277 = arith.constant dense<0.000000e+00> : vector<2x5x5xf32>
    %668 = tpu.matmul %663, %665, %cst_277 {dimension_numbers = #tpu.dot_dimension_numbers<[2], [2], [1], [1], [0, 0, 0, 1, 1, 1], [0], [0]>} : vector<2x5x32xbf16>, vector<2x5x32xbf16>, vector<2x5x5xf32> -> vector<2x5x5xf32>
    "tpu.trace_stop"() : () -> ()
    %cst_278 = arith.constant 0.176776692 : f32
    %669 = vector.broadcast %cst_278 : f32 to vector<2x5x5xf32>
    %670 = arith.mulf %668, %669 : vector<2x5x5xf32>
    %cst_279 = arith.constant dense<0xFF800000> : vector<2x5xf32>
    %671 = vector.multi_reduction <maximumf>, %670, %cst_279 [2] : vector<2x5x5xf32> to vector<2x5xf32>
    %672 = vector.shape_cast %671 : vector<2x5xf32> to vector<2x5x1xf32>
    %673 = vector.broadcast %672 : vector<2x5x1xf32> to vector<2x5x5xf32>
    %674 = arith.subf %670, %673 : vector<2x5x5xf32>
    %675 = math.exp %674 : vector<2x5x5xf32>
    %cst_280 = arith.constant dense<0.000000e+00> : vector<2x5xf32>
    %676 = vector.multi_reduction <add>, %675, %cst_280 [2] : vector<2x5x5xf32> to vector<2x5xf32>
    %677 = vector.shape_cast %676 : vector<2x5xf32> to vector<2x5x1xf32>
    %678 = tpu.reciprocal %677 {approx = true} : vector<2x5x1xf32> -> vector<2x5x1xf32>
    %679 = vector.broadcast %678 : vector<2x5x1xf32> to vector<2x5x5xf32>
    %680 = arith.mulf %675, %679 : vector<2x5x5xf32>
    %681 = arith.truncf %680 : vector<2x5x5xf32> to vector<2x5x5xbf16>
    "tpu.trace_start"() <{level = 10 : i32, message = "bqk,bkd->bqd"}> : () -> ()
    %cst_281 = arith.constant dense<0.000000e+00> : vector<2x5x32xf32>
    %682 = tpu.matmul %681, %667, %cst_281 {dimension_numbers = #tpu.dot_dimension_numbers<[2], [1], [1], [2], [0, 0, 0, 1, 1, 2], [0], [0]>} : vector<2x5x5xbf16>, vector<2x5x32xbf16>, vector<2x5x32xf32> -> vector<2x5x32xf32>
    "tpu.trace_stop"() : () -> ()
    %683 = vector.extract_strided_slice %619 {offsets = [0, 0, 96], sizes = [2, 5, 32], strides = [1, 1, 1]} : vector<2x5x384xf32> to vector<2x5x32xf32>
    %684 = arith.truncf %683 : vector<2x5x32xf32> to vector<2x5x32xbf16>
    %685 = vector.extract_strided_slice %619 {offsets = [0, 0, 224], sizes = [2, 5, 32], strides = [1, 1, 1]} : vector<2x5x384xf32> to vector<2x5x32xf32>
    %686 = arith.truncf %685 : vector<2x5x32xf32> to vector<2x5x32xbf16>
    %687 = vector.extract_strided_slice %619 {offsets = [0, 0, 352], sizes = [2, 5, 32], strides = [1, 1, 1]} : vector<2x5x384xf32> to vector<2x5x32xf32>
    %688 = arith.truncf %687 : vector<2x5x32xf32> to vector<2x5x32xbf16>
    "tpu.trace_start"() <{level = 10 : i32, message = "bqd,bkd->bqk"}> : () -> ()
    %cst_282 = arith.constant dense<0.000000e+00> : vector<2x5x5xf32>
    %689 = tpu.matmul %684, %686, %cst_282 {dimension_numbers = #tpu.dot_dimension_numbers<[2], [2], [1], [1], [0, 0, 0, 1, 1, 1], [0], [0]>} : vector<2x5x32xbf16>, vector<2x5x32xbf16>, vector<2x5x5xf32> -> vector<2x5x5xf32>
    "tpu.trace_stop"() : () -> ()
    %cst_283 = arith.constant 0.176776692 : f32
    %690 = vector.broadcast %cst_283 : f32 to vector<2x5x5xf32>
    %691 = arith.mulf %689, %690 : vector<2x5x5xf32>
    %cst_284 = arith.constant dense<0xFF800000> : vector<2x5xf32>
    %692 = vector.multi_reduction <maximumf>, %691, %cst_284 [2] : vector<2x5x5xf32> to vector<2x5xf32>
    %693 = vector.shape_cast %692 : vector<2x5xf32> to vector<2x5x1xf32>
    %694 = vector.broadcast %693 : vector<2x5x1xf32> to vector<2x5x5xf32>
    %695 = arith.subf %691, %694 : vector<2x5x5xf32>
    %696 = math.exp %695 : vector<2x5x5xf32>
    %cst_285 = arith.constant dense<0.000000e+00> : vector<2x5xf32>
    %697 = vector.multi_reduction <add>, %696, %cst_285 [2] : vector<2x5x5xf32> to vector<2x5xf32>
    %698 = vector.shape_cast %697 : vector<2x5xf32> to vector<2x5x1xf32>
    %699 = tpu.reciprocal %698 {approx = true} : vector<2x5x1xf32> -> vector<2x5x1xf32>
    %700 = vector.broadcast %699 : vector<2x5x1xf32> to vector<2x5x5xf32>
    %701 = arith.mulf %696, %700 : vector<2x5x5xf32>
    %702 = arith.truncf %701 : vector<2x5x5xf32> to vector<2x5x5xbf16>
    "tpu.trace_start"() <{level = 10 : i32, message = "bqk,bkd->bqd"}> : () -> ()
    %cst_286 = arith.constant dense<0.000000e+00> : vector<2x5x32xf32>
    %703 = tpu.matmul %702, %688, %cst_286 {dimension_numbers = #tpu.dot_dimension_numbers<[2], [1], [1], [2], [0, 0, 0, 1, 1, 2], [0], [0]>} : vector<2x5x5xbf16>, vector<2x5x32xbf16>, vector<2x5x32xf32> -> vector<2x5x32xf32>
    "tpu.trace_stop"() : () -> ()
    %704 = tpu.concatenate %640, %661, %682, %703 in 2 : vector<2x5x32xf32>, vector<2x5x32xf32>, vector<2x5x32xf32>, vector<2x5x32xf32> -> vector<2x5x128xf32>
    %705 = vector.shape_cast %704 : vector<2x5x128xf32> to vector<10x128xf32>
    %706 = arith.truncf %705 : vector<10x128xf32> to vector<10x128xbf16>
    %cst_287 = arith.constant dense<0.000000e+00> : vector<10x128xf32>
    %707 = tpu.matmul %706, %575, %cst_287 {dimension_numbers = #tpu.dot_dimension_numbers<[1], [0], [0], [1], [0, 0, 1, 1], [], []>} : vector<10x128xbf16>, vector<128x128xbf16>, vector<10x128xf32> -> vector<10x128xf32>
    %708 = vector.broadcast %577 : vector<1x128xf32> to vector<10x128xf32>
    %709 = arith.addf %707, %708 : vector<10x128xf32>
    %710 = vector.shape_cast %709 : vector<10x128xf32> to vector<2x5x128xf32>
    %711 = arith.addf %565, %710 : vector<2x5x128xf32>
    %cst_288 = arith.constant dense<0.000000e+00> : vector<2x5xf32>
    %712 = vector.multi_reduction <add>, %711, %cst_288 [2] : vector<2x5x128xf32> to vector<2x5xf32>
    %713 = vector.shape_cast %712 : vector<2x5xf32> to vector<2x5x1xf32>
    %cst_289 = arith.constant 1.280000e+02 : f32
    %714 = vector.broadcast %cst_289 : f32 to vector<2x5x1xf32>
    %715 = arith.divf %713, %714 : vector<2x5x1xf32>
    %716 = vector.broadcast %715 : vector<2x5x1xf32> to vector<2x5x128xf32>
    %717 = arith.subf %711, %716 : vector<2x5x128xf32>
    %718 = arith.mulf %717, %717 : vector<2x5x128xf32>
    %cst_290 = arith.constant dense<0.000000e+00> : vector<2x5xf32>
    %719 = vector.multi_reduction <add>, %718, %cst_290 [2] : vector<2x5x128xf32> to vector<2x5xf32>
    %720 = vector.shape_cast %719 : vector<2x5xf32> to vector<2x5x1xf32>
    %cst_291 = arith.constant 1.280000e+02 : f32
    %721 = vector.broadcast %cst_291 : f32 to vector<2x5x1xf32>
    %722 = arith.divf %720, %721 : vector<2x5x1xf32>
    %723 = vector.broadcast %715 : vector<2x5x1xf32> to vector<2x5x128xf32>
    %724 = arith.subf %711, %723 : vector<2x5x128xf32>
    %cst_292 = arith.constant 9.99999974E-6 : f32
    %725 = vector.broadcast %cst_292 : f32 to vector<2x5x1xf32>
    %726 = arith.addf %722, %725 : vector<2x5x1xf32>
    %727 = math.rsqrt %726 : vector<2x5x1xf32>
    %728 = vector.broadcast %727 : vector<2x5x1xf32> to vector<2x5x128xf32>
    %729 = arith.mulf %724, %728 : vector<2x5x128xf32>
    %730 = vector.shape_cast %579 : vector<1x128xf32> to vector<1x1x128xf32>
    %731 = vector.broadcast %730 : vector<1x1x128xf32> to vector<2x5x128xf32>
    %732 = arith.mulf %729, %731 : vector<2x5x128xf32>
    %733 = vector.shape_cast %581 : vector<1x128xf32> to vector<1x1x128xf32>
    %734 = vector.broadcast %733 : vector<1x1x128xf32> to vector<2x5x128xf32>
    %735 = arith.addf %732, %734 : vector<2x5x128xf32>
    %736 = vector.shape_cast %735 : vector<2x5x128xf32> to vector<10x128xf32>
    %737 = arith.truncf %736 : vector<10x128xf32> to vector<10x128xbf16>
    %cst_293 = arith.constant dense<0.000000e+00> : vector<10x128xf32>
    %738 = tpu.matmul %737, %583, %cst_293 {dimension_numbers = #tpu.dot_dimension_numbers<[1], [0], [0], [1], [0, 0, 1, 1], [], []>} : vector<10x128xbf16>, vector<128x128xbf16>, vector<10x128xf32> -> vector<10x128xf32>
    %739 = vector.broadcast %585 : vector<1x128xf32> to vector<10x128xf32>
    %740 = arith.addf %738, %739 : vector<10x128xf32>
    %cst_294 = arith.constant 5.000000e-01 : f32
    %741 = vector.broadcast %cst_294 : f32 to vector<10x128xf32>
    %742 = arith.mulf %741, %740 : vector<10x128xf32>
    %cst_295 = arith.constant 0.707106769 : f32
    %743 = vector.broadcast %cst_295 : f32 to vector<10x128xf32>
    %744 = arith.mulf %740, %743 : vector<10x128xf32>
    %745 = math.erf %744 : vector<10x128xf32>
    %cst_296 = arith.constant 1.000000e+00 : f32
    %746 = vector.broadcast %cst_296 : f32 to vector<10x128xf32>
    %747 = arith.addf %746, %745 : vector<10x128xf32>
    %748 = arith.mulf %742, %747 : vector<10x128xf32>
    %749 = arith.truncf %748 : vector<10x128xf32> to vector<10x128xbf16>
    %cst_297 = arith.constant dense<0.000000e+00> : vector<10x128xf32>
    %750 = tpu.matmul %749, %587, %cst_297 {dimension_numbers = #tpu.dot_dimension_numbers<[1], [0], [0], [1], [0, 0, 1, 1], [], []>} : vector<10x128xbf16>, vector<128x128xbf16>, vector<10x128xf32> -> vector<10x128xf32>
    %751 = vector.broadcast %589 : vector<1x128xf32> to vector<10x128xf32>
    %752 = arith.addf %750, %751 : vector<10x128xf32>
    %753 = vector.shape_cast %752 : vector<10x128xf32> to vector<2x5x128xf32>
    %754 = arith.addf %711, %753 : vector<2x5x128xf32>
    %c0_298 = arith.constant 0 : index
    %c0_299 = arith.constant 0 : index
    %755 = vector.load %arg35[%c0_298, %c0_299] : memref<1x128xf32, #tpu.memory_space<vmem>>, vector<1x128xf32>
    %c0_300 = arith.constant 0 : index
    %c0_301 = arith.constant 0 : index
    %756 = vector.load %arg36[%c0_300, %c0_301] : memref<1x128xf32, #tpu.memory_space<vmem>>, vector<1x128xf32>
    %cst_302 = arith.constant dense<0.000000e+00> : vector<2x5xf32>
    %757 = vector.multi_reduction <add>, %754, %cst_302 [2] : vector<2x5x128xf32> to vector<2x5xf32>
    %758 = vector.shape_cast %757 : vector<2x5xf32> to vector<2x5x1xf32>
    %cst_303 = arith.constant 1.280000e+02 : f32
    %759 = vector.broadcast %cst_303 : f32 to vector<2x5x1xf32>
    %760 = arith.divf %758, %759 : vector<2x5x1xf32>
    %761 = vector.broadcast %760 : vector<2x5x1xf32> to vector<2x5x128xf32>
    %762 = arith.subf %754, %761 : vector<2x5x128xf32>
    %763 = arith.mulf %762, %762 : vector<2x5x128xf32>
    %cst_304 = arith.constant dense<0.000000e+00> : vector<2x5xf32>
    %764 = vector.multi_reduction <add>, %763, %cst_304 [2] : vector<2x5x128xf32> to vector<2x5xf32>
    %765 = vector.shape_cast %764 : vector<2x5xf32> to vector<2x5x1xf32>
    %cst_305 = arith.constant 1.280000e+02 : f32
    %766 = vector.broadcast %cst_305 : f32 to vector<2x5x1xf32>
    %767 = arith.divf %765, %766 : vector<2x5x1xf32>
    %768 = vector.broadcast %760 : vector<2x5x1xf32> to vector<2x5x128xf32>
    %769 = arith.subf %754, %768 : vector<2x5x128xf32>
    %cst_306 = arith.constant 9.99999974E-6 : f32
    %770 = vector.broadcast %cst_306 : f32 to vector<2x5x1xf32>
    %771 = arith.addf %767, %770 : vector<2x5x1xf32>
    %772 = math.rsqrt %771 : vector<2x5x1xf32>
    %773 = vector.broadcast %772 : vector<2x5x1xf32> to vector<2x5x128xf32>
    %774 = arith.mulf %769, %773 : vector<2x5x128xf32>
    %775 = vector.shape_cast %755 : vector<1x128xf32> to vector<1x1x128xf32>
    %776 = vector.broadcast %775 : vector<1x1x128xf32> to vector<2x5x128xf32>
    %777 = arith.mulf %774, %776 : vector<2x5x128xf32>
    %778 = vector.shape_cast %756 : vector<1x128xf32> to vector<1x1x128xf32>
    %779 = vector.broadcast %778 : vector<1x1x128xf32> to vector<2x5x128xf32>
    %780 = arith.addf %777, %779 : vector<2x5x128xf32>
    %781 = vector.shape_cast %780 : vector<2x5x128xf32> to vector<10x128xf32>
    %782 = arith.truncf %781 : vector<10x128xf32> to vector<10x128xbf16>
    %c0_307 = arith.constant 0 : index
    %c0_308 = arith.constant 0 : index
    %783 = vector.load %arg37[%c0_307, %c0_308] : memref<128x64xbf16, #tpu.memory_space<vmem>>, vector<128x64xbf16>
    %cst_309 = arith.constant dense<0.000000e+00> : vector<10x64xf32>
    %784 = tpu.matmul %782, %783, %cst_309 {dimension_numbers = #tpu.dot_dimension_numbers<[1], [0], [0], [1], [0, 0, 1, 1], [], []>} : vector<10x128xbf16>, vector<128x64xbf16>, vector<10x64xf32> -> vector<10x64xf32>
    %c0_310 = arith.constant 0 : index
    %c0_311 = arith.constant 0 : index
    %785 = vector.load %arg38[%c0_310, %c0_311] : memref<1x64xf32, #tpu.memory_space<vmem>>, vector<1x64xf32>
    %786 = vector.broadcast %785 : vector<1x64xf32> to vector<10x64xf32>
    %787 = arith.addf %784, %786 : vector<10x64xf32>
    %788 = vector.shape_cast %787 : vector<10x64xf32> to vector<2x5x64xf32>
    %c0_312 = arith.constant 0 : index
    %c0_313 = arith.constant 0 : index
    %c0_314 = arith.constant 0 : index
    %789 = vector.load %arg39[%c0_312, %c0_313, %c0_314] : memref<2x5x64xf32, #tpu.memory_space<vmem>>, vector<2x5x64xf32>
    tpu.vector_store %arg39[%c0_312, %c0_313, %c0_314], %788 {strides = array<i32>} : memref<2x5x64xf32, #tpu.memory_space<vmem>>, vector<2x5x64xf32>,
    %c0_315 = arith.constant 0 : index
    %c0_316 = arith.constant 0 : index
    %c0_317 = arith.constant 0 : index
    %790 = vector.load %arg4[%c0_315, %c0_316, %c0_317] : memref<2x5x64xf32, #tpu.memory_space<vmem>>, vector<2x5x64xf32>
    %791 = arith.subf %788, %790 : vector<2x5x64xf32>
    %792 = arith.mulf %791, %791 : vector<2x5x64xf32>
    %cst_318 = arith.constant dense<0.000000e+00> : vector<2x5xf32>
    %793 = vector.multi_reduction <add>, %792, %cst_318 [2] : vector<2x5x64xf32> to vector<2x5xf32>
    %cst_319 = arith.constant 6.400000e+01 : f32
    %794 = vector.broadcast %cst_319 : f32 to vector<2x5xf32>
    %795 = arith.divf %793, %794 : vector<2x5xf32>
    %c0_320 = arith.constant 0 : index
    %c0_321 = arith.constant 0 : index
    %796 = vector.load %arg3[%c0_320, %c0_321] : memref<2x5xf32, #tpu.memory_space<vmem>>, vector<2x5xf32>
    %797 = arith.mulf %795, %796 : vector<2x5xf32>
    %798 = vector.shape_cast %797 : vector<2x5xf32> to vector<1x2x5xf32>
    %cst_322 = arith.constant dense<0.000000e+00> : vector<1xf32>
    %799 = vector.multi_reduction <add>, %798, %cst_322 [1, 2] : vector<1x2x5xf32> to vector<1xf32>
    %800 = vector.shape_cast %799 : vector<1xf32> to vector<1x1x1xf32>
    %801 = vector.extract %800[0, 0, 0] : f32 from vector<1x1x1xf32>
    %802 = vector.broadcast %801 : f32 to vector<1x1xf32>
    %803 = vector.shape_cast %796 : vector<2x5xf32> to vector<1x2x5xf32>
    %cst_323 = arith.constant dense<0.000000e+00> : vector<1xf32>
    %804 = vector.multi_reduction <add>, %803, %cst_323 [1, 2] : vector<1x2x5xf32> to vector<1xf32>
    %805 = vector.shape_cast %804 : vector<1xf32> to vector<1x1x1xf32>
    %806 = vector.extract %805[0, 0, 0] : f32 from vector<1x1x1xf32>
    %807 = vector.broadcast %806 : f32 to vector<1x1xf32>
    %808 = arith.divf %802, %807 : vector<1x1xf32>
    %c0_324 = arith.constant 0 : index
    %c0_325 = arith.constant 0 : index
    %809 = vector.load %arg40[%c0_324, %c0_325] : memref<1x1xf32, #tpu.memory_space<vmem>>, vector<1x1xf32>
    tpu.vector_store %arg40[%c0_324, %c0_325], %808 {strides = array<i32>} : memref<1x1xf32, #tpu.memory_space<vmem>>, vector<1x1xf32>,
    return
  }
  func.func @transform_0(%arg0: i32, %arg1: memref<2x4xi32, #tpu.memory_space<smem>>) -> (i32, i32, i32) {
    %c0_i32 = arith.constant 0 : i32
    %c0_i32_0 = arith.constant 0 : i32
    %c0_i32_1 = arith.constant 0 : i32
    %c0_i32_2 = arith.constant 0 : i32
    return %c0_i32, %c0_i32_0, %c0_i32_1 : i32, i32, i32
  }
  func.func @transform_1(%arg0: i32, %arg1: memref<2x4xi32, #tpu.memory_space<smem>>) -> (i32, i32) {
    %c0_i32 = arith.constant 0 : i32
    %c0_i32_0 = arith.constant 0 : i32
    %c0_i32_1 = arith.constant 0 : i32
    return %c0_i32, %c0_i32_0 : i32, i32
  }
  func.func @transform_2(%arg0: i32, %arg1: memref<2x4xi32, #tpu.memory_space<smem>>) -> (i32, i32, i32) {
    %c0_i32 = arith.constant 0 : i32
    %c0_i32_0 = arith.constant 0 : i32
    %c0_i32_1 = arith.constant 0 : i32
    %c0_i32_2 = arith.constant 0 : i32
    return %c0_i32, %c0_i32_0, %c0_i32_1 : i32, i32, i32
  }
  func.func @transform_3(%arg0: i32, %arg1: memref<2x4xi32, #tpu.memory_space<smem>>) -> (i32, i32, i32) {
    %c0_i32 = arith.constant 0 : i32
    %c0_i32_0 = arith.constant 0 : i32
    %c0_i32_1 = arith.constant 0 : i32
    %c0_i32_2 = arith.constant 0 : i32
    return %c0_i32, %c0_i32_0, %c0_i32_1 : i32, i32, i32
  }
  func.func @transform_4(%arg0: i32, %arg1: memref<2x4xi32, #tpu.memory_space<smem>>) -> (i32, i32, i32) {
    %c0_i32 = arith.constant 0 : i32
    %c0_i32_0 = arith.constant 0 : i32
    %c0_i32_1 = arith.constant 0 : i32
    %c0_i32_2 = arith.constant 0 : i32
    return %c0_i32, %c0_i32_0, %c0_i32_1 : i32, i32, i32
  }
  func.func @transform_5(%arg0: i32, %arg1: memref<2x4xi32, #tpu.memory_space<smem>>) -> (i32, i32, i32) {
    %c0_i32 = arith.constant 0 : i32
    %c0_i32_0 = arith.constant 0 : i32
    %c0_i32_1 = arith.constant 0 : i32
    %c0_i32_2 = arith.constant 0 : i32
    return %c0_i32, %c0_i32_0, %c0_i32_1 : i32, i32, i32
  }
  func.func @transform_6(%arg0: i32, %arg1: memref<2x4xi32, #tpu.memory_space<smem>>) -> (i32, i32, i32) {
    %c0_i32 = arith.constant 0 : i32
    %c0_i32_0 = arith.constant 0 : i32
    %c0_i32_1 = arith.constant 0 : i32
    %c0_i32_2 = arith.constant 0 : i32
    return %c0_i32, %c0_i32_0, %c0_i32_1 : i32, i32, i32
  }
  func.func @transform_7(%arg0: i32, %arg1: memref<2x4xi32, #tpu.memory_space<smem>>) -> (i32, i32, i32) {
    %c0_i32 = arith.constant 0 : i32
    %c0_i32_0 = arith.constant 0 : i32
    %c0_i32_1 = arith.constant 0 : i32
    %c0_i32_2 = arith.constant 0 : i32
    return %c0_i32, %c0_i32_0, %c0_i32_1 : i32, i32, i32
  }
  func.func @transform_8(%arg0: i32, %arg1: memref<2x4xi32, #tpu.memory_space<smem>>) -> (i32, i32, i32) {
    %c0_i32 = arith.constant 0 : i32
    %c0_i32_0 = arith.constant 0 : i32
    %c0_i32_1 = arith.constant 0 : i32
    %c0_i32_2 = arith.constant 0 : i32
    return %c0_i32, %c0_i32_0, %c0_i32_1 : i32, i32, i32
  }
  func.func @transform_9(%arg0: i32, %arg1: memref<2x4xi32, #tpu.memory_space<smem>>) -> (i32, i32, i32) {
    %c0_i32 = arith.constant 0 : i32
    %c0_i32_0 = arith.constant 0 : i32
    %c0_i32_1 = arith.constant 0 : i32
    %c0_i32_2 = arith.constant 0 : i32
    return %c0_i32, %c0_i32_0, %c0_i32_1 : i32, i32, i32
  }
  func.func @transform_10(%arg0: i32, %arg1: memref<2x4xi32, #tpu.memory_space<smem>>) -> (i32, i32, i32) {
    %c0_i32 = arith.constant 0 : i32
    %c0_i32_0 = arith.constant 0 : i32
    %c0_i32_1 = arith.constant 0 : i32
    %c0_i32_2 = arith.constant 0 : i32
    return %c0_i32, %c0_i32_0, %c0_i32_1 : i32, i32, i32
  }
  func.func @transform_11(%arg0: i32, %arg1: memref<2x4xi32, #tpu.memory_space<smem>>) -> (i32, i32, i32) {
    %c0_i32 = arith.constant 0 : i32
    %c0_i32_0 = arith.constant 0 : i32
    %c0_i32_1 = arith.constant 0 : i32
    %c0_i32_2 = arith.constant 0 : i32
    return %c0_i32, %c0_i32_0, %c0_i32_1 : i32, i32, i32
  }
  func.func @transform_12(%arg0: i32, %arg1: memref<2x4xi32, #tpu.memory_space<smem>>) -> (i32, i32, i32) {
    %c0_i32 = arith.constant 0 : i32
    %c0_i32_0 = arith.constant 0 : i32
    %c0_i32_1 = arith.constant 0 : i32
    %c0_i32_2 = arith.constant 0 : i32
    return %c0_i32, %c0_i32_0, %c0_i32_1 : i32, i32, i32
  }
  func.func @transform_13(%arg0: i32, %arg1: memref<2x4xi32, #tpu.memory_space<smem>>) -> (i32, i32, i32) {
    %c0_i32 = arith.constant 0 : i32
    %c0_i32_0 = arith.constant 0 : i32
    %c0_i32_1 = arith.constant 0 : i32
    %c0_i32_2 = arith.constant 0 : i32
    return %c0_i32, %c0_i32_0, %c0_i32_1 : i32, i32, i32
  }
  func.func @transform_14(%arg0: i32, %arg1: memref<2x4xi32, #tpu.memory_space<smem>>) -> (i32, i32, i32) {
    %c0_i32 = arith.constant 0 : i32
    %c0_i32_0 = arith.constant 0 : i32
    %c0_i32_1 = arith.constant 0 : i32
    %c0_i32_2 = arith.constant 0 : i32
    return %c0_i32, %c0_i32_0, %c0_i32_1 : i32, i32, i32
  }
  func.func @transform_15(%arg0: i32, %arg1: memref<2x4xi32, #tpu.memory_space<smem>>) -> (i32, i32) {
    %c0_i32 = arith.constant 0 : i32
    %c0_i32_0 = arith.constant 0 : i32
    %c0_i32_1 = arith.constant 0 : i32
    return %c0_i32, %c0_i32_0 : i32, i32
  }
  func.func @transform_16(%arg0: i32, %arg1: memref<2x4xi32, #tpu.memory_space<smem>>) -> (i32, i32) {
    %c0_i32 = arith.constant 0 : i32
    %c0_i32_0 = arith.constant 0 : i32
    %c0_i32_1 = arith.constant 0 : i32
    return %c0_i32, %c0_i32_0 : i32, i32
  }
  func.func @transform_17(%arg0: i32, %arg1: memref<2x4xi32, #tpu.memory_space<smem>>) -> (i32, i32) {
    %c0_i32 = arith.constant 0 : i32
    %c0_i32_0 = arith.constant 0 : i32
    %c0_i32_1 = arith.constant 0 : i32
    return %c0_i32, %c0_i32_0 : i32, i32
  }
  func.func @transform_18(%arg0: i32, %arg1: memref<2x4xi32, #tpu.memory_space<smem>>) -> (i32, i32) {
    %c0_i32 = arith.constant 0 : i32
    %c0_i32_0 = arith.constant 0 : i32
    %c0_i32_1 = arith.constant 0 : i32
    return %c0_i32, %c0_i32_0 : i32, i32
  }
  func.func @transform_19(%arg0: i32, %arg1: memref<2x4xi32, #tpu.memory_space<smem>>) -> (i32, i32) {
    %c0_i32 = arith.constant 0 : i32
    %c0_i32_0 = arith.constant 0 : i32
    %c0_i32_1 = arith.constant 0 : i32
    return %c0_i32, %c0_i32_0 : i32, i32
  }
  func.func @transform_20(%arg0: i32, %arg1: memref<2x4xi32, #tpu.memory_space<smem>>) -> (i32, i32) {
    %c0_i32 = arith.constant 0 : i32
    %c0_i32_0 = arith.constant 0 : i32
    %c0_i32_1 = arith.constant 0 : i32
    return %c0_i32, %c0_i32_0 : i32, i32
  }
  func.func @transform_21(%arg0: i32, %arg1: memref<2x4xi32, #tpu.memory_space<smem>>) -> (i32, i32, i32) {
    %c0_i32 = arith.constant 0 : i32
    %c0_i32_0 = arith.constant 0 : i32
    %c0_i32_1 = arith.constant 0 : i32
    %c0_i32_2 = arith.constant 0 : i32
    return %c0_i32, %c0_i32_0, %c0_i32_1 : i32, i32, i32
  }
  func.func @transform_22(%arg0: i32, %arg1: memref<2x4xi32, #tpu.memory_space<smem>>) -> (i32, i32, i32) {
    %c0_i32 = arith.constant 0 : i32
    %c0_i32_0 = arith.constant 0 : i32
    %c0_i32_1 = arith.constant 0 : i32
    %c0_i32_2 = arith.constant 0 : i32
    return %c0_i32, %c0_i32_0, %c0_i32_1 : i32, i32, i32
  }
  func.func @transform_23(%arg0: i32, %arg1: memref<2x4xi32, #tpu.memory_space<smem>>) -> (i32, i32, i32) {
    %c0_i32 = arith.constant 0 : i32
    %c0_i32_0 = arith.constant 0 : i32
    %c0_i32_1 = arith.constant 0 : i32
    %c0_i32_2 = arith.constant 0 : i32
    return %c0_i32, %c0_i32_0, %c0_i32_1 : i32, i32, i32
  }
  func.func @transform_24(%arg0: i32, %arg1: memref<2x4xi32, #tpu.memory_space<smem>>) -> (i32, i32, i32) {
    %c0_i32 = arith.constant 0 : i32
    %c0_i32_0 = arith.constant 0 : i32
    %c0_i32_1 = arith.constant 0 : i32
    %c0_i32_2 = arith.constant 0 : i32
    return %c0_i32, %c0_i32_0, %c0_i32_1 : i32, i32, i32
  }
  func.func @transform_25(%arg0: i32, %arg1: memref<2x4xi32, #tpu.memory_space<smem>>) -> (i32, i32, i32) {
    %c0_i32 = arith.constant 0 : i32
    %c0_i32_0 = arith.constant 0 : i32
    %c0_i32_1 = arith.constant 0 : i32
    %c0_i32_2 = arith.constant 0 : i32
    return %c0_i32, %c0_i32_0, %c0_i32_1 : i32, i32, i32
  }
  func.func @transform_26(%arg0: i32, %arg1: memref<2x4xi32, #tpu.memory_space<smem>>) -> (i32, i32, i32) {
    %c0_i32 = arith.constant 0 : i32
    %c0_i32_0 = arith.constant 0 : i32
    %c0_i32_1 = arith.constant 0 : i32
    %c0_i32_2 = arith.constant 0 : i32
    return %c0_i32, %c0_i32_0, %c0_i32_1 : i32, i32, i32
  }
  func.func @transform_27(%arg0: i32, %arg1: memref<2x4xi32, #tpu.memory_space<smem>>) -> (i32, i32, i32) {
    %c0_i32 = arith.constant 0 : i32
    %c0_i32_0 = arith.constant 0 : i32
    %c0_i32_1 = arith.constant 0 : i32
    %c0_i32_2 = arith.constant 0 : i32
    return %c0_i32, %c0_i32_0, %c0_i32_1 : i32, i32, i32
  }
  func.func @transform_28(%arg0: i32, %arg1: memref<2x4xi32, #tpu.memory_space<smem>>) -> (i32, i32, i32) {
    %c0_i32 = arith.constant 0 : i32
    %c0_i32_0 = arith.constant 0 : i32
    %c0_i32_1 = arith.constant 0 : i32
    %c0_i32_2 = arith.constant 0 : i32
    return %c0_i32, %c0_i32_0, %c0_i32_1 : i32, i32, i32
  }
  func.func @transform_29(%arg0: i32, %arg1: memref<2x4xi32, #tpu.memory_space<smem>>) -> (i32, i32, i32) {
    %c0_i32 = arith.constant 0 : i32
    %c0_i32_0 = arith.constant 0 : i32
    %c0_i32_1 = arith.constant 0 : i32
    %c0_i32_2 = arith.constant 0 : i32
    return %c0_i32, %c0_i32_0, %c0_i32_1 : i32, i32, i32
  }
  func.func @transform_30(%arg0: i32, %arg1: memref<2x4xi32, #tpu.memory_space<smem>>) -> (i32, i32, i32) {
    %c0_i32 = arith.constant 0 : i32
    %c0_i32_0 = arith.constant 0 : i32
    %c0_i32_1 = arith.constant 0 : i32
    %c0_i32_2 = arith.constant 0 : i32
    return %c0_i32, %c0_i32_0, %c0_i32_1 : i32, i32, i32
  }
  func.func @transform_31(%arg0: i32, %arg1: memref<2x4xi32, #tpu.memory_space<smem>>) -> (i32, i32, i32) {
    %c0_i32 = arith.constant 0 : i32
    %c0_i32_0 = arith.constant 0 : i32
    %c0_i32_1 = arith.constant 0 : i32
    %c0_i32_2 = arith.constant 0 : i32
    return %c0_i32, %c0_i32_0, %c0_i32_1 : i32, i32, i32
  }
  func.func @transform_32(%arg0: i32, %arg1: memref<2x4xi32, #tpu.memory_space<smem>>) -> (i32, i32, i32) {
    %c0_i32 = arith.constant 0 : i32
    %c0_i32_0 = arith.constant 0 : i32
    %c0_i32_1 = arith.constant 0 : i32
    %c0_i32_2 = arith.constant 0 : i32
    return %c0_i32, %c0_i32_0, %c0_i32_1 : i32, i32, i32
  }
  func.func @transform_33(%arg0: i32, %arg1: memref<2x4xi32, #tpu.memory_space<smem>>) -> (i32, i32) {
    %c0_i32 = arith.constant 0 : i32
    %c0_i32_0 = arith.constant 0 : i32
    %c0_i32_1 = arith.constant 0 : i32
    return %c0_i32, %c0_i32_0 : i32, i32
  }
  func.func @transform_34(%arg0: i32, %arg1: memref<2x4xi32, #tpu.memory_space<smem>>) -> (i32, i32) {
    %c0_i32 = arith.constant 0 : i32
    %c0_i32_0 = arith.constant 0 : i32
    %c0_i32_1 = arith.constant 0 : i32
    return %c0_i32, %c0_i32_0 : i32, i32
  }
  func.func @transform_35(%arg0: i32, %arg1: memref<2x4xi32, #tpu.memory_space<smem>>) -> (i32, i32) {
    %c0_i32 = arith.constant 0 : i32
    %c0_i32_0 = arith.constant 0 : i32
    %c0_i32_1 = arith.constant 0 : i32
    return %c0_i32, %c0_i32_0 : i32, i32
  }
  func.func @transform_36(%arg0: i32, %arg1: memref<2x4xi32, #tpu.memory_space<smem>>) -> (i32, i32) {
    %c0_i32 = arith.constant 0 : i32
    %c0_i32_0 = arith.constant 0 : i32
    %c0_i32_1 = arith.constant 0 : i32
    return %c0_i32, %c0_i32_0 : i32, i32
  }
  func.func @transform_37(%arg0: i32, %arg1: memref<2x4xi32, #tpu.memory_space<smem>>) -> (i32, i32, i32) {
    %c0_i32 = arith.constant 0 : i32
    %c0_i32_0 = arith.constant 0 : i32
    %c0_i32_1 = arith.constant 0 : i32
    %c0_i32_2 = arith.constant 0 : i32
    return %c0_i32, %c0_i32_0, %c0_i32_1 : i32, i32, i32
  }
  func.func @transform_38(%arg0: i32, %arg1: memref<2x4xi32, #tpu.memory_space<smem>>) -> (i32, i32) {
    %c0_i32 = arith.constant 0 : i32
    %c0_i32_0 = arith.constant 0 : i32
    %c0_i32_1 = arith.constant 0 : i32
    return %c0_i32, %c0_i32_0 : i32, i32
  }
}

</mosaic_0001>

<llo_original>
// kernel: autoencoder_forward.1
$region0: #{autoencoder_forward.1}
  #allocation0 [shape = 'u32[]', space=smem, size = 0x4, offset = 0x4, fixed_abs, tag = 'smem constant byte address 0x4 - core index']
  #allocation1 [shape = 'u32[144,128]{1,0:T(1,128)}', space=vmem, size = 0x12000, scoped, tag = 'internal scratch']
  #allocation2 [shape = 'f32[2,5,128]{2,1,0:T(8,128)}', space=vmem, size = 0x2000, scoped, tag = 'scratch operand']
  #allocation3 [shape = 's32[1]{0}', space=sflag, size = 0x4, scoped, tag = 'scoped memory for autoencoder_forward.1']
  #allocation4 [shape = 'u8[1024]{0}', space=smem, size = 0x400, scoped, tag = 'prefetched SMEM operand 0']
  %s0 = inlined_call_operand.smem [shape: u32[40], index: -1, kind: input, shape index: {}]
  %s1 = sld [smem:[%s0]]
  %s2 = scalar_lea.smem %s0, 1
  %s3 = sld [smem:[%s2]]
  %s4 = scalar_lea.smem %s0, 2
  %s5 = sld [smem:[%s4]]
  %s6 = scalar_lea.smem %s0, 3
  %s7 = sld [smem:[%s6]]
  %s8 = scalar_lea.smem %s0, 4
  %s9 = sld [smem:[%s8]]
  %s10 = scalar_lea.smem %s0, 5
  %s11 = sld [smem:[%s10]]
  %s12 = scalar_lea.smem %s0, 6
  %s13 = sld [smem:[%s12]]
  %s14 = scalar_lea.smem %s0, 7
  %s15 = sld [smem:[%s14]]
  %s16 = scalar_lea.smem %s0, 8
  %s17 = sld [smem:[%s16]]
  %s18 = scalar_lea.smem %s0, 9
  %s19 = sld [smem:[%s18]]
  %s20 = scalar_lea.smem %s0, 10
  %s21 = sld [smem:[%s20]]
  %s22 = scalar_lea.smem %s0, 11
  %s23 = sld [smem:[%s22]]
  %s24 = scalar_lea.smem %s0, 12
  %s25 = sld [smem:[%s24]]
  %s26 = scalar_lea.smem %s0, 13
  %s27 = sld [smem:[%s26]]
  %s28 = scalar_lea.smem %s0, 14
  %s29 = sld [smem:[%s28]]
  %s30 = scalar_lea.smem %s0, 15
  %s31 = sld [smem:[%s30]]
  %s32 = scalar_lea.smem %s0, 16
  %s33 = sld [smem:[%s32]]
  %s34 = scalar_lea.smem %s0, 17
  %s35 = sld [smem:[%s34]]
  %s36 = scalar_lea.smem %s0, 18
  %s37 = sld [smem:[%s36]]
  %s38 = scalar_lea.smem %s0, 19
  %s39 = sld [smem:[%s38]]
  %s40 = scalar_lea.smem %s0, 20
  %s41 = sld [smem:[%s40]]
  %s42 = scalar_lea.smem %s0, 21
  %s43 = sld [smem:[%s42]]
  %s44 = scalar_lea.smem %s0, 22
  %s45 = sld [smem:[%s44]]
  %s46 = scalar_lea.smem %s0, 23
  %s47 = sld [smem:[%s46]]
  %s48 = scalar_lea.smem %s0, 24
  %s49 = sld [smem:[%s48]]
  %s50 = scalar_lea.smem %s0, 25
  %s51 = sld [smem:[%s50]]
  %s52 = scalar_lea.smem %s0, 26
  %s53 = sld [smem:[%s52]]
  %s54 = scalar_lea.smem %s0, 27
  %s55 = sld [smem:[%s54]]
  %s56 = scalar_lea.smem %s0, 28
  %s57 = sld [smem:[%s56]]
  %s58 = scalar_lea.smem %s0, 29
  %s59 = sld [smem:[%s58]]
  %s60 = scalar_lea.smem %s0, 30
  %s61 = sld [smem:[%s60]]
  %s62 = scalar_lea.smem %s0, 31
  %s63 = sld [smem:[%s62]]
  %s64 = scalar_lea.smem %s0, 32
  %s65 = sld [smem:[%s64]]
  %s66 = scalar_lea.smem %s0, 33
  %s67 = sld [smem:[%s66]]
  %s68 = scalar_lea.smem %s0, 34
  %s69 = sld [smem:[%s68]]
  %s70 = scalar_lea.smem %s0, 35
  %s71 = sld [smem:[%s70]]
  %s72 = scalar_lea.smem %s0, 36
  %s73 = sld [smem:[%s72]]
  %s74 = scalar_lea.smem %s0, 37
  %s75 = sld [smem:[%s74]]
  %s76 = scalar_lea.smem %s0, 38
  %s77 = sld [smem:[%s76]]
  %s78 = scalar_lea.smem %s0, 39
  %s79 = sld [smem:[%s78]]
  %80 = xla_tuple %s77, %s79
  %s81 = sld [smem:[#allocation0]]
  $region166: #{autoencoder_forward.1} parent=0
    _
  %s83 = ssub.s32 1, %s81
  %s84 = scalar_select 0, %s83, %s81
  %s85 = sshll.u32 %s1, 4
  %s86 = int_to_ptr.vmem [resolvable:$true] %s85
  %88 = dma.vmem_to_smem %s86, 32, [#allocation4], [#allocation3]
  %89 = dma.done [#allocation3], 32
  %90 = sfence
  $region1: #{autoencoder_forward.1} parent=0
    #allocation5 [shape = 'u8[512]{0}', space=vmem, size = 0x400, scoped, tag = 'output window, operand 1, single buffered']
    #allocation6 [shape = 's32[1]{0}', space=sflag, size = 0x4, scoped, tag = 'scoped memory for autoencoder_forward.1']
    %91 = vsyncpa [#allocation6], 0
    // Predicated region
    $region2: #{autoencoder_forward.1} parent=1 // pred_check
      _
    $region3: #{autoencoder_forward.1} parent=1 // pred_check_branch
      %93 = sbr.rel (0) target = $region5
    $region4: #{autoencoder_forward.1} parent=1 // pred_region
      _
    $region5: #{autoencoder_forward.1} parent=1 // pred_fallthru
      _
    // Predicated region
    $region6: #{autoencoder_forward.1} parent=1 // pred_check
      _
    $region7: #{autoencoder_forward.1} parent=1 // pred_check_branch
      %95 = sbr.rel (0) target = $region9
    $region8: #{autoencoder_forward.1} parent=1 // pred_region
      _
    $region9: #{autoencoder_forward.1} parent=1 // pred_fallthru
      _
    // Predicated region
    $region10: #{autoencoder_forward.1} parent=1 // pred_check
      _
    $region11: #{autoencoder_forward.1} parent=1 // pred_check_branch
      %97 = sbr.rel (0) target = $region13
    $region12: #{autoencoder_forward.1} parent=1 // pred_region
      _
    $region13: #{autoencoder_forward.1} parent=1 // pred_fallthru
      _
    // Predicated region
    $region14: #{autoencoder_forward.1} parent=1 // pred_check
      _
    $region15: #{autoencoder_forward.1} parent=1 // pred_check_branch
      %99 = sbr.rel (0) target = $region17
    $region16: #{autoencoder_forward.1} parent=1 // pred_region
      _
    $region17: #{autoencoder_forward.1} parent=1 // pred_fallthru
      _
    // Predicated region
    $region18: #{autoencoder_forward.1} parent=1 // pred_check
      _
    $region19: #{autoencoder_forward.1} parent=1 // pred_check_branch
      %101 = sbr.rel (0) target = $region21
    $region20: #{autoencoder_forward.1} parent=1 // pred_region
      _
    $region21: #{autoencoder_forward.1} parent=1 // pred_fallthru
      _
    // Predicated region
    $region22: #{autoencoder_forward.1} parent=1 // pred_check
      _
    $region23: #{autoencoder_forward.1} parent=1 // pred_check_branch
      %103 = sbr.rel (0) target = $region25
    $region24: #{autoencoder_forward.1} parent=1 // pred_region
      _
    $region25: #{autoencoder_forward.1} parent=1 // pred_fallthru
      _
    // Predicated region
    $region26: #{autoencoder_forward.1} parent=1 // pred_check
      _
    $region27: #{autoencoder_forward.1} parent=1 // pred_check_branch
      %105 = sbr.rel (0) target = $region29
    $region28: #{autoencoder_forward.1} parent=1 // pred_region
      _
    $region29: #{autoencoder_forward.1} parent=1 // pred_fallthru
      _
    // Predicated region
    $region30: #{autoencoder_forward.1} parent=1 // pred_check
      _
    $region31: #{autoencoder_forward.1} parent=1 // pred_check_branch
      %107 = sbr.rel (0) target = $region33
    $region32: #{autoencoder_forward.1} parent=1 // pred_region
      _
    $region33: #{autoencoder_forward.1} parent=1 // pred_fallthru
      _
    // Predicated region
    $region34: #{autoencoder_forward.1} parent=1 // pred_check
      _
    $region35: #{autoencoder_forward.1} parent=1 // pred_check_branch
      %109 = sbr.rel (0) target = $region37
    $region36: #{autoencoder_forward.1} parent=1 // pred_region
      _
    $region37: #{autoencoder_forward.1} parent=1 // pred_fallthru
      _
    // Predicated region
    $region38: #{autoencoder_forward.1} parent=1 // pred_check
      _
    $region39: #{autoencoder_forward.1} parent=1 // pred_check_branch
      %111 = sbr.rel (0) target = $region41
    $region40: #{autoencoder_forward.1} parent=1 // pred_region
      _
    $region41: #{autoencoder_forward.1} parent=1 // pred_fallthru
      _
    // Predicated region
    $region42: #{autoencoder_forward.1} parent=1 // pred_check
      _
    $region43: #{autoencoder_forward.1} parent=1 // pred_check_branch
      %113 = sbr.rel (0) target = $region45
    $region44: #{autoencoder_forward.1} parent=1 // pred_region
      _
    $region45: #{autoencoder_forward.1} parent=1 // pred_fallthru
      _
    // Predicated region
    $region46: #{autoencoder_forward.1} parent=1 // pred_check
      _
    $region47: #{autoencoder_forward.1} parent=1 // pred_check_branch
      %115 = sbr.rel (0) target = $region49
    $region48: #{autoencoder_forward.1} parent=1 // pred_region
      _
    $region49: #{autoencoder_forward.1} parent=1 // pred_fallthru
      _
    // Predicated region
    $region50: #{autoencoder_forward.1} parent=1 // pred_check
      _
    $region51: #{autoencoder_forward.1} parent=1 // pred_check_branch
      %117 = sbr.rel (0) target = $region53
    $region52: #{autoencoder_forward.1} parent=1 // pred_region
      _
    $region53: #{autoencoder_forward.1} parent=1 // pred_fallthru
      _
    // Predicated region
    $region54: #{autoencoder_forward.1} parent=1 // pred_check
      _
    $region55: #{autoencoder_forward.1} parent=1 // pred_check_branch
      %119 = sbr.rel (0) target = $region57
    $region56: #{autoencoder_forward.1} parent=1 // pred_region
      _
    $region57: #{autoencoder_forward.1} parent=1 // pred_fallthru
      _
    // Predicated region
    $region58: #{autoencoder_forward.1} parent=1 // pred_check
      _
    $region59: #{autoencoder_forward.1} parent=1 // pred_check_branch
      %121 = sbr.rel (0) target = $region61
    $region60: #{autoencoder_forward.1} parent=1 // pred_region
      _
    $region61: #{autoencoder_forward.1} parent=1 // pred_fallthru
      _
    // Predicated region
    $region62: #{autoencoder_forward.1} parent=1 // pred_check
      _
    $region63: #{autoencoder_forward.1} parent=1 // pred_check_branch
      %123 = sbr.rel (0) target = $region65
    $region64: #{autoencoder_forward.1} parent=1 // pred_region
      _
    $region65: #{autoencoder_forward.1} parent=1 // pred_fallthru
      _
    // Predicated region
    $region66: #{autoencoder_forward.1} parent=1 // pred_check
      _
    $region67: #{autoencoder_forward.1} parent=1 // pred_check_branch
      %125 = sbr.rel (0) target = $region69
    $region68: #{autoencoder_forward.1} parent=1 // pred_region
      _
    $region69: #{autoencoder_forward.1} parent=1 // pred_fallthru
      _
    // Predicated region
    $region70: #{autoencoder_forward.1} parent=1 // pred_check
      _
    $region71: #{autoencoder_forward.1} parent=1 // pred_check_branch
      %127 = sbr.rel (0) target = $region73
    $region72: #{autoencoder_forward.1} parent=1 // pred_region
      _
    $region73: #{autoencoder_forward.1} parent=1 // pred_fallthru
      _
    // Predicated region
    $region74: #{autoencoder_forward.1} parent=1 // pred_check
      _
    $region75: #{autoencoder_forward.1} parent=1 // pred_check_branch
      %129 = sbr.rel (0) target = $region77
    $region76: #{autoencoder_forward.1} parent=1 // pred_region
      _
    $region77: #{autoencoder_forward.1} parent=1 // pred_fallthru
      _
    // Predicated region
    $region78: #{autoencoder_forward.1} parent=1 // pred_check
      _
    $region79: #{autoencoder_forward.1} parent=1 // pred_check_branch
      %131 = sbr.rel (0) target = $region81
    $region80: #{autoencoder_forward.1} parent=1 // pred_region
      _
    $region81: #{autoencoder_forward.1} parent=1 // pred_fallthru
      _
    // Predicated region
    $region82: #{autoencoder_forward.1} parent=1 // pred_check
      _
    $region83: #{autoencoder_forward.1} parent=1 // pred_check_branch
      %133 = sbr.rel (0) target = $region85
    $region84: #{autoencoder_forward.1} parent=1 // pred_region
      _
    $region85: #{autoencoder_forward.1} parent=1 // pred_fallthru
      _
    // Predicated region
    $region86: #{autoencoder_forward.1} parent=1 // pred_check
      _
    $region87: #{autoencoder_forward.1} parent=1 // pred_check_branch
      %135 = sbr.rel (0) target = $region89
    $region88: #{autoencoder_forward.1} parent=1 // pred_region
      _
    $region89: #{autoencoder_forward.1} parent=1 // pred_fallthru
      _
    // Predicated region
    $region90: #{autoencoder_forward.1} parent=1 // pred_check
      _
    $region91: #{autoencoder_forward.1} parent=1 // pred_check_branch
      %137 = sbr.rel (0) target = $region93
    $region92: #{autoencoder_forward.1} parent=1 // pred_region
      _
    $region93: #{autoencoder_forward.1} parent=1 // pred_fallthru
      _
    // Predicated region
    $region94: #{autoencoder_forward.1} parent=1 // pred_check
      _
    $region95: #{autoencoder_forward.1} parent=1 // pred_check_branch
      %139 = sbr.rel (0) target = $region97
    $region96: #{autoencoder_forward.1} parent=1 // pred_region
      _
    $region97: #{autoencoder_forward.1} parent=1 // pred_fallthru
      _
    // Predicated region
    $region98: #{autoencoder_forward.1} parent=1 // pred_check
      _
    $region99: #{autoencoder_forward.1} parent=1 // pred_check_branch
      %141 = sbr.rel (0) target = $region101
    $region100: #{autoencoder_forward.1} parent=1 // pred_region
      _
    $region101: #{autoencoder_forward.1} parent=1 // pred_fallthru
      _
    // Predicated region
    $region102: #{autoencoder_forward.1} parent=1 // pred_check
      _
    $region103: #{autoencoder_forward.1} parent=1 // pred_check_branch
      %143 = sbr.rel (0) target = $region105
    $region104: #{autoencoder_forward.1} parent=1 // pred_region
      _
    $region105: #{autoencoder_forward.1} parent=1 // pred_fallthru
      _
    // Predicated region
    $region106: #{autoencoder_forward.1} parent=1 // pred_check
      _
    $region107: #{autoencoder_forward.1} parent=1 // pred_check_branch
      %145 = sbr.rel (0) target = $region109
    $region108: #{autoencoder_forward.1} parent=1 // pred_region
      _
    $region109: #{autoencoder_forward.1} parent=1 // pred_fallthru
      _
    // Predicated region
    $region110: #{autoencoder_forward.1} parent=1 // pred_check
      _
    $region111: #{autoencoder_forward.1} parent=1 // pred_check_branch
      %147 = sbr.rel (0) target = $region113
    $region112: #{autoencoder_forward.1} parent=1 // pred_region
      _
    $region113: #{autoencoder_forward.1} parent=1 // pred_fallthru
      _
    // Predicated region
    $region114: #{autoencoder_forward.1} parent=1 // pred_check
      _
    $region115: #{autoencoder_forward.1} parent=1 // pred_check_branch
      %149 = sbr.rel (0) target = $region117
    $region116: #{autoencoder_forward.1} parent=1 // pred_region
      _
    $region117: #{autoencoder_forward.1} parent=1 // pred_fallthru
      _
    // Predicated region
    $region118: #{autoencoder_forward.1} parent=1 // pred_check
      _
    $region119: #{autoencoder_forward.1} parent=1 // pred_check_branch
      %151 = sbr.rel (0) target = $region121
    $region120: #{autoencoder_forward.1} parent=1 // pred_region
      _
    $region121: #{autoencoder_forward.1} parent=1 // pred_fallthru
      _
    // Predicated region
    $region122: #{autoencoder_forward.1} parent=1 // pred_check
      _
    $region123: #{autoencoder_forward.1} parent=1 // pred_check_branch
      %153 = sbr.rel (0) target = $region125
    $region124: #{autoencoder_forward.1} parent=1 // pred_region
      _
    $region125: #{autoencoder_forward.1} parent=1 // pred_fallthru
      _
    // Predicated region
    $region126: #{autoencoder_forward.1} parent=1 // pred_check
      _
    $region127: #{autoencoder_forward.1} parent=1 // pred_check_branch
      %155 = sbr.rel (0) target = $region129
    $region128: #{autoencoder_forward.1} parent=1 // pred_region
      _
    $region129: #{autoencoder_forward.1} parent=1 // pred_fallthru
      _
    // Predicated region
    $region130: #{autoencoder_forward.1} parent=1 // pred_check
      _
    $region131: #{autoencoder_forward.1} parent=1 // pred_check_branch
      %157 = sbr.rel (0) target = $region133
    $region132: #{autoencoder_forward.1} parent=1 // pred_region
      _
    $region133: #{autoencoder_forward.1} parent=1 // pred_fallthru
      _
    // Predicated region
    $region134: #{autoencoder_forward.1} parent=1 // pred_check
      _
    $region135: #{autoencoder_forward.1} parent=1 // pred_check_branch
      %159 = sbr.rel (0) target = $region137
    $region136: #{autoencoder_forward.1} parent=1 // pred_region
      _
    $region137: #{autoencoder_forward.1} parent=1 // pred_fallthru
      _
    // Predicated region
    $region138: #{autoencoder_forward.1} parent=1 // pred_check
      _
    $region139: #{autoencoder_forward.1} parent=1 // pred_check_branch
      %161 = sbr.rel (0) target = $region141
    $region140: #{autoencoder_forward.1} parent=1 // pred_region
      _
    $region141: #{autoencoder_forward.1} parent=1 // pred_fallthru
      _
    // Predicated region
    $region142: #{autoencoder_forward.1} parent=1 // pred_check
      _
    $region143: #{autoencoder_forward.1} parent=1 // pred_check_branch
      %163 = sbr.rel (0) target = $region145
    $region144: #{autoencoder_forward.1} parent=1 // pred_region
      _
    $region145: #{autoencoder_forward.1} parent=1 // pred_fallthru
      _
    // Predicated region
    $region146: #{autoencoder_forward.1} parent=1 // pred_check
      _
    $region147: #{autoencoder_forward.1} parent=1 // pred_check_branch
      %165 = sbr.rel (0) target = $region149
    $region148: #{autoencoder_forward.1} parent=1 // pred_region
      _
    $region149: #{autoencoder_forward.1} parent=1 // pred_fallthru
      _
    %v167 = vld [vmem:[%s3] sm:$0x3]
    %v168 = vld [vmem:[%s3 + $0x2] sm:$0x3]
    %v169 = vld [vmem:[%s9] sm:$0x1]
    %v170 = vld [vmem:[%s11] sm:$0x1]
    %v171 = vld [vmem:[%s13] sm:$0xff]
    %v172 = vld [vmem:[%s13 + $0x8] sm:$0xf]
    %v173 = vld [vmem:[%s13 + $0xc] sm:$0xff]
    %v174 = vld [vmem:[%s13 + $0x14] sm:$0xf]
    %v175 = vld [vmem:[%s13 + $0x18] sm:$0xff]
    %v176 = vld [vmem:[%s13 + $0x20] sm:$0xf]
    %v177 = vld [vmem:[%s13 + $0x24] sm:$0xff]
    %v178 = vld [vmem:[%s13 + $0x2c] sm:$0xf]
    %v179 = vld [vmem:[%s13 + $0x30] sm:$0xff]
    %v180 = vld [vmem:[%s13 + $0x38] sm:$0xf]
    %v181 = vld [vmem:[%s13 + $0x3c] sm:$0xff]
    %v182 = vld [vmem:[%s13 + $0x44] sm:$0xf]
    %v183 = vld [vmem:[%s13 + $0x48] sm:$0xff]
    %v184 = vld [vmem:[%s13 + $0x50] sm:$0xf]
    %v185 = vld [vmem:[%s13 + $0x54] sm:$0xff]
    %v186 = vld [vmem:[%s13 + $0x5c] sm:$0xf]
    %v187 = vld [vmem:[%s13 + $0x60] sm:$0xff]
    %v188 = vld [vmem:[%s13 + $0x68] sm:$0xf]
    %v189 = vld [vmem:[%s13 + $0x6c] sm:$0xff]
    %v190 = vld [vmem:[%s13 + $0x74] sm:$0xf]
    %v191 = vld [vmem:[%s13 + $0x78] sm:$0xff]
    %v192 = vld [vmem:[%s13 + $0x80] sm:$0xf]
    %v193 = vld [vmem:[%s13 + $0x84] sm:$0xff]
    %v194 = vld [vmem:[%s13 + $0x8c] sm:$0xf]
    %v195 = vld [vmem:[%s13 + $0x90] sm:$0xff]
    %v196 = vld [vmem:[%s13 + $0x98] sm:$0xf]
    %v197 = vld [vmem:[%s13 + $0x9c] sm:$0xff]
    %v198 = vld [vmem:[%s13 + $0xa4] sm:$0xf]
    %v199 = vld [vmem:[%s13 + $0xa8] sm:$0xff]
    %v200 = vld [vmem:[%s13 + $0xb0] sm:$0xf]
    %v201 = vld [vmem:[%s13 + $0xb4] sm:$0xff]
    %v202 = vld [vmem:[%s13 + $0xbc] sm:$0xf]
    %v203 = vld [vmem:[%s15] sm:$0x7]
    %v204 = vld [vmem:[%s17] sm:$0xf]
    %v205 = vld [vmem:[%s17 + $0x4] sm:$0xf]
    %v206 = vld [vmem:[%s17 + $0x8] sm:$0xf]
    %v207 = vld [vmem:[%s17 + $0xc] sm:$0xf]
    %v208 = vld [vmem:[%s17 + $0x10] sm:$0xf]
    %v209 = vld [vmem:[%s17 + $0x14] sm:$0xf]
    %v210 = vld [vmem:[%s17 + $0x18] sm:$0xf]
    %v211 = vld [vmem:[%s17 + $0x1c] sm:$0xf]
    %v212 = vld [vmem:[%s17 + $0x20] sm:$0xf]
    %v213 = vld [vmem:[%s17 + $0x24] sm:$0xf]
    %v214 = vld [vmem:[%s17 + $0x28] sm:$0xf]
    %v215 = vld [vmem:[%s17 + $0x2c] sm:$0xf]
    %v216 = vld [vmem:[%s17 + $0x30] sm:$0xf]
    %v217 = vld [vmem:[%s17 + $0x34] sm:$0xf]
    %v218 = vld [vmem:[%s17 + $0x38] sm:$0xf]
    %v219 = vld [vmem:[%s17 + $0x3c] sm:$0xf]
    %v220 = vld [vmem:[%s19] sm:$0x1]
    %v221 = vld [vmem:[%s21] sm:$0x1]
    %v222 = vld [vmem:[%s23] sm:$0x1]
    %v223 = vld [vmem:[%s25] sm:$0xf]
    %v224 = vld [vmem:[%s25 + $0x4] sm:$0xf]
    %v225 = vld [vmem:[%s25 + $0x8] sm:$0xf]
    %v226 = vld [vmem:[%s25 + $0xc] sm:$0xf]
    %v227 = vld [vmem:[%s25 + $0x10] sm:$0xf]
    %v228 = vld [vmem:[%s25 + $0x14] sm:$0xf]
    %v229 = vld [vmem:[%s25 + $0x18] sm:$0xf]
    %v230 = vld [vmem:[%s25 + $0x1c] sm:$0xf]
    %v231 = vld [vmem:[%s25 + $0x20] sm:$0xf]
    %v232 = vld [vmem:[%s25 + $0x24] sm:$0xf]
    %v233 = vld [vmem:[%s25 + $0x28] sm:$0xf]
    %v234 = vld [vmem:[%s25 + $0x2c] sm:$0xf]
    %v235 = vld [vmem:[%s25 + $0x30] sm:$0xf]
    %v236 = vld [vmem:[%s25 + $0x34] sm:$0xf]
    %v237 = vld [vmem:[%s25 + $0x38] sm:$0xf]
    %v238 = vld [vmem:[%s25 + $0x3c] sm:$0xf]
    %v239 = vld [vmem:[%s27] sm:$0x1]
    %v240 = vld [vmem:[%s29] sm:$0xf]
    %v241 = vld [vmem:[%s29 + $0x4] sm:$0xf]
    %v242 = vld [vmem:[%s29 + $0x8] sm:$0xf]
    %v243 = vld [vmem:[%s29 + $0xc] sm:$0xf]
    %v244 = vld [vmem:[%s29 + $0x10] sm:$0xf]
    %v245 = vld [vmem:[%s29 + $0x14] sm:$0xf]
    %v246 = vld [vmem:[%s29 + $0x18] sm:$0xf]
    %v247 = vld [vmem:[%s29 + $0x1c] sm:$0xf]
    %v248 = vld [vmem:[%s29 + $0x20] sm:$0xf]
    %v249 = vld [vmem:[%s29 + $0x24] sm:$0xf]
    %v250 = vld [vmem:[%s29 + $0x28] sm:$0xf]
    %v251 = vld [vmem:[%s29 + $0x2c] sm:$0xf]
    %v252 = vld [vmem:[%s29 + $0x30] sm:$0xf]
    %v253 = vld [vmem:[%s29 + $0x34] sm:$0xf]
    %v254 = vld [vmem:[%s29 + $0x38] sm:$0xf]
    %v255 = vld [vmem:[%s29 + $0x3c] sm:$0xf]
    %v256 = vld [vmem:[%s31] sm:$0x1]
    %vm257 = vcmask 1041408
    %v258 = vsel %vm257, %v167, 0.0
    %259 = vadd.xlane.f32.xlu0 %v258
    %v260 = vpop.xlane.xlu0 %259
    %v261 = vsel %vm257, %v168, 0.0
    %262 = vadd.xlane.f32.xlu0 %v261
    %v263 = vpop.xlane.xlu0 %262
    %v264 = vrcp.pop 128.0
    %v265 = vmul.f32 %v260, %v264
    %v266 = vmul.f32 %v263, %v264
    %v267 = vsub.f32 %v167, %v265
    %v268 = vsub.f32 %v168, %v266
    %v269 = vmul.f32 %v267, %v267
    %v270 = vmul.f32 %v268, %v268
    %v271 = vsel %vm257, %v269, 0.0
    %272 = vadd.xlane.f32.xlu0 %v271
    %v273 = vpop.xlane.xlu0 %272
    %v274 = vsel %vm257, %v270, 0.0
    %275 = vadd.xlane.f32.xlu0 %v274
    %v276 = vpop.xlane.xlu0 %275
    %v277 = vmul.f32 %v273, %v264
    %v278 = vmul.f32 %v276, %v264
    %v279 = vadd.f32 %v277, 1e-05
    %v280 = vadd.f32 %v278, 1e-05
    %v281 = vrsqrt.pop %v279
    %v282 = vrsqrt.pop %v280
    %v283 = vmul.f32 %v267, %v281
    %v284 = vmul.f32 %v268, %v282
    %v286 = vlaneseq
    %v287 = vshrl.u32 %v286, 7
    %v288 = vsub.s32 0, %v287
    %v289 = vrot.slane %v169, %v288
    %v291 = vmul.f32 %v283, %v289
    %v292 = vmul.f32 %v284, %v289
    %v294 = vlaneseq
    %v295 = vshrl.u32 %v294, 7
    %v296 = vsub.s32 0, %v295
    %v297 = vrot.slane %v170, %v296
    %v299 = vadd.f32 %v291, %v297
    %v300 = vadd.f32 %v292, %v297
    %v303 = vcombine.low %v299, %v300
    %v305 = vunpack.c.l.s4 1983009808
    %v306 = vunpack.c.0.s8 %v305
    %v307 = vlaneseq
    %v308 = vshrl.u32 %v307, 7
    %v309 = vsub.s32 %v306, %v308
    %v310 = vrot.slane %v303, %v309
    %v312 = vpack.c.bf16 %v310, %v310
    %v314 = vlaneseq
    %v315 = vshrl.u32 %v314, 7
    %v316 = vsub.s32 0, %v315
    %v317 = vrot.slane %v203, %v316
    %v318 = vlaneseq
    %v319 = vshrl.u32 %v318, 7
    %v320 = vsub.s32 1, %v319
    %v321 = vrot.slane %v203, %v320
    %v322 = vlaneseq
    %v323 = vshrl.u32 %v322, 7
    %v324 = vsub.s32 2, %v323
    %v325 = vrot.slane %v203, %v324
    %v361 = vunpack.c.l.b16 %v171
    %v362 = vunpack.c.h.b16 %v171
    %v363 = vunpack.c.l.b16 %v172
    %v364 = vunpack.c.l.b16 %v173
    %v365 = vunpack.c.h.b16 %v173
    %v366 = vunpack.c.l.b16 %v174
    %v367 = vunpack.c.l.b16 %v175
    %v368 = vunpack.c.h.b16 %v175
    %v369 = vunpack.c.l.b16 %v176
    %v370 = vunpack.c.l.b16 %v177
    %v371 = vunpack.c.h.b16 %v177
    %v372 = vunpack.c.l.b16 %v178
    %v373 = vunpack.c.l.b16 %v179
    %v374 = vunpack.c.h.b16 %v179
    %v375 = vunpack.c.l.b16 %v180
    %v376 = vunpack.c.l.b16 %v181
    %v377 = vunpack.c.h.b16 %v181
    %v378 = vunpack.c.l.b16 %v182
    %v379 = vunpack.c.l.b16 %v183
    %v380 = vunpack.c.h.b16 %v183
    %v381 = vunpack.c.l.b16 %v184
    %v382 = vunpack.c.l.b16 %v185
    %v383 = vunpack.c.h.b16 %v185
    %v384 = vunpack.c.l.b16 %v186
    %v385 = vunpack.c.l.b16 %v187
    %v386 = vunpack.c.h.b16 %v187
    %v387 = vunpack.c.l.b16 %v188
    %v388 = vunpack.c.l.b16 %v189
    %v389 = vunpack.c.h.b16 %v189
    %v390 = vunpack.c.l.b16 %v190
    %v391 = vunpack.c.l.b16 %v191
    %v392 = vunpack.c.h.b16 %v191
    %v393 = vunpack.c.l.b16 %v192
    %v394 = vunpack.c.l.b16 %v193
    %v395 = vunpack.c.h.b16 %v193
    %v396 = vunpack.c.l.b16 %v194
    %v397 = vunpack.c.l.b16 %v195
    %v398 = vunpack.c.h.b16 %v195
    %v399 = vunpack.c.l.b16 %v196
    %v400 = vunpack.c.l.b16 %v197
    %v401 = vunpack.c.h.b16 %v197
    %v402 = vunpack.c.l.b16 %v198
    %v403 = vunpack.c.l.b16 %v199
    %v404 = vunpack.c.h.b16 %v199
    %v405 = vunpack.c.l.b16 %v200
    %v406 = vunpack.c.l.b16 %v201
    %v407 = vunpack.c.h.b16 %v201
    %v408 = vunpack.c.l.b16 %v202
    %v409 = vpack.c.b16 %v364, %v361
    %v410 = vpack.c.b16 %v365, %v362
    %v411 = vpack.c.b16 %v366, %v363
    %v412 = vpack.c.b16 %v370, %v367
    %v413 = vpack.c.b16 %v371, %v368
    %v414 = vpack.c.b16 %v372, %v369
    %v415 = vpack.c.b16 %v376, %v373
    %v416 = vpack.c.b16 %v377, %v374
    %v417 = vpack.c.b16 %v378, %v375
    %v418 = vpack.c.b16 %v382, %v379
    %v419 = vpack.c.b16 %v383, %v380
    %v420 = vpack.c.b16 %v384, %v381
    %v421 = vpack.c.b16 %v388, %v385
    %v422 = vpack.c.b16 %v389, %v386
    %v423 = vpack.c.b16 %v390, %v387
    %v424 = vpack.c.b16 %v394, %v391
    %v425 = vpack.c.b16 %v395, %v392
    %v426 = vpack.c.b16 %v396, %v393
    %v427 = vpack.c.b16 %v400, %v397
    %v428 = vpack.c.b16 %v401, %v398
    %v429 = vpack.c.b16 %v402, %v399
    %v430 = vpack.c.b16 %v406, %v403
    %v431 = vpack.c.b16 %v407, %v404
    %v432 = vpack.c.b16 %v408, %v405
    %457 = vmatprep.subr.bf16.mxu0 %v410
    %458 = vmatpush1.bf16.msra.mxu0 %v409
    %459 = vmatprep.subr.bf16.mxu0 %v413
    %460 = vmatpush1.bf16.msra.mxu0 %v412
    %461 = vmatprep.subr.bf16.mxu0 %v416
    %462 = vmatpush1.bf16.msra.mxu0 %v415
    %463 = vmatprep.subr.bf16.mxu0 %v419
    %464 = vmatpush1.bf16.msra.mxu0 %v418
    %465 = vmatprep.subr.bf16.mxu0 %v422
    %466 = vmatpush1.bf16.msra.mxu0 %v421
    %467 = vmatprep.subr.bf16.mxu0 %v425
    %468 = vmatpush1.bf16.msra.mxu0 %v424
    %469 = vmatprep.subr.bf16.mxu0 %v428
    %470 = vmatpush1.bf16.msra.mxu0 %v427
    %471 = vmatprep.subr.bf16.mxu0 %v431
    %472 = vmatpush1.bf16.msra.mxu0 %v430
    %473 = vmatprep.subr.bf16.mxu0 0
    %474 = vmatpush1.bf16.msra.mxu0 0
    %475 = vmatprep.subr.bf16.mxu0 0
    %476 = vmatpush1.bf16.msra.mxu0 0
    %477 = vmatprep.subr.bf16.mxu0 0
    %478 = vmatpush1.bf16.msra.mxu0 0
    %479 = vmatprep.subr.bf16.mxu0 0
    %480 = vmatpush1.bf16.msra.mxu0 0
    %481 = vmatprep.subr.bf16.mxu0 0
    %482 = vmatpush1.bf16.msra.mxu0 0
    %483 = vmatprep.subr.bf16.mxu0 0
    %484 = vmatpush1.bf16.msra.mxu0 0
    %485 = vmatprep.subr.bf16.mxu0 0
    %486 = vmatpush1.bf16.msra.mxu0 0
    %487 = vmatprep.subr.bf16.mxu0 0
    %488 = vmatpush1.bf16.msra.mxu0 0
    %489 = vmatprep.mubr.bf16.mxu0 0
    %490 = vmatmul.mubr.bf16.gmra.mrb[0].mxu0 %v312
    %v491 = vpop.f32.mrb[0].mxu0
    %v492 = vadd.f32 %v317, %v491
    %v493 = vpop.f32.mrb[0].mxu0
    %v494 = vadd.f32 %v321, %v493
    %v495 = vpop.f32.mrb[0].mxu0
    %v496 = vpop.f32.mrb[0].mxu0
    %497 = vdwg.mxu0
    %498 = vmatprep.subr.bf16.mxu0 0
    %499 = vmatpush1.bf16.msra.mxu0 %v411
    %500 = vmatprep.subr.bf16.mxu0 0
    %501 = vmatpush1.bf16.msra.mxu0 %v414
    %502 = vmatprep.subr.bf16.mxu0 0
    %503 = vmatpush1.bf16.msra.mxu0 %v417
    %504 = vmatprep.subr.bf16.mxu0 0
    %505 = vmatpush1.bf16.msra.mxu0 %v420
    %506 = vmatprep.subr.bf16.mxu0 0
    %507 = vmatpush1.bf16.msra.mxu0 %v423
    %508 = vmatprep.subr.bf16.mxu0 0
    %509 = vmatpush1.bf16.msra.mxu0 %v426
    %510 = vmatprep.subr.bf16.mxu0 0
    %511 = vmatpush1.bf16.msra.mxu0 %v429
    %512 = vmatprep.subr.bf16.mxu0 0
    %513 = vmatpush1.bf16.msra.mxu0 %v432
    %514 = vmatprep.subr.bf16.mxu0 0
    %515 = vmatpush1.bf16.msra.mxu0 0
    %516 = vmatprep.subr.bf16.mxu0 0
    %517 = vmatpush1.bf16.msra.mxu0 0
    %518 = vmatprep.subr.bf16.mxu0 0
    %519 = vmatpush1.bf16.msra.mxu0 0
    %520 = vmatprep.subr.bf16.mxu0 0
    %521 = vmatpush1.bf16.msra.mxu0 0
    %522 = vmatprep.subr.bf16.mxu0 0
    %523 = vmatpush1.bf16.msra.mxu0 0
    %524 = vmatprep.subr.bf16.mxu0 0
    %525 = vmatpush1.bf16.msra.mxu0 0
    %526 = vmatprep.subr.bf16.mxu0 0
    %527 = vmatpush1.bf16.msra.mxu0 0
    %528 = vmatprep.subr.bf16.mxu0 0
    %529 = vmatpush1.bf16.msra.mxu0 0
    %530 = vmatprep.mubr.bf16.mxu0 0
    %531 = vmatmul.mubr.bf16.gmra.mrb[0].mxu0 %v312
    %v532 = vpop.f32.mrb[0].mxu0
    %v533 = vadd.f32 %v325, %v532
    %v534 = vpop.f32.mrb[0].mxu0
    %v535 = vpop.f32.mrb[0].mxu0
    %v536 = vpop.f32.mrb[0].mxu0
    %537 = vdwg.mxu0
    %v541 = vcombine.low %v492, %v494
    %v543 = vunpack.c.l.s4 1983009808
    %v544 = vunpack.c.0.s8 %v543
    %v545 = vlaneseq
    %v546 = vshrl.u32 %v545, 7
    %v547 = vsub.s32 %v544, %v546
    %v548 = vrot.slane %v541, %v547
    %v550 = vunpack.c.l.s4 1983009808
    %v551 = vunpack.c.0.s8 %v550
    %v552 = vlaneseq
    %v553 = vshrl.u32 %v552, 7
    %v554 = vsub.s32 %v551, %v553
    %v555 = vrot.slane %v533, %v554
    %v556 = vcombine.low %v548, %v555
    %v557 = vcombine.high %v548, %v555
    %v560 = vpack.c.bf16 %v556, %v556
    %v561 = vpack.c.bf16 %v557, %v557
    %v563 = vunpack.c.l.s4 1983009808
    %v564 = vunpack.c.0.s8 %v563
    %v565 = vlaneseq
    %v566 = vshrl.u32 %v565, 7
    %v567 = vsub.s32 %v564, %v566
    %v568 = vrot.slane %v556, %v567
    %v569 = vcombine.high %v568, %v568
    %v571 = vunpack.c.l.s4 1983009808
    %v572 = vunpack.c.0.s8 %v571
    %v573 = vlaneseq
    %v574 = vshrl.u32 %v573, 7
    %v575 = vsub.s32 %v572, %v574
    %v576 = vrot.slane %v557, %v575
    %v577 = vcombine.high %v576, %v576
    %v580 = vpack.c.bf16 %v569, %v569
    %v581 = vpack.c.bf16 %v577, %v577
    %v582 = vcombine.high %v556, %v556
    %v584 = vunpack.c.l.s4 1983009808
    %v585 = vunpack.c.0.s8 %v584
    %v586 = vlaneseq
    %v587 = vshrl.u32 %v586, 7
    %v588 = vsub.s32 %v585, %v587
    %v589 = vrot.slane %v582, %v588
    %v590 = vcombine.high %v557, %v557
    %v592 = vunpack.c.l.s4 1983009808
    %v593 = vunpack.c.0.s8 %v592
    %v594 = vlaneseq
    %v595 = vshrl.u32 %v594, 7
    %v596 = vsub.s32 %v593, %v595
    %v597 = vrot.slane %v590, %v596
    %v600 = vpack.c.bf16 %v589, %v589
    %v601 = vpack.c.bf16 %v597, %v597
    %vm602 = vcmask 261120
    %v604 = vsel %vm602, %v560, 0
    %v607 = vsel %vm602, %v580, 0
    %609 = vmatprep.subr.bf16.mxu0 0
    %610 = vmatpush1.bf16.xpose.msra.mxu0 %v607
    %611 = vmatprep.subr.bf16.mxu0 0
    %612 = vmatpush1.bf16.xpose.msra.mxu0 0
    %613 = vmatprep.subr.bf16.mxu0 0
    %614 = vmatpush1.bf16.xpose.msra.mxu0 0
    %615 = vmatprep.subr.bf16.mxu0 0
    %616 = vmatpush1.bf16.xpose.msra.mxu0 0
    %617 = vmatprep.subr.bf16.mxu0 0
    %618 = vmatpush1.bf16.xpose.msra.mxu0 0
    %619 = vmatprep.subr.bf16.mxu0 0
    %620 = vmatpush1.bf16.xpose.msra.mxu0 0
    %621 = vmatprep.subr.bf16.mxu0 0
    %622 = vmatpush1.bf16.xpose.msra.mxu0 0
    %623 = vmatprep.subr.bf16.mxu0 0
    %624 = vmatpush1.bf16.xpose.msra.mxu0 0
    %625 = vmatprep.subr.bf16.mxu0 0
    %626 = vmatpush1.bf16.xpose.msra.mxu0 0
    %627 = vmatprep.subr.bf16.mxu0 0
    %628 = vmatpush1.bf16.xpose.msra.mxu0 0
    %629 = vmatprep.subr.bf16.mxu0 0
    %630 = vmatpush1.bf16.xpose.msra.mxu0 0
    %631 = vmatprep.subr.bf16.mxu0 0
    %632 = vmatpush1.bf16.xpose.msra.mxu0 0
    %633 = vmatprep.subr.bf16.mxu0 0
    %634 = vmatpush1.bf16.xpose.msra.mxu0 0
    %635 = vmatprep.subr.bf16.mxu0 0
    %636 = vmatpush1.bf16.xpose.msra.mxu0 0
    %637 = vmatprep.subr.bf16.mxu0 0
    %638 = vmatpush1.bf16.xpose.msra.mxu0 0
    %639 = vmatprep.subr.bf16.mxu0 0
    %640 = vmatpush1.bf16.xpose.msra.mxu0 0
    %641 = vmatprep.mubr.bf16.mxu0 0
    %642 = vmatmul.mubr.bf16.gmra.mrb[0].mxu0 %v604
    %v643 = vpop.f32.mrb[0].mxu0
    %v644 = vadd.f32 0.0, %v643
    %v645 = vpop.f32.mrb[0].mxu0
    %v646 = vpop.f32.mrb[0].mxu0
    %v647 = vpop.f32.mrb[0].mxu0
    %648 = vdwg.mxu0
    %v650 = vsel %vm602, %v561, 0
    %v653 = vsel %vm602, %v581, 0
    %655 = vmatprep.subr.bf16.mxu0 0
    %656 = vmatpush1.bf16.xpose.msra.mxu0 %v653
    %657 = vmatprep.subr.bf16.mxu0 0
    %658 = vmatpush1.bf16.xpose.msra.mxu0 0
    %659 = vmatprep.subr.bf16.mxu0 0
    %660 = vmatpush1.bf16.xpose.msra.mxu0 0
    %661 = vmatprep.subr.bf16.mxu0 0
    %662 = vmatpush1.bf16.xpose.msra.mxu0 0
    %663 = vmatprep.subr.bf16.mxu0 0
    %664 = vmatpush1.bf16.xpose.msra.mxu0 0
    %665 = vmatprep.subr.bf16.mxu0 0
    %666 = vmatpush1.bf16.xpose.msra.mxu0 0
    %667 = vmatprep.subr.bf16.mxu0 0
    %668 = vmatpush1.bf16.xpose.msra.mxu0 0
    %669 = vmatprep.subr.bf16.mxu0 0
    %670 = vmatpush1.bf16.xpose.msra.mxu0 0
    %671 = vmatprep.subr.bf16.mxu0 0
    %672 = vmatpush1.bf16.xpose.msra.mxu0 0
    %673 = vmatprep.subr.bf16.mxu0 0
    %674 = vmatpush1.bf16.xpose.msra.mxu0 0
    %675 = vmatprep.subr.bf16.mxu0 0
    %676 = vmatpush1.bf16.xpose.msra.mxu0 0
    %677 = vmatprep.subr.bf16.mxu0 0
    %678 = vmatpush1.bf16.xpose.msra.mxu0 0
    %679 = vmatprep.subr.bf16.mxu0 0
    %680 = vmatpush1.bf16.xpose.msra.mxu0 0
    %681 = vmatprep.subr.bf16.mxu0 0
    %682 = vmatpush1.bf16.xpose.msra.mxu0 0
    %683 = vmatprep.subr.bf16.mxu0 0
    %684 = vmatpush1.bf16.xpose.msra.mxu0 0
    %685 = vmatprep.subr.bf16.mxu0 0
    %686 = vmatpush1.bf16.xpose.msra.mxu0 0
    %687 = vmatprep.mubr.bf16.mxu0 0
    %688 = vmatmul.mubr.bf16.gmra.mrb[0].mxu0 %v650
    %v689 = vpop.f32.mrb[0].mxu0
    %v690 = vadd.f32 0.0, %v689
    %v691 = vpop.f32.mrb[0].mxu0
    %v692 = vpop.f32.mrb[0].mxu0
    %v693 = vpop.f32.mrb[0].mxu0
    %694 = vdwg.mxu0
    %v695 = vmul.f32 %v644, 0.17677669
    %v696 = vmul.f32 %v690, 0.17677669
    %vm697 = vcmask 9216
    %v698 = vsel %vm697, %v695, -inf
    %699 = vmax.xlane.f32.xlu0 %v698
    %v700 = vpop.xlane.xlu0 %699
    %v701 = vsel %vm697, %v696, -inf
    %702 = vmax.xlane.f32.xlu0 %v701
    %v703 = vpop.xlane.xlu0 %702
    %v704 = vsub.f32 %v695, %v700
    %v705 = vsub.f32 %v696, %v703
    %v706 = vmul.f32 %v704, 1.442695
    %v707 = vpow.pop %v706
    %v708 = vmul.f32 %v705, 1.442695
    %v709 = vpow.pop %v708
    %v710 = vsel %vm697, %v707, 0.0
    %711 = vadd.xlane.f32.xlu0 %v710
    %v712 = vpop.xlane.xlu0 %711
    %v713 = vsel %vm697, %v709, 0.0
    %714 = vadd.xlane.f32.xlu0 %v713
    %v715 = vpop.xlane.xlu0 %714
    %v716 = vrcp.pop %v712
    %v717 = vrcp.pop %v715
    %v718 = vmul.f32 %v707, %v716
    %v719 = vmul.f32 %v709, %v717
    %v720 = vpack.c.bf16 %v718, %v718
    %v721 = vpack.c.bf16 %v719, %v719
    %vm722 = vcmask 15360
    %v724 = vsel %vm722, %v720, 0
    %vm726 = vcmask 1040384
    %v728 = vsel %vm726, %v600, 0
    %730 = vmatprep.subr.bf16.mxu0 0
    %731 = vmatpush1.bf16.msra.mxu0 %v728
    %732 = vmatprep.subr.bf16.mxu0 0
    %733 = vmatpush1.bf16.msra.mxu0 0
    %734 = vmatprep.subr.bf16.mxu0 0
    %735 = vmatpush1.bf16.msra.mxu0 0
    %736 = vmatprep.subr.bf16.mxu0 0
    %737 = vmatpush1.bf16.msra.mxu0 0
    %738 = vmatprep.subr.bf16.mxu0 0
    %739 = vmatpush1.bf16.msra.mxu0 0
    %740 = vmatprep.subr.bf16.mxu0 0
    %741 = vmatpush1.bf16.msra.mxu0 0
    %742 = vmatprep.subr.bf16.mxu0 0
    %743 = vmatpush1.bf16.msra.mxu0 0
    %744 = vmatprep.subr.bf16.mxu0 0
    %745 = vmatpush1.bf16.msra.mxu0 0
    %746 = vmatprep.subr.bf16.mxu0 0
    %747 = vmatpush1.bf16.msra.mxu0 0
    %748 = vmatprep.subr.bf16.mxu0 0
    %749 = vmatpush1.bf16.msra.mxu0 0
    %750 = vmatprep.subr.bf16.mxu0 0
    %751 = vmatpush1.bf16.msra.mxu0 0
    %752 = vmatprep.subr.bf16.mxu0 0
    %753 = vmatpush1.bf16.msra.mxu0 0
    %754 = vmatprep.subr.bf16.mxu0 0
    %755 = vmatpush1.bf16.msra.mxu0 0
    %756 = vmatprep.subr.bf16.mxu0 0
    %757 = vmatpush1.bf16.msra.mxu0 0
    %758 = vmatprep.subr.bf16.mxu0 0
    %759 = vmatpush1.bf16.msra.mxu0 0
    %760 = vmatprep.subr.bf16.mxu0 0
    %761 = vmatpush1.bf16.msra.mxu0 0
    %762 = vmatprep.mubr.bf16.mxu0 0
    %763 = vmatmul.mubr.bf16.gmra.mrb[0].mxu0 %v724
    %v764 = vpop.f32.mrb[0].mxu0
    %v765 = vadd.f32 0.0, %v764
    %v766 = vpop.f32.mrb[0].mxu0
    %v767 = vpop.f32.mrb[0].mxu0
    %v768 = vpop.f32.mrb[0].mxu0
    %769 = vdwg.mxu0
    %v771 = vsel %vm722, %v721, 0
    %v774 = vsel %vm726, %v601, 0
    %776 = vmatprep.subr.bf16.mxu0 0
    %777 = vmatpush1.bf16.msra.mxu0 %v774
    %778 = vmatprep.subr.bf16.mxu0 0
    %779 = vmatpush1.bf16.msra.mxu0 0
    %780 = vmatprep.subr.bf16.mxu0 0
    %781 = vmatpush1.bf16.msra.mxu0 0
    %782 = vmatprep.subr.bf16.mxu0 0
    %783 = vmatpush1.bf16.msra.mxu0 0
    %784 = vmatprep.subr.bf16.mxu0 0
    %785 = vmatpush1.bf16.msra.mxu0 0
    %786 = vmatprep.subr.bf16.mxu0 0
    %787 = vmatpush1.bf16.msra.mxu0 0
    %788 = vmatprep.subr.bf16.mxu0 0
    %789 = vmatpush1.bf16.msra.mxu0 0
    %790 = vmatprep.subr.bf16.mxu0 0
    %791 = vmatpush1.bf16.msra.mxu0 0
    %792 = vmatprep.subr.bf16.mxu0 0
    %793 = vmatpush1.bf16.msra.mxu0 0
    %794 = vmatprep.subr.bf16.mxu0 0
    %795 = vmatpush1.bf16.msra.mxu0 0
    %796 = vmatprep.subr.bf16.mxu0 0
    %797 = vmatpush1.bf16.msra.mxu0 0
    %798 = vmatprep.subr.bf16.mxu0 0
    %799 = vmatpush1.bf16.msra.mxu0 0
    %800 = vmatprep.subr.bf16.mxu0 0
    %801 = vmatpush1.bf16.msra.mxu0 0
    %802 = vmatprep.subr.bf16.mxu0 0
    %803 = vmatpush1.bf16.msra.mxu0 0
    %804 = vmatprep.subr.bf16.mxu0 0
    %805 = vmatpush1.bf16.msra.mxu0 0
    %806 = vmatprep.subr.bf16.mxu0 0
    %807 = vmatpush1.bf16.msra.mxu0 0
    %808 = vmatprep.mubr.bf16.mxu0 0
    %809 = vmatmul.mubr.bf16.gmra.mrb[0].mxu0 %v771
    %v810 = vpop.f32.mrb[0].mxu0
    %v811 = vadd.f32 0.0, %v810
    %v812 = vpop.f32.mrb[0].mxu0
    %v813 = vpop.f32.mrb[0].mxu0
    %v814 = vpop.f32.mrb[0].mxu0
    %815 = vdwg.mxu0
    %816 = vrot.lane.b32.xlu0 %v569, 96
    %v817 = vpop.permute.xlu0 %816
    %818 = vrot.lane.b32.xlu0 %v577, 96
    %v819 = vpop.permute.xlu0 %818
    %v822 = vpack.c.bf16 %v817, %v817
    %v823 = vpack.c.bf16 %v819, %v819
    %824 = vrot.lane.b32.xlu0 %v589, 96
    %v825 = vpop.permute.xlu0 %824
    %826 = vrot.lane.b32.xlu0 %v597, 96
    %v827 = vpop.permute.xlu0 %826
    %v830 = vpack.c.bf16 %v825, %v825
    %v831 = vpack.c.bf16 %v827, %v827
    %833 = vrot.lane.b32.xlu0 %v560, 96
    %v834 = vpop.permute.xlu0 %833
    %v836 = vsel %vm602, %v834, 0
    %v839 = vsel %vm602, %v822, 0
    %841 = vmatprep.subr.bf16.mxu0 0
    %842 = vmatpush1.bf16.xpose.msra.mxu0 %v839
    %843 = vmatprep.subr.bf16.mxu0 0
    %844 = vmatpush1.bf16.xpose.msra.mxu0 0
    %845 = vmatprep.subr.bf16.mxu0 0
    %846 = vmatpush1.bf16.xpose.msra.mxu0 0
    %847 = vmatprep.subr.bf16.mxu0 0
    %848 = vmatpush1.bf16.xpose.msra.mxu0 0
    %849 = vmatprep.subr.bf16.mxu0 0
    %850 = vmatpush1.bf16.xpose.msra.mxu0 0
    %851 = vmatprep.subr.bf16.mxu0 0
    %852 = vmatpush1.bf16.xpose.msra.mxu0 0
    %853 = vmatprep.subr.bf16.mxu0 0
    %854 = vmatpush1.bf16.xpose.msra.mxu0 0
    %855 = vmatprep.subr.bf16.mxu0 0
    %856 = vmatpush1.bf16.xpose.msra.mxu0 0
    %857 = vmatprep.subr.bf16.mxu0 0
    %858 = vmatpush1.bf16.xpose.msra.mxu0 0
    %859 = vmatprep.subr.bf16.mxu0 0
    %860 = vmatpush1.bf16.xpose.msra.mxu0 0
    %861 = vmatprep.subr.bf16.mxu0 0
    %862 = vmatpush1.bf16.xpose.msra.mxu0 0
    %863 = vmatprep.subr.bf16.mxu0 0
    %864 = vmatpush1.bf16.xpose.msra.mxu0 0
    %865 = vmatprep.subr.bf16.mxu0 0
    %866 = vmatpush1.bf16.xpose.msra.mxu0 0
    %867 = vmatprep.subr.bf16.mxu0 0
    %868 = vmatpush1.bf16.xpose.msra.mxu0 0
    %869 = vmatprep.subr.bf16.mxu0 0
    %870 = vmatpush1.bf16.xpose.msra.mxu0 0
    %871 = vmatprep.subr.bf16.mxu0 0
    %872 = vmatpush1.bf16.xpose.msra.mxu0 0
    %873 = vmatprep.mubr.bf16.mxu0 0
    %874 = vmatmul.mubr.bf16.gmra.mrb[0].mxu0 %v836
    %v875 = vpop.f32.mrb[0].mxu0
    %v876 = vadd.f32 0.0, %v875
    %v877 = vpop.f32.mrb[0].mxu0
    %v878 = vpop.f32.mrb[0].mxu0
    %v879 = vpop.f32.mrb[0].mxu0
    %880 = vdwg.mxu0
    %882 = vrot.lane.b32.xlu0 %v561, 96
    %v883 = vpop.permute.xlu0 %882
    %v885 = vsel %vm602, %v883, 0
    %v888 = vsel %vm602, %v823, 0
    %890 = vmatprep.subr.bf16.mxu0 0
    %891 = vmatpush1.bf16.xpose.msra.mxu0 %v888
    %892 = vmatprep.subr.bf16.mxu0 0
    %893 = vmatpush1.bf16.xpose.msra.mxu0 0
    %894 = vmatprep.subr.bf16.mxu0 0
    %895 = vmatpush1.bf16.xpose.msra.mxu0 0
    %896 = vmatprep.subr.bf16.mxu0 0
    %897 = vmatpush1.bf16.xpose.msra.mxu0 0
    %898 = vmatprep.subr.bf16.mxu0 0
    %899 = vmatpush1.bf16.xpose.msra.mxu0 0
    %900 = vmatprep.subr.bf16.mxu0 0
    %901 = vmatpush1.bf16.xpose.msra.mxu0 0
    %902 = vmatprep.subr.bf16.mxu0 0
    %903 = vmatpush1.bf16.xpose.msra.mxu0 0
    %904 = vmatprep.subr.bf16.mxu0 0
    %905 = vmatpush1.bf16.xpose.msra.mxu0 0
    %906 = vmatprep.subr.bf16.mxu0 0
    %907 = vmatpush1.bf16.xpose.msra.mxu0 0
    %908 = vmatprep.subr.bf16.mxu0 0
    %909 = vmatpush1.bf16.xpose.msra.mxu0 0
    %910 = vmatprep.subr.bf16.mxu0 0
    %911 = vmatpush1.bf16.xpose.msra.mxu0 0
    %912 = vmatprep.subr.bf16.mxu0 0
    %913 = vmatpush1.bf16.xpose.msra.mxu0 0
    %914 = vmatprep.subr.bf16.mxu0 0
    %915 = vmatpush1.bf16.xpose.msra.mxu0 0
    %916 = vmatprep.subr.bf16.mxu0 0
    %917 = vmatpush1.bf16.xpose.msra.mxu0 0
    %918 = vmatprep.subr.bf16.mxu0 0
    %919 = vmatpush1.bf16.xpose.msra.mxu0 0
    %920 = vmatprep.subr.bf16.mxu0 0
    %921 = vmatpush1.bf16.xpose.msra.mxu0 0
    %922 = vmatprep.mubr.bf16.mxu0 0
    %923 = vmatmul.mubr.bf16.gmra.mrb[0].mxu0 %v885
    %v924 = vpop.f32.mrb[0].mxu0
    %v925 = vadd.f32 0.0, %v924
    %v926 = vpop.f32.mrb[0].mxu0
    %v927 = vpop.f32.mrb[0].mxu0
    %v928 = vpop.f32.mrb[0].mxu0
    %929 = vdwg.mxu0
    %v930 = vmul.f32 %v876, 0.17677669
    %v931 = vmul.f32 %v925, 0.17677669
    %v932 = vsel %vm697, %v930, -inf
    %933 = vmax.xlane.f32.xlu0 %v932
    %v934 = vpop.xlane.xlu0 %933
    %v935 = vsel %vm697, %v931, -inf
    %936 = vmax.xlane.f32.xlu0 %v935
    %v937 = vpop.xlane.xlu0 %936
    %v938 = vsub.f32 %v930, %v934
    %v939 = vsub.f32 %v931, %v937
    %v940 = vmul.f32 %v938, 1.442695
    %v941 = vpow.pop %v940
    %v942 = vmul.f32 %v939, 1.442695
    %v943 = vpow.pop %v942
    %v944 = vsel %vm697, %v941, 0.0
    %945 = vadd.xlane.f32.xlu0 %v944
    %v946 = vpop.xlane.xlu0 %945
    %v947 = vsel %vm697, %v943, 0.0
    %948 = vadd.xlane.f32.xlu0 %v947
    %v949 = vpop.xlane.xlu0 %948
    %v950 = vrcp.pop %v946
    %v951 = vrcp.pop %v949
    %v952 = vmul.f32 %v941, %v950
    %v953 = vmul.f32 %v943, %v951
    %v954 = vpack.c.bf16 %v952, %v952
    %v955 = vpack.c.bf16 %v953, %v953
    %v957 = vsel %vm722, %v954, 0
    %v960 = vsel %vm726, %v830, 0
    %962 = vmatprep.subr.bf16.mxu0 0
    %963 = vmatpush1.bf16.msra.mxu0 %v960
    %964 = vmatprep.subr.bf16.mxu0 0
    %965 = vmatpush1.bf16.msra.mxu0 0
    %966 = vmatprep.subr.bf16.mxu0 0
    %967 = vmatpush1.bf16.msra.mxu0 0
    %968 = vmatprep.subr.bf16.mxu0 0
    %969 = vmatpush1.bf16.msra.mxu0 0
    %970 = vmatprep.subr.bf16.mxu0 0
    %971 = vmatpush1.bf16.msra.mxu0 0
    %972 = vmatprep.subr.bf16.mxu0 0
    %973 = vmatpush1.bf16.msra.mxu0 0
    %974 = vmatprep.subr.bf16.mxu0 0
    %975 = vmatpush1.bf16.msra.mxu0 0
    %976 = vmatprep.subr.bf16.mxu0 0
    %977 = vmatpush1.bf16.msra.mxu0 0
    %978 = vmatprep.subr.bf16.mxu0 0
    %979 = vmatpush1.bf16.msra.mxu0 0
    %980 = vmatprep.subr.bf16.mxu0 0
    %981 = vmatpush1.bf16.msra.mxu0 0
    %982 = vmatprep.subr.bf16.mxu0 0
    %983 = vmatpush1.bf16.msra.mxu0 0
    %984 = vmatprep.subr.bf16.mxu0 0
    %985 = vmatpush1.bf16.msra.mxu0 0
    %986 = vmatprep.subr.bf16.mxu0 0
    %987 = vmatpush1.bf16.msra.mxu0 0
    %988 = vmatprep.subr.bf16.mxu0 0
    %989 = vmatpush1.bf16.msra.mxu0 0
    %990 = vmatprep.subr.bf16.mxu0 0
    %991 = vmatpush1.bf16.msra.mxu0 0
    %992 = vmatprep.subr.bf16.mxu0 0
    %993 = vmatpush1.bf16.msra.mxu0 0
    %994 = vmatprep.mubr.bf16.mxu0 0
    %995 = vmatmul.mubr.bf16.gmra.mrb[0].mxu0 %v957
    %v996 = vpop.f32.mrb[0].mxu0
    %v997 = vadd.f32 0.0, %v996
    %v998 = vpop.f32.mrb[0].mxu0
    %v999 = vpop.f32.mrb[0].mxu0
    %v1000 = vpop.f32.mrb[0].mxu0
    %1001 = vdwg.mxu0
    %v1003 = vsel %vm722, %v955, 0
    %v1006 = vsel %vm726, %v831, 0
    %1008 = vmatprep.subr.bf16.mxu0 0
    %1009 = vmatpush1.bf16.msra.mxu0 %v1006
    %1010 = vmatprep.subr.bf16.mxu0 0
    %1011 = vmatpush1.bf16.msra.mxu0 0
    %1012 = vmatprep.subr.bf16.mxu0 0
    %1013 = vmatpush1.bf16.msra.mxu0 0
    %1014 = vmatprep.subr.bf16.mxu0 0
    %1015 = vmatpush1.bf16.msra.mxu0 0
    %1016 = vmatprep.subr.bf16.mxu0 0
    %1017 = vmatpush1.bf16.msra.mxu0 0
    %1018 = vmatprep.subr.bf16.mxu0 0
    %1019 = vmatpush1.bf16.msra.mxu0 0
    %1020 = vmatprep.subr.bf16.mxu0 0
    %1021 = vmatpush1.bf16.msra.mxu0 0
    %1022 = vmatprep.subr.bf16.mxu0 0
    %1023 = vmatpush1.bf16.msra.mxu0 0
    %1024 = vmatprep.subr.bf16.mxu0 0
    %1025 = vmatpush1.bf16.msra.mxu0 0
    %1026 = vmatprep.subr.bf16.mxu0 0
    %1027 = vmatpush1.bf16.msra.mxu0 0
    %1028 = vmatprep.subr.bf16.mxu0 0
    %1029 = vmatpush1.bf16.msra.mxu0 0
    %1030 = vmatprep.subr.bf16.mxu0 0
    %1031 = vmatpush1.bf16.msra.mxu0 0
    %1032 = vmatprep.subr.bf16.mxu0 0
    %1033 = vmatpush1.bf16.msra.mxu0 0
    %1034 = vmatprep.subr.bf16.mxu0 0
    %1035 = vmatpush1.bf16.msra.mxu0 0
    %1036 = vmatprep.subr.bf16.mxu0 0
    %1037 = vmatpush1.bf16.msra.mxu0 0
    %1038 = vmatprep.subr.bf16.mxu0 0
    %1039 = vmatpush1.bf16.msra.mxu0 0
    %1040 = vmatprep.mubr.bf16.mxu0 0
    %1041 = vmatmul.mubr.bf16.gmra.mrb[0].mxu0 %v1003
    %v1042 = vpop.f32.mrb[0].mxu0
    %v1043 = vadd.f32 0.0, %v1042
    %v1044 = vpop.f32.mrb[0].mxu0
    %v1045 = vpop.f32.mrb[0].mxu0
    %v1046 = vpop.f32.mrb[0].mxu0
    %1047 = vdwg.mxu0
    %1048 = vrot.lane.b32.xlu0 %v569, 64
    %v1049 = vpop.permute.xlu0 %1048
    %1050 = vrot.lane.b32.xlu0 %v577, 64
    %v1051 = vpop.permute.xlu0 %1050
    %v1054 = vpack.c.bf16 %v1049, %v1049
    %v1055 = vpack.c.bf16 %v1051, %v1051
    %1056 = vrot.lane.b32.xlu0 %v589, 64
    %v1057 = vpop.permute.xlu0 %1056
    %1058 = vrot.lane.b32.xlu0 %v597, 64
    %v1059 = vpop.permute.xlu0 %1058
    %v1062 = vpack.c.bf16 %v1057, %v1057
    %v1063 = vpack.c.bf16 %v1059, %v1059
    %1064 = vrot.lane.b32.xlu0 %v560, 64
    %v1065 = vpop.permute.xlu0 %1064
    %v1067 = vsel %vm602, %v1065, 0
    %v1070 = vsel %vm602, %v1054, 0
    %1072 = vmatprep.subr.bf16.mxu0 0
    %1073 = vmatpush1.bf16.xpose.msra.mxu0 %v1070
    %1074 = vmatprep.subr.bf16.mxu0 0
    %1075 = vmatpush1.bf16.xpose.msra.mxu0 0
    %1076 = vmatprep.subr.bf16.mxu0 0
    %1077 = vmatpush1.bf16.xpose.msra.mxu0 0
    %1078 = vmatprep.subr.bf16.mxu0 0
    %1079 = vmatpush1.bf16.xpose.msra.mxu0 0
    %1080 = vmatprep.subr.bf16.mxu0 0
    %1081 = vmatpush1.bf16.xpose.msra.mxu0 0
    %1082 = vmatprep.subr.bf16.mxu0 0
    %1083 = vmatpush1.bf16.xpose.msra.mxu0 0
    %1084 = vmatprep.subr.bf16.mxu0 0
    %1085 = vmatpush1.bf16.xpose.msra.mxu0 0
    %1086 = vmatprep.subr.bf16.mxu0 0
    %1087 = vmatpush1.bf16.xpose.msra.mxu0 0
    %1088 = vmatprep.subr.bf16.mxu0 0
    %1089 = vmatpush1.bf16.xpose.msra.mxu0 0
    %1090 = vmatprep.subr.bf16.mxu0 0
    %1091 = vmatpush1.bf16.xpose.msra.mxu0 0
    %1092 = vmatprep.subr.bf16.mxu0 0
    %1093 = vmatpush1.bf16.xpose.msra.mxu0 0
    %1094 = vmatprep.subr.bf16.mxu0 0
    %1095 = vmatpush1.bf16.xpose.msra.mxu0 0
    %1096 = vmatprep.subr.bf16.mxu0 0
    %1097 = vmatpush1.bf16.xpose.msra.mxu0 0
    %1098 = vmatprep.subr.bf16.mxu0 0
    %1099 = vmatpush1.bf16.xpose.msra.mxu0 0
    %1100 = vmatprep.subr.bf16.mxu0 0
    %1101 = vmatpush1.bf16.xpose.msra.mxu0 0
    %1102 = vmatprep.subr.bf16.mxu0 0
    %1103 = vmatpush1.bf16.xpose.msra.mxu0 0
    %1104 = vmatprep.mubr.bf16.mxu0 0
    %1105 = vmatmul.mubr.bf16.gmra.mrb[0].mxu0 %v1067
    %v1106 = vpop.f32.mrb[0].mxu0
    %v1107 = vadd.f32 0.0, %v1106
    %v1108 = vpop.f32.mrb[0].mxu0
    %v1109 = vpop.f32.mrb[0].mxu0
    %v1110 = vpop.f32.mrb[0].mxu0
    %1111 = vdwg.mxu0
    %1112 = vrot.lane.b32.xlu0 %v561, 64
    %v1113 = vpop.permute.xlu0 %1112
    %v1115 = vsel %vm602, %v1113, 0
    %v1118 = vsel %vm602, %v1055, 0
    %1120 = vmatprep.subr.bf16.mxu0 0
    %1121 = vmatpush1.bf16.xpose.msra.mxu0 %v1118
    %1122 = vmatprep.subr.bf16.mxu0 0
    %1123 = vmatpush1.bf16.xpose.msra.mxu0 0
    %1124 = vmatprep.subr.bf16.mxu0 0
    %1125 = vmatpush1.bf16.xpose.msra.mxu0 0
    %1126 = vmatprep.subr.bf16.mxu0 0
    %1127 = vmatpush1.bf16.xpose.msra.mxu0 0
    %1128 = vmatprep.subr.bf16.mxu0 0
    %1129 = vmatpush1.bf16.xpose.msra.mxu0 0
    %1130 = vmatprep.subr.bf16.mxu0 0
    %1131 = vmatpush1.bf16.xpose.msra.mxu0 0
    %1132 = vmatprep.subr.bf16.mxu0 0
    %1133 = vmatpush1.bf16.xpose.msra.mxu0 0
    %1134 = vmatprep.subr.bf16.mxu0 0
    %1135 = vmatpush1.bf16.xpose.msra.mxu0 0
    %1136 = vmatprep.subr.bf16.mxu0 0
    %1137 = vmatpush1.bf16.xpose.msra.mxu0 0
    %1138 = vmatprep.subr.bf16.mxu0 0
    %1139 = vmatpush1.bf16.xpose.msra.mxu0 0
    %1140 = vmatprep.subr.bf16.mxu0 0
    %1141 = vmatpush1.bf16.xpose.msra.mxu0 0
    %1142 = vmatprep.subr.bf16.mxu0 0
    %1143 = vmatpush1.bf16.xpose.msra.mxu0 0
    %1144 = vmatprep.subr.bf16.mxu0 0
    %1145 = vmatpush1.bf16.xpose.msra.mxu0 0
    %1146 = vmatprep.subr.bf16.mxu0 0
    %1147 = vmatpush1.bf16.xpose.msra.mxu0 0
    %1148 = vmatprep.subr.bf16.mxu0 0
    %1149 = vmatpush1.bf16.xpose.msra.mxu0 0
    %1150 = vmatprep.subr.bf16.mxu0 0
    %1151 = vmatpush1.bf16.xpose.msra.mxu0 0
    %1152 = vmatprep.mubr.bf16.mxu0 0
    %1153 = vmatmul.mubr.bf16.gmra.mrb[0].mxu0 %v1115
    %v1154 = vpop.f32.mrb[0].mxu0
    %v1155 = vadd.f32 0.0, %v1154
    %v1156 = vpop.f32.mrb[0].mxu0
    %v1157 = vpop.f32.mrb[0].mxu0
    %v1158 = vpop.f32.mrb[0].mxu0
    %1159 = vdwg.mxu0
    %v1160 = vmul.f32 %v1107, 0.17677669
    %v1161 = vmul.f32 %v1155, 0.17677669
    %v1162 = vsel %vm697, %v1160, -inf
    %1163 = vmax.xlane.f32.xlu0 %v1162
    %v1164 = vpop.xlane.xlu0 %1163
    %v1165 = vsel %vm697, %v1161, -inf
    %1166 = vmax.xlane.f32.xlu0 %v1165
    %v1167 = vpop.xlane.xlu0 %1166
    %v1168 = vsub.f32 %v1160, %v1164
    %v1169 = vsub.f32 %v1161, %v1167
    %v1170 = vmul.f32 %v1168, 1.442695
    %v1171 = vpow.pop %v1170
    %v1172 = vmul.f32 %v1169, 1.442695
    %v1173 = vpow.pop %v1172
    %v1174 = vsel %vm697, %v1171, 0.0
    %1175 = vadd.xlane.f32.xlu0 %v1174
    %v1176 = vpop.xlane.xlu0 %1175
    %v1177 = vsel %vm697, %v1173, 0.0
    %1178 = vadd.xlane.f32.xlu0 %v1177
    %v1179 = vpop.xlane.xlu0 %1178
    %v1180 = vrcp.pop %v1176
    %v1181 = vrcp.pop %v1179
    %v1182 = vmul.f32 %v1171, %v1180
    %v1183 = vmul.f32 %v1173, %v1181
    %v1184 = vpack.c.bf16 %v1182, %v1182
    %v1185 = vpack.c.bf16 %v1183, %v1183
    %v1187 = vsel %vm722, %v1184, 0
    %v1190 = vsel %vm726, %v1062, 0
    %1192 = vmatprep.subr.bf16.mxu0 0
    %1193 = vmatpush1.bf16.msra.mxu0 %v1190
    %1194 = vmatprep.subr.bf16.mxu0 0
    %1195 = vmatpush1.bf16.msra.mxu0 0
    %1196 = vmatprep.subr.bf16.mxu0 0
    %1197 = vmatpush1.bf16.msra.mxu0 0
    %1198 = vmatprep.subr.bf16.mxu0 0
    %1199 = vmatpush1.bf16.msra.mxu0 0
    %1200 = vmatprep.subr.bf16.mxu0 0
    %1201 = vmatpush1.bf16.msra.mxu0 0
    %1202 = vmatprep.subr.bf16.mxu0 0
    %1203 = vmatpush1.bf16.msra.mxu0 0
    %1204 = vmatprep.subr.bf16.mxu0 0
    %1205 = vmatpush1.bf16.msra.mxu0 0
    %1206 = vmatprep.subr.bf16.mxu0 0
    %1207 = vmatpush1.bf16.msra.mxu0 0
    %1208 = vmatprep.subr.bf16.mxu0 0
    %1209 = vmatpush1.bf16.msra.mxu0 0
    %1210 = vmatprep.subr.bf16.mxu0 0
    %1211 = vmatpush1.bf16.msra.mxu0 0
    %1212 = vmatprep.subr.bf16.mxu0 0
    %1213 = vmatpush1.bf16.msra.mxu0 0
    %1214 = vmatprep.subr.bf16.mxu0 0
    %1215 = vmatpush1.bf16.msra.mxu0 0
    %1216 = vmatprep.subr.bf16.mxu0 0
    %1217 = vmatpush1.bf16.msra.mxu0 0
    %1218 = vmatprep.subr.bf16.mxu0 0
    %1219 = vmatpush1.bf16.msra.mxu0 0
    %1220 = vmatprep.subr.bf16.mxu0 0
    %1221 = vmatpush1.bf16.msra.mxu0 0
    %1222 = vmatprep.subr.bf16.mxu0 0
    %1223 = vmatpush1.bf16.msra.mxu0 0
    %1224 = vmatprep.mubr.bf16.mxu0 0
    %1225 = vmatmul.mubr.bf16.gmra.mrb[0].mxu0 %v1187
    %v1226 = vpop.f32.mrb[0].mxu0
    %v1227 = vadd.f32 0.0, %v1226
    %v1228 = vpop.f32.mrb[0].mxu0
    %v1229 = vpop.f32.mrb[0].mxu0
    %v1230 = vpop.f32.mrb[0].mxu0
    %1231 = vdwg.mxu0
    %v1233 = vsel %vm722, %v1185, 0
    %v1236 = vsel %vm726, %v1063, 0
    %1238 = vmatprep.subr.bf16.mxu0 0
    %1239 = vmatpush1.bf16.msra.mxu0 %v1236
    %1240 = vmatprep.subr.bf16.mxu0 0
    %1241 = vmatpush1.bf16.msra.mxu0 0
    %1242 = vmatprep.subr.bf16.mxu0 0
    %1243 = vmatpush1.bf16.msra.mxu0 0
    %1244 = vmatprep.subr.bf16.mxu0 0
    %1245 = vmatpush1.bf16.msra.mxu0 0
    %1246 = vmatprep.subr.bf16.mxu0 0
    %1247 = vmatpush1.bf16.msra.mxu0 0
    %1248 = vmatprep.subr.bf16.mxu0 0
    %1249 = vmatpush1.bf16.msra.mxu0 0
    %1250 = vmatprep.subr.bf16.mxu0 0
    %1251 = vmatpush1.bf16.msra.mxu0 0
    %1252 = vmatprep.subr.bf16.mxu0 0
    %1253 = vmatpush1.bf16.msra.mxu0 0
    %1254 = vmatprep.subr.bf16.mxu0 0
    %1255 = vmatpush1.bf16.msra.mxu0 0
    %1256 = vmatprep.subr.bf16.mxu0 0
    %1257 = vmatpush1.bf16.msra.mxu0 0
    %1258 = vmatprep.subr.bf16.mxu0 0
    %1259 = vmatpush1.bf16.msra.mxu0 0
    %1260 = vmatprep.subr.bf16.mxu0 0
    %1261 = vmatpush1.bf16.msra.mxu0 0
    %1262 = vmatprep.subr.bf16.mxu0 0
    %1263 = vmatpush1.bf16.msra.mxu0 0
    %1264 = vmatprep.subr.bf16.mxu0 0
    %1265 = vmatpush1.bf16.msra.mxu0 0
    %1266 = vmatprep.subr.bf16.mxu0 0
    %1267 = vmatpush1.bf16.msra.mxu0 0
    %1268 = vmatprep.subr.bf16.mxu0 0
    %1269 = vmatpush1.bf16.msra.mxu0 0
    %1270 = vmatprep.mubr.bf16.mxu0 0
    %1271 = vmatmul.mubr.bf16.gmra.mrb[0].mxu0 %v1233
    %v1272 = vpop.f32.mrb[0].mxu0
    %v1273 = vadd.f32 0.0, %v1272
    %v1274 = vpop.f32.mrb[0].mxu0
    %v1275 = vpop.f32.mrb[0].mxu0
    %v1276 = vpop.f32.mrb[0].mxu0
    %1277 = vdwg.mxu0
    %1278 = vrot.lane.b32.xlu0 %v569, 32
    %v1279 = vpop.permute.xlu0 %1278
    %1280 = vrot.lane.b32.xlu0 %v577, 32
    %v1281 = vpop.permute.xlu0 %1280
    %v1284 = vpack.c.bf16 %v1279, %v1279
    %v1285 = vpack.c.bf16 %v1281, %v1281
    %1286 = vrot.lane.b32.xlu0 %v589, 32
    %v1287 = vpop.permute.xlu0 %1286
    %1288 = vrot.lane.b32.xlu0 %v597, 32
    %v1289 = vpop.permute.xlu0 %1288
    %v1292 = vpack.c.bf16 %v1287, %v1287
    %v1293 = vpack.c.bf16 %v1289, %v1289
    %1294 = vrot.lane.b32.xlu0 %v560, 32
    %v1295 = vpop.permute.xlu0 %1294
    %v1297 = vsel %vm602, %v1295, 0
    %v1300 = vsel %vm602, %v1284, 0
    %1302 = vmatprep.subr.bf16.mxu0 0
    %1303 = vmatpush1.bf16.xpose.msra.mxu0 %v1300
    %1304 = vmatprep.subr.bf16.mxu0 0
    %1305 = vmatpush1.bf16.xpose.msra.mxu0 0
    %1306 = vmatprep.subr.bf16.mxu0 0
    %1307 = vmatpush1.bf16.xpose.msra.mxu0 0
    %1308 = vmatprep.subr.bf16.mxu0 0
    %1309 = vmatpush1.bf16.xpose.msra.mxu0 0
    %1310 = vmatprep.subr.bf16.mxu0 0
    %1311 = vmatpush1.bf16.xpose.msra.mxu0 0
    %1312 = vmatprep.subr.bf16.mxu0 0
    %1313 = vmatpush1.bf16.xpose.msra.mxu0 0
    %1314 = vmatprep.subr.bf16.mxu0 0
    %1315 = vmatpush1.bf16.xpose.msra.mxu0 0
    %1316 = vmatprep.subr.bf16.mxu0 0
    %1317 = vmatpush1.bf16.xpose.msra.mxu0 0
    %1318 = vmatprep.subr.bf16.mxu0 0
    %1319 = vmatpush1.bf16.xpose.msra.mxu0 0
    %1320 = vmatprep.subr.bf16.mxu0 0
    %1321 = vmatpush1.bf16.xpose.msra.mxu0 0
    %1322 = vmatprep.subr.bf16.mxu0 0
    %1323 = vmatpush1.bf16.xpose.msra.mxu0 0
    %1324 = vmatprep.subr.bf16.mxu0 0
    %1325 = vmatpush1.bf16.xpose.msra.mxu0 0
    %1326 = vmatprep.subr.bf16.mxu0 0
    %1327 = vmatpush1.bf16.xpose.msra.mxu0 0
    %1328 = vmatprep.subr.bf16.mxu0 0
    %1329 = vmatpush1.bf16.xpose.msra.mxu0 0
    %1330 = vmatprep.subr.bf16.mxu0 0
    %1331 = vmatpush1.bf16.xpose.msra.mxu0 0
    %1332 = vmatprep.subr.bf16.mxu0 0
    %1333 = vmatpush1.bf16.xpose.msra.mxu0 0
    %1334 = vmatprep.mubr.bf16.mxu0 0
    %1335 = vmatmul.mubr.bf16.gmra.mrb[0].mxu0 %v1297
    %v1336 = vpop.f32.mrb[0].mxu0
    %v1337 = vadd.f32 0.0, %v1336
    %v1338 = vpop.f32.mrb[0].mxu0
    %v1339 = vpop.f32.mrb[0].mxu0
    %v1340 = vpop.f32.mrb[0].mxu0
    %1341 = vdwg.mxu0
    %1342 = vrot.lane.b32.xlu0 %v561, 32
    %v1343 = vpop.permute.xlu0 %1342
    %v1345 = vsel %vm602, %v1343, 0
    %v1348 = vsel %vm602, %v1285, 0
    %1350 = vmatprep.subr.bf16.mxu0 0
    %1351 = vmatpush1.bf16.xpose.msra.mxu0 %v1348
    %1352 = vmatprep.subr.bf16.mxu0 0
    %1353 = vmatpush1.bf16.xpose.msra.mxu0 0
    %1354 = vmatprep.subr.bf16.mxu0 0
    %1355 = vmatpush1.bf16.xpose.msra.mxu0 0
    %1356 = vmatprep.subr.bf16.mxu0 0
    %1357 = vmatpush1.bf16.xpose.msra.mxu0 0
    %1358 = vmatprep.subr.bf16.mxu0 0
    %1359 = vmatpush1.bf16.xpose.msra.mxu0 0
    %1360 = vmatprep.subr.bf16.mxu0 0
    %1361 = vmatpush1.bf16.xpose.msra.mxu0 0
    %1362 = vmatprep.subr.bf16.mxu0 0
    %1363 = vmatpush1.bf16.xpose.msra.mxu0 0
    %1364 = vmatprep.subr.bf16.mxu0 0
    %1365 = vmatpush1.bf16.xpose.msra.mxu0 0
    %1366 = vmatprep.subr.bf16.mxu0 0
    %1367 = vmatpush1.bf16.xpose.msra.mxu0 0
    %1368 = vmatprep.subr.bf16.mxu0 0
    %1369 = vmatpush1.bf16.xpose.msra.mxu0 0
    %1370 = vmatprep.subr.bf16.mxu0 0
    %1371 = vmatpush1.bf16.xpose.msra.mxu0 0
    %1372 = vmatprep.subr.bf16.mxu0 0
    %1373 = vmatpush1.bf16.xpose.msra.mxu0 0
    %1374 = vmatprep.subr.bf16.mxu0 0
    %1375 = vmatpush1.bf16.xpose.msra.mxu0 0
    %1376 = vmatprep.subr.bf16.mxu0 0
    %1377 = vmatpush1.bf16.xpose.msra.mxu0 0
    %1378 = vmatprep.subr.bf16.mxu0 0
    %1379 = vmatpush1.bf16.xpose.msra.mxu0 0
    %1380 = vmatprep.subr.bf16.mxu0 0
    %1381 = vmatpush1.bf16.xpose.msra.mxu0 0
    %1382 = vmatprep.mubr.bf16.mxu0 0
    %1383 = vmatmul.mubr.bf16.gmra.mrb[0].mxu0 %v1345
    %v1384 = vpop.f32.mrb[0].mxu0
    %v1385 = vadd.f32 0.0, %v1384
    %v1386 = vpop.f32.mrb[0].mxu0
    %v1387 = vpop.f32.mrb[0].mxu0
    %v1388 = vpop.f32.mrb[0].mxu0
    %1389 = vdwg.mxu0
    %v1390 = vmul.f32 %v1337, 0.17677669
    %v1391 = vmul.f32 %v1385, 0.17677669
    %v1392 = vsel %vm697, %v1390, -inf
    %1393 = vmax.xlane.f32.xlu0 %v1392
    %v1394 = vpop.xlane.xlu0 %1393
    %v1395 = vsel %vm697, %v1391, -inf
    %1396 = vmax.xlane.f32.xlu0 %v1395
    %v1397 = vpop.xlane.xlu0 %1396
    %v1398 = vsub.f32 %v1390, %v1394
    %v1399 = vsub.f32 %v1391, %v1397
    %v1400 = vmul.f32 %v1398, 1.442695
    %v1401 = vpow.pop %v1400
    %v1402 = vmul.f32 %v1399, 1.442695
    %v1403 = vpow.pop %v1402
    %v1404 = vsel %vm697, %v1401, 0.0
    %1405 = vadd.xlane.f32.xlu0 %v1404
    %v1406 = vpop.xlane.xlu0 %1405
    %v1407 = vsel %vm697, %v1403, 0.0
    %1408 = vadd.xlane.f32.xlu0 %v1407
    %v1409 = vpop.xlane.xlu0 %1408
    %v1410 = vrcp.pop %v1406
    %v1411 = vrcp.pop %v1409
    %v1412 = vmul.f32 %v1401, %v1410
    %v1413 = vmul.f32 %v1403, %v1411
    %v1414 = vpack.c.bf16 %v1412, %v1412
    %v1415 = vpack.c.bf16 %v1413, %v1413
    %v1417 = vsel %vm722, %v1414, 0
    %v1420 = vsel %vm726, %v1292, 0
    %1422 = vmatprep.subr.bf16.mxu0 0
    %1423 = vmatpush1.bf16.msra.mxu0 %v1420
    %1424 = vmatprep.subr.bf16.mxu0 0
    %1425 = vmatpush1.bf16.msra.mxu0 0
    %1426 = vmatprep.subr.bf16.mxu0 0
    %1427 = vmatpush1.bf16.msra.mxu0 0
    %1428 = vmatprep.subr.bf16.mxu0 0
    %1429 = vmatpush1.bf16.msra.mxu0 0
    %1430 = vmatprep.subr.bf16.mxu0 0
    %1431 = vmatpush1.bf16.msra.mxu0 0
    %1432 = vmatprep.subr.bf16.mxu0 0
    %1433 = vmatpush1.bf16.msra.mxu0 0
    %1434 = vmatprep.subr.bf16.mxu0 0
    %1435 = vmatpush1.bf16.msra.mxu0 0
    %1436 = vmatprep.subr.bf16.mxu0 0
    %1437 = vmatpush1.bf16.msra.mxu0 0
    %1438 = vmatprep.subr.bf16.mxu0 0
    %1439 = vmatpush1.bf16.msra.mxu0 0
    %1440 = vmatprep.subr.bf16.mxu0 0
    %1441 = vmatpush1.bf16.msra.mxu0 0
    %1442 = vmatprep.subr.bf16.mxu0 0
    %1443 = vmatpush1.bf16.msra.mxu0 0
    %1444 = vmatprep.subr.bf16.mxu0 0
    %1445 = vmatpush1.bf16.msra.mxu0 0
    %1446 = vmatprep.subr.bf16.mxu0 0
    %1447 = vmatpush1.bf16.msra.mxu0 0
    %1448 = vmatprep.subr.bf16.mxu0 0
    %1449 = vmatpush1.bf16.msra.mxu0 0
    %1450 = vmatprep.subr.bf16.mxu0 0
    %1451 = vmatpush1.bf16.msra.mxu0 0
    %1452 = vmatprep.subr.bf16.mxu0 0
    %1453 = vmatpush1.bf16.msra.mxu0 0
    %1454 = vmatprep.mubr.bf16.mxu0 0
    %1455 = vmatmul.mubr.bf16.gmra.mrb[0].mxu0 %v1417
    %v1456 = vpop.f32.mrb[0].mxu0
    %v1457 = vadd.f32 0.0, %v1456
    %v1458 = vpop.f32.mrb[0].mxu0
    %v1459 = vpop.f32.mrb[0].mxu0
    %v1460 = vpop.f32.mrb[0].mxu0
    %1461 = vdwg.mxu0
    %v1463 = vsel %vm722, %v1415, 0
    %v1466 = vsel %vm726, %v1293, 0
    %1468 = vmatprep.subr.bf16.mxu0 0
    %1469 = vmatpush1.bf16.msra.mxu0 %v1466
    %1470 = vmatprep.subr.bf16.mxu0 0
    %1471 = vmatpush1.bf16.msra.mxu0 0
    %1472 = vmatprep.subr.bf16.mxu0 0
    %1473 = vmatpush1.bf16.msra.mxu0 0
    %1474 = vmatprep.subr.bf16.mxu0 0
    %1475 = vmatpush1.bf16.msra.mxu0 0
    %1476 = vmatprep.subr.bf16.mxu0 0
    %1477 = vmatpush1.bf16.msra.mxu0 0
    %1478 = vmatprep.subr.bf16.mxu0 0
    %1479 = vmatpush1.bf16.msra.mxu0 0
    %1480 = vmatprep.subr.bf16.mxu0 0
    %1481 = vmatpush1.bf16.msra.mxu0 0
    %1482 = vmatprep.subr.bf16.mxu0 0
    %1483 = vmatpush1.bf16.msra.mxu0 0
    %1484 = vmatprep.subr.bf16.mxu0 0
    %1485 = vmatpush1.bf16.msra.mxu0 0
    %1486 = vmatprep.subr.bf16.mxu0 0
    %1487 = vmatpush1.bf16.msra.mxu0 0
    %1488 = vmatprep.subr.bf16.mxu0 0
    %1489 = vmatpush1.bf16.msra.mxu0 0
    %1490 = vmatprep.subr.bf16.mxu0 0
    %1491 = vmatpush1.bf16.msra.mxu0 0
    %1492 = vmatprep.subr.bf16.mxu0 0
    %1493 = vmatpush1.bf16.msra.mxu0 0
    %1494 = vmatprep.subr.bf16.mxu0 0
    %1495 = vmatpush1.bf16.msra.mxu0 0
    %1496 = vmatprep.subr.bf16.mxu0 0
    %1497 = vmatpush1.bf16.msra.mxu0 0
    %1498 = vmatprep.subr.bf16.mxu0 0
    %1499 = vmatpush1.bf16.msra.mxu0 0
    %1500 = vmatprep.mubr.bf16.mxu0 0
    %1501 = vmatmul.mubr.bf16.gmra.mrb[0].mxu0 %v1463
    %v1502 = vpop.f32.mrb[0].mxu0
    %v1503 = vadd.f32 0.0, %v1502
    %v1504 = vpop.f32.mrb[0].mxu0
    %v1505 = vpop.f32.mrb[0].mxu0
    %v1506 = vpop.f32.mrb[0].mxu0
    %1507 = vdwg.mxu0
    %1510 = vrot.lane.b32.xlu0 %v997, 32
    %v1511 = vpop.permute.xlu0 %1510
    %1512 = vrot.lane.b32.xlu0 %v1043, 32
    %v1513 = vpop.permute.xlu0 %1512
    %1518 = vrot.lane.b32.xlu0 %v1227, 64
    %v1519 = vpop.permute.xlu0 %1518
    %1520 = vrot.lane.b32.xlu0 %v1273, 64
    %v1521 = vpop.permute.xlu0 %1520
    %1526 = vrot.lane.b32.xlu0 %v1457, 96
    %v1527 = vpop.permute.xlu0 %1526
    %1528 = vrot.lane.b32.xlu0 %v1503, 96
    %v1529 = vpop.permute.xlu0 %1528
    %v1532 = vsel %vm602, %v765, %v1511
    %v1533 = vsel %vm602, %v811, %v1513
    %vm1534 = vcmask 523264
    %v1535 = vsel %vm1534, %v1532, %v1519
    %v1536 = vsel %vm1534, %v1533, %v1521
    %vm1537 = vcmask 785408
    %v1538 = vsel %vm1537, %v1535, %v1527
    %v1539 = vsel %vm1537, %v1536, %v1529
    %v1542 = vcombine.low %v1538, %v1539
    %v1544 = vunpack.c.l.s4 1983009808
    %v1545 = vunpack.c.0.s8 %v1544
    %v1546 = vlaneseq
    %v1547 = vshrl.u32 %v1546, 7
    %v1548 = vsub.s32 %v1545, %v1547
    %v1549 = vrot.slane %v1542, %v1548
    %v1551 = vpack.c.bf16 %v1549, %v1549
    %v1553 = vlaneseq
    %v1554 = vshrl.u32 %v1553, 7
    %v1555 = vsub.s32 0, %v1554
    %v1556 = vrot.slane %v220, %v1555
    %v1574 = vunpack.c.l.b16 %v204
    %v1575 = vunpack.c.l.b16 %v205
    %v1576 = vunpack.c.l.b16 %v206
    %v1577 = vunpack.c.l.b16 %v207
    %v1578 = vunpack.c.l.b16 %v208
    %v1579 = vunpack.c.l.b16 %v209
    %v1580 = vunpack.c.l.b16 %v210
    %v1581 = vunpack.c.l.b16 %v211
    %v1582 = vunpack.c.l.b16 %v212
    %v1583 = vunpack.c.l.b16 %v213
    %v1584 = vunpack.c.l.b16 %v214
    %v1585 = vunpack.c.l.b16 %v215
    %v1586 = vunpack.c.l.b16 %v216
    %v1587 = vunpack.c.l.b16 %v217
    %v1588 = vunpack.c.l.b16 %v218
    %v1589 = vunpack.c.l.b16 %v219
    %v1590 = vpack.c.b16 %v1575, %v1574
    %v1591 = vpack.c.b16 %v1577, %v1576
    %v1592 = vpack.c.b16 %v1579, %v1578
    %v1593 = vpack.c.b16 %v1581, %v1580
    %v1594 = vpack.c.b16 %v1583, %v1582
    %v1595 = vpack.c.b16 %v1585, %v1584
    %v1596 = vpack.c.b16 %v1587, %v1586
    %v1597 = vpack.c.b16 %v1589, %v1588
    %1606 = vmatprep.subr.bf16.mxu0 0
    %1607 = vmatpush1.bf16.msra.mxu0 %v1590
    %1608 = vmatprep.subr.bf16.mxu0 0
    %1609 = vmatpush1.bf16.msra.mxu0 %v1591
    %1610 = vmatprep.subr.bf16.mxu0 0
    %1611 = vmatpush1.bf16.msra.mxu0 %v1592
    %1612 = vmatprep.subr.bf16.mxu0 0
    %1613 = vmatpush1.bf16.msra.mxu0 %v1593
    %1614 = vmatprep.subr.bf16.mxu0 0
    %1615 = vmatpush1.bf16.msra.mxu0 %v1594
    %1616 = vmatprep.subr.bf16.mxu0 0
    %1617 = vmatpush1.bf16.msra.mxu0 %v1595
    %1618 = vmatprep.subr.bf16.mxu0 0
    %1619 = vmatpush1.bf16.msra.mxu0 %v1596
    %1620 = vmatprep.subr.bf16.mxu0 0
    %1621 = vmatpush1.bf16.msra.mxu0 %v1597
    %1622 = vmatprep.subr.bf16.mxu0 0
    %1623 = vmatpush1.bf16.msra.mxu0 0
    %1624 = vmatprep.subr.bf16.mxu0 0
    %1625 = vmatpush1.bf16.msra.mxu0 0
    %1626 = vmatprep.subr.bf16.mxu0 0
    %1627 = vmatpush1.bf16.msra.mxu0 0
    %1628 = vmatprep.subr.bf16.mxu0 0
    %1629 = vmatpush1.bf16.msra.mxu0 0
    %1630 = vmatprep.subr.bf16.mxu0 0
    %1631 = vmatpush1.bf16.msra.mxu0 0
    %1632 = vmatprep.subr.bf16.mxu0 0
    %1633 = vmatpush1.bf16.msra.mxu0 0
    %1634 = vmatprep.subr.bf16.mxu0 0
    %1635 = vmatpush1.bf16.msra.mxu0 0
    %1636 = vmatprep.subr.bf16.mxu0 0
    %1637 = vmatpush1.bf16.msra.mxu0 0
    %1638 = vmatprep.mubr.bf16.mxu0 0
    %1639 = vmatmul.mubr.bf16.gmra.mrb[0].mxu0 %v1551
    %v1640 = vpop.f32.mrb[0].mxu0
    %v1641 = vadd.f32 %v1556, %v1640
    %v1642 = vpop.f32.mrb[0].mxu0
    %v1643 = vpop.f32.mrb[0].mxu0
    %v1644 = vpop.f32.mrb[0].mxu0
    %1645 = vdwg.mxu0
    %v1648 = vunpack.c.l.s4 1983009808
    %v1649 = vunpack.c.0.s8 %v1648
    %v1650 = vlaneseq
    %v1651 = vshrl.u32 %v1650, 7
    %v1652 = vsub.s32 %v1649, %v1651
    %v1653 = vrot.slane %v1641, %v1652
    %v1654 = vcombine.high %v1653, %v1653
    %v1657 = vadd.f32 %v167, %v1653
    %v1658 = vadd.f32 %v168, %v1654
    %v1659 = vsel %vm257, %v1657, 0.0
    %1660 = vadd.xlane.f32.xlu0 %v1659
    %v1661 = vpop.xlane.xlu0 %1660
    %v1662 = vsel %vm257, %v1658, 0.0
    %1663 = vadd.xlane.f32.xlu0 %v1662
    %v1664 = vpop.xlane.xlu0 %1663
    %v1665 = vmul.f32 %v1661, %v264
    %v1666 = vmul.f32 %v1664, %v264
    %v1667 = vsub.f32 %v1657, %v1665
    %v1668 = vsub.f32 %v1658, %v1666
    %v1669 = vmul.f32 %v1667, %v1667
    %v1670 = vmul.f32 %v1668, %v1668
    %v1671 = vsel %vm257, %v1669, 0.0
    %1672 = vadd.xlane.f32.xlu0 %v1671
    %v1673 = vpop.xlane.xlu0 %1672
    %v1674 = vsel %vm257, %v1670, 0.0
    %1675 = vadd.xlane.f32.xlu0 %v1674
    %v1676 = vpop.xlane.xlu0 %1675
    %v1677 = vmul.f32 %v1673, %v264
    %v1678 = vmul.f32 %v1676, %v264
    %v1679 = vadd.f32 %v1677, 1e-05
    %v1680 = vadd.f32 %v1678, 1e-05
    %v1681 = vrsqrt.pop %v1679
    %v1682 = vrsqrt.pop %v1680
    %v1683 = vmul.f32 %v1667, %v1681
    %v1684 = vmul.f32 %v1668, %v1682
    %v1686 = vlaneseq
    %v1687 = vshrl.u32 %v1686, 7
    %v1688 = vsub.s32 0, %v1687
    %v1689 = vrot.slane %v221, %v1688
    %v1691 = vmul.f32 %v1683, %v1689
    %v1692 = vmul.f32 %v1684, %v1689
    %v1694 = vlaneseq
    %v1695 = vshrl.u32 %v1694, 7
    %v1696 = vsub.s32 0, %v1695
    %v1697 = vrot.slane %v222, %v1696
    %v1699 = vadd.f32 %v1691, %v1697
    %v1700 = vadd.f32 %v1692, %v1697
    %v1703 = vcombine.low %v1699, %v1700
    %v1705 = vunpack.c.l.s4 1983009808
    %v1706 = vunpack.c.0.s8 %v1705
    %v1707 = vlaneseq
    %v1708 = vshrl.u32 %v1707, 7
    %v1709 = vsub.s32 %v1706, %v1708
    %v1710 = vrot.slane %v1703, %v1709
    %v1712 = vpack.c.bf16 %v1710, %v1710
    %v1714 = vlaneseq
    %v1715 = vshrl.u32 %v1714, 7
    %v1716 = vsub.s32 0, %v1715
    %v1717 = vrot.slane %v239, %v1716
    %v1735 = vunpack.c.l.b16 %v223
    %v1736 = vunpack.c.l.b16 %v224
    %v1737 = vunpack.c.l.b16 %v225
    %v1738 = vunpack.c.l.b16 %v226
    %v1739 = vunpack.c.l.b16 %v227
    %v1740 = vunpack.c.l.b16 %v228
    %v1741 = vunpack.c.l.b16 %v229
    %v1742 = vunpack.c.l.b16 %v230
    %v1743 = vunpack.c.l.b16 %v231
    %v1744 = vunpack.c.l.b16 %v232
    %v1745 = vunpack.c.l.b16 %v233
    %v1746 = vunpack.c.l.b16 %v234
    %v1747 = vunpack.c.l.b16 %v235
    %v1748 = vunpack.c.l.b16 %v236
    %v1749 = vunpack.c.l.b16 %v237
    %v1750 = vunpack.c.l.b16 %v238
    %v1751 = vpack.c.b16 %v1736, %v1735
    %v1752 = vpack.c.b16 %v1738, %v1737
    %v1753 = vpack.c.b16 %v1740, %v1739
    %v1754 = vpack.c.b16 %v1742, %v1741
    %v1755 = vpack.c.b16 %v1744, %v1743
    %v1756 = vpack.c.b16 %v1746, %v1745
    %v1757 = vpack.c.b16 %v1748, %v1747
    %v1758 = vpack.c.b16 %v1750, %v1749
    %1767 = vmatprep.subr.bf16.mxu0 0
    %1768 = vmatpush1.bf16.msra.mxu0 %v1751
    %1769 = vmatprep.subr.bf16.mxu0 0
    %1770 = vmatpush1.bf16.msra.mxu0 %v1752
    %1771 = vmatprep.subr.bf16.mxu0 0
    %1772 = vmatpush1.bf16.msra.mxu0 %v1753
    %1773 = vmatprep.subr.bf16.mxu0 0
    %1774 = vmatpush1.bf16.msra.mxu0 %v1754
    %1775 = vmatprep.subr.bf16.mxu0 0
    %1776 = vmatpush1.bf16.msra.mxu0 %v1755
    %1777 = vmatprep.subr.bf16.mxu0 0
    %1778 = vmatpush1.bf16.msra.mxu0 %v1756
    %1779 = vmatprep.subr.bf16.mxu0 0
    %1780 = vmatpush1.bf16.msra.mxu0 %v1757
    %1781 = vmatprep.subr.bf16.mxu0 0
    %1782 = vmatpush1.bf16.msra.mxu0 %v1758
    %1783 = vmatprep.subr.bf16.mxu0 0
    %1784 = vmatpush1.bf16.msra.mxu0 0
    %1785 = vmatprep.subr.bf16.mxu0 0
    %1786 = vmatpush1.bf16.msra.mxu0 0
    %1787 = vmatprep.subr.bf16.mxu0 0
    %1788 = vmatpush1.bf16.msra.mxu0 0
    %1789 = vmatprep.subr.bf16.mxu0 0
    %1790 = vmatpush1.bf16.msra.mxu0 0
    %1791 = vmatprep.subr.bf16.mxu0 0
    %1792 = vmatpush1.bf16.msra.mxu0 0
    %1793 = vmatprep.subr.bf16.mxu0 0
    %1794 = vmatpush1.bf16.msra.mxu0 0
    %1795 = vmatprep.subr.bf16.mxu0 0
    %1796 = vmatpush1.bf16.msra.mxu0 0
    %1797 = vmatprep.subr.bf16.mxu0 0
    %1798 = vmatpush1.bf16.msra.mxu0 0
    %1799 = vmatprep.mubr.bf16.mxu0 0
    %1800 = vmatmul.mubr.bf16.gmra.mrb[0].mxu0 %v1712
    %v1801 = vpop.f32.mrb[0].mxu0
    %v1802 = vadd.f32 %v1717, %v1801
    %v1803 = vpop.f32.mrb[0].mxu0
    %v1804 = vpop.f32.mrb[0].mxu0
    %v1805 = vpop.f32.mrb[0].mxu0
    %1806 = vdwg.mxu0
    %v1807 = vmul.f32 %v1802, 0.5
    %v1808 = vmul.f32 %v1802, 0.70710677
    %v1809 = verf.f32.pop %v1808
    %v1810 = vadd.f32 %v1809, 1.0
    %v1811 = vmul.f32 %v1807, %v1810
    %v1812 = vpack.c.bf16 %v1811, %v1811
    %v1814 = vlaneseq
    %v1815 = vshrl.u32 %v1814, 7
    %v1816 = vsub.s32 0, %v1815
    %v1817 = vrot.slane %v256, %v1816
    %v1835 = vunpack.c.l.b16 %v240
    %v1836 = vunpack.c.l.b16 %v241
    %v1837 = vunpack.c.l.b16 %v242
    %v1838 = vunpack.c.l.b16 %v243
    %v1839 = vunpack.c.l.b16 %v244
    %v1840 = vunpack.c.l.b16 %v245
    %v1841 = vunpack.c.l.b16 %v246
    %v1842 = vunpack.c.l.b16 %v247
    %v1843 = vunpack.c.l.b16 %v248
    %v1844 = vunpack.c.l.b16 %v249
    %v1845 = vunpack.c.l.b16 %v250
    %v1846 = vunpack.c.l.b16 %v251
    %v1847 = vunpack.c.l.b16 %v252
    %v1848 = vunpack.c.l.b16 %v253
    %v1849 = vunpack.c.l.b16 %v254
    %v1850 = vunpack.c.l.b16 %v255
    %v1851 = vpack.c.b16 %v1836, %v1835
    %v1852 = vpack.c.b16 %v1838, %v1837
    %v1853 = vpack.c.b16 %v1840, %v1839
    %v1854 = vpack.c.b16 %v1842, %v1841
    %v1855 = vpack.c.b16 %v1844, %v1843
    %v1856 = vpack.c.b16 %v1846, %v1845
    %v1857 = vpack.c.b16 %v1848, %v1847
    %v1858 = vpack.c.b16 %v1850, %v1849
    %1867 = vmatprep.subr.bf16.mxu0 0
    %1868 = vmatpush1.bf16.msra.mxu0 %v1851
    %1869 = vmatprep.subr.bf16.mxu0 0
    %1870 = vmatpush1.bf16.msra.mxu0 %v1852
    %1871 = vmatprep.subr.bf16.mxu0 0
    %1872 = vmatpush1.bf16.msra.mxu0 %v1853
    %1873 = vmatprep.subr.bf16.mxu0 0
    %1874 = vmatpush1.bf16.msra.mxu0 %v1854
    %1875 = vmatprep.subr.bf16.mxu0 0
    %1876 = vmatpush1.bf16.msra.mxu0 %v1855
    %1877 = vmatprep.subr.bf16.mxu0 0
    %1878 = vmatpush1.bf16.msra.mxu0 %v1856
    %1879 = vmatprep.subr.bf16.mxu0 0
    %1880 = vmatpush1.bf16.msra.mxu0 %v1857
    %1881 = vmatprep.subr.bf16.mxu0 0
    %1882 = vmatpush1.bf16.msra.mxu0 %v1858
    %1883 = vmatprep.subr.bf16.mxu0 0
    %1884 = vmatpush1.bf16.msra.mxu0 0
    %1885 = vmatprep.subr.bf16.mxu0 0
    %1886 = vmatpush1.bf16.msra.mxu0 0
    %1887 = vmatprep.subr.bf16.mxu0 0
    %1888 = vmatpush1.bf16.msra.mxu0 0
    %1889 = vmatprep.subr.bf16.mxu0 0
    %1890 = vmatpush1.bf16.msra.mxu0 0
    %1891 = vmatprep.subr.bf16.mxu0 0
    %1892 = vmatpush1.bf16.msra.mxu0 0
    %1893 = vmatprep.subr.bf16.mxu0 0
    %1894 = vmatpush1.bf16.msra.mxu0 0
    %1895 = vmatprep.subr.bf16.mxu0 0
    %1896 = vmatpush1.bf16.msra.mxu0 0
    %1897 = vmatprep.subr.bf16.mxu0 0
    %1898 = vmatpush1.bf16.msra.mxu0 0
    %1899 = vmatprep.mubr.bf16.mxu0 0
    %1900 = vmatmul.mubr.bf16.gmra.mrb[0].mxu0 %v1812
    %v1901 = vpop.f32.mrb[0].mxu0
    %v1902 = vadd.f32 %v1817, %v1901
    %v1903 = vpop.f32.mrb[0].mxu0
    %v1904 = vpop.f32.mrb[0].mxu0
    %v1905 = vpop.f32.mrb[0].mxu0
    %1906 = vdwg.mxu0
    %v1909 = vunpack.c.l.s4 1983009808
    %v1910 = vunpack.c.0.s8 %v1909
    %v1911 = vlaneseq
    %v1912 = vshrl.u32 %v1911, 7
    %v1913 = vsub.s32 %v1910, %v1912
    %v1914 = vrot.slane %v1902, %v1913
    %v1915 = vcombine.high %v1914, %v1914
    %v1918 = vadd.f32 %v1657, %v1914
    %v1919 = vadd.f32 %v1658, %v1915
    %s1920 = scalar_lea.vmem %s9, 1
    %v1921 = vld [vmem:[%s1920] sm:$0x1]
    %s1922 = scalar_lea.vmem %s11, 1
    %v1923 = vld [vmem:[%s1922] sm:$0x1]
    %s1924 = scalar_lea.vmem %s13, 192
    %v1925 = vld [vmem:[%s1924] sm:$0xff]
    %v1926 = vld [vmem:[%s1924 + $0x8] sm:$0xf]
    %v1927 = vld [vmem:[%s1924 + $0xc] sm:$0xff]
    %v1928 = vld [vmem:[%s1924 + $0x14] sm:$0xf]
    %v1929 = vld [vmem:[%s1924 + $0x18] sm:$0xff]
    %v1930 = vld [vmem:[%s1924 + $0x20] sm:$0xf]
    %v1931 = vld [vmem:[%s1924 + $0x24] sm:$0xff]
    %v1932 = vld [vmem:[%s1924 + $0x2c] sm:$0xf]
    %v1933 = vld [vmem:[%s1924 + $0x30] sm:$0xff]
    %v1934 = vld [vmem:[%s1924 + $0x38] sm:$0xf]
    %v1935 = vld [vmem:[%s1924 + $0x3c] sm:$0xff]
    %v1936 = vld [vmem:[%s1924 + $0x44] sm:$0xf]
    %v1937 = vld [vmem:[%s1924 + $0x48] sm:$0xff]
    %v1938 = vld [vmem:[%s1924 + $0x50] sm:$0xf]
    %v1939 = vld [vmem:[%s1924 + $0x54] sm:$0xff]
    %v1940 = vld [vmem:[%s1924 + $0x5c] sm:$0xf]
    %v1941 = vld [vmem:[%s1924 + $0x60] sm:$0xff]
    %v1942 = vld [vmem:[%s1924 + $0x68] sm:$0xf]
    %v1943 = vld [vmem:[%s1924 + $0x6c] sm:$0xff]
    %v1944 = vld [vmem:[%s1924 + $0x74] sm:$0xf]
    %v1945 = vld [vmem:[%s1924 + $0x78] sm:$0xff]
    %v1946 = vld [vmem:[%s1924 + $0x80] sm:$0xf]
    %v1947 = vld [vmem:[%s1924 + $0x84] sm:$0xff]
    %v1948 = vld [vmem:[%s1924 + $0x8c] sm:$0xf]
    %v1949 = vld [vmem:[%s1924 + $0x90] sm:$0xff]
    %v1950 = vld [vmem:[%s1924 + $0x98] sm:$0xf]
    %v1951 = vld [vmem:[%s1924 + $0x9c] sm:$0xff]
    %v1952 = vld [vmem:[%s1924 + $0xa4] sm:$0xf]
    %v1953 = vld [vmem:[%s1924 + $0xa8] sm:$0xff]
    %v1954 = vld [vmem:[%s1924 + $0xb0] sm:$0xf]
    %v1955 = vld [vmem:[%s1924 + $0xb4] sm:$0xff]
    %v1956 = vld [vmem:[%s1924 + $0xbc] sm:$0xf]
    %s1957 = scalar_lea.vmem %s15, 3
    %v1958 = vld [vmem:[%s1957] sm:$0x7]
    %s1959 = scalar_lea.vmem %s17, 64
    %v1960 = vld [vmem:[%s1959] sm:$0xf]
    %v1961 = vld [vmem:[%s1959 + $0x4] sm:$0xf]
    %v1962 = vld [vmem:[%s1959 + $0x8] sm:$0xf]
    %v1963 = vld [vmem:[%s1959 + $0xc] sm:$0xf]
    %v1964 = vld [vmem:[%s1959 + $0x10] sm:$0xf]
    %v1965 = vld [vmem:[%s1959 + $0x14] sm:$0xf]
    %v1966 = vld [vmem:[%s1959 + $0x18] sm:$0xf]
    %v1967 = vld [vmem:[%s1959 + $0x1c] sm:$0xf]
    %v1968 = vld [vmem:[%s1959 + $0x20] sm:$0xf]
    %v1969 = vld [vmem:[%s1959 + $0x24] sm:$0xf]
    %v1970 = vld [vmem:[%s1959 + $0x28] sm:$0xf]
    %v1971 = vld [vmem:[%s1959 + $0x2c] sm:$0xf]
    %v1972 = vld [vmem:[%s1959 + $0x30] sm:$0xf]
    %v1973 = vld [vmem:[%s1959 + $0x34] sm:$0xf]
    %v1974 = vld [vmem:[%s1959 + $0x38] sm:$0xf]
    %v1975 = vld [vmem:[%s1959 + $0x3c] sm:$0xf]
    %s1976 = scalar_lea.vmem %s19, 1
    %v1977 = vld [vmem:[%s1976] sm:$0x1]
    %s1978 = scalar_lea.vmem %s21, 1
    %v1979 = vld [vmem:[%s1978] sm:$0x1]
    %s1980 = scalar_lea.vmem %s23, 1
    %v1981 = vld [vmem:[%s1980] sm:$0x1]
    %s1982 = scalar_lea.vmem %s25, 64
    %v1983 = vld [vmem:[%s1982] sm:$0xf]
    %v1984 = vld [vmem:[%s1982 + $0x4] sm:$0xf]
    %v1985 = vld [vmem:[%s1982 + $0x8] sm:$0xf]
    %v1986 = vld [vmem:[%s1982 + $0xc] sm:$0xf]
    %v1987 = vld [vmem:[%s1982 + $0x10] sm:$0xf]
    %v1988 = vld [vmem:[%s1982 + $0x14] sm:$0xf]
    %v1989 = vld [vmem:[%s1982 + $0x18] sm:$0xf]
    %v1990 = vld [vmem:[%s1982 + $0x1c] sm:$0xf]
    %v1991 = vld [vmem:[%s1982 + $0x20] sm:$0xf]
    %v1992 = vld [vmem:[%s1982 + $0x24] sm:$0xf]
    %v1993 = vld [vmem:[%s1982 + $0x28] sm:$0xf]
    %v1994 = vld [vmem:[%s1982 + $0x2c] sm:$0xf]
    %v1995 = vld [vmem:[%s1982 + $0x30] sm:$0xf]
    %v1996 = vld [vmem:[%s1982 + $0x34] sm:$0xf]
    %v1997 = vld [vmem:[%s1982 + $0x38] sm:$0xf]
    %v1998 = vld [vmem:[%s1982 + $0x3c] sm:$0xf]
    %s1999 = scalar_lea.vmem %s27, 1
    %v2000 = vld [vmem:[%s1999] sm:$0x1]
    %s2001 = scalar_lea.vmem %s29, 64
    %v2002 = vld [vmem:[%s2001] sm:$0xf]
    %v2003 = vld [vmem:[%s2001 + $0x4] sm:$0xf]
    %v2004 = vld [vmem:[%s2001 + $0x8] sm:$0xf]
    %v2005 = vld [vmem:[%s2001 + $0xc] sm:$0xf]
    %v2006 = vld [vmem:[%s2001 + $0x10] sm:$0xf]
    %v2007 = vld [vmem:[%s2001 + $0x14] sm:$0xf]
    %v2008 = vld [vmem:[%s2001 + $0x18] sm:$0xf]
    %v2009 = vld [vmem:[%s2001 + $0x1c] sm:$0xf]
    %v2010 = vld [vmem:[%s2001 + $0x20] sm:$0xf]
    %v2011 = vld [vmem:[%s2001 + $0x24] sm:$0xf]
    %v2012 = vld [vmem:[%s2001 + $0x28] sm:$0xf]
    %v2013 = vld [vmem:[%s2001 + $0x2c] sm:$0xf]
    %v2014 = vld [vmem:[%s2001 + $0x30] sm:$0xf]
    %v2015 = vld [vmem:[%s2001 + $0x34] sm:$0xf]
    %v2016 = vld [vmem:[%s2001 + $0x38] sm:$0xf]
    %v2017 = vld [vmem:[%s2001 + $0x3c] sm:$0xf]
    %s2018 = scalar_lea.vmem %s31, 1
    %v2019 = vld [vmem:[%s2018] sm:$0x1]
    %v2020 = vsel %vm257, %v1918, 0.0
    %2021 = vadd.xlane.f32.xlu0 %v2020
    %v2022 = vpop.xlane.xlu0 %2021
    %v2023 = vsel %vm257, %v1919, 0.0
    %2024 = vadd.xlane.f32.xlu0 %v2023
    %v2025 = vpop.xlane.xlu0 %2024
    %v2026 = vmul.f32 %v2022, %v264
    %v2027 = vmul.f32 %v2025, %v264
    %v2028 = vsub.f32 %v1918, %v2026
    %v2029 = vsub.f32 %v1919, %v2027
    %v2030 = vmul.f32 %v2028, %v2028
    %v2031 = vmul.f32 %v2029, %v2029
    %v2032 = vsel %vm257, %v2030, 0.0
    %2033 = vadd.xlane.f32.xlu0 %v2032
    %v2034 = vpop.xlane.xlu0 %2033
    %v2035 = vsel %vm257, %v2031, 0.0
    %2036 = vadd.xlane.f32.xlu0 %v2035
    %v2037 = vpop.xlane.xlu0 %2036
    %v2038 = vmul.f32 %v2034, %v264
    %v2039 = vmul.f32 %v2037, %v264
    %v2040 = vadd.f32 %v2038, 1e-05
    %v2041 = vadd.f32 %v2039, 1e-05
    %v2042 = vrsqrt.pop %v2040
    %v2043 = vrsqrt.pop %v2041
    %v2044 = vmul.f32 %v2028, %v2042
    %v2045 = vmul.f32 %v2029, %v2043
    %v2047 = vlaneseq
    %v2048 = vshrl.u32 %v2047, 7
    %v2049 = vsub.s32 0, %v2048
    %v2050 = vrot.slane %v1921, %v2049
    %v2052 = vmul.f32 %v2044, %v2050
    %v2053 = vmul.f32 %v2045, %v2050
    %v2055 = vlaneseq
    %v2056 = vshrl.u32 %v2055, 7
    %v2057 = vsub.s32 0, %v2056
    %v2058 = vrot.slane %v1923, %v2057
    %v2060 = vadd.f32 %v2052, %v2058
    %v2061 = vadd.f32 %v2053, %v2058
    %v2064 = vcombine.low %v2060, %v2061
    %v2066 = vunpack.c.l.s4 1983009808
    %v2067 = vunpack.c.0.s8 %v2066
    %v2068 = vlaneseq
    %v2069 = vshrl.u32 %v2068, 7
    %v2070 = vsub.s32 %v2067, %v2069
    %v2071 = vrot.slane %v2064, %v2070
    %v2073 = vpack.c.bf16 %v2071, %v2071
    %v2075 = vlaneseq
    %v2076 = vshrl.u32 %v2075, 7
    %v2077 = vsub.s32 0, %v2076
    %v2078 = vrot.slane %v1958, %v2077
    %v2079 = vlaneseq
    %v2080 = vshrl.u32 %v2079, 7
    %v2081 = vsub.s32 1, %v2080
    %v2082 = vrot.slane %v1958, %v2081
    %v2083 = vlaneseq
    %v2084 = vshrl.u32 %v2083, 7
    %v2085 = vsub.s32 2, %v2084
    %v2086 = vrot.slane %v1958, %v2085
    %v2122 = vunpack.c.l.b16 %v1925
    %v2123 = vunpack.c.h.b16 %v1925
    %v2124 = vunpack.c.l.b16 %v1926
    %v2125 = vunpack.c.l.b16 %v1927
    %v2126 = vunpack.c.h.b16 %v1927
    %v2127 = vunpack.c.l.b16 %v1928
    %v2128 = vunpack.c.l.b16 %v1929
    %v2129 = vunpack.c.h.b16 %v1929
    %v2130 = vunpack.c.l.b16 %v1930
    %v2131 = vunpack.c.l.b16 %v1931
    %v2132 = vunpack.c.h.b16 %v1931
    %v2133 = vunpack.c.l.b16 %v1932
    %v2134 = vunpack.c.l.b16 %v1933
    %v2135 = vunpack.c.h.b16 %v1933
    %v2136 = vunpack.c.l.b16 %v1934
    %v2137 = vunpack.c.l.b16 %v1935
    %v2138 = vunpack.c.h.b16 %v1935
    %v2139 = vunpack.c.l.b16 %v1936
    %v2140 = vunpack.c.l.b16 %v1937
    %v2141 = vunpack.c.h.b16 %v1937
    %v2142 = vunpack.c.l.b16 %v1938
    %v2143 = vunpack.c.l.b16 %v1939
    %v2144 = vunpack.c.h.b16 %v1939
    %v2145 = vunpack.c.l.b16 %v1940
    %v2146 = vunpack.c.l.b16 %v1941
    %v2147 = vunpack.c.h.b16 %v1941
    %v2148 = vunpack.c.l.b16 %v1942
    %v2149 = vunpack.c.l.b16 %v1943
    %v2150 = vunpack.c.h.b16 %v1943
    %v2151 = vunpack.c.l.b16 %v1944
    %v2152 = vunpack.c.l.b16 %v1945
    %v2153 = vunpack.c.h.b16 %v1945
    %v2154 = vunpack.c.l.b16 %v1946
    %v2155 = vunpack.c.l.b16 %v1947
    %v2156 = vunpack.c.h.b16 %v1947
    %v2157 = vunpack.c.l.b16 %v1948
    %v2158 = vunpack.c.l.b16 %v1949
    %v2159 = vunpack.c.h.b16 %v1949
    %v2160 = vunpack.c.l.b16 %v1950
    %v2161 = vunpack.c.l.b16 %v1951
    %v2162 = vunpack.c.h.b16 %v1951
    %v2163 = vunpack.c.l.b16 %v1952
    %v2164 = vunpack.c.l.b16 %v1953
    %v2165 = vunpack.c.h.b16 %v1953
    %v2166 = vunpack.c.l.b16 %v1954
    %v2167 = vunpack.c.l.b16 %v1955
    %v2168 = vunpack.c.h.b16 %v1955
    %v2169 = vunpack.c.l.b16 %v1956
    %v2170 = vpack.c.b16 %v2125, %v2122
    %v2171 = vpack.c.b16 %v2126, %v2123
    %v2172 = vpack.c.b16 %v2127, %v2124
    %v2173 = vpack.c.b16 %v2131, %v2128
    %v2174 = vpack.c.b16 %v2132, %v2129
    %v2175 = vpack.c.b16 %v2133, %v2130
    %v2176 = vpack.c.b16 %v2137, %v2134
    %v2177 = vpack.c.b16 %v2138, %v2135
    %v2178 = vpack.c.b16 %v2139, %v2136
    %v2179 = vpack.c.b16 %v2143, %v2140
    %v2180 = vpack.c.b16 %v2144, %v2141
    %v2181 = vpack.c.b16 %v2145, %v2142
    %v2182 = vpack.c.b16 %v2149, %v2146
    %v2183 = vpack.c.b16 %v2150, %v2147
    %v2184 = vpack.c.b16 %v2151, %v2148
    %v2185 = vpack.c.b16 %v2155, %v2152
    %v2186 = vpack.c.b16 %v2156, %v2153
    %v2187 = vpack.c.b16 %v2157, %v2154
    %v2188 = vpack.c.b16 %v2161, %v2158
    %v2189 = vpack.c.b16 %v2162, %v2159
    %v2190 = vpack.c.b16 %v2163, %v2160
    %v2191 = vpack.c.b16 %v2167, %v2164
    %v2192 = vpack.c.b16 %v2168, %v2165
    %v2193 = vpack.c.b16 %v2169, %v2166
    %2218 = vmatprep.subr.bf16.mxu0 %v2171
    %2219 = vmatpush1.bf16.msra.mxu0 %v2170
    %2220 = vmatprep.subr.bf16.mxu0 %v2174
    %2221 = vmatpush1.bf16.msra.mxu0 %v2173
    %2222 = vmatprep.subr.bf16.mxu0 %v2177
    %2223 = vmatpush1.bf16.msra.mxu0 %v2176
    %2224 = vmatprep.subr.bf16.mxu0 %v2180
    %2225 = vmatpush1.bf16.msra.mxu0 %v2179
    %2226 = vmatprep.subr.bf16.mxu0 %v2183
    %2227 = vmatpush1.bf16.msra.mxu0 %v2182
    %2228 = vmatprep.subr.bf16.mxu0 %v2186
    %2229 = vmatpush1.bf16.msra.mxu0 %v2185
    %2230 = vmatprep.subr.bf16.mxu0 %v2189
    %2231 = vmatpush1.bf16.msra.mxu0 %v2188
    %2232 = vmatprep.subr.bf16.mxu0 %v2192
    %2233 = vmatpush1.bf16.msra.mxu0 %v2191
    %2234 = vmatprep.subr.bf16.mxu0 0
    %2235 = vmatpush1.bf16.msra.mxu0 0
    %2236 = vmatprep.subr.bf16.mxu0 0
    %2237 = vmatpush1.bf16.msra.mxu0 0
    %2238 = vmatprep.subr.bf16.mxu0 0
    %2239 = vmatpush1.bf16.msra.mxu0 0
    %2240 = vmatprep.subr.bf16.mxu0 0
    %2241 = vmatpush1.bf16.msra.mxu0 0
    %2242 = vmatprep.subr.bf16.mxu0 0
    %2243 = vmatpush1.bf16.msra.mxu0 0
    %2244 = vmatprep.subr.bf16.mxu0 0
    %2245 = vmatpush1.bf16.msra.mxu0 0
    %2246 = vmatprep.subr.bf16.mxu0 0
    %2247 = vmatpush1.bf16.msra.mxu0 0
    %2248 = vmatprep.subr.bf16.mxu0 0
    %2249 = vmatpush1.bf16.msra.mxu0 0
    %2250 = vmatprep.mubr.bf16.mxu0 0
    %2251 = vmatmul.mubr.bf16.gmra.mrb[0].mxu0 %v2073
    %v2252 = vpop.f32.mrb[0].mxu0
    %v2253 = vadd.f32 %v2078, %v2252
    %v2254 = vpop.f32.mrb[0].mxu0
    %v2255 = vadd.f32 %v2082, %v2254
    %v2256 = vpop.f32.mrb[0].mxu0
    %v2257 = vpop.f32.mrb[0].mxu0
    %2258 = vdwg.mxu0
    %2259 = vmatprep.subr.bf16.mxu0 0
    %2260 = vmatpush1.bf16.msra.mxu0 %v2172
    %2261 = vmatprep.subr.bf16.mxu0 0
    %2262 = vmatpush1.bf16.msra.mxu0 %v2175
    %2263 = vmatprep.subr.bf16.mxu0 0
    %2264 = vmatpush1.bf16.msra.mxu0 %v2178
    %2265 = vmatprep.subr.bf16.mxu0 0
    %2266 = vmatpush1.bf16.msra.mxu0 %v2181
    %2267 = vmatprep.subr.bf16.mxu0 0
    %2268 = vmatpush1.bf16.msra.mxu0 %v2184
    %2269 = vmatprep.subr.bf16.mxu0 0
    %2270 = vmatpush1.bf16.msra.mxu0 %v2187
    %2271 = vmatprep.subr.bf16.mxu0 0
    %2272 = vmatpush1.bf16.msra.mxu0 %v2190
    %2273 = vmatprep.subr.bf16.mxu0 0
    %2274 = vmatpush1.bf16.msra.mxu0 %v2193
    %2275 = vmatprep.subr.bf16.mxu0 0
    %2276 = vmatpush1.bf16.msra.mxu0 0
    %2277 = vmatprep.subr.bf16.mxu0 0
    %2278 = vmatpush1.bf16.msra.mxu0 0
    %2279 = vmatprep.subr.bf16.mxu0 0
    %2280 = vmatpush1.bf16.msra.mxu0 0
    %2281 = vmatprep.subr.bf16.mxu0 0
    %2282 = vmatpush1.bf16.msra.mxu0 0
    %2283 = vmatprep.subr.bf16.mxu0 0
    %2284 = vmatpush1.bf16.msra.mxu0 0
    %2285 = vmatprep.subr.bf16.mxu0 0
    %2286 = vmatpush1.bf16.msra.mxu0 0
    %2287 = vmatprep.subr.bf16.mxu0 0
    %2288 = vmatpush1.bf16.msra.mxu0 0
    %2289 = vmatprep.subr.bf16.mxu0 0
    %2290 = vmatpush1.bf16.msra.mxu0 0
    %2291 = vmatprep.mubr.bf16.mxu0 0
    %2292 = vmatmul.mubr.bf16.gmra.mrb[0].mxu0 %v2073
    %v2293 = vpop.f32.mrb[0].mxu0
    %v2294 = vadd.f32 %v2086, %v2293
    %v2295 = vpop.f32.mrb[0].mxu0
    %v2296 = vpop.f32.mrb[0].mxu0
    %v2297 = vpop.f32.mrb[0].mxu0
    %2298 = vdwg.mxu0
    %v2302 = vcombine.low %v2253, %v2255
    %v2304 = vunpack.c.l.s4 1983009808
    %v2305 = vunpack.c.0.s8 %v2304
    %v2306 = vlaneseq
    %v2307 = vshrl.u32 %v2306, 7
    %v2308 = vsub.s32 %v2305, %v2307
    %v2309 = vrot.slane %v2302, %v2308
    %v2311 = vunpack.c.l.s4 1983009808
    %v2312 = vunpack.c.0.s8 %v2311
    %v2313 = vlaneseq
    %v2314 = vshrl.u32 %v2313, 7
    %v2315 = vsub.s32 %v2312, %v2314
    %v2316 = vrot.slane %v2294, %v2315
    %v2317 = vcombine.low %v2309, %v2316
    %v2318 = vcombine.high %v2309, %v2316
    %v2321 = vpack.c.bf16 %v2317, %v2317
    %v2322 = vpack.c.bf16 %v2318, %v2318
    %v2324 = vunpack.c.l.s4 1983009808
    %v2325 = vunpack.c.0.s8 %v2324
    %v2326 = vlaneseq
    %v2327 = vshrl.u32 %v2326, 7
    %v2328 = vsub.s32 %v2325, %v2327
    %v2329 = vrot.slane %v2317, %v2328
    %v2330 = vcombine.high %v2329, %v2329
    %v2332 = vunpack.c.l.s4 1983009808
    %v2333 = vunpack.c.0.s8 %v2332
    %v2334 = vlaneseq
    %v2335 = vshrl.u32 %v2334, 7
    %v2336 = vsub.s32 %v2333, %v2335
    %v2337 = vrot.slane %v2318, %v2336
    %v2338 = vcombine.high %v2337, %v2337
    %v2341 = vpack.c.bf16 %v2330, %v2330
    %v2342 = vpack.c.bf16 %v2338, %v2338
    %v2343 = vcombine.high %v2317, %v2317
    %v2345 = vunpack.c.l.s4 1983009808
    %v2346 = vunpack.c.0.s8 %v2345
    %v2347 = vlaneseq
    %v2348 = vshrl.u32 %v2347, 7
    %v2349 = vsub.s32 %v2346, %v2348
    %v2350 = vrot.slane %v2343, %v2349
    %v2351 = vcombine.high %v2318, %v2318
    %v2353 = vunpack.c.l.s4 1983009808
    %v2354 = vunpack.c.0.s8 %v2353
    %v2355 = vlaneseq
    %v2356 = vshrl.u32 %v2355, 7
    %v2357 = vsub.s32 %v2354, %v2356
    %v2358 = vrot.slane %v2351, %v2357
    %v2361 = vpack.c.bf16 %v2350, %v2350
    %v2362 = vpack.c.bf16 %v2358, %v2358
    %v2364 = vsel %vm602, %v2321, 0
    %v2367 = vsel %vm602, %v2341, 0
    %2369 = vmatprep.subr.bf16.mxu0 0
    %2370 = vmatpush1.bf16.xpose.msra.mxu0 %v2367
    %2371 = vmatprep.subr.bf16.mxu0 0
    %2372 = vmatpush1.bf16.xpose.msra.mxu0 0
    %2373 = vmatprep.subr.bf16.mxu0 0
    %2374 = vmatpush1.bf16.xpose.msra.mxu0 0
    %2375 = vmatprep.subr.bf16.mxu0 0
    %2376 = vmatpush1.bf16.xpose.msra.mxu0 0
    %2377 = vmatprep.subr.bf16.mxu0 0
    %2378 = vmatpush1.bf16.xpose.msra.mxu0 0
    %2379 = vmatprep.subr.bf16.mxu0 0
    %2380 = vmatpush1.bf16.xpose.msra.mxu0 0
    %2381 = vmatprep.subr.bf16.mxu0 0
    %2382 = vmatpush1.bf16.xpose.msra.mxu0 0
    %2383 = vmatprep.subr.bf16.mxu0 0
    %2384 = vmatpush1.bf16.xpose.msra.mxu0 0
    %2385 = vmatprep.subr.bf16.mxu0 0
    %2386 = vmatpush1.bf16.xpose.msra.mxu0 0
    %2387 = vmatprep.subr.bf16.mxu0 0
    %2388 = vmatpush1.bf16.xpose.msra.mxu0 0
    %2389 = vmatprep.subr.bf16.mxu0 0
    %2390 = vmatpush1.bf16.xpose.msra.mxu0 0
    %2391 = vmatprep.subr.bf16.mxu0 0
    %2392 = vmatpush1.bf16.xpose.msra.mxu0 0
    %2393 = vmatprep.subr.bf16.mxu0 0
    %2394 = vmatpush1.bf16.xpose.msra.mxu0 0
    %2395 = vmatprep.subr.bf16.mxu0 0
    %2396 = vmatpush1.bf16.xpose.msra.mxu0 0
    %2397 = vmatprep.subr.bf16.mxu0 0
    %2398 = vmatpush1.bf16.xpose.msra.mxu0 0
    %2399 = vmatprep.subr.bf16.mxu0 0
    %2400 = vmatpush1.bf16.xpose.msra.mxu0 0
    %2401 = vmatprep.mubr.bf16.mxu0 0
    %2402 = vmatmul.mubr.bf16.gmra.mrb[0].mxu0 %v2364
    %v2403 = vpop.f32.mrb[0].mxu0
    %v2404 = vadd.f32 0.0, %v2403
    %v2405 = vpop.f32.mrb[0].mxu0
    %v2406 = vpop.f32.mrb[0].mxu0
    %v2407 = vpop.f32.mrb[0].mxu0
    %2408 = vdwg.mxu0
    %v2410 = vsel %vm602, %v2322, 0
    %v2413 = vsel %vm602, %v2342, 0
    %2415 = vmatprep.subr.bf16.mxu0 0
    %2416 = vmatpush1.bf16.xpose.msra.mxu0 %v2413
    %2417 = vmatprep.subr.bf16.mxu0 0
    %2418 = vmatpush1.bf16.xpose.msra.mxu0 0
    %2419 = vmatprep.subr.bf16.mxu0 0
    %2420 = vmatpush1.bf16.xpose.msra.mxu0 0
    %2421 = vmatprep.subr.bf16.mxu0 0
    %2422 = vmatpush1.bf16.xpose.msra.mxu0 0
    %2423 = vmatprep.subr.bf16.mxu0 0
    %2424 = vmatpush1.bf16.xpose.msra.mxu0 0
    %2425 = vmatprep.subr.bf16.mxu0 0
    %2426 = vmatpush1.bf16.xpose.msra.mxu0 0
    %2427 = vmatprep.subr.bf16.mxu0 0
    %2428 = vmatpush1.bf16.xpose.msra.mxu0 0
    %2429 = vmatprep.subr.bf16.mxu0 0
    %2430 = vmatpush1.bf16.xpose.msra.mxu0 0
    %2431 = vmatprep.subr.bf16.mxu0 0
    %2432 = vmatpush1.bf16.xpose.msra.mxu0 0
    %2433 = vmatprep.subr.bf16.mxu0 0
    %2434 = vmatpush1.bf16.xpose.msra.mxu0 0
    %2435 = vmatprep.subr.bf16.mxu0 0
    %2436 = vmatpush1.bf16.xpose.msra.mxu0 0
    %2437 = vmatprep.subr.bf16.mxu0 0
    %2438 = vmatpush1.bf16.xpose.msra.mxu0 0
    %2439 = vmatprep.subr.bf16.mxu0 0
    %2440 = vmatpush1.bf16.xpose.msra.mxu0 0
    %2441 = vmatprep.subr.bf16.mxu0 0
    %2442 = vmatpush1.bf16.xpose.msra.mxu0 0
    %2443 = vmatprep.subr.bf16.mxu0 0
    %2444 = vmatpush1.bf16.xpose.msra.mxu0 0
    %2445 = vmatprep.subr.bf16.mxu0 0
    %2446 = vmatpush1.bf16.xpose.msra.mxu0 0
    %2447 = vmatprep.mubr.bf16.mxu0 0
    %2448 = vmatmul.mubr.bf16.gmra.mrb[0].mxu0 %v2410
    %v2449 = vpop.f32.mrb[0].mxu0
    %v2450 = vadd.f32 0.0, %v2449
    %v2451 = vpop.f32.mrb[0].mxu0
    %v2452 = vpop.f32.mrb[0].mxu0
    %v2453 = vpop.f32.mrb[0].mxu0
    %2454 = vdwg.mxu0
    %v2455 = vmul.f32 %v2404, 0.17677669
    %v2456 = vmul.f32 %v2450, 0.17677669
    %v2457 = vsel %vm697, %v2455, -inf
    %2458 = vmax.xlane.f32.xlu0 %v2457
    %v2459 = vpop.xlane.xlu0 %2458
    %v2460 = vsel %vm697, %v2456, -inf
    %2461 = vmax.xlane.f32.xlu0 %v2460
    %v2462 = vpop.xlane.xlu0 %2461
    %v2463 = vsub.f32 %v2455, %v2459
    %v2464 = vsub.f32 %v2456, %v2462
    %v2465 = vmul.f32 %v2463, 1.442695
    %v2466 = vpow.pop %v2465
    %v2467 = vmul.f32 %v2464, 1.442695
    %v2468 = vpow.pop %v2467
    %v2469 = vsel %vm697, %v2466, 0.0
    %2470 = vadd.xlane.f32.xlu0 %v2469
    %v2471 = vpop.xlane.xlu0 %2470
    %v2472 = vsel %vm697, %v2468, 0.0
    %2473 = vadd.xlane.f32.xlu0 %v2472
    %v2474 = vpop.xlane.xlu0 %2473
    %v2475 = vrcp.pop %v2471
    %v2476 = vrcp.pop %v2474
    %v2477 = vmul.f32 %v2466, %v2475
    %v2478 = vmul.f32 %v2468, %v2476
    %v2479 = vpack.c.bf16 %v2477, %v2477
    %v2480 = vpack.c.bf16 %v2478, %v2478
    %v2482 = vsel %vm722, %v2479, 0
    %v2485 = vsel %vm726, %v2361, 0
    %2487 = vmatprep.subr.bf16.mxu0 0
    %2488 = vmatpush1.bf16.msra.mxu0 %v2485
    %2489 = vmatprep.subr.bf16.mxu0 0
    %2490 = vmatpush1.bf16.msra.mxu0 0
    %2491 = vmatprep.subr.bf16.mxu0 0
    %2492 = vmatpush1.bf16.msra.mxu0 0
    %2493 = vmatprep.subr.bf16.mxu0 0
    %2494 = vmatpush1.bf16.msra.mxu0 0
    %2495 = vmatprep.subr.bf16.mxu0 0
    %2496 = vmatpush1.bf16.msra.mxu0 0
    %2497 = vmatprep.subr.bf16.mxu0 0
    %2498 = vmatpush1.bf16.msra.mxu0 0
    %2499 = vmatprep.subr.bf16.mxu0 0
    %2500 = vmatpush1.bf16.msra.mxu0 0
    %2501 = vmatprep.subr.bf16.mxu0 0
    %2502 = vmatpush1.bf16.msra.mxu0 0
    %2503 = vmatprep.subr.bf16.mxu0 0
    %2504 = vmatpush1.bf16.msra.mxu0 0
    %2505 = vmatprep.subr.bf16.mxu0 0
    %2506 = vmatpush1.bf16.msra.mxu0 0
    %2507 = vmatprep.subr.bf16.mxu0 0
    %2508 = vmatpush1.bf16.msra.mxu0 0
    %2509 = vmatprep.subr.bf16.mxu0 0
    %2510 = vmatpush1.bf16.msra.mxu0 0
    %2511 = vmatprep.subr.bf16.mxu0 0
    %2512 = vmatpush1.bf16.msra.mxu0 0
    %2513 = vmatprep.subr.bf16.mxu0 0
    %2514 = vmatpush1.bf16.msra.mxu0 0
    %2515 = vmatprep.subr.bf16.mxu0 0
    %2516 = vmatpush1.bf16.msra.mxu0 0
    %2517 = vmatprep.subr.bf16.mxu0 0
    %2518 = vmatpush1.bf16.msra.mxu0 0
    %2519 = vmatprep.mubr.bf16.mxu0 0
    %2520 = vmatmul.mubr.bf16.gmra.mrb[0].mxu0 %v2482
    %v2521 = vpop.f32.mrb[0].mxu0
    %v2522 = vadd.f32 0.0, %v2521
    %v2523 = vpop.f32.mrb[0].mxu0
    %v2524 = vpop.f32.mrb[0].mxu0
    %v2525 = vpop.f32.mrb[0].mxu0
    %2526 = vdwg.mxu0
    %v2528 = vsel %vm722, %v2480, 0
    %v2531 = vsel %vm726, %v2362, 0
    %2533 = vmatprep.subr.bf16.mxu0 0
    %2534 = vmatpush1.bf16.msra.mxu0 %v2531
    %2535 = vmatprep.subr.bf16.mxu0 0
    %2536 = vmatpush1.bf16.msra.mxu0 0
    %2537 = vmatprep.subr.bf16.mxu0 0
    %2538 = vmatpush1.bf16.msra.mxu0 0
    %2539 = vmatprep.subr.bf16.mxu0 0
    %2540 = vmatpush1.bf16.msra.mxu0 0
    %2541 = vmatprep.subr.bf16.mxu0 0
    %2542 = vmatpush1.bf16.msra.mxu0 0
    %2543 = vmatprep.subr.bf16.mxu0 0
    %2544 = vmatpush1.bf16.msra.mxu0 0
    %2545 = vmatprep.subr.bf16.mxu0 0
    %2546 = vmatpush1.bf16.msra.mxu0 0
    %2547 = vmatprep.subr.bf16.mxu0 0
    %2548 = vmatpush1.bf16.msra.mxu0 0
    %2549 = vmatprep.subr.bf16.mxu0 0
    %2550 = vmatpush1.bf16.msra.mxu0 0
    %2551 = vmatprep.subr.bf16.mxu0 0
    %2552 = vmatpush1.bf16.msra.mxu0 0
    %2553 = vmatprep.subr.bf16.mxu0 0
    %2554 = vmatpush1.bf16.msra.mxu0 0
    %2555 = vmatprep.subr.bf16.mxu0 0
    %2556 = vmatpush1.bf16.msra.mxu0 0
    %2557 = vmatprep.subr.bf16.mxu0 0
    %2558 = vmatpush1.bf16.msra.mxu0 0
    %2559 = vmatprep.subr.bf16.mxu0 0
    %2560 = vmatpush1.bf16.msra.mxu0 0
    %2561 = vmatprep.subr.bf16.mxu0 0
    %2562 = vmatpush1.bf16.msra.mxu0 0
    %2563 = vmatprep.subr.bf16.mxu0 0
    %2564 = vmatpush1.bf16.msra.mxu0 0
    %2565 = vmatprep.mubr.bf16.mxu0 0
    %2566 = vmatmul.mubr.bf16.gmra.mrb[0].mxu0 %v2528
    %v2567 = vpop.f32.mrb[0].mxu0
    %v2568 = vadd.f32 0.0, %v2567
    %v2569 = vpop.f32.mrb[0].mxu0
    %v2570 = vpop.f32.mrb[0].mxu0
    %v2571 = vpop.f32.mrb[0].mxu0
    %2572 = vdwg.mxu0
    %2573 = vrot.lane.b32.xlu0 %v2330, 96
    %v2574 = vpop.permute.xlu0 %2573
    %2575 = vrot.lane.b32.xlu0 %v2338, 96
    %v2576 = vpop.permute.xlu0 %2575
    %v2579 = vpack.c.bf16 %v2574, %v2574
    %v2580 = vpack.c.bf16 %v2576, %v2576
    %2581 = vrot.lane.b32.xlu0 %v2350, 96
    %v2582 = vpop.permute.xlu0 %2581
    %2583 = vrot.lane.b32.xlu0 %v2358, 96
    %v2584 = vpop.permute.xlu0 %2583
    %v2587 = vpack.c.bf16 %v2582, %v2582
    %v2588 = vpack.c.bf16 %v2584, %v2584
    %2590 = vrot.lane.b32.xlu0 %v2321, 96
    %v2591 = vpop.permute.xlu0 %2590
    %v2593 = vsel %vm602, %v2591, 0
    %v2596 = vsel %vm602, %v2579, 0
    %2598 = vmatprep.subr.bf16.mxu0 0
    %2599 = vmatpush1.bf16.xpose.msra.mxu0 %v2596
    %2600 = vmatprep.subr.bf16.mxu0 0
    %2601 = vmatpush1.bf16.xpose.msra.mxu0 0
    %2602 = vmatprep.subr.bf16.mxu0 0
    %2603 = vmatpush1.bf16.xpose.msra.mxu0 0
    %2604 = vmatprep.subr.bf16.mxu0 0
    %2605 = vmatpush1.bf16.xpose.msra.mxu0 0
    %2606 = vmatprep.subr.bf16.mxu0 0
    %2607 = vmatpush1.bf16.xpose.msra.mxu0 0
    %2608 = vmatprep.subr.bf16.mxu0 0
    %2609 = vmatpush1.bf16.xpose.msra.mxu0 0
    %2610 = vmatprep.subr.bf16.mxu0 0
    %2611 = vmatpush1.bf16.xpose.msra.mxu0 0
    %2612 = vmatprep.subr.bf16.mxu0 0
    %2613 = vmatpush1.bf16.xpose.msra.mxu0 0
    %2614 = vmatprep.subr.bf16.mxu0 0
    %2615 = vmatpush1.bf16.xpose.msra.mxu0 0
    %2616 = vmatprep.subr.bf16.mxu0 0
    %2617 = vmatpush1.bf16.xpose.msra.mxu0 0
    %2618 = vmatprep.subr.bf16.mxu0 0
    %2619 = vmatpush1.bf16.xpose.msra.mxu0 0
    %2620 = vmatprep.subr.bf16.mxu0 0
    %2621 = vmatpush1.bf16.xpose.msra.mxu0 0
    %2622 = vmatprep.subr.bf16.mxu0 0
    %2623 = vmatpush1.bf16.xpose.msra.mxu0 0
    %2624 = vmatprep.subr.bf16.mxu0 0
    %2625 = vmatpush1.bf16.xpose.msra.mxu0 0
    %2626 = vmatprep.subr.bf16.mxu0 0
    %2627 = vmatpush1.bf16.xpose.msra.mxu0 0
    %2628 = vmatprep.subr.bf16.mxu0 0
    %2629 = vmatpush1.bf16.xpose.msra.mxu0 0
    %2630 = vmatprep.mubr.bf16.mxu0 0
    %2631 = vmatmul.mubr.bf16.gmra.mrb[0].mxu0 %v2593
    %v2632 = vpop.f32.mrb[0].mxu0
    %v2633 = vadd.f32 0.0, %v2632
    %v2634 = vpop.f32.mrb[0].mxu0
    %v2635 = vpop.f32.mrb[0].mxu0
    %v2636 = vpop.f32.mrb[0].mxu0
    %2637 = vdwg.mxu0
    %2639 = vrot.lane.b32.xlu0 %v2322, 96
    %v2640 = vpop.permute.xlu0 %2639
    %v2642 = vsel %vm602, %v2640, 0
    %v2645 = vsel %vm602, %v2580, 0
    %2647 = vmatprep.subr.bf16.mxu0 0
    %2648 = vmatpush1.bf16.xpose.msra.mxu0 %v2645
    %2649 = vmatprep.subr.bf16.mxu0 0
    %2650 = vmatpush1.bf16.xpose.msra.mxu0 0
    %2651 = vmatprep.subr.bf16.mxu0 0
    %2652 = vmatpush1.bf16.xpose.msra.mxu0 0
    %2653 = vmatprep.subr.bf16.mxu0 0
    %2654 = vmatpush1.bf16.xpose.msra.mxu0 0
    %2655 = vmatprep.subr.bf16.mxu0 0
    %2656 = vmatpush1.bf16.xpose.msra.mxu0 0
    %2657 = vmatprep.subr.bf16.mxu0 0
    %2658 = vmatpush1.bf16.xpose.msra.mxu0 0
    %2659 = vmatprep.subr.bf16.mxu0 0
    %2660 = vmatpush1.bf16.xpose.msra.mxu0 0
    %2661 = vmatprep.subr.bf16.mxu0 0
    %2662 = vmatpush1.bf16.xpose.msra.mxu0 0
    %2663 = vmatprep.subr.bf16.mxu0 0
    %2664 = vmatpush1.bf16.xpose.msra.mxu0 0
    %2665 = vmatprep.subr.bf16.mxu0 0
    %2666 = vmatpush1.bf16.xpose.msra.mxu0 0
    %2667 = vmatprep.subr.bf16.mxu0 0
    %2668 = vmatpush1.bf16.xpose.msra.mxu0 0
    %2669 = vmatprep.subr.bf16.mxu0 0
    %2670 = vmatpush1.bf16.xpose.msra.mxu0 0
    %2671 = vmatprep.subr.bf16.mxu0 0
    %2672 = vmatpush1.bf16.xpose.msra.mxu0 0
    %2673 = vmatprep.subr.bf16.mxu0 0
    %2674 = vmatpush1.bf16.xpose.msra.mxu0 0
    %2675 = vmatprep.subr.bf16.mxu0 0
    %2676 = vmatpush1.bf16.xpose.msra.mxu0 0
    %2677 = vmatprep.subr.bf16.mxu0 0
    %2678 = vmatpush1.bf16.xpose.msra.mxu0 0
    %2679 = vmatprep.mubr.bf16.mxu0 0
    %2680 = vmatmul.mubr.bf16.gmra.mrb[0].mxu0 %v2642
    %v2681 = vpop.f32.mrb[0].mxu0
    %v2682 = vadd.f32 0.0, %v2681
    %v2683 = vpop.f32.mrb[0].mxu0
    %v2684 = vpop.f32.mrb[0].mxu0
    %v2685 = vpop.f32.mrb[0].mxu0
    %2686 = vdwg.mxu0
    %v2687 = vmul.f32 %v2633, 0.17677669
    %v2688 = vmul.f32 %v2682, 0.17677669
    %v2689 = vsel %vm697, %v2687, -inf
    %2690 = vmax.xlane.f32.xlu0 %v2689
    %v2691 = vpop.xlane.xlu0 %2690
    %v2692 = vsel %vm697, %v2688, -inf
    %2693 = vmax.xlane.f32.xlu0 %v2692
    %v2694 = vpop.xlane.xlu0 %2693
    %v2695 = vsub.f32 %v2687, %v2691
    %v2696 = vsub.f32 %v2688, %v2694
    %v2697 = vmul.f32 %v2695, 1.442695
    %v2698 = vpow.pop %v2697
    %v2699 = vmul.f32 %v2696, 1.442695
    %v2700 = vpow.pop %v2699
    %v2701 = vsel %vm697, %v2698, 0.0
    %2702 = vadd.xlane.f32.xlu0 %v2701
    %v2703 = vpop.xlane.xlu0 %2702
    %v2704 = vsel %vm697, %v2700, 0.0
    %2705 = vadd.xlane.f32.xlu0 %v2704
    %v2706 = vpop.xlane.xlu0 %2705
    %v2707 = vrcp.pop %v2703
    %v2708 = vrcp.pop %v2706
    %v2709 = vmul.f32 %v2698, %v2707
    %v2710 = vmul.f32 %v2700, %v2708
    %v2711 = vpack.c.bf16 %v2709, %v2709
    %v2712 = vpack.c.bf16 %v2710, %v2710
    %v2714 = vsel %vm722, %v2711, 0
    %v2717 = vsel %vm726, %v2587, 0
    %2719 = vmatprep.subr.bf16.mxu0 0
    %2720 = vmatpush1.bf16.msra.mxu0 %v2717
    %2721 = vmatprep.subr.bf16.mxu0 0
    %2722 = vmatpush1.bf16.msra.mxu0 0
    %2723 = vmatprep.subr.bf16.mxu0 0
    %2724 = vmatpush1.bf16.msra.mxu0 0
    %2725 = vmatprep.subr.bf16.mxu0 0
    %2726 = vmatpush1.bf16.msra.mxu0 0
    %2727 = vmatprep.subr.bf16.mxu0 0
    %2728 = vmatpush1.bf16.msra.mxu0 0
    %2729 = vmatprep.subr.bf16.mxu0 0
    %2730 = vmatpush1.bf16.msra.mxu0 0
    %2731 = vmatprep.subr.bf16.mxu0 0
    %2732 = vmatpush1.bf16.msra.mxu0 0
    %2733 = vmatprep.subr.bf16.mxu0 0
    %2734 = vmatpush1.bf16.msra.mxu0 0
    %2735 = vmatprep.subr.bf16.mxu0 0
    %2736 = vmatpush1.bf16.msra.mxu0 0
    %2737 = vmatprep.subr.bf16.mxu0 0
    %2738 = vmatpush1.bf16.msra.mxu0 0
    %2739 = vmatprep.subr.bf16.mxu0 0
    %2740 = vmatpush1.bf16.msra.mxu0 0
    %2741 = vmatprep.subr.bf16.mxu0 0
    %2742 = vmatpush1.bf16.msra.mxu0 0
    %2743 = vmatprep.subr.bf16.mxu0 0
    %2744 = vmatpush1.bf16.msra.mxu0 0
    %2745 = vmatprep.subr.bf16.mxu0 0
    %2746 = vmatpush1.bf16.msra.mxu0 0
    %2747 = vmatprep.subr.bf16.mxu0 0
    %2748 = vmatpush1.bf16.msra.mxu0 0
    %2749 = vmatprep.subr.bf16.mxu0 0
    %2750 = vmatpush1.bf16.msra.mxu0 0
    %2751 = vmatprep.mubr.bf16.mxu0 0
    %2752 = vmatmul.mubr.bf16.gmra.mrb[0].mxu0 %v2714
    %v2753 = vpop.f32.mrb[0].mxu0
    %v2754 = vadd.f32 0.0, %v2753
    %v2755 = vpop.f32.mrb[0].mxu0
    %v2756 = vpop.f32.mrb[0].mxu0
    %v2757 = vpop.f32.mrb[0].mxu0
    %2758 = vdwg.mxu0
    %v2760 = vsel %vm722, %v2712, 0
    %v2763 = vsel %vm726, %v2588, 0
    %2765 = vmatprep.subr.bf16.mxu0 0
    %2766 = vmatpush1.bf16.msra.mxu0 %v2763
    %2767 = vmatprep.subr.bf16.mxu0 0
    %2768 = vmatpush1.bf16.msra.mxu0 0
    %2769 = vmatprep.subr.bf16.mxu0 0
    %2770 = vmatpush1.bf16.msra.mxu0 0
    %2771 = vmatprep.subr.bf16.mxu0 0
    %2772 = vmatpush1.bf16.msra.mxu0 0
    %2773 = vmatprep.subr.bf16.mxu0 0
    %2774 = vmatpush1.bf16.msra.mxu0 0
    %2775 = vmatprep.subr.bf16.mxu0 0
    %2776 = vmatpush1.bf16.msra.mxu0 0
    %2777 = vmatprep.subr.bf16.mxu0 0
    %2778 = vmatpush1.bf16.msra.mxu0 0
    %2779 = vmatprep.subr.bf16.mxu0 0
    %2780 = vmatpush1.bf16.msra.mxu0 0
    %2781 = vmatprep.subr.bf16.mxu0 0
    %2782 = vmatpush1.bf16.msra.mxu0 0
    %2783 = vmatprep.subr.bf16.mxu0 0
    %2784 = vmatpush1.bf16.msra.mxu0 0
    %2785 = vmatprep.subr.bf16.mxu0 0
    %2786 = vmatpush1.bf16.msra.mxu0 0
    %2787 = vmatprep.subr.bf16.mxu0 0
    %2788 = vmatpush1.bf16.msra.mxu0 0
    %2789 = vmatprep.subr.bf16.mxu0 0
    %2790 = vmatpush1.bf16.msra.mxu0 0
    %2791 = vmatprep.subr.bf16.mxu0 0
    %2792 = vmatpush1.bf16.msra.mxu0 0
    %2793 = vmatprep.subr.bf16.mxu0 0
    %2794 = vmatpush1.bf16.msra.mxu0 0
    %2795 = vmatprep.subr.bf16.mxu0 0
    %2796 = vmatpush1.bf16.msra.mxu0 0
    %2797 = vmatprep.mubr.bf16.mxu0 0
    %2798 = vmatmul.mubr.bf16.gmra.mrb[0].mxu0 %v2760
    %v2799 = vpop.f32.mrb[0].mxu0
    %v2800 = vadd.f32 0.0, %v2799
    %v2801 = vpop.f32.mrb[0].mxu0
    %v2802 = vpop.f32.mrb[0].mxu0
    %v2803 = vpop.f32.mrb[0].mxu0
    %2804 = vdwg.mxu0
    %2805 = vrot.lane.b32.xlu0 %v2330, 64
    %v2806 = vpop.permute.xlu0 %2805
    %2807 = vrot.lane.b32.xlu0 %v2338, 64
    %v2808 = vpop.permute.xlu0 %2807
    %v2811 = vpack.c.bf16 %v2806, %v2806
    %v2812 = vpack.c.bf16 %v2808, %v2808
    %2813 = vrot.lane.b32.xlu0 %v2350, 64
    %v2814 = vpop.permute.xlu0 %2813
    %2815 = vrot.lane.b32.xlu0 %v2358, 64
    %v2816 = vpop.permute.xlu0 %2815
    %v2819 = vpack.c.bf16 %v2814, %v2814
    %v2820 = vpack.c.bf16 %v2816, %v2816
    %2821 = vrot.lane.b32.xlu0 %v2321, 64
    %v2822 = vpop.permute.xlu0 %2821
    %v2824 = vsel %vm602, %v2822, 0
    %v2827 = vsel %vm602, %v2811, 0
    %2829 = vmatprep.subr.bf16.mxu0 0
    %2830 = vmatpush1.bf16.xpose.msra.mxu0 %v2827
    %2831 = vmatprep.subr.bf16.mxu0 0
    %2832 = vmatpush1.bf16.xpose.msra.mxu0 0
    %2833 = vmatprep.subr.bf16.mxu0 0
    %2834 = vmatpush1.bf16.xpose.msra.mxu0 0
    %2835 = vmatprep.subr.bf16.mxu0 0
    %2836 = vmatpush1.bf16.xpose.msra.mxu0 0
    %2837 = vmatprep.subr.bf16.mxu0 0
    %2838 = vmatpush1.bf16.xpose.msra.mxu0 0
    %2839 = vmatprep.subr.bf16.mxu0 0
    %2840 = vmatpush1.bf16.xpose.msra.mxu0 0
    %2841 = vmatprep.subr.bf16.mxu0 0
    %2842 = vmatpush1.bf16.xpose.msra.mxu0 0
    %2843 = vmatprep.subr.bf16.mxu0 0
    %2844 = vmatpush1.bf16.xpose.msra.mxu0 0
    %2845 = vmatprep.subr.bf16.mxu0 0
    %2846 = vmatpush1.bf16.xpose.msra.mxu0 0
    %2847 = vmatprep.subr.bf16.mxu0 0
    %2848 = vmatpush1.bf16.xpose.msra.mxu0 0
    %2849 = vmatprep.subr.bf16.mxu0 0
    %2850 = vmatpush1.bf16.xpose.msra.mxu0 0
    %2851 = vmatprep.subr.bf16.mxu0 0
    %2852 = vmatpush1.bf16.xpose.msra.mxu0 0
    %2853 = vmatprep.subr.bf16.mxu0 0
    %2854 = vmatpush1.bf16.xpose.msra.mxu0 0
    %2855 = vmatprep.subr.bf16.mxu0 0
    %2856 = vmatpush1.bf16.xpose.msra.mxu0 0
    %2857 = vmatprep.subr.bf16.mxu0 0
    %2858 = vmatpush1.bf16.xpose.msra.mxu0 0
    %2859 = vmatprep.subr.bf16.mxu0 0
    %2860 = vmatpush1.bf16.xpose.msra.mxu0 0
    %2861 = vmatprep.mubr.bf16.mxu0 0
    %2862 = vmatmul.mubr.bf16.gmra.mrb[0].mxu0 %v2824
    %v2863 = vpop.f32.mrb[0].mxu0
    %v2864 = vadd.f32 0.0, %v2863
    %v2865 = vpop.f32.mrb[0].mxu0
    %v2866 = vpop.f32.mrb[0].mxu0
    %v2867 = vpop.f32.mrb[0].mxu0
    %2868 = vdwg.mxu0
    %2869 = vrot.lane.b32.xlu0 %v2322, 64
    %v2870 = vpop.permute.xlu0 %2869
    %v2872 = vsel %vm602, %v2870, 0
    %v2875 = vsel %vm602, %v2812, 0
    %2877 = vmatprep.subr.bf16.mxu0 0
    %2878 = vmatpush1.bf16.xpose.msra.mxu0 %v2875
    %2879 = vmatprep.subr.bf16.mxu0 0
    %2880 = vmatpush1.bf16.xpose.msra.mxu0 0
    %2881 = vmatprep.subr.bf16.mxu0 0
    %2882 = vmatpush1.bf16.xpose.msra.mxu0 0
    %2883 = vmatprep.subr.bf16.mxu0 0
    %2884 = vmatpush1.bf16.xpose.msra.mxu0 0
    %2885 = vmatprep.subr.bf16.mxu0 0
    %2886 = vmatpush1.bf16.xpose.msra.mxu0 0
    %2887 = vmatprep.subr.bf16.mxu0 0
    %2888 = vmatpush1.bf16.xpose.msra.mxu0 0
    %2889 = vmatprep.subr.bf16.mxu0 0
    %2890 = vmatpush1.bf16.xpose.msra.mxu0 0
    %2891 = vmatprep.subr.bf16.mxu0 0
    %2892 = vmatpush1.bf16.xpose.msra.mxu0 0
    %2893 = vmatprep.subr.bf16.mxu0 0
    %2894 = vmatpush1.bf16.xpose.msra.mxu0 0
    %2895 = vmatprep.subr.bf16.mxu0 0
    %2896 = vmatpush1.bf16.xpose.msra.mxu0 0
    %2897 = vmatprep.subr.bf16.mxu0 0
    %2898 = vmatpush1.bf16.xpose.msra.mxu0 0
    %2899 = vmatprep.subr.bf16.mxu0 0
    %2900 = vmatpush1.bf16.xpose.msra.mxu0 0
    %2901 = vmatprep.subr.bf16.mxu0 0
    %2902 = vmatpush1.bf16.xpose.msra.mxu0 0
    %2903 = vmatprep.subr.bf16.mxu0 0
    %2904 = vmatpush1.bf16.xpose.msra.mxu0 0
    %2905 = vmatprep.subr.bf16.mxu0 0
    %2906 = vmatpush1.bf16.xpose.msra.mxu0 0
    %2907 = vmatprep.subr.bf16.mxu0 0
    %2908 = vmatpush1.bf16.xpose.msra.mxu0 0
    %2909 = vmatprep.mubr.bf16.mxu0 0
    %2910 = vmatmul.mubr.bf16.gmra.mrb[0].mxu0 %v2872
    %v2911 = vpop.f32.mrb[0].mxu0
    %v2912 = vadd.f32 0.0, %v2911
    %v2913 = vpop.f32.mrb[0].mxu0
    %v2914 = vpop.f32.mrb[0].mxu0
    %v2915 = vpop.f32.mrb[0].mxu0
    %2916 = vdwg.mxu0
    %v2917 = vmul.f32 %v2864, 0.17677669
    %v2918 = vmul.f32 %v2912, 0.17677669
    %v2919 = vsel %vm697, %v2917, -inf
    %2920 = vmax.xlane.f32.xlu0 %v2919
    %v2921 = vpop.xlane.xlu0 %2920
    %v2922 = vsel %vm697, %v2918, -inf
    %2923 = vmax.xlane.f32.xlu0 %v2922
    %v2924 = vpop.xlane.xlu0 %2923
    %v2925 = vsub.f32 %v2917, %v2921
    %v2926 = vsub.f32 %v2918, %v2924
    %v2927 = vmul.f32 %v2925, 1.442695
    %v2928 = vpow.pop %v2927
    %v2929 = vmul.f32 %v2926, 1.442695
    %v2930 = vpow.pop %v2929
    %v2931 = vsel %vm697, %v2928, 0.0
    %2932 = vadd.xlane.f32.xlu0 %v2931
    %v2933 = vpop.xlane.xlu0 %2932
    %v2934 = vsel %vm697, %v2930, 0.0
    %2935 = vadd.xlane.f32.xlu0 %v2934
    %v2936 = vpop.xlane.xlu0 %2935
    %v2937 = vrcp.pop %v2933
    %v2938 = vrcp.pop %v2936
    %v2939 = vmul.f32 %v2928, %v2937
    %v2940 = vmul.f32 %v2930, %v2938
    %v2941 = vpack.c.bf16 %v2939, %v2939
    %v2942 = vpack.c.bf16 %v2940, %v2940
    %v2944 = vsel %vm722, %v2941, 0
    %v2947 = vsel %vm726, %v2819, 0
    %2949 = vmatprep.subr.bf16.mxu0 0
    %2950 = vmatpush1.bf16.msra.mxu0 %v2947
    %2951 = vmatprep.subr.bf16.mxu0 0
    %2952 = vmatpush1.bf16.msra.mxu0 0
    %2953 = vmatprep.subr.bf16.mxu0 0
    %2954 = vmatpush1.bf16.msra.mxu0 0
    %2955 = vmatprep.subr.bf16.mxu0 0
    %2956 = vmatpush1.bf16.msra.mxu0 0
    %2957 = vmatprep.subr.bf16.mxu0 0
    %2958 = vmatpush1.bf16.msra.mxu0 0
    %2959 = vmatprep.subr.bf16.mxu0 0
    %2960 = vmatpush1.bf16.msra.mxu0 0
    %2961 = vmatprep.subr.bf16.mxu0 0
    %2962 = vmatpush1.bf16.msra.mxu0 0
    %2963 = vmatprep.subr.bf16.mxu0 0
    %2964 = vmatpush1.bf16.msra.mxu0 0
    %2965 = vmatprep.subr.bf16.mxu0 0
    %2966 = vmatpush1.bf16.msra.mxu0 0
    %2967 = vmatprep.subr.bf16.mxu0 0
    %2968 = vmatpush1.bf16.msra.mxu0 0
    %2969 = vmatprep.subr.bf16.mxu0 0
    %2970 = vmatpush1.bf16.msra.mxu0 0
    %2971 = vmatprep.subr.bf16.mxu0 0
    %2972 = vmatpush1.bf16.msra.mxu0 0
    %2973 = vmatprep.subr.bf16.mxu0 0
    %2974 = vmatpush1.bf16.msra.mxu0 0
    %2975 = vmatprep.subr.bf16.mxu0 0
    %2976 = vmatpush1.bf16.msra.mxu0 0
    %2977 = vmatprep.subr.bf16.mxu0 0
    %2978 = vmatpush1.bf16.msra.mxu0 0
    %2979 = vmatprep.subr.bf16.mxu0 0
    %2980 = vmatpush1.bf16.msra.mxu0 0
    %2981 = vmatprep.mubr.bf16.mxu0 0
    %2982 = vmatmul.mubr.bf16.gmra.mrb[0].mxu0 %v2944
    %v2983 = vpop.f32.mrb[0].mxu0
    %v2984 = vadd.f32 0.0, %v2983
    %v2985 = vpop.f32.mrb[0].mxu0
    %v2986 = vpop.f32.mrb[0].mxu0
    %v2987 = vpop.f32.mrb[0].mxu0
    %2988 = vdwg.mxu0
    %v2990 = vsel %vm722, %v2942, 0
    %v2993 = vsel %vm726, %v2820, 0
    %2995 = vmatprep.subr.bf16.mxu0 0
    %2996 = vmatpush1.bf16.msra.mxu0 %v2993
    %2997 = vmatprep.subr.bf16.mxu0 0
    %2998 = vmatpush1.bf16.msra.mxu0 0
    %2999 = vmatprep.subr.bf16.mxu0 0
    %3000 = vmatpush1.bf16.msra.mxu0 0
    %3001 = vmatprep.subr.bf16.mxu0 0
    %3002 = vmatpush1.bf16.msra.mxu0 0
    %3003 = vmatprep.subr.bf16.mxu0 0
    %3004 = vmatpush1.bf16.msra.mxu0 0
    %3005 = vmatprep.subr.bf16.mxu0 0
    %3006 = vmatpush1.bf16.msra.mxu0 0
    %3007 = vmatprep.subr.bf16.mxu0 0
    %3008 = vmatpush1.bf16.msra.mxu0 0
    %3009 = vmatprep.subr.bf16.mxu0 0
    %3010 = vmatpush1.bf16.msra.mxu0 0
    %3011 = vmatprep.subr.bf16.mxu0 0
    %3012 = vmatpush1.bf16.msra.mxu0 0
    %3013 = vmatprep.subr.bf16.mxu0 0
    %3014 = vmatpush1.bf16.msra.mxu0 0
    %3015 = vmatprep.subr.bf16.mxu0 0
    %3016 = vmatpush1.bf16.msra.mxu0 0
    %3017 = vmatprep.subr.bf16.mxu0 0
    %3018 = vmatpush1.bf16.msra.mxu0 0
    %3019 = vmatprep.subr.bf16.mxu0 0
    %3020 = vmatpush1.bf16.msra.mxu0 0
    %3021 = vmatprep.subr.bf16.mxu0 0
    %3022 = vmatpush1.bf16.msra.mxu0 0
    %3023 = vmatprep.subr.bf16.mxu0 0
    %3024 = vmatpush1.bf16.msra.mxu0 0
    %3025 = vmatprep.subr.bf16.mxu0 0
    %3026 = vmatpush1.bf16.msra.mxu0 0
    %3027 = vmatprep.mubr.bf16.mxu0 0
    %3028 = vmatmul.mubr.bf16.gmra.mrb[0].mxu0 %v2990
    %v3029 = vpop.f32.mrb[0].mxu0
    %v3030 = vadd.f32 0.0, %v3029
    %v3031 = vpop.f32.mrb[0].mxu0
    %v3032 = vpop.f32.mrb[0].mxu0
    %v3033 = vpop.f32.mrb[0].mxu0
    %3034 = vdwg.mxu0
    %3035 = vrot.lane.b32.xlu0 %v2330, 32
    %v3036 = vpop.permute.xlu0 %3035
    %3037 = vrot.lane.b32.xlu0 %v2338, 32
    %v3038 = vpop.permute.xlu0 %3037
    %v3041 = vpack.c.bf16 %v3036, %v3036
    %v3042 = vpack.c.bf16 %v3038, %v3038
    %3043 = vrot.lane.b32.xlu0 %v2350, 32
    %v3044 = vpop.permute.xlu0 %3043
    %3045 = vrot.lane.b32.xlu0 %v2358, 32
    %v3046 = vpop.permute.xlu0 %3045
    %v3049 = vpack.c.bf16 %v3044, %v3044
    %v3050 = vpack.c.bf16 %v3046, %v3046
    %3051 = vrot.lane.b32.xlu0 %v2321, 32
    %v3052 = vpop.permute.xlu0 %3051
    %v3054 = vsel %vm602, %v3052, 0
    %v3057 = vsel %vm602, %v3041, 0
    %3059 = vmatprep.subr.bf16.mxu0 0
    %3060 = vmatpush1.bf16.xpose.msra.mxu0 %v3057
    %3061 = vmatprep.subr.bf16.mxu0 0
    %3062 = vmatpush1.bf16.xpose.msra.mxu0 0
    %3063 = vmatprep.subr.bf16.mxu0 0
    %3064 = vmatpush1.bf16.xpose.msra.mxu0 0
    %3065 = vmatprep.subr.bf16.mxu0 0
    %3066 = vmatpush1.bf16.xpose.msra.mxu0 0
    %3067 = vmatprep.subr.bf16.mxu0 0
    %3068 = vmatpush1.bf16.xpose.msra.mxu0 0
    %3069 = vmatprep.subr.bf16.mxu0 0
    %3070 = vmatpush1.bf16.xpose.msra.mxu0 0
    %3071 = vmatprep.subr.bf16.mxu0 0
    %3072 = vmatpush1.bf16.xpose.msra.mxu0 0
    %3073 = vmatprep.subr.bf16.mxu0 0
    %3074 = vmatpush1.bf16.xpose.msra.mxu0 0
    %3075 = vmatprep.subr.bf16.mxu0 0
    %3076 = vmatpush1.bf16.xpose.msra.mxu0 0
    %3077 = vmatprep.subr.bf16.mxu0 0
    %3078 = vmatpush1.bf16.xpose.msra.mxu0 0
    %3079 = vmatprep.subr.bf16.mxu0 0
    %3080 = vmatpush1.bf16.xpose.msra.mxu0 0
    %3081 = vmatprep.subr.bf16.mxu0 0
    %3082 = vmatpush1.bf16.xpose.msra.mxu0 0
    %3083 = vmatprep.subr.bf16.mxu0 0
    %3084 = vmatpush1.bf16.xpose.msra.mxu0 0
    %3085 = vmatprep.subr.bf16.mxu0 0
    %3086 = vmatpush1.bf16.xpose.msra.mxu0 0
    %3087 = vmatprep.subr.bf16.mxu0 0
    %3088 = vmatpush1.bf16.xpose.msra.mxu0 0
    %3089 = vmatprep.subr.bf16.mxu0 0
    %3090 = vmatpush1.bf16.xpose.msra.mxu0 0
    %3091 = vmatprep.mubr.bf16.mxu0 0
    %3092 = vmatmul.mubr.bf16.gmra.mrb[0].mxu0 %v3054
    %v3093 = vpop.f32.mrb[0].mxu0
    %v3094 = vadd.f32 0.0, %v3093
    %v3095 = vpop.f32.mrb[0].mxu0
    %v3096 = vpop.f32.mrb[0].mxu0
    %v3097 = vpop.f32.mrb[0].mxu0
    %3098 = vdwg.mxu0
    %3099 = vrot.lane.b32.xlu0 %v2322, 32
    %v3100 = vpop.permute.xlu0 %3099
    %v3102 = vsel %vm602, %v3100, 0
    %v3105 = vsel %vm602, %v3042, 0
    %3107 = vmatprep.subr.bf16.mxu0 0
    %3108 = vmatpush1.bf16.xpose.msra.mxu0 %v3105
    %3109 = vmatprep.subr.bf16.mxu0 0
    %3110 = vmatpush1.bf16.xpose.msra.mxu0 0
    %3111 = vmatprep.subr.bf16.mxu0 0
    %3112 = vmatpush1.bf16.xpose.msra.mxu0 0
    %3113 = vmatprep.subr.bf16.mxu0 0
    %3114 = vmatpush1.bf16.xpose.msra.mxu0 0
    %3115 = vmatprep.subr.bf16.mxu0 0
    %3116 = vmatpush1.bf16.xpose.msra.mxu0 0
    %3117 = vmatprep.subr.bf16.mxu0 0
    %3118 = vmatpush1.bf16.xpose.msra.mxu0 0
    %3119 = vmatprep.subr.bf16.mxu0 0
    %3120 = vmatpush1.bf16.xpose.msra.mxu0 0
    %3121 = vmatprep.subr.bf16.mxu0 0
    %3122 = vmatpush1.bf16.xpose.msra.mxu0 0
    %3123 = vmatprep.subr.bf16.mxu0 0
    %3124 = vmatpush1.bf16.xpose.msra.mxu0 0
    %3125 = vmatprep.subr.bf16.mxu0 0
    %3126 = vmatpush1.bf16.xpose.msra.mxu0 0
    %3127 = vmatprep.subr.bf16.mxu0 0
    %3128 = vmatpush1.bf16.xpose.msra.mxu0 0
    %3129 = vmatprep.subr.bf16.mxu0 0
    %3130 = vmatpush1.bf16.xpose.msra.mxu0 0
    %3131 = vmatprep.subr.bf16.mxu0 0
    %3132 = vmatpush1.bf16.xpose.msra.mxu0 0
    %3133 = vmatprep.subr.bf16.mxu0 0
    %3134 = vmatpush1.bf16.xpose.msra.mxu0 0
    %3135 = vmatprep.subr.bf16.mxu0 0
    %3136 = vmatpush1.bf16.xpose.msra.mxu0 0
    %3137 = vmatprep.subr.bf16.mxu0 0
    %3138 = vmatpush1.bf16.xpose.msra.mxu0 0
    %3139 = vmatprep.mubr.bf16.mxu0 0
    %3140 = vmatmul.mubr.bf16.gmra.mrb[0].mxu0 %v3102
    %v3141 = vpop.f32.mrb[0].mxu0
    %v3142 = vadd.f32 0.0, %v3141
    %v3143 = vpop.f32.mrb[0].mxu0
    %v3144 = vpop.f32.mrb[0].mxu0
    %v3145 = vpop.f32.mrb[0].mxu0
    %3146 = vdwg.mxu0
    %v3147 = vmul.f32 %v3094, 0.17677669
    %v3148 = vmul.f32 %v3142, 0.17677669
    %v3149 = vsel %vm697, %v3147, -inf
    %3150 = vmax.xlane.f32.xlu0 %v3149
    %v3151 = vpop.xlane.xlu0 %3150
    %v3152 = vsel %vm697, %v3148, -inf
    %3153 = vmax.xlane.f32.xlu0 %v3152
    %v3154 = vpop.xlane.xlu0 %3153
    %v3155 = vsub.f32 %v3147, %v3151
    %v3156 = vsub.f32 %v3148, %v3154
    %v3157 = vmul.f32 %v3155, 1.442695
    %v3158 = vpow.pop %v3157
    %v3159 = vmul.f32 %v3156, 1.442695
    %v3160 = vpow.pop %v3159
    %v3161 = vsel %vm697, %v3158, 0.0
    %3162 = vadd.xlane.f32.xlu0 %v3161
    %v3163 = vpop.xlane.xlu0 %3162
    %v3164 = vsel %vm697, %v3160, 0.0
    %3165 = vadd.xlane.f32.xlu0 %v3164
    %v3166 = vpop.xlane.xlu0 %3165
    %v3167 = vrcp.pop %v3163
    %v3168 = vrcp.pop %v3166
    %v3169 = vmul.f32 %v3158, %v3167
    %v3170 = vmul.f32 %v3160, %v3168
    %v3171 = vpack.c.bf16 %v3169, %v3169
    %v3172 = vpack.c.bf16 %v3170, %v3170
    %v3174 = vsel %vm722, %v3171, 0
    %v3177 = vsel %vm726, %v3049, 0
    %3179 = vmatprep.subr.bf16.mxu0 0
    %3180 = vmatpush1.bf16.msra.mxu0 %v3177
    %3181 = vmatprep.subr.bf16.mxu0 0
    %3182 = vmatpush1.bf16.msra.mxu0 0
    %3183 = vmatprep.subr.bf16.mxu0 0
    %3184 = vmatpush1.bf16.msra.mxu0 0
    %3185 = vmatprep.subr.bf16.mxu0 0
    %3186 = vmatpush1.bf16.msra.mxu0 0
    %3187 = vmatprep.subr.bf16.mxu0 0
    %3188 = vmatpush1.bf16.msra.mxu0 0
    %3189 = vmatprep.subr.bf16.mxu0 0
    %3190 = vmatpush1.bf16.msra.mxu0 0
    %3191 = vmatprep.subr.bf16.mxu0 0
    %3192 = vmatpush1.bf16.msra.mxu0 0
    %3193 = vmatprep.subr.bf16.mxu0 0
    %3194 = vmatpush1.bf16.msra.mxu0 0
    %3195 = vmatprep.subr.bf16.mxu0 0
    %3196 = vmatpush1.bf16.msra.mxu0 0
    %3197 = vmatprep.subr.bf16.mxu0 0
    %3198 = vmatpush1.bf16.msra.mxu0 0
    %3199 = vmatprep.subr.bf16.mxu0 0
    %3200 = vmatpush1.bf16.msra.mxu0 0
    %3201 = vmatprep.subr.bf16.mxu0 0
    %3202 = vmatpush1.bf16.msra.mxu0 0
    %3203 = vmatprep.subr.bf16.mxu0 0
    %3204 = vmatpush1.bf16.msra.mxu0 0
    %3205 = vmatprep.subr.bf16.mxu0 0
    %3206 = vmatpush1.bf16.msra.mxu0 0
    %3207 = vmatprep.subr.bf16.mxu0 0
    %3208 = vmatpush1.bf16.msra.mxu0 0
    %3209 = vmatprep.subr.bf16.mxu0 0
    %3210 = vmatpush1.bf16.msra.mxu0 0
    %3211 = vmatprep.mubr.bf16.mxu0 0
    %3212 = vmatmul.mubr.bf16.gmra.mrb[0].mxu0 %v3174
    %v3213 = vpop.f32.mrb[0].mxu0
    %v3214 = vadd.f32 0.0, %v3213
    %v3215 = vpop.f32.mrb[0].mxu0
    %v3216 = vpop.f32.mrb[0].mxu0
    %v3217 = vpop.f32.mrb[0].mxu0
    %3218 = vdwg.mxu0
    %v3220 = vsel %vm722, %v3172, 0
    %v3223 = vsel %vm726, %v3050, 0
    %3225 = vmatprep.subr.bf16.mxu0 0
    %3226 = vmatpush1.bf16.msra.mxu0 %v3223
    %3227 = vmatprep.subr.bf16.mxu0 0
    %3228 = vmatpush1.bf16.msra.mxu0 0
    %3229 = vmatprep.subr.bf16.mxu0 0
    %3230 = vmatpush1.bf16.msra.mxu0 0
    %3231 = vmatprep.subr.bf16.mxu0 0
    %3232 = vmatpush1.bf16.msra.mxu0 0
    %3233 = vmatprep.subr.bf16.mxu0 0
    %3234 = vmatpush1.bf16.msra.mxu0 0
    %3235 = vmatprep.subr.bf16.mxu0 0
    %3236 = vmatpush1.bf16.msra.mxu0 0
    %3237 = vmatprep.subr.bf16.mxu0 0
    %3238 = vmatpush1.bf16.msra.mxu0 0
    %3239 = vmatprep.subr.bf16.mxu0 0
    %3240 = vmatpush1.bf16.msra.mxu0 0
    %3241 = vmatprep.subr.bf16.mxu0 0
    %3242 = vmatpush1.bf16.msra.mxu0 0
    %3243 = vmatprep.subr.bf16.mxu0 0
    %3244 = vmatpush1.bf16.msra.mxu0 0
    %3245 = vmatprep.subr.bf16.mxu0 0
    %3246 = vmatpush1.bf16.msra.mxu0 0
    %3247 = vmatprep.subr.bf16.mxu0 0
    %3248 = vmatpush1.bf16.msra.mxu0 0
    %3249 = vmatprep.subr.bf16.mxu0 0
    %3250 = vmatpush1.bf16.msra.mxu0 0
    %3251 = vmatprep.subr.bf16.mxu0 0
    %3252 = vmatpush1.bf16.msra.mxu0 0
    %3253 = vmatprep.subr.bf16.mxu0 0
    %3254 = vmatpush1.bf16.msra.mxu0 0
    %3255 = vmatprep.subr.bf16.mxu0 0
    %3256 = vmatpush1.bf16.msra.mxu0 0
    %3257 = vmatprep.mubr.bf16.mxu0 0
    %3258 = vmatmul.mubr.bf16.gmra.mrb[0].mxu0 %v3220
    %v3259 = vpop.f32.mrb[0].mxu0
    %v3260 = vadd.f32 0.0, %v3259
    %v3261 = vpop.f32.mrb[0].mxu0
    %v3262 = vpop.f32.mrb[0].mxu0
    %v3263 = vpop.f32.mrb[0].mxu0
    %3264 = vdwg.mxu0
    %3267 = vrot.lane.b32.xlu0 %v2754, 32
    %v3268 = vpop.permute.xlu0 %3267
    %3269 = vrot.lane.b32.xlu0 %v2800, 32
    %v3270 = vpop.permute.xlu0 %3269
    %3275 = vrot.lane.b32.xlu0 %v2984, 64
    %v3276 = vpop.permute.xlu0 %3275
    %3277 = vrot.lane.b32.xlu0 %v3030, 64
    %v3278 = vpop.permute.xlu0 %3277
    %3283 = vrot.lane.b32.xlu0 %v3214, 96
    %v3284 = vpop.permute.xlu0 %3283
    %3285 = vrot.lane.b32.xlu0 %v3260, 96
    %v3286 = vpop.permute.xlu0 %3285
    %v3289 = vsel %vm602, %v2522, %v3268
    %v3290 = vsel %vm602, %v2568, %v3270
    %v3291 = vsel %vm1534, %v3289, %v3276
    %v3292 = vsel %vm1534, %v3290, %v3278
    %v3293 = vsel %vm1537, %v3291, %v3284
    %v3294 = vsel %vm1537, %v3292, %v3286
    %v3297 = vcombine.low %v3293, %v3294
    %v3299 = vunpack.c.l.s4 1983009808
    %v3300 = vunpack.c.0.s8 %v3299
    %v3301 = vlaneseq
    %v3302 = vshrl.u32 %v3301, 7
    %v3303 = vsub.s32 %v3300, %v3302
    %v3304 = vrot.slane %v3297, %v3303
    %v3306 = vpack.c.bf16 %v3304, %v3304
    %v3308 = vlaneseq
    %v3309 = vshrl.u32 %v3308, 7
    %v3310 = vsub.s32 0, %v3309
    %v3311 = vrot.slane %v1977, %v3310
    %v3329 = vunpack.c.l.b16 %v1960
    %v3330 = vunpack.c.l.b16 %v1961
    %v3331 = vunpack.c.l.b16 %v1962
    %v3332 = vunpack.c.l.b16 %v1963
    %v3333 = vunpack.c.l.b16 %v1964
    %v3334 = vunpack.c.l.b16 %v1965
    %v3335 = vunpack.c.l.b16 %v1966
    %v3336 = vunpack.c.l.b16 %v1967
    %v3337 = vunpack.c.l.b16 %v1968
    %v3338 = vunpack.c.l.b16 %v1969
    %v3339 = vunpack.c.l.b16 %v1970
    %v3340 = vunpack.c.l.b16 %v1971
    %v3341 = vunpack.c.l.b16 %v1972
    %v3342 = vunpack.c.l.b16 %v1973
    %v3343 = vunpack.c.l.b16 %v1974
    %v3344 = vunpack.c.l.b16 %v1975
    %v3345 = vpack.c.b16 %v3330, %v3329
    %v3346 = vpack.c.b16 %v3332, %v3331
    %v3347 = vpack.c.b16 %v3334, %v3333
    %v3348 = vpack.c.b16 %v3336, %v3335
    %v3349 = vpack.c.b16 %v3338, %v3337
    %v3350 = vpack.c.b16 %v3340, %v3339
    %v3351 = vpack.c.b16 %v3342, %v3341
    %v3352 = vpack.c.b16 %v3344, %v3343
    %3361 = vmatprep.subr.bf16.mxu0 0
    %3362 = vmatpush1.bf16.msra.mxu0 %v3345
    %3363 = vmatprep.subr.bf16.mxu0 0
    %3364 = vmatpush1.bf16.msra.mxu0 %v3346
    %3365 = vmatprep.subr.bf16.mxu0 0
    %3366 = vmatpush1.bf16.msra.mxu0 %v3347
    %3367 = vmatprep.subr.bf16.mxu0 0
    %3368 = vmatpush1.bf16.msra.mxu0 %v3348
    %3369 = vmatprep.subr.bf16.mxu0 0
    %3370 = vmatpush1.bf16.msra.mxu0 %v3349
    %3371 = vmatprep.subr.bf16.mxu0 0
    %3372 = vmatpush1.bf16.msra.mxu0 %v3350
    %3373 = vmatprep.subr.bf16.mxu0 0
    %3374 = vmatpush1.bf16.msra.mxu0 %v3351
    %3375 = vmatprep.subr.bf16.mxu0 0
    %3376 = vmatpush1.bf16.msra.mxu0 %v3352
    %3377 = vmatprep.subr.bf16.mxu0 0
    %3378 = vmatpush1.bf16.msra.mxu0 0
    %3379 = vmatprep.subr.bf16.mxu0 0
    %3380 = vmatpush1.bf16.msra.mxu0 0
    %3381 = vmatprep.subr.bf16.mxu0 0
    %3382 = vmatpush1.bf16.msra.mxu0 0
    %3383 = vmatprep.subr.bf16.mxu0 0
    %3384 = vmatpush1.bf16.msra.mxu0 0
    %3385 = vmatprep.subr.bf16.mxu0 0
    %3386 = vmatpush1.bf16.msra.mxu0 0
    %3387 = vmatprep.subr.bf16.mxu0 0
    %3388 = vmatpush1.bf16.msra.mxu0 0
    %3389 = vmatprep.subr.bf16.mxu0 0
    %3390 = vmatpush1.bf16.msra.mxu0 0
    %3391 = vmatprep.subr.bf16.mxu0 0
    %3392 = vmatpush1.bf16.msra.mxu0 0
    %3393 = vmatprep.mubr.bf16.mxu0 0
    %3394 = vmatmul.mubr.bf16.gmra.mrb[0].mxu0 %v3306
    %v3395 = vpop.f32.mrb[0].mxu0
    %v3396 = vadd.f32 %v3311, %v3395
    %v3397 = vpop.f32.mrb[0].mxu0
    %v3398 = vpop.f32.mrb[0].mxu0
    %v3399 = vpop.f32.mrb[0].mxu0
    %3400 = vdwg.mxu0
    %v3403 = vunpack.c.l.s4 1983009808
    %v3404 = vunpack.c.0.s8 %v3403
    %v3405 = vlaneseq
    %v3406 = vshrl.u32 %v3405, 7
    %v3407 = vsub.s32 %v3404, %v3406
    %v3408 = vrot.slane %v3396, %v3407
    %v3409 = vcombine.high %v3408, %v3408
    %v3412 = vadd.f32 %v1918, %v3408
    %v3413 = vadd.f32 %v1919, %v3409
    %v3414 = vsel %vm257, %v3412, 0.0
    %3415 = vadd.xlane.f32.xlu0 %v3414
    %v3416 = vpop.xlane.xlu0 %3415
    %v3417 = vsel %vm257, %v3413, 0.0
    %3418 = vadd.xlane.f32.xlu0 %v3417
    %v3419 = vpop.xlane.xlu0 %3418
    %v3420 = vmul.f32 %v3416, %v264
    %v3421 = vmul.f32 %v3419, %v264
    %v3422 = vsub.f32 %v3412, %v3420
    %v3423 = vsub.f32 %v3413, %v3421
    %v3424 = vmul.f32 %v3422, %v3422
    %v3425 = vmul.f32 %v3423, %v3423
    %v3426 = vsel %vm257, %v3424, 0.0
    %3427 = vadd.xlane.f32.xlu0 %v3426
    %v3428 = vpop.xlane.xlu0 %3427
    %v3429 = vsel %vm257, %v3425, 0.0
    %3430 = vadd.xlane.f32.xlu0 %v3429
    %v3431 = vpop.xlane.xlu0 %3430
    %v3432 = vmul.f32 %v3428, %v264
    %v3433 = vmul.f32 %v3431, %v264
    %v3434 = vadd.f32 %v3432, 1e-05
    %v3435 = vadd.f32 %v3433, 1e-05
    %v3436 = vrsqrt.pop %v3434
    %v3437 = vrsqrt.pop %v3435
    %v3438 = vmul.f32 %v3422, %v3436
    %v3439 = vmul.f32 %v3423, %v3437
    %v3441 = vlaneseq
    %v3442 = vshrl.u32 %v3441, 7
    %v3443 = vsub.s32 0, %v3442
    %v3444 = vrot.slane %v1979, %v3443
    %v3446 = vmul.f32 %v3438, %v3444
    %v3447 = vmul.f32 %v3439, %v3444
    %v3449 = vlaneseq
    %v3450 = vshrl.u32 %v3449, 7
    %v3451 = vsub.s32 0, %v3450
    %v3452 = vrot.slane %v1981, %v3451
    %v3454 = vadd.f32 %v3446, %v3452
    %v3455 = vadd.f32 %v3447, %v3452
    %v3458 = vcombine.low %v3454, %v3455
    %v3460 = vunpack.c.l.s4 1983009808
    %v3461 = vunpack.c.0.s8 %v3460
    %v3462 = vlaneseq
    %v3463 = vshrl.u32 %v3462, 7
    %v3464 = vsub.s32 %v3461, %v3463
    %v3465 = vrot.slane %v3458, %v3464
    %v3467 = vpack.c.bf16 %v3465, %v3465
    %v3469 = vlaneseq
    %v3470 = vshrl.u32 %v3469, 7
    %v3471 = vsub.s32 0, %v3470
    %v3472 = vrot.slane %v2000, %v3471
    %v3490 = vunpack.c.l.b16 %v1983
    %v3491 = vunpack.c.l.b16 %v1984
    %v3492 = vunpack.c.l.b16 %v1985
    %v3493 = vunpack.c.l.b16 %v1986
    %v3494 = vunpack.c.l.b16 %v1987
    %v3495 = vunpack.c.l.b16 %v1988
    %v3496 = vunpack.c.l.b16 %v1989
    %v3497 = vunpack.c.l.b16 %v1990
    %v3498 = vunpack.c.l.b16 %v1991
    %v3499 = vunpack.c.l.b16 %v1992
    %v3500 = vunpack.c.l.b16 %v1993
    %v3501 = vunpack.c.l.b16 %v1994
    %v3502 = vunpack.c.l.b16 %v1995
    %v3503 = vunpack.c.l.b16 %v1996
    %v3504 = vunpack.c.l.b16 %v1997
    %v3505 = vunpack.c.l.b16 %v1998
    %v3506 = vpack.c.b16 %v3491, %v3490
    %v3507 = vpack.c.b16 %v3493, %v3492
    %v3508 = vpack.c.b16 %v3495, %v3494
    %v3509 = vpack.c.b16 %v3497, %v3496
    %v3510 = vpack.c.b16 %v3499, %v3498
    %v3511 = vpack.c.b16 %v3501, %v3500
    %v3512 = vpack.c.b16 %v3503, %v3502
    %v3513 = vpack.c.b16 %v3505, %v3504
    %3522 = vmatprep.subr.bf16.mxu0 0
    %3523 = vmatpush1.bf16.msra.mxu0 %v3506
    %3524 = vmatprep.subr.bf16.mxu0 0
    %3525 = vmatpush1.bf16.msra.mxu0 %v3507
    %3526 = vmatprep.subr.bf16.mxu0 0
    %3527 = vmatpush1.bf16.msra.mxu0 %v3508
    %3528 = vmatprep.subr.bf16.mxu0 0
    %3529 = vmatpush1.bf16.msra.mxu0 %v3509
    %3530 = vmatprep.subr.bf16.mxu0 0
    %3531 = vmatpush1.bf16.msra.mxu0 %v3510
    %3532 = vmatprep.subr.bf16.mxu0 0
    %3533 = vmatpush1.bf16.msra.mxu0 %v3511
    %3534 = vmatprep.subr.bf16.mxu0 0
    %3535 = vmatpush1.bf16.msra.mxu0 %v3512
    %3536 = vmatprep.subr.bf16.mxu0 0
    %3537 = vmatpush1.bf16.msra.mxu0 %v3513
    %3538 = vmatprep.subr.bf16.mxu0 0
    %3539 = vmatpush1.bf16.msra.mxu0 0
    %3540 = vmatprep.subr.bf16.mxu0 0
    %3541 = vmatpush1.bf16.msra.mxu0 0
    %3542 = vmatprep.subr.bf16.mxu0 0
    %3543 = vmatpush1.bf16.msra.mxu0 0
    %3544 = vmatprep.subr.bf16.mxu0 0
    %3545 = vmatpush1.bf16.msra.mxu0 0
    %3546 = vmatprep.subr.bf16.mxu0 0
    %3547 = vmatpush1.bf16.msra.mxu0 0
    %3548 = vmatprep.subr.bf16.mxu0 0
    %3549 = vmatpush1.bf16.msra.mxu0 0
    %3550 = vmatprep.subr.bf16.mxu0 0
    %3551 = vmatpush1.bf16.msra.mxu0 0
    %3552 = vmatprep.subr.bf16.mxu0 0
    %3553 = vmatpush1.bf16.msra.mxu0 0
    %3554 = vmatprep.mubr.bf16.mxu0 0
    %3555 = vmatmul.mubr.bf16.gmra.mrb[0].mxu0 %v3467
    %v3556 = vpop.f32.mrb[0].mxu0
    %v3557 = vadd.f32 %v3472, %v3556
    %v3558 = vpop.f32.mrb[0].mxu0
    %v3559 = vpop.f32.mrb[0].mxu0
    %v3560 = vpop.f32.mrb[0].mxu0
    %3561 = vdwg.mxu0
    %v3562 = vmul.f32 %v3557, 0.5
    %v3563 = vmul.f32 %v3557, 0.70710677
    %v3564 = verf.f32.pop %v3563
    %v3565 = vadd.f32 %v3564, 1.0
    %v3566 = vmul.f32 %v3562, %v3565
    %v3567 = vpack.c.bf16 %v3566, %v3566
    %v3569 = vlaneseq
    %v3570 = vshrl.u32 %v3569, 7
    %v3571 = vsub.s32 0, %v3570
    %v3572 = vrot.slane %v2019, %v3571
    %v3590 = vunpack.c.l.b16 %v2002
    %v3591 = vunpack.c.l.b16 %v2003
    %v3592 = vunpack.c.l.b16 %v2004
    %v3593 = vunpack.c.l.b16 %v2005
    %v3594 = vunpack.c.l.b16 %v2006
    %v3595 = vunpack.c.l.b16 %v2007
    %v3596 = vunpack.c.l.b16 %v2008
    %v3597 = vunpack.c.l.b16 %v2009
    %v3598 = vunpack.c.l.b16 %v2010
    %v3599 = vunpack.c.l.b16 %v2011
    %v3600 = vunpack.c.l.b16 %v2012
    %v3601 = vunpack.c.l.b16 %v2013
    %v3602 = vunpack.c.l.b16 %v2014
    %v3603 = vunpack.c.l.b16 %v2015
    %v3604 = vunpack.c.l.b16 %v2016
    %v3605 = vunpack.c.l.b16 %v2017
    %v3606 = vpack.c.b16 %v3591, %v3590
    %v3607 = vpack.c.b16 %v3593, %v3592
    %v3608 = vpack.c.b16 %v3595, %v3594
    %v3609 = vpack.c.b16 %v3597, %v3596
    %v3610 = vpack.c.b16 %v3599, %v3598
    %v3611 = vpack.c.b16 %v3601, %v3600
    %v3612 = vpack.c.b16 %v3603, %v3602
    %v3613 = vpack.c.b16 %v3605, %v3604
    %3622 = vmatprep.subr.bf16.mxu0 0
    %3623 = vmatpush1.bf16.msra.mxu0 %v3606
    %3624 = vmatprep.subr.bf16.mxu0 0
    %3625 = vmatpush1.bf16.msra.mxu0 %v3607
    %3626 = vmatprep.subr.bf16.mxu0 0
    %3627 = vmatpush1.bf16.msra.mxu0 %v3608
    %3628 = vmatprep.subr.bf16.mxu0 0
    %3629 = vmatpush1.bf16.msra.mxu0 %v3609
    %3630 = vmatprep.subr.bf16.mxu0 0
    %3631 = vmatpush1.bf16.msra.mxu0 %v3610
    %3632 = vmatprep.subr.bf16.mxu0 0
    %3633 = vmatpush1.bf16.msra.mxu0 %v3611
    %3634 = vmatprep.subr.bf16.mxu0 0
    %3635 = vmatpush1.bf16.msra.mxu0 %v3612
    %3636 = vmatprep.subr.bf16.mxu0 0
    %3637 = vmatpush1.bf16.msra.mxu0 %v3613
    %3638 = vmatprep.subr.bf16.mxu0 0
    %3639 = vmatpush1.bf16.msra.mxu0 0
    %3640 = vmatprep.subr.bf16.mxu0 0
    %3641 = vmatpush1.bf16.msra.mxu0 0
    %3642 = vmatprep.subr.bf16.mxu0 0
    %3643 = vmatpush1.bf16.msra.mxu0 0
    %3644 = vmatprep.subr.bf16.mxu0 0
    %3645 = vmatpush1.bf16.msra.mxu0 0
    %3646 = vmatprep.subr.bf16.mxu0 0
    %3647 = vmatpush1.bf16.msra.mxu0 0
    %3648 = vmatprep.subr.bf16.mxu0 0
    %3649 = vmatpush1.bf16.msra.mxu0 0
    %3650 = vmatprep.subr.bf16.mxu0 0
    %3651 = vmatpush1.bf16.msra.mxu0 0
    %3652 = vmatprep.subr.bf16.mxu0 0
    %3653 = vmatpush1.bf16.msra.mxu0 0
    %3654 = vmatprep.mubr.bf16.mxu0 0
    %3655 = vmatmul.mubr.bf16.gmra.mrb[0].mxu0 %v3567
    %v3656 = vpop.f32.mrb[0].mxu0
    %v3657 = vadd.f32 %v3572, %v3656
    %v3658 = vpop.f32.mrb[0].mxu0
    %v3659 = vpop.f32.mrb[0].mxu0
    %v3660 = vpop.f32.mrb[0].mxu0
    %3661 = vdwg.mxu0
    %v3664 = vunpack.c.l.s4 1983009808
    %v3665 = vunpack.c.0.s8 %v3664
    %v3666 = vlaneseq
    %v3667 = vshrl.u32 %v3666, 7
    %v3668 = vsub.s32 %v3665, %v3667
    %v3669 = vrot.slane %v3657, %v3668
    %v3670 = vcombine.high %v3669, %v3669
    %v3673 = vadd.f32 %v3412, %v3669
    %v3674 = vadd.f32 %v3413, %v3670
    %v3675 = vld [vmem:[%s33] sm:$0x1]
    %v3676 = vld [vmem:[%s35] sm:$0x1]
    %v3677 = vsel %vm257, %v3673, 0.0
    %3678 = vadd.xlane.f32.xlu0 %v3677
    %v3679 = vpop.xlane.xlu0 %3678
    %v3680 = vsel %vm257, %v3674, 0.0
    %3681 = vadd.xlane.f32.xlu0 %v3680
    %v3682 = vpop.xlane.xlu0 %3681
    %v3683 = vmul.f32 %v3679, %v264
    %v3684 = vmul.f32 %v3682, %v264
    %v3685 = vsub.f32 %v3673, %v3683
    %v3686 = vsub.f32 %v3674, %v3684
    %v3687 = vmul.f32 %v3685, %v3685
    %v3688 = vmul.f32 %v3686, %v3686
    %v3689 = vsel %vm257, %v3687, 0.0
    %3690 = vadd.xlane.f32.xlu0 %v3689
    %v3691 = vpop.xlane.xlu0 %3690
    %v3692 = vsel %vm257, %v3688, 0.0
    %3693 = vadd.xlane.f32.xlu0 %v3692
    %v3694 = vpop.xlane.xlu0 %3693
    %v3695 = vmul.f32 %v3691, %v264
    %v3696 = vmul.f32 %v3694, %v264
    %v3697 = vadd.f32 %v3695, 1e-05
    %v3698 = vadd.f32 %v3696, 1e-05
    %v3699 = vrsqrt.pop %v3697
    %v3700 = vrsqrt.pop %v3698
    %v3701 = vmul.f32 %v3685, %v3699
    %v3702 = vmul.f32 %v3686, %v3700
    %v3704 = vlaneseq
    %v3705 = vshrl.u32 %v3704, 7
    %v3706 = vsub.s32 0, %v3705
    %v3707 = vrot.slane %v3675, %v3706
    %v3709 = vmul.f32 %v3701, %v3707
    %v3710 = vmul.f32 %v3702, %v3707
    %v3712 = vlaneseq
    %v3713 = vshrl.u32 %v3712, 7
    %v3714 = vsub.s32 0, %v3713
    %v3715 = vrot.slane %v3676, %v3714
    %v3717 = vadd.f32 %v3709, %v3715
    %v3718 = vadd.f32 %v3710, %v3715
    %v3721 = vcombine.low %v3717, %v3718
    %v3723 = vunpack.c.l.s4 1983009808
    %v3724 = vunpack.c.0.s8 %v3723
    %v3725 = vlaneseq
    %v3726 = vshrl.u32 %v3725, 7
    %v3727 = vsub.s32 %v3724, %v3726
    %v3728 = vrot.slane %v3721, %v3727
    %v3730 = vpack.c.bf16 %v3728, %v3728
    %v3731 = vld [vmem:[%s37] sm:$0xf]
    %v3732 = vld [vmem:[%s37 + $0x4] sm:$0xf]
    %v3733 = vld [vmem:[%s37 + $0x8] sm:$0xf]
    %v3734 = vld [vmem:[%s37 + $0xc] sm:$0xf]
    %v3735 = vld [vmem:[%s37 + $0x10] sm:$0xf]
    %v3736 = vld [vmem:[%s37 + $0x14] sm:$0xf]
    %v3737 = vld [vmem:[%s37 + $0x18] sm:$0xf]
    %v3738 = vld [vmem:[%s37 + $0x1c] sm:$0xf]
    %v3739 = vld [vmem:[%s37 + $0x20] sm:$0xf]
    %v3740 = vld [vmem:[%s37 + $0x24] sm:$0xf]
    %v3741 = vld [vmem:[%s37 + $0x28] sm:$0xf]
    %v3742 = vld [vmem:[%s37 + $0x2c] sm:$0xf]
    %v3743 = vld [vmem:[%s37 + $0x30] sm:$0xf]
    %v3744 = vld [vmem:[%s37 + $0x34] sm:$0xf]
    %v3745 = vld [vmem:[%s37 + $0x38] sm:$0xf]
    %v3746 = vld [vmem:[%s37 + $0x3c] sm:$0xf]
    %v3747 = vld [vmem:[%s39] sm:$0x1]
    %v3749 = vlaneseq
    %v3750 = vshrl.u32 %v3749, 7
    %v3751 = vsub.s32 0, %v3750
    %v3752 = vrot.slane %v3747, %v3751
    %v3770 = vunpack.c.l.b16 %v3731
    %v3771 = vunpack.c.l.b16 %v3732
    %v3772 = vunpack.c.l.b16 %v3733
    %v3773 = vunpack.c.l.b16 %v3734
    %v3774 = vunpack.c.l.b16 %v3735
    %v3775 = vunpack.c.l.b16 %v3736
    %v3776 = vunpack.c.l.b16 %v3737
    %v3777 = vunpack.c.l.b16 %v3738
    %v3778 = vunpack.c.l.b16 %v3739
    %v3779 = vunpack.c.l.b16 %v3740
    %v3780 = vunpack.c.l.b16 %v3741
    %v3781 = vunpack.c.l.b16 %v3742
    %v3782 = vunpack.c.l.b16 %v3743
    %v3783 = vunpack.c.l.b16 %v3744
    %v3784 = vunpack.c.l.b16 %v3745
    %v3785 = vunpack.c.l.b16 %v3746
    %v3786 = vpack.c.b16 %v3771, %v3770
    %v3787 = vpack.c.b16 %v3773, %v3772
    %v3788 = vpack.c.b16 %v3775, %v3774
    %v3789 = vpack.c.b16 %v3777, %v3776
    %v3790 = vpack.c.b16 %v3779, %v3778
    %v3791 = vpack.c.b16 %v3781, %v3780
    %v3792 = vpack.c.b16 %v3783, %v3782
    %v3793 = vpack.c.b16 %v3785, %v3784
    %3802 = vmatprep.subr.bf16.mxu0 0
    %3803 = vmatpush1.bf16.msra.mxu0 %v3786
    %3804 = vmatprep.subr.bf16.mxu0 0
    %3805 = vmatpush1.bf16.msra.mxu0 %v3787
    %3806 = vmatprep.subr.bf16.mxu0 0
    %3807 = vmatpush1.bf16.msra.mxu0 %v3788
    %3808 = vmatprep.subr.bf16.mxu0 0
    %3809 = vmatpush1.bf16.msra.mxu0 %v3789
    %3810 = vmatprep.subr.bf16.mxu0 0
    %3811 = vmatpush1.bf16.msra.mxu0 %v3790
    %3812 = vmatprep.subr.bf16.mxu0 0
    %3813 = vmatpush1.bf16.msra.mxu0 %v3791
    %3814 = vmatprep.subr.bf16.mxu0 0
    %3815 = vmatpush1.bf16.msra.mxu0 %v3792
    %3816 = vmatprep.subr.bf16.mxu0 0
    %3817 = vmatpush1.bf16.msra.mxu0 %v3793
    %3818 = vmatprep.subr.bf16.mxu0 0
    %3819 = vmatpush1.bf16.msra.mxu0 0
    %3820 = vmatprep.subr.bf16.mxu0 0
    %3821 = vmatpush1.bf16.msra.mxu0 0
    %3822 = vmatprep.subr.bf16.mxu0 0
    %3823 = vmatpush1.bf16.msra.mxu0 0
    %3824 = vmatprep.subr.bf16.mxu0 0
    %3825 = vmatpush1.bf16.msra.mxu0 0
    %3826 = vmatprep.subr.bf16.mxu0 0
    %3827 = vmatpush1.bf16.msra.mxu0 0
    %3828 = vmatprep.subr.bf16.mxu0 0
    %3829 = vmatpush1.bf16.msra.mxu0 0
    %3830 = vmatprep.subr.bf16.mxu0 0
    %3831 = vmatpush1.bf16.msra.mxu0 0
    %3832 = vmatprep.subr.bf16.mxu0 0
    %3833 = vmatpush1.bf16.msra.mxu0 0
    %3834 = vmatprep.mubr.bf16.mxu0 0
    %3835 = vmatmul.mubr.bf16.gmra.mrb[0].mxu0 %v3730
    %v3836 = vpop.f32.mrb[0].mxu0
    %v3837 = vadd.f32 %v3752, %v3836
    %v3838 = vpop.f32.mrb[0].mxu0
    %v3839 = vpop.f32.mrb[0].mxu0
    %v3840 = vpop.f32.mrb[0].mxu0
    %3841 = vdwg.mxu0
    %v3842 = vld [vmem:[%s41] sm:$0x1]
    %v3843 = vld [vmem:[%s43] sm:$0x1f]
    %v3844 = vadd.f32 %v3837, %v3843
    %3845 = vst [vmem:[#allocation2] sm:$0x1] %v3844
    %s3846 = sld [smem:[#allocation4]]
    %p3847 = scmp.eq.s32.totalorder %s3846, 0
    %s3848 = scalar_select %p3847, 1, 0
    %s3849 = scvt.s32.f32 %s3848
    %v3850 = vstv %s3849
    %v3851 = vmul.f32 %v3850, %v3837
    %s3852 = ssub.f32 1.0, %s3849
    %v3853 = vstv %s3852
    %v3854 = vmul.f32 %v3853, %v3842
    %v3856 = vlaneseq
    %v3857 = vshrl.u32 %v3856, 7
    %v3858 = vsub.s32 0, %v3857
    %v3859 = vrot.slane %v3854, %v3858
    %v3861 = vadd.f32 %v3851, %v3859
    %v3862 = vadd.f32 %v3861, %v3843
    %3863 = vst [vmem:[#allocation2] sm:$0x2] %v3862
    %s3864 = sld [smem:[#allocation4 + $0x1]]
    %p3865 = scmp.eq.s32.totalorder %s3864, 0
    %s3866 = scalar_select %p3865, 1, 0
    %s3867 = scvt.s32.f32 %s3866
    %v3868 = vstv %s3867
    %v3869 = vmul.f32 %v3868, %v3837
    %s3870 = ssub.f32 1.0, %s3867
    %v3871 = vstv %s3870
    %v3872 = vmul.f32 %v3871, %v3842
    %v3874 = vlaneseq
    %v3875 = vshrl.u32 %v3874, 7
    %v3876 = vsub.s32 0, %v3875
    %v3877 = vrot.slane %v3872, %v3876
    %v3879 = vadd.f32 %v3869, %v3877
    %v3881 = vrot.slane %v3843, 1
    %v3883 = vadd.f32 %v3879, %v3881
    %3884 = vst [vmem:[#allocation2 + $0x1] sm:$0x2] %v3883
    %s3885 = sld [smem:[#allocation4 + $0x2]]
    %p3886 = scmp.eq.s32.totalorder %s3885, 0
    %s3887 = scalar_select %p3886, 1, 0
    %s3888 = scvt.s32.f32 %s3887
    %v3889 = vstv %s3888
    %v3890 = vmul.f32 %v3889, %v3837
    %s3891 = ssub.f32 1.0, %s3888
    %v3892 = vstv %s3891
    %v3893 = vmul.f32 %v3892, %v3842
    %v3895 = vlaneseq
    %v3896 = vshrl.u32 %v3895, 7
    %v3897 = vsub.s32 0, %v3896
    %v3898 = vrot.slane %v3893, %v3897
    %v3900 = vadd.f32 %v3890, %v3898
    %v3901 = vrot.slane %v3843, 2
    %v3903 = vadd.f32 %v3900, %v3901
    %3904 = vst [vmem:[#allocation2 + $0x2] sm:$0x2] %v3903
    %s3905 = sld [smem:[#allocation4 + $0x3]]
    %p3906 = scmp.eq.s32.totalorder %s3905, 0
    %s3907 = scalar_select %p3906, 1, 0
    %s3908 = scvt.s32.f32 %s3907
    %v3909 = vstv %s3908
    %v3910 = vmul.f32 %v3909, %v3837
    %s3911 = ssub.f32 1.0, %s3908
    %v3912 = vstv %s3911
    %v3913 = vmul.f32 %v3912, %v3842
    %v3915 = vlaneseq
    %v3916 = vshrl.u32 %v3915, 7
    %v3917 = vsub.s32 0, %v3916
    %v3918 = vrot.slane %v3913, %v3917
    %v3920 = vadd.f32 %v3910, %v3918
    %v3921 = vrot.slane %v3843, 3
    %v3923 = vadd.f32 %v3920, %v3921
    %3924 = vst [vmem:[#allocation2 + $0x3] sm:$0x2] %v3923
    %v3925 = vrot.slane %v3843, 6
    %v3927 = vadd.f32 %v3837, %v3925
    %s3928 = scalar_lea.vmem [#allocation2], 8
    %3929 = vst [vmem:[%s3928 - $0x2] sm:$0x4] %v3927
    %s3930 = sld [smem:[#allocation4 + $0x80]]
    %p3931 = scmp.eq.s32.totalorder %s3930, 0
    %s3932 = scalar_select %p3931, 1, 0
    %s3933 = scvt.s32.f32 %s3932
    %v3934 = vstv %s3933
    %v3935 = vmul.f32 %v3934, %v3837
    %s3936 = ssub.f32 1.0, %s3933
    %v3937 = vstv %s3936
    %v3938 = vmul.f32 %v3937, %v3842
    %v3940 = vlaneseq
    %v3941 = vshrl.u32 %v3940, 7
    %v3942 = vsub.s32 0, %v3941
    %v3943 = vrot.slane %v3938, %v3942
    %v3945 = vadd.f32 %v3935, %v3943
    %v3946 = vadd.f32 %v3945, %v3925
    %3947 = vst [vmem:[%s3928 - $0x2] sm:$0x8] %v3946
    %s3948 = sld [smem:[#allocation4 + $0x81]]
    %p3949 = scmp.eq.s32.totalorder %s3948, 0
    %s3950 = scalar_select %p3949, 1, 0
    %s3951 = scvt.s32.f32 %s3950
    %v3952 = vstv %s3951
    %v3953 = vmul.f32 %v3952, %v3837
    %s3954 = ssub.f32 1.0, %s3951
    %v3955 = vstv %s3954
    %v3956 = vmul.f32 %v3955, %v3842
    %v3958 = vlaneseq
    %v3959 = vshrl.u32 %v3958, 7
    %v3960 = vsub.s32 0, %v3959
    %v3961 = vrot.slane %v3956, %v3960
    %v3963 = vadd.f32 %v3953, %v3961
    %v3964 = vrot.slane %v3843, 7
    %v3966 = vadd.f32 %v3963, %v3964
    %3967 = vst [vmem:[%s3928 - $0x1] sm:$0x8] %v3966
    %s3968 = sld [smem:[#allocation4 + $0x82]]
    %p3969 = scmp.eq.s32.totalorder %s3968, 0
    %s3970 = scalar_select %p3969, 1, 0
    %s3971 = scvt.s32.f32 %s3970
    %v3972 = vstv %s3971
    %v3973 = vmul.f32 %v3972, %v3837
    %s3974 = ssub.f32 1.0, %s3971
    %v3975 = vstv %s3974
    %v3976 = vmul.f32 %v3975, %v3842
    %v3978 = vlaneseq
    %v3979 = vshrl.u32 %v3978, 7
    %v3980 = vsub.s32 0, %v3979
    %v3981 = vrot.slane %v3976, %v3980
    %v3983 = vadd.f32 %v3973, %v3981
    %v3984 = vadd.f32 %v3983, %v3843
    %3985 = vst [vmem:[%s3928] sm:$0x8] %v3984
    %s3986 = sld [smem:[#allocation4 + $0x83]]
    %p3987 = scmp.eq.s32.totalorder %s3986, 0
    %s3988 = scalar_select %p3987, 1, 0
    %s3989 = scvt.s32.f32 %s3988
    %v3990 = vstv %s3989
    %v3991 = vmul.f32 %v3990, %v3837
    %s3992 = ssub.f32 1.0, %s3989
    %v3993 = vstv %s3992
    %v3994 = vmul.f32 %v3993, %v3842
    %v3996 = vlaneseq
    %v3997 = vshrl.u32 %v3996, 7
    %v3998 = vsub.s32 0, %v3997
    %v3999 = vrot.slane %v3994, %v3998
    %v4001 = vadd.f32 %v3991, %v3999
    %v4002 = vadd.f32 %v4001, %v3881
    %4003 = vst [vmem:[%s3928 + $0x1] sm:$0x8] %v4002
    %v4004 = vld [vmem:[#allocation2] sm:$0x1f]
    %v4005 = vld [vmem:[#allocation2 + $0x8] sm:$0x1f]
    %v4006 = vld [vmem:[%s45] sm:$0x1]
    %v4007 = vld [vmem:[%s47] sm:$0x1]
    %v4008 = vld [vmem:[%s49] sm:$0xff]
    %v4009 = vld [vmem:[%s49 + $0x8] sm:$0xf]
    %v4010 = vld [vmem:[%s49 + $0xc] sm:$0xff]
    %v4011 = vld [vmem:[%s49 + $0x14] sm:$0xf]
    %v4012 = vld [vmem:[%s49 + $0x18] sm:$0xff]
    %v4013 = vld [vmem:[%s49 + $0x20] sm:$0xf]
    %v4014 = vld [vmem:[%s49 + $0x24] sm:$0xff]
    %v4015 = vld [vmem:[%s49 + $0x2c] sm:$0xf]
    %v4016 = vld [vmem:[%s49 + $0x30] sm:$0xff]
    %v4017 = vld [vmem:[%s49 + $0x38] sm:$0xf]
    %v4018 = vld [vmem:[%s49 + $0x3c] sm:$0xff]
    %v4019 = vld [vmem:[%s49 + $0x44] sm:$0xf]
    %v4020 = vld [vmem:[%s49 + $0x48] sm:$0xff]
    %v4021 = vld [vmem:[%s49 + $0x50] sm:$0xf]
    %v4022 = vld [vmem:[%s49 + $0x54] sm:$0xff]
    %v4023 = vld [vmem:[%s49 + $0x5c] sm:$0xf]
    %v4024 = vld [vmem:[%s49 + $0x60] sm:$0xff]
    %v4025 = vld [vmem:[%s49 + $0x68] sm:$0xf]
    %v4026 = vld [vmem:[%s49 + $0x6c] sm:$0xff]
    %v4027 = vld [vmem:[%s49 + $0x74] sm:$0xf]
    %v4028 = vld [vmem:[%s49 + $0x78] sm:$0xff]
    %v4029 = vld [vmem:[%s49 + $0x80] sm:$0xf]
    %v4030 = vld [vmem:[%s49 + $0x84] sm:$0xff]
    %v4031 = vld [vmem:[%s49 + $0x8c] sm:$0xf]
    %v4032 = vld [vmem:[%s49 + $0x90] sm:$0xff]
    %v4033 = vld [vmem:[%s49 + $0x98] sm:$0xf]
    %v4034 = vld [vmem:[%s49 + $0x9c] sm:$0xff]
    %v4035 = vld [vmem:[%s49 + $0xa4] sm:$0xf]
    %v4036 = vld [vmem:[%s49 + $0xa8] sm:$0xff]
    %v4037 = vld [vmem:[%s49 + $0xb0] sm:$0xf]
    %v4038 = vld [vmem:[%s49 + $0xb4] sm:$0xff]
    %v4039 = vld [vmem:[%s49 + $0xbc] sm:$0xf]
    %v4040 = vld [vmem:[%s51] sm:$0x7]
    %v4041 = vld [vmem:[%s53] sm:$0xf]
    %v4042 = vld [vmem:[%s53 + $0x4] sm:$0xf]
    %v4043 = vld [vmem:[%s53 + $0x8] sm:$0xf]
    %v4044 = vld [vmem:[%s53 + $0xc] sm:$0xf]
    %v4045 = vld [vmem:[%s53 + $0x10] sm:$0xf]
    %v4046 = vld [vmem:[%s53 + $0x14] sm:$0xf]
    %v4047 = vld [vmem:[%s53 + $0x18] sm:$0xf]
    %v4048 = vld [vmem:[%s53 + $0x1c] sm:$0xf]
    %v4049 = vld [vmem:[%s53 + $0x20] sm:$0xf]
    %v4050 = vld [vmem:[%s53 + $0x24] sm:$0xf]
    %v4051 = vld [vmem:[%s53 + $0x28] sm:$0xf]
    %v4052 = vld [vmem:[%s53 + $0x2c] sm:$0xf]
    %v4053 = vld [vmem:[%s53 + $0x30] sm:$0xf]
    %v4054 = vld [vmem:[%s53 + $0x34] sm:$0xf]
    %v4055 = vld [vmem:[%s53 + $0x38] sm:$0xf]
    %v4056 = vld [vmem:[%s53 + $0x3c] sm:$0xf]
    %v4057 = vld [vmem:[%s55] sm:$0x1]
    %v4058 = vld [vmem:[%s57] sm:$0x1]
    %v4059 = vld [vmem:[%s59] sm:$0x1]
    %v4060 = vld [vmem:[%s61] sm:$0xf]
    %v4061 = vld [vmem:[%s61 + $0x4] sm:$0xf]
    %v4062 = vld [vmem:[%s61 + $0x8] sm:$0xf]
    %v4063 = vld [vmem:[%s61 + $0xc] sm:$0xf]
    %v4064 = vld [vmem:[%s61 + $0x10] sm:$0xf]
    %v4065 = vld [vmem:[%s61 + $0x14] sm:$0xf]
    %v4066 = vld [vmem:[%s61 + $0x18] sm:$0xf]
    %v4067 = vld [vmem:[%s61 + $0x1c] sm:$0xf]
    %v4068 = vld [vmem:[%s61 + $0x20] sm:$0xf]
    %v4069 = vld [vmem:[%s61 + $0x24] sm:$0xf]
    %v4070 = vld [vmem:[%s61 + $0x28] sm:$0xf]
    %v4071 = vld [vmem:[%s61 + $0x2c] sm:$0xf]
    %v4072 = vld [vmem:[%s61 + $0x30] sm:$0xf]
    %v4073 = vld [vmem:[%s61 + $0x34] sm:$0xf]
    %v4074 = vld [vmem:[%s61 + $0x38] sm:$0xf]
    %v4075 = vld [vmem:[%s61 + $0x3c] sm:$0xf]
    %v4076 = vld [vmem:[%s63] sm:$0x1]
    %v4077 = vld [vmem:[%s65] sm:$0xf]
    %v4078 = vld [vmem:[%s65 + $0x4] sm:$0xf]
    %v4079 = vld [vmem:[%s65 + $0x8] sm:$0xf]
    %v4080 = vld [vmem:[%s65 + $0xc] sm:$0xf]
    %v4081 = vld [vmem:[%s65 + $0x10] sm:$0xf]
    %v4082 = vld [vmem:[%s65 + $0x14] sm:$0xf]
    %v4083 = vld [vmem:[%s65 + $0x18] sm:$0xf]
    %v4084 = vld [vmem:[%s65 + $0x1c] sm:$0xf]
    %v4085 = vld [vmem:[%s65 + $0x20] sm:$0xf]
    %v4086 = vld [vmem:[%s65 + $0x24] sm:$0xf]
    %v4087 = vld [vmem:[%s65 + $0x28] sm:$0xf]
    %v4088 = vld [vmem:[%s65 + $0x2c] sm:$0xf]
    %v4089 = vld [vmem:[%s65 + $0x30] sm:$0xf]
    %v4090 = vld [vmem:[%s65 + $0x34] sm:$0xf]
    %v4091 = vld [vmem:[%s65 + $0x38] sm:$0xf]
    %v4092 = vld [vmem:[%s65 + $0x3c] sm:$0xf]
    %v4093 = vld [vmem:[%s67] sm:$0x1]
    %vm4094 = vcmask 1044480
    %v4095 = vsel %vm4094, %v4004, 0.0
    %4096 = vadd.xlane.f32.xlu0 %v4095
    %v4097 = vpop.xlane.xlu0 %4096
    %v4098 = vsel %vm4094, %v4005, 0.0
    %4099 = vadd.xlane.f32.xlu0 %v4098
    %v4100 = vpop.xlane.xlu0 %4099
    %v4101 = vmul.f32 %v4097, %v264
    %v4102 = vmul.f32 %v4100, %v264
    %v4103 = vsub.f32 %v4004, %v4101
    %v4104 = vsub.f32 %v4005, %v4102
    %v4105 = vmul.f32 %v4103, %v4103
    %v4106 = vmul.f32 %v4104, %v4104
    %v4107 = vsel %vm4094, %v4105, 0.0
    %4108 = vadd.xlane.f32.xlu0 %v4107
    %v4109 = vpop.xlane.xlu0 %4108
    %v4110 = vsel %vm4094, %v4106, 0.0
    %4111 = vadd.xlane.f32.xlu0 %v4110
    %v4112 = vpop.xlane.xlu0 %4111
    %v4113 = vmul.f32 %v4109, %v264
    %v4114 = vmul.f32 %v4112, %v264
    %v4115 = vadd.f32 %v4113, 1e-05
    %v4116 = vadd.f32 %v4114, 1e-05
    %v4117 = vrsqrt.pop %v4115
    %v4118 = vrsqrt.pop %v4116
    %v4119 = vmul.f32 %v4103, %v4117
    %v4120 = vmul.f32 %v4104, %v4118
    %v4122 = vlaneseq
    %v4123 = vshrl.u32 %v4122, 7
    %v4124 = vsub.s32 0, %v4123
    %v4125 = vrot.slane %v4006, %v4124
    %v4127 = vmul.f32 %v4119, %v4125
    %v4128 = vmul.f32 %v4120, %v4125
    %v4130 = vlaneseq
    %v4131 = vshrl.u32 %v4130, 7
    %v4132 = vsub.s32 0, %v4131
    %v4133 = vrot.slane %v4007, %v4132
    %v4135 = vadd.f32 %v4127, %v4133
    %v4136 = vadd.f32 %v4128, %v4133
    %v4139 = vcombine.high %v4135, %v4135
    %v4141 = vunpack.c.l.s4 1966171168
    %v4142 = vunpack.c.0.s8 %v4141
    %v4143 = vlaneseq
    %v4144 = vshrl.u32 %v4143, 7
    %v4145 = vsub.s32 %v4142, %v4144
    %v4146 = vrot.slane %v4135, %v4145
    %v4148 = vunpack.c.l.s4 1966171168
    %v4149 = vunpack.c.0.s8 %v4148
    %v4150 = vlaneseq
    %v4151 = vshrl.u32 %v4150, 7
    %v4152 = vsub.s32 %v4149, %v4151
    %v4153 = vrot.slane %v4139, %v4152
    %v4154 = vcombine.high %v4146, %v4146
    %v4156 = vunpack.c.l.s4 1966171168
    %v4157 = vunpack.c.0.s8 %v4156
    %v4158 = vlaneseq
    %v4159 = vshrl.u32 %v4158, 7
    %v4160 = vsub.s32 %v4157, %v4159
    %v4161 = vrot.slane %v4146, %v4160
    %v4163 = vunpack.c.l.s4 1966171168
    %v4164 = vunpack.c.0.s8 %v4163
    %v4165 = vlaneseq
    %v4166 = vshrl.u32 %v4165, 7
    %v4167 = vsub.s32 %v4164, %v4166
    %v4168 = vrot.slane %v4153, %v4167
    %v4170 = vunpack.c.l.s4 1966171168
    %v4171 = vunpack.c.0.s8 %v4170
    %v4172 = vlaneseq
    %v4173 = vshrl.u32 %v4172, 7
    %v4174 = vsub.s32 %v4171, %v4173
    %v4175 = vrot.slane %v4154, %v4174
    %v4176 = vcombine.high %v4161, %v4161
    %v4177 = vcombine.high %v4175, %v4175
    %v4178 = vcombine.high %v4136, %v4136
    %v4180 = vunpack.c.l.s4 1966171168
    %v4181 = vunpack.c.0.s8 %v4180
    %v4182 = vlaneseq
    %v4183 = vshrl.u32 %v4182, 7
    %v4184 = vsub.s32 %v4181, %v4183
    %v4185 = vrot.slane %v4136, %v4184
    %v4187 = vunpack.c.l.s4 1966171168
    %v4188 = vunpack.c.0.s8 %v4187
    %v4189 = vlaneseq
    %v4190 = vshrl.u32 %v4189, 7
    %v4191 = vsub.s32 %v4188, %v4190
    %v4192 = vrot.slane %v4178, %v4191
    %v4193 = vcombine.high %v4185, %v4185
    %v4195 = vunpack.c.l.s4 1966171168
    %v4196 = vunpack.c.0.s8 %v4195
    %v4197 = vlaneseq
    %v4198 = vshrl.u32 %v4197, 7
    %v4199 = vsub.s32 %v4196, %v4198
    %v4200 = vrot.slane %v4185, %v4199
    %v4202 = vunpack.c.l.s4 1966171168
    %v4203 = vunpack.c.0.s8 %v4202
    %v4204 = vlaneseq
    %v4205 = vshrl.u32 %v4204, 7
    %v4206 = vsub.s32 %v4203, %v4205
    %v4207 = vrot.slane %v4192, %v4206
    %v4209 = vunpack.c.l.s4 1966171168
    %v4210 = vunpack.c.0.s8 %v4209
    %v4211 = vlaneseq
    %v4212 = vshrl.u32 %v4211, 7
    %v4213 = vsub.s32 %v4210, %v4212
    %v4214 = vrot.slane %v4193, %v4213
    %v4215 = vcombine.high %v4200, %v4200
    %v4216 = vcombine.high %v4214, %v4214
    %v4217 = vcombine.low %v4161, %v4175
    %v4218 = vcombine.low %v4176, %v4177
    %v4219 = vcombine.low %v4168, %v4200
    %v4220 = vcombine.low %v4214, %v4215
    %v4222 = vunpack.c.l.s4 1966171168
    %v4223 = vunpack.c.0.s8 %v4222
    %v4224 = vlaneseq
    %v4225 = vshrl.u32 %v4224, 7
    %v4226 = vsub.s32 %v4223, %v4225
    %v4227 = vrot.slane %v4217, %v4226
    %v4229 = vunpack.c.l.s4 1966171168
    %v4230 = vunpack.c.0.s8 %v4229
    %v4231 = vlaneseq
    %v4232 = vshrl.u32 %v4231, 7
    %v4233 = vsub.s32 %v4230, %v4232
    %v4234 = vrot.slane %v4218, %v4233
    %v4236 = vunpack.c.l.s4 1966171168
    %v4237 = vunpack.c.0.s8 %v4236
    %v4238 = vlaneseq
    %v4239 = vshrl.u32 %v4238, 7
    %v4240 = vsub.s32 %v4237, %v4239
    %v4241 = vrot.slane %v4219, %v4240
    %v4243 = vunpack.c.l.s4 1966171168
    %v4244 = vunpack.c.0.s8 %v4243
    %v4245 = vlaneseq
    %v4246 = vshrl.u32 %v4245, 7
    %v4247 = vsub.s32 %v4244, %v4246
    %v4248 = vrot.slane %v4220, %v4247
    %v4249 = vcombine.low %v4227, %v4234
    %v4250 = vcombine.low %v4241, %v4248
    %v4252 = vunpack.c.l.s4 1966171168
    %v4253 = vunpack.c.0.s8 %v4252
    %v4254 = vlaneseq
    %v4255 = vshrl.u32 %v4254, 7
    %v4256 = vsub.s32 %v4253, %v4255
    %v4257 = vrot.slane %v4249, %v4256
    %v4259 = vunpack.c.l.s4 1966171168
    %v4260 = vunpack.c.0.s8 %v4259
    %v4261 = vlaneseq
    %v4262 = vshrl.u32 %v4261, 7
    %v4263 = vsub.s32 %v4260, %v4262
    %v4264 = vrot.slane %v4250, %v4263
    %v4265 = vcombine.low %v4257, %v4264
    %v4266 = vcombine.low %v4216, %v4207
    %v4268 = vunpack.c.l.s4 1966171168
    %v4269 = vunpack.c.0.s8 %v4268
    %v4270 = vlaneseq
    %v4271 = vshrl.u32 %v4270, 7
    %v4272 = vsub.s32 %v4269, %v4271
    %v4273 = vrot.slane %v4266, %v4272
    %v4275 = vunpack.c.l.s4 1966171168
    %v4276 = vunpack.c.0.s8 %v4275
    %v4277 = vlaneseq
    %v4278 = vshrl.u32 %v4277, 7
    %v4279 = vsub.s32 %v4276, %v4278
    %v4280 = vrot.slane %v4273, %v4279
    %v4283 = vpack.c.bf16 %v4280, %v4265
    %v4285 = vlaneseq
    %v4286 = vshrl.u32 %v4285, 7
    %v4287 = vsub.s32 0, %v4286
    %v4288 = vrot.slane %v4040, %v4287
    %v4289 = vlaneseq
    %v4290 = vshrl.u32 %v4289, 7
    %v4291 = vsub.s32 1, %v4290
    %v4292 = vrot.slane %v4040, %v4291
    %v4293 = vlaneseq
    %v4294 = vshrl.u32 %v4293, 7
    %v4295 = vsub.s32 2, %v4294
    %v4296 = vrot.slane %v4040, %v4295
    %v4332 = vunpack.c.l.b16 %v4008
    %v4333 = vunpack.c.h.b16 %v4008
    %v4334 = vunpack.c.l.b16 %v4009
    %v4335 = vunpack.c.l.b16 %v4010
    %v4336 = vunpack.c.h.b16 %v4010
    %v4337 = vunpack.c.l.b16 %v4011
    %v4338 = vunpack.c.l.b16 %v4012
    %v4339 = vunpack.c.h.b16 %v4012
    %v4340 = vunpack.c.l.b16 %v4013
    %v4341 = vunpack.c.l.b16 %v4014
    %v4342 = vunpack.c.h.b16 %v4014
    %v4343 = vunpack.c.l.b16 %v4015
    %v4344 = vunpack.c.l.b16 %v4016
    %v4345 = vunpack.c.h.b16 %v4016
    %v4346 = vunpack.c.l.b16 %v4017
    %v4347 = vunpack.c.l.b16 %v4018
    %v4348 = vunpack.c.h.b16 %v4018
    %v4349 = vunpack.c.l.b16 %v4019
    %v4350 = vunpack.c.l.b16 %v4020
    %v4351 = vunpack.c.h.b16 %v4020
    %v4352 = vunpack.c.l.b16 %v4021
    %v4353 = vunpack.c.l.b16 %v4022
    %v4354 = vunpack.c.h.b16 %v4022
    %v4355 = vunpack.c.l.b16 %v4023
    %v4356 = vunpack.c.l.b16 %v4024
    %v4357 = vunpack.c.h.b16 %v4024
    %v4358 = vunpack.c.l.b16 %v4025
    %v4359 = vunpack.c.l.b16 %v4026
    %v4360 = vunpack.c.h.b16 %v4026
    %v4361 = vunpack.c.l.b16 %v4027
    %v4362 = vunpack.c.l.b16 %v4028
    %v4363 = vunpack.c.h.b16 %v4028
    %v4364 = vunpack.c.l.b16 %v4029
    %v4365 = vunpack.c.l.b16 %v4030
    %v4366 = vunpack.c.h.b16 %v4030
    %v4367 = vunpack.c.l.b16 %v4031
    %v4368 = vunpack.c.l.b16 %v4032
    %v4369 = vunpack.c.h.b16 %v4032
    %v4370 = vunpack.c.l.b16 %v4033
    %v4371 = vunpack.c.l.b16 %v4034
    %v4372 = vunpack.c.h.b16 %v4034
    %v4373 = vunpack.c.l.b16 %v4035
    %v4374 = vunpack.c.l.b16 %v4036
    %v4375 = vunpack.c.h.b16 %v4036
    %v4376 = vunpack.c.l.b16 %v4037
    %v4377 = vunpack.c.l.b16 %v4038
    %v4378 = vunpack.c.h.b16 %v4038
    %v4379 = vunpack.c.l.b16 %v4039
    %v4380 = vpack.c.b16 %v4335, %v4332
    %v4381 = vpack.c.b16 %v4336, %v4333
    %v4382 = vpack.c.b16 %v4337, %v4334
    %v4383 = vpack.c.b16 %v4341, %v4338
    %v4384 = vpack.c.b16 %v4342, %v4339
    %v4385 = vpack.c.b16 %v4343, %v4340
    %v4386 = vpack.c.b16 %v4347, %v4344
    %v4387 = vpack.c.b16 %v4348, %v4345
    %v4388 = vpack.c.b16 %v4349, %v4346
    %v4389 = vpack.c.b16 %v4353, %v4350
    %v4390 = vpack.c.b16 %v4354, %v4351
    %v4391 = vpack.c.b16 %v4355, %v4352
    %v4392 = vpack.c.b16 %v4359, %v4356
    %v4393 = vpack.c.b16 %v4360, %v4357
    %v4394 = vpack.c.b16 %v4361, %v4358
    %v4395 = vpack.c.b16 %v4365, %v4362
    %v4396 = vpack.c.b16 %v4366, %v4363
    %v4397 = vpack.c.b16 %v4367, %v4364
    %v4398 = vpack.c.b16 %v4371, %v4368
    %v4399 = vpack.c.b16 %v4372, %v4369
    %v4400 = vpack.c.b16 %v4373, %v4370
    %v4401 = vpack.c.b16 %v4377, %v4374
    %v4402 = vpack.c.b16 %v4378, %v4375
    %v4403 = vpack.c.b16 %v4379, %v4376
    %4428 = vmatprep.subr.bf16.mxu0 %v4381
    %4429 = vmatpush1.bf16.msra.mxu0 %v4380
    %4430 = vmatprep.subr.bf16.mxu0 %v4384
    %4431 = vmatpush1.bf16.msra.mxu0 %v4383
    %4432 = vmatprep.subr.bf16.mxu0 %v4387
    %4433 = vmatpush1.bf16.msra.mxu0 %v4386
    %4434 = vmatprep.subr.bf16.mxu0 %v4390
    %4435 = vmatpush1.bf16.msra.mxu0 %v4389
    %4436 = vmatprep.subr.bf16.mxu0 %v4393
    %4437 = vmatpush1.bf16.msra.mxu0 %v4392
    %4438 = vmatprep.subr.bf16.mxu0 %v4396
    %4439 = vmatpush1.bf16.msra.mxu0 %v4395
    %4440 = vmatprep.subr.bf16.mxu0 %v4399
    %4441 = vmatpush1.bf16.msra.mxu0 %v4398
    %4442 = vmatprep.subr.bf16.mxu0 %v4402
    %4443 = vmatpush1.bf16.msra.mxu0 %v4401
    %4444 = vmatprep.subr.bf16.mxu0 0
    %4445 = vmatpush1.bf16.msra.mxu0 0
    %4446 = vmatprep.subr.bf16.mxu0 0
    %4447 = vmatpush1.bf16.msra.mxu0 0
    %4448 = vmatprep.subr.bf16.mxu0 0
    %4449 = vmatpush1.bf16.msra.mxu0 0
    %4450 = vmatprep.subr.bf16.mxu0 0
    %4451 = vmatpush1.bf16.msra.mxu0 0
    %4452 = vmatprep.subr.bf16.mxu0 0
    %4453 = vmatpush1.bf16.msra.mxu0 0
    %4454 = vmatprep.subr.bf16.mxu0 0
    %4455 = vmatpush1.bf16.msra.mxu0 0
    %4456 = vmatprep.subr.bf16.mxu0 0
    %4457 = vmatpush1.bf16.msra.mxu0 0
    %4458 = vmatprep.subr.bf16.mxu0 0
    %4459 = vmatpush1.bf16.msra.mxu0 0
    %4460 = vmatprep.mubr.bf16.mxu0 0
    %4461 = vmatmul.mubr.bf16.gmra.mrb[0].mxu0 %v4283
    %v4462 = vpop.f32.mrb[0].mxu0
    %v4463 = vadd.f32 %v4288, %v4462
    %v4464 = vpop.f32.mrb[0].mxu0
    %v4465 = vadd.f32 %v4292, %v4464
    %v4466 = vpop.f32.mrb[0].mxu0
    %v4467 = vadd.f32 %v4288, %v4466
    %v4468 = vpop.f32.mrb[0].mxu0
    %v4469 = vadd.f32 %v4292, %v4468
    %4470 = vdwg.mxu0
    %4471 = vmatprep.subr.bf16.mxu0 0
    %4472 = vmatpush1.bf16.msra.mxu0 %v4382
    %4473 = vmatprep.subr.bf16.mxu0 0
    %4474 = vmatpush1.bf16.msra.mxu0 %v4385
    %4475 = vmatprep.subr.bf16.mxu0 0
    %4476 = vmatpush1.bf16.msra.mxu0 %v4388
    %4477 = vmatprep.subr.bf16.mxu0 0
    %4478 = vmatpush1.bf16.msra.mxu0 %v4391
    %4479 = vmatprep.subr.bf16.mxu0 0
    %4480 = vmatpush1.bf16.msra.mxu0 %v4394
    %4481 = vmatprep.subr.bf16.mxu0 0
    %4482 = vmatpush1.bf16.msra.mxu0 %v4397
    %4483 = vmatprep.subr.bf16.mxu0 0
    %4484 = vmatpush1.bf16.msra.mxu0 %v4400
    %4485 = vmatprep.subr.bf16.mxu0 0
    %4486 = vmatpush1.bf16.msra.mxu0 %v4403
    %4487 = vmatprep.subr.bf16.mxu0 0
    %4488 = vmatpush1.bf16.msra.mxu0 0
    %4489 = vmatprep.subr.bf16.mxu0 0
    %4490 = vmatpush1.bf16.msra.mxu0 0
    %4491 = vmatprep.subr.bf16.mxu0 0
    %4492 = vmatpush1.bf16.msra.mxu0 0
    %4493 = vmatprep.subr.bf16.mxu0 0
    %4494 = vmatpush1.bf16.msra.mxu0 0
    %4495 = vmatprep.subr.bf16.mxu0 0
    %4496 = vmatpush1.bf16.msra.mxu0 0
    %4497 = vmatprep.subr.bf16.mxu0 0
    %4498 = vmatpush1.bf16.msra.mxu0 0
    %4499 = vmatprep.subr.bf16.mxu0 0
    %4500 = vmatpush1.bf16.msra.mxu0 0
    %4501 = vmatprep.subr.bf16.mxu0 0
    %4502 = vmatpush1.bf16.msra.mxu0 0
    %4503 = vmatprep.mubr.bf16.mxu0 0
    %4504 = vmatmul.mubr.bf16.gmra.mrb[0].mxu0 %v4283
    %v4505 = vpop.f32.mrb[0].mxu0
    %v4506 = vadd.f32 %v4296, %v4505
    %v4507 = vpop.f32.mrb[0].mxu0
    %v4508 = vpop.f32.mrb[0].mxu0
    %v4509 = vadd.f32 %v4296, %v4508
    %v4510 = vpop.f32.mrb[0].mxu0
    %4511 = vdwg.mxu0
    %v4518 = vcombine.low %v4463, %v4465
    %v4519 = vcombine.high %v4463, %v4465
    %v4520 = vcombine.high %v4506, %v4506
    %v4522 = vunpack.c.l.s4 1966171168
    %v4523 = vunpack.c.0.s8 %v4522
    %v4524 = vlaneseq
    %v4525 = vshrl.u32 %v4524, 7
    %v4526 = vsub.s32 %v4523, %v4525
    %v4527 = vrot.slane %v4518, %v4526
    %v4529 = vunpack.c.l.s4 1966171168
    %v4530 = vunpack.c.0.s8 %v4529
    %v4531 = vlaneseq
    %v4532 = vshrl.u32 %v4531, 7
    %v4533 = vsub.s32 %v4530, %v4532
    %v4534 = vrot.slane %v4519, %v4533
    %v4536 = vunpack.c.l.s4 1966171168
    %v4537 = vunpack.c.0.s8 %v4536
    %v4538 = vlaneseq
    %v4539 = vshrl.u32 %v4538, 7
    %v4540 = vsub.s32 %v4537, %v4539
    %v4541 = vrot.slane %v4506, %v4540
    %v4543 = vunpack.c.l.s4 1966171168
    %v4544 = vunpack.c.0.s8 %v4543
    %v4545 = vlaneseq
    %v4546 = vshrl.u32 %v4545, 7
    %v4547 = vsub.s32 %v4544, %v4546
    %v4548 = vrot.slane %v4520, %v4547
    %v4549 = vcombine.low %v4527, %v4541
    %v4550 = vcombine.high %v4527, %v4541
    %v4551 = vcombine.low %v4534, %v4548
    %v4552 = vcombine.high %v4534, %v4548
    %v4554 = vunpack.c.l.s4 1966171168
    %v4555 = vunpack.c.0.s8 %v4554
    %v4556 = vlaneseq
    %v4557 = vshrl.u32 %v4556, 7
    %v4558 = vsub.s32 %v4555, %v4557
    %v4559 = vrot.slane %v4549, %v4558
    %v4561 = vunpack.c.l.s4 1966171168
    %v4562 = vunpack.c.0.s8 %v4561
    %v4563 = vlaneseq
    %v4564 = vshrl.u32 %v4563, 7
    %v4565 = vsub.s32 %v4562, %v4564
    %v4566 = vrot.slane %v4551, %v4565
    %v4568 = vunpack.c.l.s4 1966171168
    %v4569 = vunpack.c.0.s8 %v4568
    %v4570 = vlaneseq
    %v4571 = vshrl.u32 %v4570, 7
    %v4572 = vsub.s32 %v4569, %v4571
    %v4573 = vrot.slane %v4550, %v4572
    %v4575 = vunpack.c.l.s4 1966171168
    %v4576 = vunpack.c.0.s8 %v4575
    %v4577 = vlaneseq
    %v4578 = vshrl.u32 %v4577, 7
    %v4579 = vsub.s32 %v4576, %v4578
    %v4580 = vrot.slane %v4552, %v4579
    %v4581 = vcombine.high %v4559, %v4559
    %v4582 = vcombine.high %v4566, %v4566
    %v4583 = vcombine.high %v4573, %v4573
    %v4584 = vcombine.high %v4580, %v4580
    %v4585 = vcombine.low %v4467, %v4469
    %v4587 = vunpack.c.l.s4 1966171168
    %v4588 = vunpack.c.0.s8 %v4587
    %v4589 = vlaneseq
    %v4590 = vshrl.u32 %v4589, 7
    %v4591 = vsub.s32 %v4588, %v4590
    %v4592 = vrot.slane %v4585, %v4591
    %v4594 = vunpack.c.l.s4 1966171168
    %v4595 = vunpack.c.0.s8 %v4594
    %v4596 = vlaneseq
    %v4597 = vshrl.u32 %v4596, 7
    %v4598 = vsub.s32 %v4595, %v4597
    %v4599 = vrot.slane %v4509, %v4598
    %v4600 = vcombine.low %v4592, %v4599
    %v4601 = vcombine.high %v4592, %v4599
    %v4603 = vunpack.c.l.s4 1966171168
    %v4604 = vunpack.c.0.s8 %v4603
    %v4605 = vlaneseq
    %v4606 = vshrl.u32 %v4605, 7
    %v4607 = vsub.s32 %v4604, %v4606
    %v4608 = vrot.slane %v4600, %v4607
    %v4610 = vunpack.c.l.s4 1966171168
    %v4611 = vunpack.c.0.s8 %v4610
    %v4612 = vlaneseq
    %v4613 = vshrl.u32 %v4612, 7
    %v4614 = vsub.s32 %v4611, %v4613
    %v4615 = vrot.slane %v4601, %v4614
    %v4616 = vcombine.low %v4559, %v4573
    %v4617 = vcombine.low %v4581, %v4583
    %v4619 = vunpack.c.l.s4 1966171168
    %v4620 = vunpack.c.0.s8 %v4619
    %v4621 = vlaneseq
    %v4622 = vshrl.u32 %v4621, 7
    %v4623 = vsub.s32 %v4620, %v4622
    %v4624 = vrot.slane %v4616, %v4623
    %v4626 = vunpack.c.l.s4 1966171168
    %v4627 = vunpack.c.0.s8 %v4626
    %v4628 = vlaneseq
    %v4629 = vshrl.u32 %v4628, 7
    %v4630 = vsub.s32 %v4627, %v4629
    %v4631 = vrot.slane %v4617, %v4630
    %v4633 = vunpack.c.l.s4 1966171168
    %v4634 = vunpack.c.0.s8 %v4633
    %v4635 = vlaneseq
    %v4636 = vshrl.u32 %v4635, 7
    %v4637 = vsub.s32 %v4634, %v4636
    %v4638 = vrot.slane %v4566, %v4637
    %v4639 = vcombine.low %v4624, %v4631
    %v4641 = vunpack.c.l.s4 1966171168
    %v4642 = vunpack.c.0.s8 %v4641
    %v4643 = vlaneseq
    %v4644 = vshrl.u32 %v4643, 7
    %v4645 = vsub.s32 %v4642, %v4644
    %v4646 = vrot.slane %v4639, %v4645
    %v4648 = vunpack.c.l.s4 1966171168
    %v4649 = vunpack.c.0.s8 %v4648
    %v4650 = vlaneseq
    %v4651 = vshrl.u32 %v4650, 7
    %v4652 = vsub.s32 %v4649, %v4651
    %v4653 = vrot.slane %v4638, %v4652
    %v4654 = vcombine.low %v4646, %v4653
    %v4655 = vcombine.low %v4580, %v4582
    %v4656 = vcombine.low %v4584, %v4608
    %v4658 = vunpack.c.l.s4 1966171168
    %v4659 = vunpack.c.0.s8 %v4658
    %v4660 = vlaneseq
    %v4661 = vshrl.u32 %v4660, 7
    %v4662 = vsub.s32 %v4659, %v4661
    %v4663 = vrot.slane %v4655, %v4662
    %v4665 = vunpack.c.l.s4 1966171168
    %v4666 = vunpack.c.0.s8 %v4665
    %v4667 = vlaneseq
    %v4668 = vshrl.u32 %v4667, 7
    %v4669 = vsub.s32 %v4666, %v4668
    %v4670 = vrot.slane %v4656, %v4669
    %v4672 = vunpack.c.l.s4 1966171168
    %v4673 = vunpack.c.0.s8 %v4672
    %v4674 = vlaneseq
    %v4675 = vshrl.u32 %v4674, 7
    %v4676 = vsub.s32 %v4673, %v4675
    %v4677 = vrot.slane %v4615, %v4676
    %v4678 = vcombine.low %v4663, %v4670
    %v4680 = vunpack.c.l.s4 1966171168
    %v4681 = vunpack.c.0.s8 %v4680
    %v4682 = vlaneseq
    %v4683 = vshrl.u32 %v4682, 7
    %v4684 = vsub.s32 %v4681, %v4683
    %v4685 = vrot.slane %v4678, %v4684
    %v4687 = vunpack.c.l.s4 1966171168
    %v4688 = vunpack.c.0.s8 %v4687
    %v4689 = vlaneseq
    %v4690 = vshrl.u32 %v4689, 7
    %v4691 = vsub.s32 %v4688, %v4690
    %v4692 = vrot.slane %v4677, %v4691
    %v4693 = vcombine.low %v4685, %v4692
    %v4696 = vpack.c.bf16 %v4654, %v4654
    %v4697 = vpack.c.bf16 %v4693, %v4693
    %v4698 = vcombine.high %v4624, %v4631
    %v4699 = vcombine.high %v4638, %v4638
    %v4701 = vunpack.c.l.s4 1966171168
    %v4702 = vunpack.c.0.s8 %v4701
    %v4703 = vlaneseq
    %v4704 = vshrl.u32 %v4703, 7
    %v4705 = vsub.s32 %v4702, %v4704
    %v4706 = vrot.slane %v4698, %v4705
    %v4708 = vunpack.c.l.s4 1966171168
    %v4709 = vunpack.c.0.s8 %v4708
    %v4710 = vlaneseq
    %v4711 = vshrl.u32 %v4710, 7
    %v4712 = vsub.s32 %v4709, %v4711
    %v4713 = vrot.slane %v4699, %v4712
    %v4714 = vcombine.low %v4706, %v4713
    %v4715 = vcombine.high %v4663, %v4670
    %v4716 = vcombine.high %v4677, %v4677
    %v4718 = vunpack.c.l.s4 1966171168
    %v4719 = vunpack.c.0.s8 %v4718
    %v4720 = vlaneseq
    %v4721 = vshrl.u32 %v4720, 7
    %v4722 = vsub.s32 %v4719, %v4721
    %v4723 = vrot.slane %v4715, %v4722
    %v4725 = vunpack.c.l.s4 1966171168
    %v4726 = vunpack.c.0.s8 %v4725
    %v4727 = vlaneseq
    %v4728 = vshrl.u32 %v4727, 7
    %v4729 = vsub.s32 %v4726, %v4728
    %v4730 = vrot.slane %v4716, %v4729
    %v4731 = vcombine.low %v4723, %v4730
    %v4734 = vpack.c.bf16 %v4714, %v4714
    %v4735 = vpack.c.bf16 %v4731, %v4731
    %v4736 = vcombine.high %v4646, %v4653
    %v4737 = vcombine.high %v4685, %v4692
    %v4740 = vpack.c.bf16 %v4736, %v4736
    %v4741 = vpack.c.bf16 %v4737, %v4737
    %v4743 = vsel %vm602, %v4696, 0
    %v4746 = vsel %vm602, %v4734, 0
    %4748 = vmatprep.subr.bf16.mxu0 0
    %4749 = vmatpush1.bf16.xpose.msra.mxu0 %v4746
    %4750 = vmatprep.subr.bf16.mxu0 0
    %4751 = vmatpush1.bf16.xpose.msra.mxu0 0
    %4752 = vmatprep.subr.bf16.mxu0 0
    %4753 = vmatpush1.bf16.xpose.msra.mxu0 0
    %4754 = vmatprep.subr.bf16.mxu0 0
    %4755 = vmatpush1.bf16.xpose.msra.mxu0 0
    %4756 = vmatprep.subr.bf16.mxu0 0
    %4757 = vmatpush1.bf16.xpose.msra.mxu0 0
    %4758 = vmatprep.subr.bf16.mxu0 0
    %4759 = vmatpush1.bf16.xpose.msra.mxu0 0
    %4760 = vmatprep.subr.bf16.mxu0 0
    %4761 = vmatpush1.bf16.xpose.msra.mxu0 0
    %4762 = vmatprep.subr.bf16.mxu0 0
    %4763 = vmatpush1.bf16.xpose.msra.mxu0 0
    %4764 = vmatprep.subr.bf16.mxu0 0
    %4765 = vmatpush1.bf16.xpose.msra.mxu0 0
    %4766 = vmatprep.subr.bf16.mxu0 0
    %4767 = vmatpush1.bf16.xpose.msra.mxu0 0
    %4768 = vmatprep.subr.bf16.mxu0 0
    %4769 = vmatpush1.bf16.xpose.msra.mxu0 0
    %4770 = vmatprep.subr.bf16.mxu0 0
    %4771 = vmatpush1.bf16.xpose.msra.mxu0 0
    %4772 = vmatprep.subr.bf16.mxu0 0
    %4773 = vmatpush1.bf16.xpose.msra.mxu0 0
    %4774 = vmatprep.subr.bf16.mxu0 0
    %4775 = vmatpush1.bf16.xpose.msra.mxu0 0
    %4776 = vmatprep.subr.bf16.mxu0 0
    %4777 = vmatpush1.bf16.xpose.msra.mxu0 0
    %4778 = vmatprep.subr.bf16.mxu0 0
    %4779 = vmatpush1.bf16.xpose.msra.mxu0 0
    %4780 = vmatprep.mubr.bf16.mxu0 0
    %4781 = vmatmul.mubr.bf16.gmra.mrb[0].mxu0 %v4743
    %v4782 = vpop.f32.mrb[0].mxu0
    %v4783 = vadd.f32 0.0, %v4782
    %v4784 = vpop.f32.mrb[0].mxu0
    %v4785 = vpop.f32.mrb[0].mxu0
    %v4786 = vpop.f32.mrb[0].mxu0
    %4787 = vdwg.mxu0
    %v4789 = vsel %vm602, %v4697, 0
    %v4792 = vsel %vm602, %v4735, 0
    %4794 = vmatprep.subr.bf16.mxu0 0
    %4795 = vmatpush1.bf16.xpose.msra.mxu0 %v4792
    %4796 = vmatprep.subr.bf16.mxu0 0
    %4797 = vmatpush1.bf16.xpose.msra.mxu0 0
    %4798 = vmatprep.subr.bf16.mxu0 0
    %4799 = vmatpush1.bf16.xpose.msra.mxu0 0
    %4800 = vmatprep.subr.bf16.mxu0 0
    %4801 = vmatpush1.bf16.xpose.msra.mxu0 0
    %4802 = vmatprep.subr.bf16.mxu0 0
    %4803 = vmatpush1.bf16.xpose.msra.mxu0 0
    %4804 = vmatprep.subr.bf16.mxu0 0
    %4805 = vmatpush1.bf16.xpose.msra.mxu0 0
    %4806 = vmatprep.subr.bf16.mxu0 0
    %4807 = vmatpush1.bf16.xpose.msra.mxu0 0
    %4808 = vmatprep.subr.bf16.mxu0 0
    %4809 = vmatpush1.bf16.xpose.msra.mxu0 0
    %4810 = vmatprep.subr.bf16.mxu0 0
    %4811 = vmatpush1.bf16.xpose.msra.mxu0 0
    %4812 = vmatprep.subr.bf16.mxu0 0
    %4813 = vmatpush1.bf16.xpose.msra.mxu0 0
    %4814 = vmatprep.subr.bf16.mxu0 0
    %4815 = vmatpush1.bf16.xpose.msra.mxu0 0
    %4816 = vmatprep.subr.bf16.mxu0 0
    %4817 = vmatpush1.bf16.xpose.msra.mxu0 0
    %4818 = vmatprep.subr.bf16.mxu0 0
    %4819 = vmatpush1.bf16.xpose.msra.mxu0 0
    %4820 = vmatprep.subr.bf16.mxu0 0
    %4821 = vmatpush1.bf16.xpose.msra.mxu0 0
    %4822 = vmatprep.subr.bf16.mxu0 0
    %4823 = vmatpush1.bf16.xpose.msra.mxu0 0
    %4824 = vmatprep.subr.bf16.mxu0 0
    %4825 = vmatpush1.bf16.xpose.msra.mxu0 0
    %4826 = vmatprep.mubr.bf16.mxu0 0
    %4827 = vmatmul.mubr.bf16.gmra.mrb[0].mxu0 %v4789
    %v4828 = vpop.f32.mrb[0].mxu0
    %v4829 = vadd.f32 0.0, %v4828
    %v4830 = vpop.f32.mrb[0].mxu0
    %v4831 = vpop.f32.mrb[0].mxu0
    %v4832 = vpop.f32.mrb[0].mxu0
    %4833 = vdwg.mxu0
    %v4834 = vmul.f32 %v4783, 0.17677669
    %v4835 = vmul.f32 %v4829, 0.17677669
    %vm4836 = vcmask 36864
    %v4837 = vsel %vm4836, %v4834, -inf
    %4838 = vmax.xlane.f32.xlu0 %v4837
    %v4839 = vpop.xlane.xlu0 %4838
    %v4840 = vsel %vm4836, %v4835, -inf
    %4841 = vmax.xlane.f32.xlu0 %v4840
    %v4842 = vpop.xlane.xlu0 %4841
    %v4843 = vsub.f32 %v4834, %v4839
    %v4844 = vsub.f32 %v4835, %v4842
    %v4845 = vmul.f32 %v4843, 1.442695
    %v4846 = vpow.pop %v4845
    %v4847 = vmul.f32 %v4844, 1.442695
    %v4848 = vpow.pop %v4847
    %v4849 = vsel %vm4836, %v4846, 0.0
    %4850 = vadd.xlane.f32.xlu0 %v4849
    %v4851 = vpop.xlane.xlu0 %4850
    %v4852 = vsel %vm4836, %v4848, 0.0
    %4853 = vadd.xlane.f32.xlu0 %v4852
    %v4854 = vpop.xlane.xlu0 %4853
    %v4855 = vrcp.pop %v4851
    %v4856 = vrcp.pop %v4854
    %v4857 = vmul.f32 %v4846, %v4855
    %v4858 = vmul.f32 %v4848, %v4856
    %v4859 = vpack.c.bf16 %v4857, %v4857
    %v4860 = vpack.c.bf16 %v4858, %v4858
    %vm4861 = vcmask 39936
    %v4863 = vsel %vm4861, %v4859, 0
    %vm4865 = vcmask 1042432
    %v4866 = vsel %vm257, 4294967295, 65535
    %v4867 = vsel %vm4865, %v4866, 0
    %v4869 = vand.u32 %v4740, %v4867
    %4871 = vmatprep.subr.bf16.mxu0 0
    %4872 = vmatpush1.bf16.msra.mxu0 %v4869
    %4873 = vmatprep.subr.bf16.mxu0 0
    %4874 = vmatpush1.bf16.msra.mxu0 0
    %4875 = vmatprep.subr.bf16.mxu0 0
    %4876 = vmatpush1.bf16.msra.mxu0 0
    %4877 = vmatprep.subr.bf16.mxu0 0
    %4878 = vmatpush1.bf16.msra.mxu0 0
    %4879 = vmatprep.subr.bf16.mxu0 0
    %4880 = vmatpush1.bf16.msra.mxu0 0
    %4881 = vmatprep.subr.bf16.mxu0 0
    %4882 = vmatpush1.bf16.msra.mxu0 0
    %4883 = vmatprep.subr.bf16.mxu0 0
    %4884 = vmatpush1.bf16.msra.mxu0 0
    %4885 = vmatprep.subr.bf16.mxu0 0
    %4886 = vmatpush1.bf16.msra.mxu0 0
    %4887 = vmatprep.subr.bf16.mxu0 0
    %4888 = vmatpush1.bf16.msra.mxu0 0
    %4889 = vmatprep.subr.bf16.mxu0 0
    %4890 = vmatpush1.bf16.msra.mxu0 0
    %4891 = vmatprep.subr.bf16.mxu0 0
    %4892 = vmatpush1.bf16.msra.mxu0 0
    %4893 = vmatprep.subr.bf16.mxu0 0
    %4894 = vmatpush1.bf16.msra.mxu0 0
    %4895 = vmatprep.subr.bf16.mxu0 0
    %4896 = vmatpush1.bf16.msra.mxu0 0
    %4897 = vmatprep.subr.bf16.mxu0 0
    %4898 = vmatpush1.bf16.msra.mxu0 0
    %4899 = vmatprep.subr.bf16.mxu0 0
    %4900 = vmatpush1.bf16.msra.mxu0 0
    %4901 = vmatprep.subr.bf16.mxu0 0
    %4902 = vmatpush1.bf16.msra.mxu0 0
    %4903 = vmatprep.mubr.bf16.mxu0 0
    %4904 = vmatmul.mubr.bf16.gmra.mrb[0].mxu0 %v4863
    %v4905 = vpop.f32.mrb[0].mxu0
    %v4906 = vadd.f32 0.0, %v4905
    %v4907 = vpop.f32.mrb[0].mxu0
    %v4908 = vpop.f32.mrb[0].mxu0
    %v4909 = vpop.f32.mrb[0].mxu0
    %4910 = vdwg.mxu0
    %v4912 = vsel %vm4861, %v4860, 0
    %v4915 = vand.u32 %v4741, %v4867
    %4917 = vmatprep.subr.bf16.mxu0 0
    %4918 = vmatpush1.bf16.msra.mxu0 %v4915
    %4919 = vmatprep.subr.bf16.mxu0 0
    %4920 = vmatpush1.bf16.msra.mxu0 0
    %4921 = vmatprep.subr.bf16.mxu0 0
    %4922 = vmatpush1.bf16.msra.mxu0 0
    %4923 = vmatprep.subr.bf16.mxu0 0
    %4924 = vmatpush1.bf16.msra.mxu0 0
    %4925 = vmatprep.subr.bf16.mxu0 0
    %4926 = vmatpush1.bf16.msra.mxu0 0
    %4927 = vmatprep.subr.bf16.mxu0 0
    %4928 = vmatpush1.bf16.msra.mxu0 0
    %4929 = vmatprep.subr.bf16.mxu0 0
    %4930 = vmatpush1.bf16.msra.mxu0 0
    %4931 = vmatprep.subr.bf16.mxu0 0
    %4932 = vmatpush1.bf16.msra.mxu0 0
    %4933 = vmatprep.subr.bf16.mxu0 0
    %4934 = vmatpush1.bf16.msra.mxu0 0
    %4935 = vmatprep.subr.bf16.mxu0 0
    %4936 = vmatpush1.bf16.msra.mxu0 0
    %4937 = vmatprep.subr.bf16.mxu0 0
    %4938 = vmatpush1.bf16.msra.mxu0 0
    %4939 = vmatprep.subr.bf16.mxu0 0
    %4940 = vmatpush1.bf16.msra.mxu0 0
    %4941 = vmatprep.subr.bf16.mxu0 0
    %4942 = vmatpush1.bf16.msra.mxu0 0
    %4943 = vmatprep.subr.bf16.mxu0 0
    %4944 = vmatpush1.bf16.msra.mxu0 0
    %4945 = vmatprep.subr.bf16.mxu0 0
    %4946 = vmatpush1.bf16.msra.mxu0 0
    %4947 = vmatprep.subr.bf16.mxu0 0
    %4948 = vmatpush1.bf16.msra.mxu0 0
    %4949 = vmatprep.mubr.bf16.mxu0 0
    %4950 = vmatmul.mubr.bf16.gmra.mrb[0].mxu0 %v4912
    %v4951 = vpop.f32.mrb[0].mxu0
    %v4952 = vadd.f32 0.0, %v4951
    %v4953 = vpop.f32.mrb[0].mxu0
    %v4954 = vpop.f32.mrb[0].mxu0
    %v4955 = vpop.f32.mrb[0].mxu0
    %4956 = vdwg.mxu0
    %4957 = vrot.lane.b32.xlu0 %v4714, 96
    %v4958 = vpop.permute.xlu0 %4957
    %4959 = vrot.lane.b32.xlu0 %v4731, 96
    %v4960 = vpop.permute.xlu0 %4959
    %v4963 = vpack.c.bf16 %v4958, %v4958
    %v4964 = vpack.c.bf16 %v4960, %v4960
    %4965 = vrot.lane.b32.xlu0 %v4736, 96
    %v4966 = vpop.permute.xlu0 %4965
    %4967 = vrot.lane.b32.xlu0 %v4737, 96
    %v4968 = vpop.permute.xlu0 %4967
    %v4971 = vpack.c.bf16 %v4966, %v4966
    %v4972 = vpack.c.bf16 %v4968, %v4968
    %4974 = vrot.lane.b32.xlu0 %v4696, 96
    %v4975 = vpop.permute.xlu0 %4974
    %v4977 = vsel %vm602, %v4975, 0
    %v4980 = vsel %vm602, %v4963, 0
    %4982 = vmatprep.subr.bf16.mxu0 0
    %4983 = vmatpush1.bf16.xpose.msra.mxu0 %v4980
    %4984 = vmatprep.subr.bf16.mxu0 0
    %4985 = vmatpush1.bf16.xpose.msra.mxu0 0
    %4986 = vmatprep.subr.bf16.mxu0 0
    %4987 = vmatpush1.bf16.xpose.msra.mxu0 0
    %4988 = vmatprep.subr.bf16.mxu0 0
    %4989 = vmatpush1.bf16.xpose.msra.mxu0 0
    %4990 = vmatprep.subr.bf16.mxu0 0
    %4991 = vmatpush1.bf16.xpose.msra.mxu0 0
    %4992 = vmatprep.subr.bf16.mxu0 0
    %4993 = vmatpush1.bf16.xpose.msra.mxu0 0
    %4994 = vmatprep.subr.bf16.mxu0 0
    %4995 = vmatpush1.bf16.xpose.msra.mxu0 0
    %4996 = vmatprep.subr.bf16.mxu0 0
    %4997 = vmatpush1.bf16.xpose.msra.mxu0 0
    %4998 = vmatprep.subr.bf16.mxu0 0
    %4999 = vmatpush1.bf16.xpose.msra.mxu0 0
    %5000 = vmatprep.subr.bf16.mxu0 0
    %5001 = vmatpush1.bf16.xpose.msra.mxu0 0
    %5002 = vmatprep.subr.bf16.mxu0 0
    %5003 = vmatpush1.bf16.xpose.msra.mxu0 0
    %5004 = vmatprep.subr.bf16.mxu0 0
    %5005 = vmatpush1.bf16.xpose.msra.mxu0 0
    %5006 = vmatprep.subr.bf16.mxu0 0
    %5007 = vmatpush1.bf16.xpose.msra.mxu0 0
    %5008 = vmatprep.subr.bf16.mxu0 0
    %5009 = vmatpush1.bf16.xpose.msra.mxu0 0
    %5010 = vmatprep.subr.bf16.mxu0 0
    %5011 = vmatpush1.bf16.xpose.msra.mxu0 0
    %5012 = vmatprep.subr.bf16.mxu0 0
    %5013 = vmatpush1.bf16.xpose.msra.mxu0 0
    %5014 = vmatprep.mubr.bf16.mxu0 0
    %5015 = vmatmul.mubr.bf16.gmra.mrb[0].mxu0 %v4977
    %v5016 = vpop.f32.mrb[0].mxu0
    %v5017 = vadd.f32 0.0, %v5016
    %v5018 = vpop.f32.mrb[0].mxu0
    %v5019 = vpop.f32.mrb[0].mxu0
    %v5020 = vpop.f32.mrb[0].mxu0
    %5021 = vdwg.mxu0
    %5023 = vrot.lane.b32.xlu0 %v4697, 96
    %v5024 = vpop.permute.xlu0 %5023
    %v5026 = vsel %vm602, %v5024, 0
    %v5029 = vsel %vm602, %v4964, 0
    %5031 = vmatprep.subr.bf16.mxu0 0
    %5032 = vmatpush1.bf16.xpose.msra.mxu0 %v5029
    %5033 = vmatprep.subr.bf16.mxu0 0
    %5034 = vmatpush1.bf16.xpose.msra.mxu0 0
    %5035 = vmatprep.subr.bf16.mxu0 0
    %5036 = vmatpush1.bf16.xpose.msra.mxu0 0
    %5037 = vmatprep.subr.bf16.mxu0 0
    %5038 = vmatpush1.bf16.xpose.msra.mxu0 0
    %5039 = vmatprep.subr.bf16.mxu0 0
    %5040 = vmatpush1.bf16.xpose.msra.mxu0 0
    %5041 = vmatprep.subr.bf16.mxu0 0
    %5042 = vmatpush1.bf16.xpose.msra.mxu0 0
    %5043 = vmatprep.subr.bf16.mxu0 0
    %5044 = vmatpush1.bf16.xpose.msra.mxu0 0
    %5045 = vmatprep.subr.bf16.mxu0 0
    %5046 = vmatpush1.bf16.xpose.msra.mxu0 0
    %5047 = vmatprep.subr.bf16.mxu0 0
    %5048 = vmatpush1.bf16.xpose.msra.mxu0 0
    %5049 = vmatprep.subr.bf16.mxu0 0
    %5050 = vmatpush1.bf16.xpose.msra.mxu0 0
    %5051 = vmatprep.subr.bf16.mxu0 0
    %5052 = vmatpush1.bf16.xpose.msra.mxu0 0
    %5053 = vmatprep.subr.bf16.mxu0 0
    %5054 = vmatpush1.bf16.xpose.msra.mxu0 0
    %5055 = vmatprep.subr.bf16.mxu0 0
    %5056 = vmatpush1.bf16.xpose.msra.mxu0 0
    %5057 = vmatprep.subr.bf16.mxu0 0
    %5058 = vmatpush1.bf16.xpose.msra.mxu0 0
    %5059 = vmatprep.subr.bf16.mxu0 0
    %5060 = vmatpush1.bf16.xpose.msra.mxu0 0
    %5061 = vmatprep.subr.bf16.mxu0 0
    %5062 = vmatpush1.bf16.xpose.msra.mxu0 0
    %5063 = vmatprep.mubr.bf16.mxu0 0
    %5064 = vmatmul.mubr.bf16.gmra.mrb[0].mxu0 %v5026
    %v5065 = vpop.f32.mrb[0].mxu0
    %v5066 = vadd.f32 0.0, %v5065
    %v5067 = vpop.f32.mrb[0].mxu0
    %v5068 = vpop.f32.mrb[0].mxu0
    %v5069 = vpop.f32.mrb[0].mxu0
    %5070 = vdwg.mxu0
    %v5071 = vmul.f32 %v5017, 0.17677669
    %v5072 = vmul.f32 %v5066, 0.17677669
    %v5073 = vsel %vm4836, %v5071, -inf
    %5074 = vmax.xlane.f32.xlu0 %v5073
    %v5075 = vpop.xlane.xlu0 %5074
    %v5076 = vsel %vm4836, %v5072, -inf
    %5077 = vmax.xlane.f32.xlu0 %v5076
    %v5078 = vpop.xlane.xlu0 %5077
    %v5079 = vsub.f32 %v5071, %v5075
    %v5080 = vsub.f32 %v5072, %v5078
    %v5081 = vmul.f32 %v5079, 1.442695
    %v5082 = vpow.pop %v5081
    %v5083 = vmul.f32 %v5080, 1.442695
    %v5084 = vpow.pop %v5083
    %v5085 = vsel %vm4836, %v5082, 0.0
    %5086 = vadd.xlane.f32.xlu0 %v5085
    %v5087 = vpop.xlane.xlu0 %5086
    %v5088 = vsel %vm4836, %v5084, 0.0
    %5089 = vadd.xlane.f32.xlu0 %v5088
    %v5090 = vpop.xlane.xlu0 %5089
    %v5091 = vrcp.pop %v5087
    %v5092 = vrcp.pop %v5090
    %v5093 = vmul.f32 %v5082, %v5091
    %v5094 = vmul.f32 %v5084, %v5092
    %v5095 = vpack.c.bf16 %v5093, %v5093
    %v5096 = vpack.c.bf16 %v5094, %v5094
    %v5098 = vsel %vm4861, %v5095, 0
    %v5101 = vand.u32 %v4971, %v4867
    %5103 = vmatprep.subr.bf16.mxu0 0
    %5104 = vmatpush1.bf16.msra.mxu0 %v5101
    %5105 = vmatprep.subr.bf16.mxu0 0
    %5106 = vmatpush1.bf16.msra.mxu0 0
    %5107 = vmatprep.subr.bf16.mxu0 0
    %5108 = vmatpush1.bf16.msra.mxu0 0
    %5109 = vmatprep.subr.bf16.mxu0 0
    %5110 = vmatpush1.bf16.msra.mxu0 0
    %5111 = vmatprep.subr.bf16.mxu0 0
    %5112 = vmatpush1.bf16.msra.mxu0 0
    %5113 = vmatprep.subr.bf16.mxu0 0
    %5114 = vmatpush1.bf16.msra.mxu0 0
    %5115 = vmatprep.subr.bf16.mxu0 0
    %5116 = vmatpush1.bf16.msra.mxu0 0
    %5117 = vmatprep.subr.bf16.mxu0 0
    %5118 = vmatpush1.bf16.msra.mxu0 0
    %5119 = vmatprep.subr.bf16.mxu0 0
    %5120 = vmatpush1.bf16.msra.mxu0 0
    %5121 = vmatprep.subr.bf16.mxu0 0
    %5122 = vmatpush1.bf16.msra.mxu0 0
    %5123 = vmatprep.subr.bf16.mxu0 0
    %5124 = vmatpush1.bf16.msra.mxu0 0
    %5125 = vmatprep.subr.bf16.mxu0 0
    %5126 = vmatpush1.bf16.msra.mxu0 0
    %5127 = vmatprep.subr.bf16.mxu0 0
    %5128 = vmatpush1.bf16.msra.mxu0 0
    %5129 = vmatprep.subr.bf16.mxu0 0
    %5130 = vmatpush1.bf16.msra.mxu0 0
    %5131 = vmatprep.subr.bf16.mxu0 0
    %5132 = vmatpush1.bf16.msra.mxu0 0
    %5133 = vmatprep.subr.bf16.mxu0 0
    %5134 = vmatpush1.bf16.msra.mxu0 0
    %5135 = vmatprep.mubr.bf16.mxu0 0
    %5136 = vmatmul.mubr.bf16.gmra.mrb[0].mxu0 %v5098
    %v5137 = vpop.f32.mrb[0].mxu0
    %v5138 = vadd.f32 0.0, %v5137
    %v5139 = vpop.f32.mrb[0].mxu0
    %v5140 = vpop.f32.mrb[0].mxu0
    %v5141 = vpop.f32.mrb[0].mxu0
    %5142 = vdwg.mxu0
    %v5144 = vsel %vm4861, %v5096, 0
    %v5147 = vand.u32 %v4972, %v4867
    %5149 = vmatprep.subr.bf16.mxu0 0
    %5150 = vmatpush1.bf16.msra.mxu0 %v5147
    %5151 = vmatprep.subr.bf16.mxu0 0
    %5152 = vmatpush1.bf16.msra.mxu0 0
    %5153 = vmatprep.subr.bf16.mxu0 0
    %5154 = vmatpush1.bf16.msra.mxu0 0
    %5155 = vmatprep.subr.bf16.mxu0 0
    %5156 = vmatpush1.bf16.msra.mxu0 0
    %5157 = vmatprep.subr.bf16.mxu0 0
    %5158 = vmatpush1.bf16.msra.mxu0 0
    %5159 = vmatprep.subr.bf16.mxu0 0
    %5160 = vmatpush1.bf16.msra.mxu0 0
    %5161 = vmatprep.subr.bf16.mxu0 0
    %5162 = vmatpush1.bf16.msra.mxu0 0
    %5163 = vmatprep.subr.bf16.mxu0 0
    %5164 = vmatpush1.bf16.msra.mxu0 0
    %5165 = vmatprep.subr.bf16.mxu0 0
    %5166 = vmatpush1.bf16.msra.mxu0 0
    %5167 = vmatprep.subr.bf16.mxu0 0
    %5168 = vmatpush1.bf16.msra.mxu0 0
    %5169 = vmatprep.subr.bf16.mxu0 0
    %5170 = vmatpush1.bf16.msra.mxu0 0
    %5171 = vmatprep.subr.bf16.mxu0 0
    %5172 = vmatpush1.bf16.msra.mxu0 0
    %5173 = vmatprep.subr.bf16.mxu0 0
    %5174 = vmatpush1.bf16.msra.mxu0 0
    %5175 = vmatprep.subr.bf16.mxu0 0
    %5176 = vmatpush1.bf16.msra.mxu0 0
    %5177 = vmatprep.subr.bf16.mxu0 0
    %5178 = vmatpush1.bf16.msra.mxu0 0
    %5179 = vmatprep.subr.bf16.mxu0 0
    %5180 = vmatpush1.bf16.msra.mxu0 0
    %5181 = vmatprep.mubr.bf16.mxu0 0
    %5182 = vmatmul.mubr.bf16.gmra.mrb[0].mxu0 %v5144
    %v5183 = vpop.f32.mrb[0].mxu0
    %v5184 = vadd.f32 0.0, %v5183
    %v5185 = vpop.f32.mrb[0].mxu0
    %v5186 = vpop.f32.mrb[0].mxu0
    %v5187 = vpop.f32.mrb[0].mxu0
    %5188 = vdwg.mxu0
    %5189 = vrot.lane.b32.xlu0 %v4714, 64
    %v5190 = vpop.permute.xlu0 %5189
    %5191 = vrot.lane.b32.xlu0 %v4731, 64
    %v5192 = vpop.permute.xlu0 %5191
    %v5195 = vpack.c.bf16 %v5190, %v5190
    %v5196 = vpack.c.bf16 %v5192, %v5192
    %5197 = vrot.lane.b32.xlu0 %v4736, 64
    %v5198 = vpop.permute.xlu0 %5197
    %5199 = vrot.lane.b32.xlu0 %v4737, 64
    %v5200 = vpop.permute.xlu0 %5199
    %v5203 = vpack.c.bf16 %v5198, %v5198
    %v5204 = vpack.c.bf16 %v5200, %v5200
    %5205 = vrot.lane.b32.xlu0 %v4696, 64
    %v5206 = vpop.permute.xlu0 %5205
    %v5208 = vsel %vm602, %v5206, 0
    %v5211 = vsel %vm602, %v5195, 0
    %5213 = vmatprep.subr.bf16.mxu0 0
    %5214 = vmatpush1.bf16.xpose.msra.mxu0 %v5211
    %5215 = vmatprep.subr.bf16.mxu0 0
    %5216 = vmatpush1.bf16.xpose.msra.mxu0 0
    %5217 = vmatprep.subr.bf16.mxu0 0
    %5218 = vmatpush1.bf16.xpose.msra.mxu0 0
    %5219 = vmatprep.subr.bf16.mxu0 0
    %5220 = vmatpush1.bf16.xpose.msra.mxu0 0
    %5221 = vmatprep.subr.bf16.mxu0 0
    %5222 = vmatpush1.bf16.xpose.msra.mxu0 0
    %5223 = vmatprep.subr.bf16.mxu0 0
    %5224 = vmatpush1.bf16.xpose.msra.mxu0 0
    %5225 = vmatprep.subr.bf16.mxu0 0
    %5226 = vmatpush1.bf16.xpose.msra.mxu0 0
    %5227 = vmatprep.subr.bf16.mxu0 0
    %5228 = vmatpush1.bf16.xpose.msra.mxu0 0
    %5229 = vmatprep.subr.bf16.mxu0 0
    %5230 = vmatpush1.bf16.xpose.msra.mxu0 0
    %5231 = vmatprep.subr.bf16.mxu0 0
    %5232 = vmatpush1.bf16.xpose.msra.mxu0 0
    %5233 = vmatprep.subr.bf16.mxu0 0
    %5234 = vmatpush1.bf16.xpose.msra.mxu0 0
    %5235 = vmatprep.subr.bf16.mxu0 0
    %5236 = vmatpush1.bf16.xpose.msra.mxu0 0
    %5237 = vmatprep.subr.bf16.mxu0 0
    %5238 = vmatpush1.bf16.xpose.msra.mxu0 0
    %5239 = vmatprep.subr.bf16.mxu0 0
    %5240 = vmatpush1.bf16.xpose.msra.mxu0 0
    %5241 = vmatprep.subr.bf16.mxu0 0
    %5242 = vmatpush1.bf16.xpose.msra.mxu0 0
    %5243 = vmatprep.subr.bf16.mxu0 0
    %5244 = vmatpush1.bf16.xpose.msra.mxu0 0
    %5245 = vmatprep.mubr.bf16.mxu0 0
    %5246 = vmatmul.mubr.bf16.gmra.mrb[0].mxu0 %v5208
    %v5247 = vpop.f32.mrb[0].mxu0
    %v5248 = vadd.f32 0.0, %v5247
    %v5249 = vpop.f32.mrb[0].mxu0
    %v5250 = vpop.f32.mrb[0].mxu0
    %v5251 = vpop.f32.mrb[0].mxu0
    %5252 = vdwg.mxu0
    %5253 = vrot.lane.b32.xlu0 %v4697, 64
    %v5254 = vpop.permute.xlu0 %5253
    %v5256 = vsel %vm602, %v5254, 0
    %v5259 = vsel %vm602, %v5196, 0
    %5261 = vmatprep.subr.bf16.mxu0 0
    %5262 = vmatpush1.bf16.xpose.msra.mxu0 %v5259
    %5263 = vmatprep.subr.bf16.mxu0 0
    %5264 = vmatpush1.bf16.xpose.msra.mxu0 0
    %5265 = vmatprep.subr.bf16.mxu0 0
    %5266 = vmatpush1.bf16.xpose.msra.mxu0 0
    %5267 = vmatprep.subr.bf16.mxu0 0
    %5268 = vmatpush1.bf16.xpose.msra.mxu0 0
    %5269 = vmatprep.subr.bf16.mxu0 0
    %5270 = vmatpush1.bf16.xpose.msra.mxu0 0
    %5271 = vmatprep.subr.bf16.mxu0 0
    %5272 = vmatpush1.bf16.xpose.msra.mxu0 0
    %5273 = vmatprep.subr.bf16.mxu0 0
    %5274 = vmatpush1.bf16.xpose.msra.mxu0 0
    %5275 = vmatprep.subr.bf16.mxu0 0
    %5276 = vmatpush1.bf16.xpose.msra.mxu0 0
    %5277 = vmatprep.subr.bf16.mxu0 0
    %5278 = vmatpush1.bf16.xpose.msra.mxu0 0
    %5279 = vmatprep.subr.bf16.mxu0 0
    %5280 = vmatpush1.bf16.xpose.msra.mxu0 0
    %5281 = vmatprep.subr.bf16.mxu0 0
    %5282 = vmatpush1.bf16.xpose.msra.mxu0 0
    %5283 = vmatprep.subr.bf16.mxu0 0
    %5284 = vmatpush1.bf16.xpose.msra.mxu0 0
    %5285 = vmatprep.subr.bf16.mxu0 0
    %5286 = vmatpush1.bf16.xpose.msra.mxu0 0
    %5287 = vmatprep.subr.bf16.mxu0 0
    %5288 = vmatpush1.bf16.xpose.msra.mxu0 0
    %5289 = vmatprep.subr.bf16.mxu0 0
    %5290 = vmatpush1.bf16.xpose.msra.mxu0 0
    %5291 = vmatprep.subr.bf16.mxu0 0
    %5292 = vmatpush1.bf16.xpose.msra.mxu0 0
    %5293 = vmatprep.mubr.bf16.mxu0 0
    %5294 = vmatmul.mubr.bf16.gmra.mrb[0].mxu0 %v5256
    %v5295 = vpop.f32.mrb[0].mxu0
    %v5296 = vadd.f32 0.0, %v5295
    %v5297 = vpop.f32.mrb[0].mxu0
    %v5298 = vpop.f32.mrb[0].mxu0
    %v5299 = vpop.f32.mrb[0].mxu0
    %5300 = vdwg.mxu0
    %v5301 = vmul.f32 %v5248, 0.17677669
    %v5302 = vmul.f32 %v5296, 0.17677669
    %v5303 = vsel %vm4836, %v5301, -inf
    %5304 = vmax.xlane.f32.xlu0 %v5303
    %v5305 = vpop.xlane.xlu0 %5304
    %v5306 = vsel %vm4836, %v5302, -inf
    %5307 = vmax.xlane.f32.xlu0 %v5306
    %v5308 = vpop.xlane.xlu0 %5307
    %v5309 = vsub.f32 %v5301, %v5305
    %v5310 = vsub.f32 %v5302, %v5308
    %v5311 = vmul.f32 %v5309, 1.442695
    %v5312 = vpow.pop %v5311
    %v5313 = vmul.f32 %v5310, 1.442695
    %v5314 = vpow.pop %v5313
    %v5315 = vsel %vm4836, %v5312, 0.0
    %5316 = vadd.xlane.f32.xlu0 %v5315
    %v5317 = vpop.xlane.xlu0 %5316
    %v5318 = vsel %vm4836, %v5314, 0.0
    %5319 = vadd.xlane.f32.xlu0 %v5318
    %v5320 = vpop.xlane.xlu0 %5319
    %v5321 = vrcp.pop %v5317
    %v5322 = vrcp.pop %v5320
    %v5323 = vmul.f32 %v5312, %v5321
    %v5324 = vmul.f32 %v5314, %v5322
    %v5325 = vpack.c.bf16 %v5323, %v5323
    %v5326 = vpack.c.bf16 %v5324, %v5324
    %v5328 = vsel %vm4861, %v5325, 0
    %v5331 = vand.u32 %v5203, %v4867
    %5333 = vmatprep.subr.bf16.mxu0 0
    %5334 = vmatpush1.bf16.msra.mxu0 %v5331
    %5335 = vmatprep.subr.bf16.mxu0 0
    %5336 = vmatpush1.bf16.msra.mxu0 0
    %5337 = vmatprep.subr.bf16.mxu0 0
    %5338 = vmatpush1.bf16.msra.mxu0 0
    %5339 = vmatprep.subr.bf16.mxu0 0
    %5340 = vmatpush1.bf16.msra.mxu0 0
    %5341 = vmatprep.subr.bf16.mxu0 0
    %5342 = vmatpush1.bf16.msra.mxu0 0
    %5343 = vmatprep.subr.bf16.mxu0 0
    %5344 = vmatpush1.bf16.msra.mxu0 0
    %5345 = vmatprep.subr.bf16.mxu0 0
    %5346 = vmatpush1.bf16.msra.mxu0 0
    %5347 = vmatprep.subr.bf16.mxu0 0
    %5348 = vmatpush1.bf16.msra.mxu0 0
    %5349 = vmatprep.subr.bf16.mxu0 0
    %5350 = vmatpush1.bf16.msra.mxu0 0
    %5351 = vmatprep.subr.bf16.mxu0 0
    %5352 = vmatpush1.bf16.msra.mxu0 0
    %5353 = vmatprep.subr.bf16.mxu0 0
    %5354 = vmatpush1.bf16.msra.mxu0 0
    %5355 = vmatprep.subr.bf16.mxu0 0
    %5356 = vmatpush1.bf16.msra.mxu0 0
    %5357 = vmatprep.subr.bf16.mxu0 0
    %5358 = vmatpush1.bf16.msra.mxu0 0
    %5359 = vmatprep.subr.bf16.mxu0 0
    %5360 = vmatpush1.bf16.msra.mxu0 0
    %5361 = vmatprep.subr.bf16.mxu0 0
    %5362 = vmatpush1.bf16.msra.mxu0 0
    %5363 = vmatprep.subr.bf16.mxu0 0
    %5364 = vmatpush1.bf16.msra.mxu0 0
    %5365 = vmatprep.mubr.bf16.mxu0 0
    %5366 = vmatmul.mubr.bf16.gmra.mrb[0].mxu0 %v5328
    %v5367 = vpop.f32.mrb[0].mxu0
    %v5368 = vadd.f32 0.0, %v5367
    %v5369 = vpop.f32.mrb[0].mxu0
    %v5370 = vpop.f32.mrb[0].mxu0
    %v5371 = vpop.f32.mrb[0].mxu0
    %5372 = vdwg.mxu0
    %v5374 = vsel %vm4861, %v5326, 0
    %v5377 = vand.u32 %v5204, %v4867
    %5379 = vmatprep.subr.bf16.mxu0 0
    %5380 = vmatpush1.bf16.msra.mxu0 %v5377
    %5381 = vmatprep.subr.bf16.mxu0 0
    %5382 = vmatpush1.bf16.msra.mxu0 0
    %5383 = vmatprep.subr.bf16.mxu0 0
    %5384 = vmatpush1.bf16.msra.mxu0 0
    %5385 = vmatprep.subr.bf16.mxu0 0
    %5386 = vmatpush1.bf16.msra.mxu0 0
    %5387 = vmatprep.subr.bf16.mxu0 0
    %5388 = vmatpush1.bf16.msra.mxu0 0
    %5389 = vmatprep.subr.bf16.mxu0 0
    %5390 = vmatpush1.bf16.msra.mxu0 0
    %5391 = vmatprep.subr.bf16.mxu0 0
    %5392 = vmatpush1.bf16.msra.mxu0 0
    %5393 = vmatprep.subr.bf16.mxu0 0
    %5394 = vmatpush1.bf16.msra.mxu0 0
    %5395 = vmatprep.subr.bf16.mxu0 0
    %5396 = vmatpush1.bf16.msra.mxu0 0
    %5397 = vmatprep.subr.bf16.mxu0 0
    %5398 = vmatpush1.bf16.msra.mxu0 0
    %5399 = vmatprep.subr.bf16.mxu0 0
    %5400 = vmatpush1.bf16.msra.mxu0 0
    %5401 = vmatprep.subr.bf16.mxu0 0
    %5402 = vmatpush1.bf16.msra.mxu0 0
    %5403 = vmatprep.subr.bf16.mxu0 0
    %5404 = vmatpush1.bf16.msra.mxu0 0
    %5405 = vmatprep.subr.bf16.mxu0 0
    %5406 = vmatpush1.bf16.msra.mxu0 0
    %5407 = vmatprep.subr.bf16.mxu0 0
    %5408 = vmatpush1.bf16.msra.mxu0 0
    %5409 = vmatprep.subr.bf16.mxu0 0
    %5410 = vmatpush1.bf16.msra.mxu0 0
    %5411 = vmatprep.mubr.bf16.mxu0 0
    %5412 = vmatmul.mubr.bf16.gmra.mrb[0].mxu0 %v5374
    %v5413 = vpop.f32.mrb[0].mxu0
    %v5414 = vadd.f32 0.0, %v5413
    %v5415 = vpop.f32.mrb[0].mxu0
    %v5416 = vpop.f32.mrb[0].mxu0
    %v5417 = vpop.f32.mrb[0].mxu0
    %5418 = vdwg.mxu0
    %5419 = vrot.lane.b32.xlu0 %v4714, 32
    %v5420 = vpop.permute.xlu0 %5419
    %5421 = vrot.lane.b32.xlu0 %v4731, 32
    %v5422 = vpop.permute.xlu0 %5421
    %v5425 = vpack.c.bf16 %v5420, %v5420
    %v5426 = vpack.c.bf16 %v5422, %v5422
    %5427 = vrot.lane.b32.xlu0 %v4736, 32
    %v5428 = vpop.permute.xlu0 %5427
    %5429 = vrot.lane.b32.xlu0 %v4737, 32
    %v5430 = vpop.permute.xlu0 %5429
    %v5433 = vpack.c.bf16 %v5428, %v5428
    %v5434 = vpack.c.bf16 %v5430, %v5430
    %5435 = vrot.lane.b32.xlu0 %v4696, 32
    %v5436 = vpop.permute.xlu0 %5435
    %v5438 = vsel %vm602, %v5436, 0
    %v5441 = vsel %vm602, %v5425, 0
    %5443 = vmatprep.subr.bf16.mxu0 0
    %5444 = vmatpush1.bf16.xpose.msra.mxu0 %v5441
    %5445 = vmatprep.subr.bf16.mxu0 0
    %5446 = vmatpush1.bf16.xpose.msra.mxu0 0
    %5447 = vmatprep.subr.bf16.mxu0 0
    %5448 = vmatpush1.bf16.xpose.msra.mxu0 0
    %5449 = vmatprep.subr.bf16.mxu0 0
    %5450 = vmatpush1.bf16.xpose.msra.mxu0 0
    %5451 = vmatprep.subr.bf16.mxu0 0
    %5452 = vmatpush1.bf16.xpose.msra.mxu0 0
    %5453 = vmatprep.subr.bf16.mxu0 0
    %5454 = vmatpush1.bf16.xpose.msra.mxu0 0
    %5455 = vmatprep.subr.bf16.mxu0 0
    %5456 = vmatpush1.bf16.xpose.msra.mxu0 0
    %5457 = vmatprep.subr.bf16.mxu0 0
    %5458 = vmatpush1.bf16.xpose.msra.mxu0 0
    %5459 = vmatprep.subr.bf16.mxu0 0
    %5460 = vmatpush1.bf16.xpose.msra.mxu0 0
    %5461 = vmatprep.subr.bf16.mxu0 0
    %5462 = vmatpush1.bf16.xpose.msra.mxu0 0
    %5463 = vmatprep.subr.bf16.mxu0 0
    %5464 = vmatpush1.bf16.xpose.msra.mxu0 0
    %5465 = vmatprep.subr.bf16.mxu0 0
    %5466 = vmatpush1.bf16.xpose.msra.mxu0 0
    %5467 = vmatprep.subr.bf16.mxu0 0
    %5468 = vmatpush1.bf16.xpose.msra.mxu0 0
    %5469 = vmatprep.subr.bf16.mxu0 0
    %5470 = vmatpush1.bf16.xpose.msra.mxu0 0
    %5471 = vmatprep.subr.bf16.mxu0 0
    %5472 = vmatpush1.bf16.xpose.msra.mxu0 0
    %5473 = vmatprep.subr.bf16.mxu0 0
    %5474 = vmatpush1.bf16.xpose.msra.mxu0 0
    %5475 = vmatprep.mubr.bf16.mxu0 0
    %5476 = vmatmul.mubr.bf16.gmra.mrb[0].mxu0 %v5438
    %v5477 = vpop.f32.mrb[0].mxu0
    %v5478 = vadd.f32 0.0, %v5477
    %v5479 = vpop.f32.mrb[0].mxu0
    %v5480 = vpop.f32.mrb[0].mxu0
    %v5481 = vpop.f32.mrb[0].mxu0
    %5482 = vdwg.mxu0
    %5483 = vrot.lane.b32.xlu0 %v4697, 32
    %v5484 = vpop.permute.xlu0 %5483
    %v5486 = vsel %vm602, %v5484, 0
    %v5489 = vsel %vm602, %v5426, 0
    %5491 = vmatprep.subr.bf16.mxu0 0
    %5492 = vmatpush1.bf16.xpose.msra.mxu0 %v5489
    %5493 = vmatprep.subr.bf16.mxu0 0
    %5494 = vmatpush1.bf16.xpose.msra.mxu0 0
    %5495 = vmatprep.subr.bf16.mxu0 0
    %5496 = vmatpush1.bf16.xpose.msra.mxu0 0
    %5497 = vmatprep.subr.bf16.mxu0 0
    %5498 = vmatpush1.bf16.xpose.msra.mxu0 0
    %5499 = vmatprep.subr.bf16.mxu0 0
    %5500 = vmatpush1.bf16.xpose.msra.mxu0 0
    %5501 = vmatprep.subr.bf16.mxu0 0
    %5502 = vmatpush1.bf16.xpose.msra.mxu0 0
    %5503 = vmatprep.subr.bf16.mxu0 0
    %5504 = vmatpush1.bf16.xpose.msra.mxu0 0
    %5505 = vmatprep.subr.bf16.mxu0 0
    %5506 = vmatpush1.bf16.xpose.msra.mxu0 0
    %5507 = vmatprep.subr.bf16.mxu0 0
    %5508 = vmatpush1.bf16.xpose.msra.mxu0 0
    %5509 = vmatprep.subr.bf16.mxu0 0
    %5510 = vmatpush1.bf16.xpose.msra.mxu0 0
    %5511 = vmatprep.subr.bf16.mxu0 0
    %5512 = vmatpush1.bf16.xpose.msra.mxu0 0
    %5513 = vmatprep.subr.bf16.mxu0 0
    %5514 = vmatpush1.bf16.xpose.msra.mxu0 0
    %5515 = vmatprep.subr.bf16.mxu0 0
    %5516 = vmatpush1.bf16.xpose.msra.mxu0 0
    %5517 = vmatprep.subr.bf16.mxu0 0
    %5518 = vmatpush1.bf16.xpose.msra.mxu0 0
    %5519 = vmatprep.subr.bf16.mxu0 0
    %5520 = vmatpush1.bf16.xpose.msra.mxu0 0
    %5521 = vmatprep.subr.bf16.mxu0 0
    %5522 = vmatpush1.bf16.xpose.msra.mxu0 0
    %5523 = vmatprep.mubr.bf16.mxu0 0
    %5524 = vmatmul.mubr.bf16.gmra.mrb[0].mxu0 %v5486
    %v5525 = vpop.f32.mrb[0].mxu0
    %v5526 = vadd.f32 0.0, %v5525
    %v5527 = vpop.f32.mrb[0].mxu0
    %v5528 = vpop.f32.mrb[0].mxu0
    %v5529 = vpop.f32.mrb[0].mxu0
    %5530 = vdwg.mxu0
    %v5531 = vmul.f32 %v5478, 0.17677669
    %v5532 = vmul.f32 %v5526, 0.17677669
    %v5533 = vsel %vm4836, %v5531, -inf
    %5534 = vmax.xlane.f32.xlu0 %v5533
    %v5535 = vpop.xlane.xlu0 %5534
    %v5536 = vsel %vm4836, %v5532, -inf
    %5537 = vmax.xlane.f32.xlu0 %v5536
    %v5538 = vpop.xlane.xlu0 %5537
    %v5539 = vsub.f32 %v5531, %v5535
    %v5540 = vsub.f32 %v5532, %v5538
    %v5541 = vmul.f32 %v5539, 1.442695
    %v5542 = vpow.pop %v5541
    %v5543 = vmul.f32 %v5540, 1.442695
    %v5544 = vpow.pop %v5543
    %v5545 = vsel %vm4836, %v5542, 0.0
    %5546 = vadd.xlane.f32.xlu0 %v5545
    %v5547 = vpop.xlane.xlu0 %5546
    %v5548 = vsel %vm4836, %v5544, 0.0
    %5549 = vadd.xlane.f32.xlu0 %v5548
    %v5550 = vpop.xlane.xlu0 %5549
    %v5551 = vrcp.pop %v5547
    %v5552 = vrcp.pop %v5550
    %v5553 = vmul.f32 %v5542, %v5551
    %v5554 = vmul.f32 %v5544, %v5552
    %v5555 = vpack.c.bf16 %v5553, %v5553
    %v5556 = vpack.c.bf16 %v5554, %v5554
    %v5558 = vsel %vm4861, %v5555, 0
    %v5561 = vand.u32 %v5433, %v4867
    %5563 = vmatprep.subr.bf16.mxu0 0
    %5564 = vmatpush1.bf16.msra.mxu0 %v5561
    %5565 = vmatprep.subr.bf16.mxu0 0
    %5566 = vmatpush1.bf16.msra.mxu0 0
    %5567 = vmatprep.subr.bf16.mxu0 0
    %5568 = vmatpush1.bf16.msra.mxu0 0
    %5569 = vmatprep.subr.bf16.mxu0 0
    %5570 = vmatpush1.bf16.msra.mxu0 0
    %5571 = vmatprep.subr.bf16.mxu0 0
    %5572 = vmatpush1.bf16.msra.mxu0 0
    %5573 = vmatprep.subr.bf16.mxu0 0
    %5574 = vmatpush1.bf16.msra.mxu0 0
    %5575 = vmatprep.subr.bf16.mxu0 0
    %5576 = vmatpush1.bf16.msra.mxu0 0
    %5577 = vmatprep.subr.bf16.mxu0 0
    %5578 = vmatpush1.bf16.msra.mxu0 0
    %5579 = vmatprep.subr.bf16.mxu0 0
    %5580 = vmatpush1.bf16.msra.mxu0 0
    %5581 = vmatprep.subr.bf16.mxu0 0
    %5582 = vmatpush1.bf16.msra.mxu0 0
    %5583 = vmatprep.subr.bf16.mxu0 0
    %5584 = vmatpush1.bf16.msra.mxu0 0
    %5585 = vmatprep.subr.bf16.mxu0 0
    %5586 = vmatpush1.bf16.msra.mxu0 0
    %5587 = vmatprep.subr.bf16.mxu0 0
    %5588 = vmatpush1.bf16.msra.mxu0 0
    %5589 = vmatprep.subr.bf16.mxu0 0
    %5590 = vmatpush1.bf16.msra.mxu0 0
    %5591 = vmatprep.subr.bf16.mxu0 0
    %5592 = vmatpush1.bf16.msra.mxu0 0
    %5593 = vmatprep.subr.bf16.mxu0 0
    %5594 = vmatpush1.bf16.msra.mxu0 0
    %5595 = vmatprep.mubr.bf16.mxu0 0
    %5596 = vmatmul.mubr.bf16.gmra.mrb[0].mxu0 %v5558
    %v5597 = vpop.f32.mrb[0].mxu0
    %v5598 = vadd.f32 0.0, %v5597
    %v5599 = vpop.f32.mrb[0].mxu0
    %v5600 = vpop.f32.mrb[0].mxu0
    %v5601 = vpop.f32.mrb[0].mxu0
    %5602 = vdwg.mxu0
    %v5604 = vsel %vm4861, %v5556, 0
    %v5607 = vand.u32 %v5434, %v4867
    %5609 = vmatprep.subr.bf16.mxu0 0
    %5610 = vmatpush1.bf16.msra.mxu0 %v5607
    %5611 = vmatprep.subr.bf16.mxu0 0
    %5612 = vmatpush1.bf16.msra.mxu0 0
    %5613 = vmatprep.subr.bf16.mxu0 0
    %5614 = vmatpush1.bf16.msra.mxu0 0
    %5615 = vmatprep.subr.bf16.mxu0 0
    %5616 = vmatpush1.bf16.msra.mxu0 0
    %5617 = vmatprep.subr.bf16.mxu0 0
    %5618 = vmatpush1.bf16.msra.mxu0 0
    %5619 = vmatprep.subr.bf16.mxu0 0
    %5620 = vmatpush1.bf16.msra.mxu0 0
    %5621 = vmatprep.subr.bf16.mxu0 0
    %5622 = vmatpush1.bf16.msra.mxu0 0
    %5623 = vmatprep.subr.bf16.mxu0 0
    %5624 = vmatpush1.bf16.msra.mxu0 0
    %5625 = vmatprep.subr.bf16.mxu0 0
    %5626 = vmatpush1.bf16.msra.mxu0 0
    %5627 = vmatprep.subr.bf16.mxu0 0
    %5628 = vmatpush1.bf16.msra.mxu0 0
    %5629 = vmatprep.subr.bf16.mxu0 0
    %5630 = vmatpush1.bf16.msra.mxu0 0
    %5631 = vmatprep.subr.bf16.mxu0 0
    %5632 = vmatpush1.bf16.msra.mxu0 0
    %5633 = vmatprep.subr.bf16.mxu0 0
    %5634 = vmatpush1.bf16.msra.mxu0 0
    %5635 = vmatprep.subr.bf16.mxu0 0
    %5636 = vmatpush1.bf16.msra.mxu0 0
    %5637 = vmatprep.subr.bf16.mxu0 0
    %5638 = vmatpush1.bf16.msra.mxu0 0
    %5639 = vmatprep.subr.bf16.mxu0 0
    %5640 = vmatpush1.bf16.msra.mxu0 0
    %5641 = vmatprep.mubr.bf16.mxu0 0
    %5642 = vmatmul.mubr.bf16.gmra.mrb[0].mxu0 %v5604
    %v5643 = vpop.f32.mrb[0].mxu0
    %v5644 = vadd.f32 0.0, %v5643
    %v5645 = vpop.f32.mrb[0].mxu0
    %v5646 = vpop.f32.mrb[0].mxu0
    %v5647 = vpop.f32.mrb[0].mxu0
    %5648 = vdwg.mxu0
    %5651 = vrot.lane.b32.xlu0 %v5138, 32
    %v5652 = vpop.permute.xlu0 %5651
    %5653 = vrot.lane.b32.xlu0 %v5184, 32
    %v5654 = vpop.permute.xlu0 %5653
    %5659 = vrot.lane.b32.xlu0 %v5368, 64
    %v5660 = vpop.permute.xlu0 %5659
    %5661 = vrot.lane.b32.xlu0 %v5414, 64
    %v5662 = vpop.permute.xlu0 %5661
    %5667 = vrot.lane.b32.xlu0 %v5598, 96
    %v5668 = vpop.permute.xlu0 %5667
    %5669 = vrot.lane.b32.xlu0 %v5644, 96
    %v5670 = vpop.permute.xlu0 %5669
    %v5673 = vsel %vm602, %v4906, %v5652
    %v5674 = vsel %vm602, %v4952, %v5654
    %v5675 = vsel %vm1534, %v5673, %v5660
    %v5676 = vsel %vm1534, %v5674, %v5662
    %v5677 = vsel %vm1537, %v5675, %v5668
    %v5678 = vsel %vm1537, %v5676, %v5670
    %v5681 = vcombine.high %v5677, %v5677
    %v5683 = vunpack.c.l.s4 1966171168
    %v5684 = vunpack.c.0.s8 %v5683
    %v5685 = vlaneseq
    %v5686 = vshrl.u32 %v5685, 7
    %v5687 = vsub.s32 %v5684, %v5686
    %v5688 = vrot.slane %v5677, %v5687
    %v5690 = vunpack.c.l.s4 1966171168
    %v5691 = vunpack.c.0.s8 %v5690
    %v5692 = vlaneseq
    %v5693 = vshrl.u32 %v5692, 7
    %v5694 = vsub.s32 %v5691, %v5693
    %v5695 = vrot.slane %v5681, %v5694
    %v5696 = vcombine.high %v5688, %v5688
    %v5698 = vunpack.c.l.s4 1966171168
    %v5699 = vunpack.c.0.s8 %v5698
    %v5700 = vlaneseq
    %v5701 = vshrl.u32 %v5700, 7
    %v5702 = vsub.s32 %v5699, %v5701
    %v5703 = vrot.slane %v5688, %v5702
    %v5705 = vunpack.c.l.s4 1966171168
    %v5706 = vunpack.c.0.s8 %v5705
    %v5707 = vlaneseq
    %v5708 = vshrl.u32 %v5707, 7
    %v5709 = vsub.s32 %v5706, %v5708
    %v5710 = vrot.slane %v5695, %v5709
    %v5712 = vunpack.c.l.s4 1966171168
    %v5713 = vunpack.c.0.s8 %v5712
    %v5714 = vlaneseq
    %v5715 = vshrl.u32 %v5714, 7
    %v5716 = vsub.s32 %v5713, %v5715
    %v5717 = vrot.slane %v5696, %v5716
    %v5718 = vcombine.high %v5703, %v5703
    %v5719 = vcombine.high %v5717, %v5717
    %v5720 = vcombine.high %v5678, %v5678
    %v5722 = vunpack.c.l.s4 1966171168
    %v5723 = vunpack.c.0.s8 %v5722
    %v5724 = vlaneseq
    %v5725 = vshrl.u32 %v5724, 7
    %v5726 = vsub.s32 %v5723, %v5725
    %v5727 = vrot.slane %v5678, %v5726
    %v5729 = vunpack.c.l.s4 1966171168
    %v5730 = vunpack.c.0.s8 %v5729
    %v5731 = vlaneseq
    %v5732 = vshrl.u32 %v5731, 7
    %v5733 = vsub.s32 %v5730, %v5732
    %v5734 = vrot.slane %v5720, %v5733
    %v5735 = vcombine.high %v5727, %v5727
    %v5737 = vunpack.c.l.s4 1966171168
    %v5738 = vunpack.c.0.s8 %v5737
    %v5739 = vlaneseq
    %v5740 = vshrl.u32 %v5739, 7
    %v5741 = vsub.s32 %v5738, %v5740
    %v5742 = vrot.slane %v5727, %v5741
    %v5744 = vunpack.c.l.s4 1966171168
    %v5745 = vunpack.c.0.s8 %v5744
    %v5746 = vlaneseq
    %v5747 = vshrl.u32 %v5746, 7
    %v5748 = vsub.s32 %v5745, %v5747
    %v5749 = vrot.slane %v5734, %v5748
    %v5751 = vunpack.c.l.s4 1966171168
    %v5752 = vunpack.c.0.s8 %v5751
    %v5753 = vlaneseq
    %v5754 = vshrl.u32 %v5753, 7
    %v5755 = vsub.s32 %v5752, %v5754
    %v5756 = vrot.slane %v5735, %v5755
    %v5757 = vcombine.high %v5742, %v5742
    %v5758 = vcombine.high %v5756, %v5756
    %v5759 = vcombine.low %v5703, %v5717
    %v5760 = vcombine.low %v5718, %v5719
    %v5761 = vcombine.low %v5710, %v5742
    %v5762 = vcombine.low %v5756, %v5757
    %v5764 = vunpack.c.l.s4 1966171168
    %v5765 = vunpack.c.0.s8 %v5764
    %v5766 = vlaneseq
    %v5767 = vshrl.u32 %v5766, 7
    %v5768 = vsub.s32 %v5765, %v5767
    %v5769 = vrot.slane %v5759, %v5768
    %v5771 = vunpack.c.l.s4 1966171168
    %v5772 = vunpack.c.0.s8 %v5771
    %v5773 = vlaneseq
    %v5774 = vshrl.u32 %v5773, 7
    %v5775 = vsub.s32 %v5772, %v5774
    %v5776 = vrot.slane %v5760, %v5775
    %v5778 = vunpack.c.l.s4 1966171168
    %v5779 = vunpack.c.0.s8 %v5778
    %v5780 = vlaneseq
    %v5781 = vshrl.u32 %v5780, 7
    %v5782 = vsub.s32 %v5779, %v5781
    %v5783 = vrot.slane %v5761, %v5782
    %v5785 = vunpack.c.l.s4 1966171168
    %v5786 = vunpack.c.0.s8 %v5785
    %v5787 = vlaneseq
    %v5788 = vshrl.u32 %v5787, 7
    %v5789 = vsub.s32 %v5786, %v5788
    %v5790 = vrot.slane %v5762, %v5789
    %v5791 = vcombine.low %v5769, %v5776
    %v5792 = vcombine.low %v5783, %v5790
    %v5794 = vunpack.c.l.s4 1966171168
    %v5795 = vunpack.c.0.s8 %v5794
    %v5796 = vlaneseq
    %v5797 = vshrl.u32 %v5796, 7
    %v5798 = vsub.s32 %v5795, %v5797
    %v5799 = vrot.slane %v5791, %v5798
    %v5801 = vunpack.c.l.s4 1966171168
    %v5802 = vunpack.c.0.s8 %v5801
    %v5803 = vlaneseq
    %v5804 = vshrl.u32 %v5803, 7
    %v5805 = vsub.s32 %v5802, %v5804
    %v5806 = vrot.slane %v5792, %v5805
    %v5807 = vcombine.low %v5799, %v5806
    %v5808 = vcombine.low %v5758, %v5749
    %v5810 = vunpack.c.l.s4 1966171168
    %v5811 = vunpack.c.0.s8 %v5810
    %v5812 = vlaneseq
    %v5813 = vshrl.u32 %v5812, 7
    %v5814 = vsub.s32 %v5811, %v5813
    %v5815 = vrot.slane %v5808, %v5814
    %v5817 = vunpack.c.l.s4 1966171168
    %v5818 = vunpack.c.0.s8 %v5817
    %v5819 = vlaneseq
    %v5820 = vshrl.u32 %v5819, 7
    %v5821 = vsub.s32 %v5818, %v5820
    %v5822 = vrot.slane %v5815, %v5821
    %v5825 = vpack.c.bf16 %v5822, %v5807
    %v5827 = vlaneseq
    %v5828 = vshrl.u32 %v5827, 7
    %v5829 = vsub.s32 0, %v5828
    %v5830 = vrot.slane %v4057, %v5829
    %v5848 = vunpack.c.l.b16 %v4041
    %v5849 = vunpack.c.l.b16 %v4042
    %v5850 = vunpack.c.l.b16 %v4043
    %v5851 = vunpack.c.l.b16 %v4044
    %v5852 = vunpack.c.l.b16 %v4045
    %v5853 = vunpack.c.l.b16 %v4046
    %v5854 = vunpack.c.l.b16 %v4047
    %v5855 = vunpack.c.l.b16 %v4048
    %v5856 = vunpack.c.l.b16 %v4049
    %v5857 = vunpack.c.l.b16 %v4050
    %v5858 = vunpack.c.l.b16 %v4051
    %v5859 = vunpack.c.l.b16 %v4052
    %v5860 = vunpack.c.l.b16 %v4053
    %v5861 = vunpack.c.l.b16 %v4054
    %v5862 = vunpack.c.l.b16 %v4055
    %v5863 = vunpack.c.l.b16 %v4056
    %v5864 = vpack.c.b16 %v5849, %v5848
    %v5865 = vpack.c.b16 %v5851, %v5850
    %v5866 = vpack.c.b16 %v5853, %v5852
    %v5867 = vpack.c.b16 %v5855, %v5854
    %v5868 = vpack.c.b16 %v5857, %v5856
    %v5869 = vpack.c.b16 %v5859, %v5858
    %v5870 = vpack.c.b16 %v5861, %v5860
    %v5871 = vpack.c.b16 %v5863, %v5862
    %5880 = vmatprep.subr.bf16.mxu0 0
    %5881 = vmatpush1.bf16.msra.mxu0 %v5864
    %5882 = vmatprep.subr.bf16.mxu0 0
    %5883 = vmatpush1.bf16.msra.mxu0 %v5865
    %5884 = vmatprep.subr.bf16.mxu0 0
    %5885 = vmatpush1.bf16.msra.mxu0 %v5866
    %5886 = vmatprep.subr.bf16.mxu0 0
    %5887 = vmatpush1.bf16.msra.mxu0 %v5867
    %5888 = vmatprep.subr.bf16.mxu0 0
    %5889 = vmatpush1.bf16.msra.mxu0 %v5868
    %5890 = vmatprep.subr.bf16.mxu0 0
    %5891 = vmatpush1.bf16.msra.mxu0 %v5869
    %5892 = vmatprep.subr.bf16.mxu0 0
    %5893 = vmatpush1.bf16.msra.mxu0 %v5870
    %5894 = vmatprep.subr.bf16.mxu0 0
    %5895 = vmatpush1.bf16.msra.mxu0 %v5871
    %5896 = vmatprep.subr.bf16.mxu0 0
    %5897 = vmatpush1.bf16.msra.mxu0 0
    %5898 = vmatprep.subr.bf16.mxu0 0
    %5899 = vmatpush1.bf16.msra.mxu0 0
    %5900 = vmatprep.subr.bf16.mxu0 0
    %5901 = vmatpush1.bf16.msra.mxu0 0
    %5902 = vmatprep.subr.bf16.mxu0 0
    %5903 = vmatpush1.bf16.msra.mxu0 0
    %5904 = vmatprep.subr.bf16.mxu0 0
    %5905 = vmatpush1.bf16.msra.mxu0 0
    %5906 = vmatprep.subr.bf16.mxu0 0
    %5907 = vmatpush1.bf16.msra.mxu0 0
    %5908 = vmatprep.subr.bf16.mxu0 0
    %5909 = vmatpush1.bf16.msra.mxu0 0
    %5910 = vmatprep.subr.bf16.mxu0 0
    %5911 = vmatpush1.bf16.msra.mxu0 0
    %5912 = vmatprep.mubr.bf16.mxu0 0
    %5913 = vmatmul.mubr.bf16.gmra.mrb[0].mxu0 %v5825
    %v5914 = vpop.f32.mrb[0].mxu0
    %v5915 = vadd.f32 %v5830, %v5914
    %v5916 = vpop.f32.mrb[0].mxu0
    %v5917 = vpop.f32.mrb[0].mxu0
    %v5918 = vadd.f32 %v5830, %v5917
    %v5919 = vpop.f32.mrb[0].mxu0
    %5920 = vdwg.mxu0
    %v5923 = vcombine.high %v5915, %v5915
    %v5925 = vunpack.c.l.s4 1966171168
    %v5926 = vunpack.c.0.s8 %v5925
    %v5927 = vlaneseq
    %v5928 = vshrl.u32 %v5927, 7
    %v5929 = vsub.s32 %v5926, %v5928
    %v5930 = vrot.slane %v5915, %v5929
    %v5932 = vunpack.c.l.s4 1966171168
    %v5933 = vunpack.c.0.s8 %v5932
    %v5934 = vlaneseq
    %v5935 = vshrl.u32 %v5934, 7
    %v5936 = vsub.s32 %v5933, %v5935
    %v5937 = vrot.slane %v5923, %v5936
    %v5938 = vcombine.high %v5930, %v5930
    %v5939 = vcombine.high %v5937, %v5937
    %v5941 = vunpack.c.l.s4 1966171168
    %v5942 = vunpack.c.0.s8 %v5941
    %v5943 = vlaneseq
    %v5944 = vshrl.u32 %v5943, 7
    %v5945 = vsub.s32 %v5942, %v5944
    %v5946 = vrot.slane %v5930, %v5945
    %v5948 = vunpack.c.l.s4 1966171168
    %v5949 = vunpack.c.0.s8 %v5948
    %v5950 = vlaneseq
    %v5951 = vshrl.u32 %v5950, 7
    %v5952 = vsub.s32 %v5949, %v5951
    %v5953 = vrot.slane %v5937, %v5952
    %v5955 = vunpack.c.l.s4 1966171168
    %v5956 = vunpack.c.0.s8 %v5955
    %v5957 = vlaneseq
    %v5958 = vshrl.u32 %v5957, 7
    %v5959 = vsub.s32 %v5956, %v5958
    %v5960 = vrot.slane %v5938, %v5959
    %v5962 = vunpack.c.l.s4 1966171168
    %v5963 = vunpack.c.0.s8 %v5962
    %v5964 = vlaneseq
    %v5965 = vshrl.u32 %v5964, 7
    %v5966 = vsub.s32 %v5963, %v5965
    %v5967 = vrot.slane %v5939, %v5966
    %v5968 = vcombine.high %v5946, %v5946
    %v5969 = vcombine.high %v5953, %v5953
    %v5970 = vcombine.high %v5960, %v5960
    %v5971 = vcombine.high %v5967, %v5967
    %v5973 = vunpack.c.l.s4 1966171168
    %v5974 = vunpack.c.0.s8 %v5973
    %v5975 = vlaneseq
    %v5976 = vshrl.u32 %v5975, 7
    %v5977 = vsub.s32 %v5974, %v5976
    %v5978 = vrot.slane %v5918, %v5977
    %v5979 = vcombine.high %v5978, %v5978
    %v5981 = vunpack.c.l.s4 1966171168
    %v5982 = vunpack.c.0.s8 %v5981
    %v5983 = vlaneseq
    %v5984 = vshrl.u32 %v5983, 7
    %v5985 = vsub.s32 %v5982, %v5984
    %v5986 = vrot.slane %v5978, %v5985
    %v5988 = vunpack.c.l.s4 1966171168
    %v5989 = vunpack.c.0.s8 %v5988
    %v5990 = vlaneseq
    %v5991 = vshrl.u32 %v5990, 7
    %v5992 = vsub.s32 %v5989, %v5991
    %v5993 = vrot.slane %v5979, %v5992
    %v5994 = vcombine.low %v5946, %v5960
    %v5995 = vcombine.low %v5968, %v5970
    %v5997 = vunpack.c.l.s4 1966171168
    %v5998 = vunpack.c.0.s8 %v5997
    %v5999 = vlaneseq
    %v6000 = vshrl.u32 %v5999, 7
    %v6001 = vsub.s32 %v5998, %v6000
    %v6002 = vrot.slane %v5994, %v6001
    %v6004 = vunpack.c.l.s4 1966171168
    %v6005 = vunpack.c.0.s8 %v6004
    %v6006 = vlaneseq
    %v6007 = vshrl.u32 %v6006, 7
    %v6008 = vsub.s32 %v6005, %v6007
    %v6009 = vrot.slane %v5995, %v6008
    %v6011 = vunpack.c.l.s4 1966171168
    %v6012 = vunpack.c.0.s8 %v6011
    %v6013 = vlaneseq
    %v6014 = vshrl.u32 %v6013, 7
    %v6015 = vsub.s32 %v6012, %v6014
    %v6016 = vrot.slane %v5953, %v6015
    %v6017 = vcombine.low %v6002, %v6009
    %v6019 = vunpack.c.l.s4 1966171168
    %v6020 = vunpack.c.0.s8 %v6019
    %v6021 = vlaneseq
    %v6022 = vshrl.u32 %v6021, 7
    %v6023 = vsub.s32 %v6020, %v6022
    %v6024 = vrot.slane %v6017, %v6023
    %v6026 = vunpack.c.l.s4 1966171168
    %v6027 = vunpack.c.0.s8 %v6026
    %v6028 = vlaneseq
    %v6029 = vshrl.u32 %v6028, 7
    %v6030 = vsub.s32 %v6027, %v6029
    %v6031 = vrot.slane %v6016, %v6030
    %v6032 = vcombine.low %v6024, %v6031
    %v6033 = vcombine.low %v5967, %v5969
    %v6034 = vcombine.low %v5971, %v5986
    %v6036 = vunpack.c.l.s4 1966171168
    %v6037 = vunpack.c.0.s8 %v6036
    %v6038 = vlaneseq
    %v6039 = vshrl.u32 %v6038, 7
    %v6040 = vsub.s32 %v6037, %v6039
    %v6041 = vrot.slane %v6033, %v6040
    %v6043 = vunpack.c.l.s4 1966171168
    %v6044 = vunpack.c.0.s8 %v6043
    %v6045 = vlaneseq
    %v6046 = vshrl.u32 %v6045, 7
    %v6047 = vsub.s32 %v6044, %v6046
    %v6048 = vrot.slane %v6034, %v6047
    %v6050 = vunpack.c.l.s4 1966171168
    %v6051 = vunpack.c.0.s8 %v6050
    %v6052 = vlaneseq
    %v6053 = vshrl.u32 %v6052, 7
    %v6054 = vsub.s32 %v6051, %v6053
    %v6055 = vrot.slane %v5993, %v6054
    %v6056 = vcombine.low %v6041, %v6048
    %v6058 = vunpack.c.l.s4 1966171168
    %v6059 = vunpack.c.0.s8 %v6058
    %v6060 = vlaneseq
    %v6061 = vshrl.u32 %v6060, 7
    %v6062 = vsub.s32 %v6059, %v6061
    %v6063 = vrot.slane %v6056, %v6062
    %v6065 = vunpack.c.l.s4 1966171168
    %v6066 = vunpack.c.0.s8 %v6065
    %v6067 = vlaneseq
    %v6068 = vshrl.u32 %v6067, 7
    %v6069 = vsub.s32 %v6066, %v6068
    %v6070 = vrot.slane %v6055, %v6069
    %v6071 = vcombine.low %v6063, %v6070
    %v6074 = vadd.f32 %v4004, %v6032
    %v6075 = vadd.f32 %v4005, %v6071
    %v6076 = vsel %vm4094, %v6074, 0.0
    %6077 = vadd.xlane.f32.xlu0 %v6076
    %v6078 = vpop.xlane.xlu0 %6077
    %v6079 = vsel %vm4094, %v6075, 0.0
    %6080 = vadd.xlane.f32.xlu0 %v6079
    %v6081 = vpop.xlane.xlu0 %6080
    %v6082 = vmul.f32 %v6078, %v264
    %v6083 = vmul.f32 %v6081, %v264
    %v6084 = vsub.f32 %v6074, %v6082
    %v6085 = vsub.f32 %v6075, %v6083
    %v6086 = vmul.f32 %v6084, %v6084
    %v6087 = vmul.f32 %v6085, %v6085
    %v6088 = vsel %vm4094, %v6086, 0.0
    %6089 = vadd.xlane.f32.xlu0 %v6088
    %v6090 = vpop.xlane.xlu0 %6089
    %v6091 = vsel %vm4094, %v6087, 0.0
    %6092 = vadd.xlane.f32.xlu0 %v6091
    %v6093 = vpop.xlane.xlu0 %6092
    %v6094 = vmul.f32 %v6090, %v264
    %v6095 = vmul.f32 %v6093, %v264
    %v6096 = vadd.f32 %v6094, 1e-05
    %v6097 = vadd.f32 %v6095, 1e-05
    %v6098 = vrsqrt.pop %v6096
    %v6099 = vrsqrt.pop %v6097
    %v6100 = vmul.f32 %v6084, %v6098
    %v6101 = vmul.f32 %v6085, %v6099
    %v6103 = vlaneseq
    %v6104 = vshrl.u32 %v6103, 7
    %v6105 = vsub.s32 0, %v6104
    %v6106 = vrot.slane %v4058, %v6105
    %v6108 = vmul.f32 %v6100, %v6106
    %v6109 = vmul.f32 %v6101, %v6106
    %v6111 = vlaneseq
    %v6112 = vshrl.u32 %v6111, 7
    %v6113 = vsub.s32 0, %v6112
    %v6114 = vrot.slane %v4059, %v6113
    %v6116 = vadd.f32 %v6108, %v6114
    %v6117 = vadd.f32 %v6109, %v6114
    %v6120 = vcombine.high %v6116, %v6116
    %v6122 = vunpack.c.l.s4 1966171168
    %v6123 = vunpack.c.0.s8 %v6122
    %v6124 = vlaneseq
    %v6125 = vshrl.u32 %v6124, 7
    %v6126 = vsub.s32 %v6123, %v6125
    %v6127 = vrot.slane %v6116, %v6126
    %v6129 = vunpack.c.l.s4 1966171168
    %v6130 = vunpack.c.0.s8 %v6129
    %v6131 = vlaneseq
    %v6132 = vshrl.u32 %v6131, 7
    %v6133 = vsub.s32 %v6130, %v6132
    %v6134 = vrot.slane %v6120, %v6133
    %v6135 = vcombine.high %v6127, %v6127
    %v6137 = vunpack.c.l.s4 1966171168
    %v6138 = vunpack.c.0.s8 %v6137
    %v6139 = vlaneseq
    %v6140 = vshrl.u32 %v6139, 7
    %v6141 = vsub.s32 %v6138, %v6140
    %v6142 = vrot.slane %v6127, %v6141
    %v6144 = vunpack.c.l.s4 1966171168
    %v6145 = vunpack.c.0.s8 %v6144
    %v6146 = vlaneseq
    %v6147 = vshrl.u32 %v6146, 7
    %v6148 = vsub.s32 %v6145, %v6147
    %v6149 = vrot.slane %v6134, %v6148
    %v6151 = vunpack.c.l.s4 1966171168
    %v6152 = vunpack.c.0.s8 %v6151
    %v6153 = vlaneseq
    %v6154 = vshrl.u32 %v6153, 7
    %v6155 = vsub.s32 %v6152, %v6154
    %v6156 = vrot.slane %v6135, %v6155
    %v6157 = vcombine.high %v6142, %v6142
    %v6158 = vcombine.high %v6156, %v6156
    %v6159 = vcombine.high %v6117, %v6117
    %v6161 = vunpack.c.l.s4 1966171168
    %v6162 = vunpack.c.0.s8 %v6161
    %v6163 = vlaneseq
    %v6164 = vshrl.u32 %v6163, 7
    %v6165 = vsub.s32 %v6162, %v6164
    %v6166 = vrot.slane %v6117, %v6165
    %v6168 = vunpack.c.l.s4 1966171168
    %v6169 = vunpack.c.0.s8 %v6168
    %v6170 = vlaneseq
    %v6171 = vshrl.u32 %v6170, 7
    %v6172 = vsub.s32 %v6169, %v6171
    %v6173 = vrot.slane %v6159, %v6172
    %v6174 = vcombine.high %v6166, %v6166
    %v6176 = vunpack.c.l.s4 1966171168
    %v6177 = vunpack.c.0.s8 %v6176
    %v6178 = vlaneseq
    %v6179 = vshrl.u32 %v6178, 7
    %v6180 = vsub.s32 %v6177, %v6179
    %v6181 = vrot.slane %v6166, %v6180
    %v6183 = vunpack.c.l.s4 1966171168
    %v6184 = vunpack.c.0.s8 %v6183
    %v6185 = vlaneseq
    %v6186 = vshrl.u32 %v6185, 7
    %v6187 = vsub.s32 %v6184, %v6186
    %v6188 = vrot.slane %v6173, %v6187
    %v6190 = vunpack.c.l.s4 1966171168
    %v6191 = vunpack.c.0.s8 %v6190
    %v6192 = vlaneseq
    %v6193 = vshrl.u32 %v6192, 7
    %v6194 = vsub.s32 %v6191, %v6193
    %v6195 = vrot.slane %v6174, %v6194
    %v6196 = vcombine.high %v6181, %v6181
    %v6197 = vcombine.high %v6195, %v6195
    %v6198 = vcombine.low %v6142, %v6156
    %v6199 = vcombine.low %v6157, %v6158
    %v6200 = vcombine.low %v6149, %v6181
    %v6201 = vcombine.low %v6195, %v6196
    %v6203 = vunpack.c.l.s4 1966171168
    %v6204 = vunpack.c.0.s8 %v6203
    %v6205 = vlaneseq
    %v6206 = vshrl.u32 %v6205, 7
    %v6207 = vsub.s32 %v6204, %v6206
    %v6208 = vrot.slane %v6198, %v6207
    %v6210 = vunpack.c.l.s4 1966171168
    %v6211 = vunpack.c.0.s8 %v6210
    %v6212 = vlaneseq
    %v6213 = vshrl.u32 %v6212, 7
    %v6214 = vsub.s32 %v6211, %v6213
    %v6215 = vrot.slane %v6199, %v6214
    %v6217 = vunpack.c.l.s4 1966171168
    %v6218 = vunpack.c.0.s8 %v6217
    %v6219 = vlaneseq
    %v6220 = vshrl.u32 %v6219, 7
    %v6221 = vsub.s32 %v6218, %v6220
    %v6222 = vrot.slane %v6200, %v6221
    %v6224 = vunpack.c.l.s4 1966171168
    %v6225 = vunpack.c.0.s8 %v6224
    %v6226 = vlaneseq
    %v6227 = vshrl.u32 %v6226, 7
    %v6228 = vsub.s32 %v6225, %v6227
    %v6229 = vrot.slane %v6201, %v6228
    %v6230 = vcombine.low %v6208, %v6215
    %v6231 = vcombine.low %v6222, %v6229
    %v6233 = vunpack.c.l.s4 1966171168
    %v6234 = vunpack.c.0.s8 %v6233
    %v6235 = vlaneseq
    %v6236 = vshrl.u32 %v6235, 7
    %v6237 = vsub.s32 %v6234, %v6236
    %v6238 = vrot.slane %v6230, %v6237
    %v6240 = vunpack.c.l.s4 1966171168
    %v6241 = vunpack.c.0.s8 %v6240
    %v6242 = vlaneseq
    %v6243 = vshrl.u32 %v6242, 7
    %v6244 = vsub.s32 %v6241, %v6243
    %v6245 = vrot.slane %v6231, %v6244
    %v6246 = vcombine.low %v6238, %v6245
    %v6247 = vcombine.low %v6197, %v6188
    %v6249 = vunpack.c.l.s4 1966171168
    %v6250 = vunpack.c.0.s8 %v6249
    %v6251 = vlaneseq
    %v6252 = vshrl.u32 %v6251, 7
    %v6253 = vsub.s32 %v6250, %v6252
    %v6254 = vrot.slane %v6247, %v6253
    %v6256 = vunpack.c.l.s4 1966171168
    %v6257 = vunpack.c.0.s8 %v6256
    %v6258 = vlaneseq
    %v6259 = vshrl.u32 %v6258, 7
    %v6260 = vsub.s32 %v6257, %v6259
    %v6261 = vrot.slane %v6254, %v6260
    %v6264 = vpack.c.bf16 %v6261, %v6246
    %v6266 = vlaneseq
    %v6267 = vshrl.u32 %v6266, 7
    %v6268 = vsub.s32 0, %v6267
    %v6269 = vrot.slane %v4076, %v6268
    %v6287 = vunpack.c.l.b16 %v4060
    %v6288 = vunpack.c.l.b16 %v4061
    %v6289 = vunpack.c.l.b16 %v4062
    %v6290 = vunpack.c.l.b16 %v4063
    %v6291 = vunpack.c.l.b16 %v4064
    %v6292 = vunpack.c.l.b16 %v4065
    %v6293 = vunpack.c.l.b16 %v4066
    %v6294 = vunpack.c.l.b16 %v4067
    %v6295 = vunpack.c.l.b16 %v4068
    %v6296 = vunpack.c.l.b16 %v4069
    %v6297 = vunpack.c.l.b16 %v4070
    %v6298 = vunpack.c.l.b16 %v4071
    %v6299 = vunpack.c.l.b16 %v4072
    %v6300 = vunpack.c.l.b16 %v4073
    %v6301 = vunpack.c.l.b16 %v4074
    %v6302 = vunpack.c.l.b16 %v4075
    %v6303 = vpack.c.b16 %v6288, %v6287
    %v6304 = vpack.c.b16 %v6290, %v6289
    %v6305 = vpack.c.b16 %v6292, %v6291
    %v6306 = vpack.c.b16 %v6294, %v6293
    %v6307 = vpack.c.b16 %v6296, %v6295
    %v6308 = vpack.c.b16 %v6298, %v6297
    %v6309 = vpack.c.b16 %v6300, %v6299
    %v6310 = vpack.c.b16 %v6302, %v6301
    %6319 = vmatprep.subr.bf16.mxu0 0
    %6320 = vmatpush1.bf16.msra.mxu0 %v6303
    %6321 = vmatprep.subr.bf16.mxu0 0
    %6322 = vmatpush1.bf16.msra.mxu0 %v6304
    %6323 = vmatprep.subr.bf16.mxu0 0
    %6324 = vmatpush1.bf16.msra.mxu0 %v6305
    %6325 = vmatprep.subr.bf16.mxu0 0
    %6326 = vmatpush1.bf16.msra.mxu0 %v6306
    %6327 = vmatprep.subr.bf16.mxu0 0
    %6328 = vmatpush1.bf16.msra.mxu0 %v6307
    %6329 = vmatprep.subr.bf16.mxu0 0
    %6330 = vmatpush1.bf16.msra.mxu0 %v6308
    %6331 = vmatprep.subr.bf16.mxu0 0
    %6332 = vmatpush1.bf16.msra.mxu0 %v6309
    %6333 = vmatprep.subr.bf16.mxu0 0
    %6334 = vmatpush1.bf16.msra.mxu0 %v6310
    %6335 = vmatprep.subr.bf16.mxu0 0
    %6336 = vmatpush1.bf16.msra.mxu0 0
    %6337 = vmatprep.subr.bf16.mxu0 0
    %6338 = vmatpush1.bf16.msra.mxu0 0
    %6339 = vmatprep.subr.bf16.mxu0 0
    %6340 = vmatpush1.bf16.msra.mxu0 0
    %6341 = vmatprep.subr.bf16.mxu0 0
    %6342 = vmatpush1.bf16.msra.mxu0 0
    %6343 = vmatprep.subr.bf16.mxu0 0
    %6344 = vmatpush1.bf16.msra.mxu0 0
    %6345 = vmatprep.subr.bf16.mxu0 0
    %6346 = vmatpush1.bf16.msra.mxu0 0
    %6347 = vmatprep.subr.bf16.mxu0 0
    %6348 = vmatpush1.bf16.msra.mxu0 0
    %6349 = vmatprep.subr.bf16.mxu0 0
    %6350 = vmatpush1.bf16.msra.mxu0 0
    %6351 = vmatprep.mubr.bf16.mxu0 0
    %6352 = vmatmul.mubr.bf16.gmra.mrb[0].mxu0 %v6264
    %v6353 = vpop.f32.mrb[0].mxu0
    %v6354 = vadd.f32 %v6269, %v6353
    %v6355 = vpop.f32.mrb[0].mxu0
    %v6356 = vpop.f32.mrb[0].mxu0
    %v6357 = vadd.f32 %v6269, %v6356
    %v6358 = vpop.f32.mrb[0].mxu0
    %6359 = vdwg.mxu0
    %v6360 = vmul.f32 %v6354, 0.5
    %v6361 = vmul.f32 %v6357, 0.5
    %v6362 = vmul.f32 %v6354, 0.70710677
    %v6363 = vmul.f32 %v6357, 0.70710677
    %v6364 = verf.f32.pop %v6362
    %v6365 = verf.f32.pop %v6363
    %v6366 = vadd.f32 %v6364, 1.0
    %v6367 = vadd.f32 %v6365, 1.0
    %v6368 = vmul.f32 %v6360, %v6366
    %v6369 = vmul.f32 %v6361, %v6367
    %v6370 = vpack.c.bf16 %v6369, %v6368
    %v6372 = vlaneseq
    %v6373 = vshrl.u32 %v6372, 7
    %v6374 = vsub.s32 0, %v6373
    %v6375 = vrot.slane %v4093, %v6374
    %v6393 = vunpack.c.l.b16 %v4077
    %v6394 = vunpack.c.l.b16 %v4078
    %v6395 = vunpack.c.l.b16 %v4079
    %v6396 = vunpack.c.l.b16 %v4080
    %v6397 = vunpack.c.l.b16 %v4081
    %v6398 = vunpack.c.l.b16 %v4082
    %v6399 = vunpack.c.l.b16 %v4083
    %v6400 = vunpack.c.l.b16 %v4084
    %v6401 = vunpack.c.l.b16 %v4085
    %v6402 = vunpack.c.l.b16 %v4086
    %v6403 = vunpack.c.l.b16 %v4087
    %v6404 = vunpack.c.l.b16 %v4088
    %v6405 = vunpack.c.l.b16 %v4089
    %v6406 = vunpack.c.l.b16 %v4090
    %v6407 = vunpack.c.l.b16 %v4091
    %v6408 = vunpack.c.l.b16 %v4092
    %v6409 = vpack.c.b16 %v6394, %v6393
    %v6410 = vpack.c.b16 %v6396, %v6395
    %v6411 = vpack.c.b16 %v6398, %v6397
    %v6412 = vpack.c.b16 %v6400, %v6399
    %v6413 = vpack.c.b16 %v6402, %v6401
    %v6414 = vpack.c.b16 %v6404, %v6403
    %v6415 = vpack.c.b16 %v6406, %v6405
    %v6416 = vpack.c.b16 %v6408, %v6407
    %6425 = vmatprep.subr.bf16.mxu0 0
    %6426 = vmatpush1.bf16.msra.mxu0 %v6409
    %6427 = vmatprep.subr.bf16.mxu0 0
    %6428 = vmatpush1.bf16.msra.mxu0 %v6410
    %6429 = vmatprep.subr.bf16.mxu0 0
    %6430 = vmatpush1.bf16.msra.mxu0 %v6411
    %6431 = vmatprep.subr.bf16.mxu0 0
    %6432 = vmatpush1.bf16.msra.mxu0 %v6412
    %6433 = vmatprep.subr.bf16.mxu0 0
    %6434 = vmatpush1.bf16.msra.mxu0 %v6413
    %6435 = vmatprep.subr.bf16.mxu0 0
    %6436 = vmatpush1.bf16.msra.mxu0 %v6414
    %6437 = vmatprep.subr.bf16.mxu0 0
    %6438 = vmatpush1.bf16.msra.mxu0 %v6415
    %6439 = vmatprep.subr.bf16.mxu0 0
    %6440 = vmatpush1.bf16.msra.mxu0 %v6416
    %6441 = vmatprep.subr.bf16.mxu0 0
    %6442 = vmatpush1.bf16.msra.mxu0 0
    %6443 = vmatprep.subr.bf16.mxu0 0
    %6444 = vmatpush1.bf16.msra.mxu0 0
    %6445 = vmatprep.subr.bf16.mxu0 0
    %6446 = vmatpush1.bf16.msra.mxu0 0
    %6447 = vmatprep.subr.bf16.mxu0 0
    %6448 = vmatpush1.bf16.msra.mxu0 0
    %6449 = vmatprep.subr.bf16.mxu0 0
    %6450 = vmatpush1.bf16.msra.mxu0 0
    %6451 = vmatprep.subr.bf16.mxu0 0
    %6452 = vmatpush1.bf16.msra.mxu0 0
    %6453 = vmatprep.subr.bf16.mxu0 0
    %6454 = vmatpush1.bf16.msra.mxu0 0
    %6455 = vmatprep.subr.bf16.mxu0 0
    %6456 = vmatpush1.bf16.msra.mxu0 0
    %6457 = vmatprep.mubr.bf16.mxu0 0
    %6458 = vmatmul.mubr.bf16.gmra.mrb[0].mxu0 %v6370
    %v6459 = vpop.f32.mrb[0].mxu0
    %v6460 = vadd.f32 %v6375, %v6459
    %v6461 = vpop.f32.mrb[0].mxu0
    %v6462 = vpop.f32.mrb[0].mxu0
    %v6463 = vadd.f32 %v6375, %v6462
    %v6464 = vpop.f32.mrb[0].mxu0
    %6465 = vdwg.mxu0
    %v6468 = vcombine.high %v6460, %v6460
    %v6470 = vunpack.c.l.s4 1966171168
    %v6471 = vunpack.c.0.s8 %v6470
    %v6472 = vlaneseq
    %v6473 = vshrl.u32 %v6472, 7
    %v6474 = vsub.s32 %v6471, %v6473
    %v6475 = vrot.slane %v6460, %v6474
    %v6477 = vunpack.c.l.s4 1966171168
    %v6478 = vunpack.c.0.s8 %v6477
    %v6479 = vlaneseq
    %v6480 = vshrl.u32 %v6479, 7
    %v6481 = vsub.s32 %v6478, %v6480
    %v6482 = vrot.slane %v6468, %v6481
    %v6483 = vcombine.high %v6475, %v6475
    %v6484 = vcombine.high %v6482, %v6482
    %v6486 = vunpack.c.l.s4 1966171168
    %v6487 = vunpack.c.0.s8 %v6486
    %v6488 = vlaneseq
    %v6489 = vshrl.u32 %v6488, 7
    %v6490 = vsub.s32 %v6487, %v6489
    %v6491 = vrot.slane %v6475, %v6490
    %v6493 = vunpack.c.l.s4 1966171168
    %v6494 = vunpack.c.0.s8 %v6493
    %v6495 = vlaneseq
    %v6496 = vshrl.u32 %v6495, 7
    %v6497 = vsub.s32 %v6494, %v6496
    %v6498 = vrot.slane %v6482, %v6497
    %v6500 = vunpack.c.l.s4 1966171168
    %v6501 = vunpack.c.0.s8 %v6500
    %v6502 = vlaneseq
    %v6503 = vshrl.u32 %v6502, 7
    %v6504 = vsub.s32 %v6501, %v6503
    %v6505 = vrot.slane %v6483, %v6504
    %v6507 = vunpack.c.l.s4 1966171168
    %v6508 = vunpack.c.0.s8 %v6507
    %v6509 = vlaneseq
    %v6510 = vshrl.u32 %v6509, 7
    %v6511 = vsub.s32 %v6508, %v6510
    %v6512 = vrot.slane %v6484, %v6511
    %v6513 = vcombine.high %v6491, %v6491
    %v6514 = vcombine.high %v6498, %v6498
    %v6515 = vcombine.high %v6505, %v6505
    %v6516 = vcombine.high %v6512, %v6512
    %v6518 = vunpack.c.l.s4 1966171168
    %v6519 = vunpack.c.0.s8 %v6518
    %v6520 = vlaneseq
    %v6521 = vshrl.u32 %v6520, 7
    %v6522 = vsub.s32 %v6519, %v6521
    %v6523 = vrot.slane %v6463, %v6522
    %v6524 = vcombine.high %v6523, %v6523
    %v6526 = vunpack.c.l.s4 1966171168
    %v6527 = vunpack.c.0.s8 %v6526
    %v6528 = vlaneseq
    %v6529 = vshrl.u32 %v6528, 7
    %v6530 = vsub.s32 %v6527, %v6529
    %v6531 = vrot.slane %v6523, %v6530
    %v6533 = vunpack.c.l.s4 1966171168
    %v6534 = vunpack.c.0.s8 %v6533
    %v6535 = vlaneseq
    %v6536 = vshrl.u32 %v6535, 7
    %v6537 = vsub.s32 %v6534, %v6536
    %v6538 = vrot.slane %v6524, %v6537
    %v6539 = vcombine.low %v6491, %v6505
    %v6540 = vcombine.low %v6513, %v6515
    %v6542 = vunpack.c.l.s4 1966171168
    %v6543 = vunpack.c.0.s8 %v6542
    %v6544 = vlaneseq
    %v6545 = vshrl.u32 %v6544, 7
    %v6546 = vsub.s32 %v6543, %v6545
    %v6547 = vrot.slane %v6539, %v6546
    %v6549 = vunpack.c.l.s4 1966171168
    %v6550 = vunpack.c.0.s8 %v6549
    %v6551 = vlaneseq
    %v6552 = vshrl.u32 %v6551, 7
    %v6553 = vsub.s32 %v6550, %v6552
    %v6554 = vrot.slane %v6540, %v6553
    %v6556 = vunpack.c.l.s4 1966171168
    %v6557 = vunpack.c.0.s8 %v6556
    %v6558 = vlaneseq
    %v6559 = vshrl.u32 %v6558, 7
    %v6560 = vsub.s32 %v6557, %v6559
    %v6561 = vrot.slane %v6498, %v6560
    %v6562 = vcombine.low %v6547, %v6554
    %v6564 = vunpack.c.l.s4 1966171168
    %v6565 = vunpack.c.0.s8 %v6564
    %v6566 = vlaneseq
    %v6567 = vshrl.u32 %v6566, 7
    %v6568 = vsub.s32 %v6565, %v6567
    %v6569 = vrot.slane %v6562, %v6568
    %v6571 = vunpack.c.l.s4 1966171168
    %v6572 = vunpack.c.0.s8 %v6571
    %v6573 = vlaneseq
    %v6574 = vshrl.u32 %v6573, 7
    %v6575 = vsub.s32 %v6572, %v6574
    %v6576 = vrot.slane %v6561, %v6575
    %v6577 = vcombine.low %v6569, %v6576
    %v6578 = vcombine.low %v6512, %v6514
    %v6579 = vcombine.low %v6516, %v6531
    %v6581 = vunpack.c.l.s4 1966171168
    %v6582 = vunpack.c.0.s8 %v6581
    %v6583 = vlaneseq
    %v6584 = vshrl.u32 %v6583, 7
    %v6585 = vsub.s32 %v6582, %v6584
    %v6586 = vrot.slane %v6578, %v6585
    %v6588 = vunpack.c.l.s4 1966171168
    %v6589 = vunpack.c.0.s8 %v6588
    %v6590 = vlaneseq
    %v6591 = vshrl.u32 %v6590, 7
    %v6592 = vsub.s32 %v6589, %v6591
    %v6593 = vrot.slane %v6579, %v6592
    %v6595 = vunpack.c.l.s4 1966171168
    %v6596 = vunpack.c.0.s8 %v6595
    %v6597 = vlaneseq
    %v6598 = vshrl.u32 %v6597, 7
    %v6599 = vsub.s32 %v6596, %v6598
    %v6600 = vrot.slane %v6538, %v6599
    %v6601 = vcombine.low %v6586, %v6593
    %v6603 = vunpack.c.l.s4 1966171168
    %v6604 = vunpack.c.0.s8 %v6603
    %v6605 = vlaneseq
    %v6606 = vshrl.u32 %v6605, 7
    %v6607 = vsub.s32 %v6604, %v6606
    %v6608 = vrot.slane %v6601, %v6607
    %v6610 = vunpack.c.l.s4 1966171168
    %v6611 = vunpack.c.0.s8 %v6610
    %v6612 = vlaneseq
    %v6613 = vshrl.u32 %v6612, 7
    %v6614 = vsub.s32 %v6611, %v6613
    %v6615 = vrot.slane %v6600, %v6614
    %v6616 = vcombine.low %v6608, %v6615
    %v6619 = vadd.f32 %v6074, %v6577
    %v6620 = vadd.f32 %v6075, %v6616
    %v6621 = vld [vmem:[%s69] sm:$0x1]
    %v6622 = vld [vmem:[%s71] sm:$0x1]
    %v6623 = vsel %vm4094, %v6619, 0.0
    %6624 = vadd.xlane.f32.xlu0 %v6623
    %v6625 = vpop.xlane.xlu0 %6624
    %v6626 = vsel %vm4094, %v6620, 0.0
    %6627 = vadd.xlane.f32.xlu0 %v6626
    %v6628 = vpop.xlane.xlu0 %6627
    %v6629 = vmul.f32 %v6625, %v264
    %v6630 = vmul.f32 %v6628, %v264
    %v6631 = vsub.f32 %v6619, %v6629
    %v6632 = vsub.f32 %v6620, %v6630
    %v6633 = vmul.f32 %v6631, %v6631
    %v6634 = vmul.f32 %v6632, %v6632
    %v6635 = vsel %vm4094, %v6633, 0.0
    %6636 = vadd.xlane.f32.xlu0 %v6635
    %v6637 = vpop.xlane.xlu0 %6636
    %v6638 = vsel %vm4094, %v6634, 0.0
    %6639 = vadd.xlane.f32.xlu0 %v6638
    %v6640 = vpop.xlane.xlu0 %6639
    %v6641 = vmul.f32 %v6637, %v264
    %v6642 = vmul.f32 %v6640, %v264
    %v6643 = vadd.f32 %v6641, 1e-05
    %v6644 = vadd.f32 %v6642, 1e-05
    %v6645 = vrsqrt.pop %v6643
    %v6646 = vrsqrt.pop %v6644
    %v6647 = vmul.f32 %v6631, %v6645
    %v6648 = vmul.f32 %v6632, %v6646
    %v6650 = vlaneseq
    %v6651 = vshrl.u32 %v6650, 7
    %v6652 = vsub.s32 0, %v6651
    %v6653 = vrot.slane %v6621, %v6652
    %v6655 = vmul.f32 %v6647, %v6653
    %v6656 = vmul.f32 %v6648, %v6653
    %v6658 = vlaneseq
    %v6659 = vshrl.u32 %v6658, 7
    %v6660 = vsub.s32 0, %v6659
    %v6661 = vrot.slane %v6622, %v6660
    %v6663 = vadd.f32 %v6655, %v6661
    %v6664 = vadd.f32 %v6656, %v6661
    %v6667 = vcombine.high %v6663, %v6663
    %v6669 = vunpack.c.l.s4 1966171168
    %v6670 = vunpack.c.0.s8 %v6669
    %v6671 = vlaneseq
    %v6672 = vshrl.u32 %v6671, 7
    %v6673 = vsub.s32 %v6670, %v6672
    %v6674 = vrot.slane %v6663, %v6673
    %v6676 = vunpack.c.l.s4 1966171168
    %v6677 = vunpack.c.0.s8 %v6676
    %v6678 = vlaneseq
    %v6679 = vshrl.u32 %v6678, 7
    %v6680 = vsub.s32 %v6677, %v6679
    %v6681 = vrot.slane %v6667, %v6680
    %v6682 = vcombine.high %v6674, %v6674
    %v6684 = vunpack.c.l.s4 1966171168
    %v6685 = vunpack.c.0.s8 %v6684
    %v6686 = vlaneseq
    %v6687 = vshrl.u32 %v6686, 7
    %v6688 = vsub.s32 %v6685, %v6687
    %v6689 = vrot.slane %v6674, %v6688
    %v6691 = vunpack.c.l.s4 1966171168
    %v6692 = vunpack.c.0.s8 %v6691
    %v6693 = vlaneseq
    %v6694 = vshrl.u32 %v6693, 7
    %v6695 = vsub.s32 %v6692, %v6694
    %v6696 = vrot.slane %v6681, %v6695
    %v6698 = vunpack.c.l.s4 1966171168
    %v6699 = vunpack.c.0.s8 %v6698
    %v6700 = vlaneseq
    %v6701 = vshrl.u32 %v6700, 7
    %v6702 = vsub.s32 %v6699, %v6701
    %v6703 = vrot.slane %v6682, %v6702
    %v6704 = vcombine.high %v6689, %v6689
    %v6705 = vcombine.high %v6703, %v6703
    %v6706 = vcombine.high %v6664, %v6664
    %v6708 = vunpack.c.l.s4 1966171168
    %v6709 = vunpack.c.0.s8 %v6708
    %v6710 = vlaneseq
    %v6711 = vshrl.u32 %v6710, 7
    %v6712 = vsub.s32 %v6709, %v6711
    %v6713 = vrot.slane %v6664, %v6712
    %v6715 = vunpack.c.l.s4 1966171168
    %v6716 = vunpack.c.0.s8 %v6715
    %v6717 = vlaneseq
    %v6718 = vshrl.u32 %v6717, 7
    %v6719 = vsub.s32 %v6716, %v6718
    %v6720 = vrot.slane %v6706, %v6719
    %v6721 = vcombine.high %v6713, %v6713
    %v6723 = vunpack.c.l.s4 1966171168
    %v6724 = vunpack.c.0.s8 %v6723
    %v6725 = vlaneseq
    %v6726 = vshrl.u32 %v6725, 7
    %v6727 = vsub.s32 %v6724, %v6726
    %v6728 = vrot.slane %v6713, %v6727
    %v6730 = vunpack.c.l.s4 1966171168
    %v6731 = vunpack.c.0.s8 %v6730
    %v6732 = vlaneseq
    %v6733 = vshrl.u32 %v6732, 7
    %v6734 = vsub.s32 %v6731, %v6733
    %v6735 = vrot.slane %v6720, %v6734
    %v6737 = vunpack.c.l.s4 1966171168
    %v6738 = vunpack.c.0.s8 %v6737
    %v6739 = vlaneseq
    %v6740 = vshrl.u32 %v6739, 7
    %v6741 = vsub.s32 %v6738, %v6740
    %v6742 = vrot.slane %v6721, %v6741
    %v6743 = vcombine.high %v6728, %v6728
    %v6744 = vcombine.high %v6742, %v6742
    %v6745 = vcombine.low %v6689, %v6703
    %v6746 = vcombine.low %v6704, %v6705
    %v6747 = vcombine.low %v6696, %v6728
    %v6748 = vcombine.low %v6742, %v6743
    %v6750 = vunpack.c.l.s4 1966171168
    %v6751 = vunpack.c.0.s8 %v6750
    %v6752 = vlaneseq
    %v6753 = vshrl.u32 %v6752, 7
    %v6754 = vsub.s32 %v6751, %v6753
    %v6755 = vrot.slane %v6745, %v6754
    %v6757 = vunpack.c.l.s4 1966171168
    %v6758 = vunpack.c.0.s8 %v6757
    %v6759 = vlaneseq
    %v6760 = vshrl.u32 %v6759, 7
    %v6761 = vsub.s32 %v6758, %v6760
    %v6762 = vrot.slane %v6746, %v6761
    %v6764 = vunpack.c.l.s4 1966171168
    %v6765 = vunpack.c.0.s8 %v6764
    %v6766 = vlaneseq
    %v6767 = vshrl.u32 %v6766, 7
    %v6768 = vsub.s32 %v6765, %v6767
    %v6769 = vrot.slane %v6747, %v6768
    %v6771 = vunpack.c.l.s4 1966171168
    %v6772 = vunpack.c.0.s8 %v6771
    %v6773 = vlaneseq
    %v6774 = vshrl.u32 %v6773, 7
    %v6775 = vsub.s32 %v6772, %v6774
    %v6776 = vrot.slane %v6748, %v6775
    %v6777 = vcombine.low %v6755, %v6762
    %v6778 = vcombine.low %v6769, %v6776
    %v6780 = vunpack.c.l.s4 1966171168
    %v6781 = vunpack.c.0.s8 %v6780
    %v6782 = vlaneseq
    %v6783 = vshrl.u32 %v6782, 7
    %v6784 = vsub.s32 %v6781, %v6783
    %v6785 = vrot.slane %v6777, %v6784
    %v6787 = vunpack.c.l.s4 1966171168
    %v6788 = vunpack.c.0.s8 %v6787
    %v6789 = vlaneseq
    %v6790 = vshrl.u32 %v6789, 7
    %v6791 = vsub.s32 %v6788, %v6790
    %v6792 = vrot.slane %v6778, %v6791
    %v6793 = vcombine.low %v6785, %v6792
    %v6794 = vcombine.low %v6744, %v6735
    %v6796 = vunpack.c.l.s4 1966171168
    %v6797 = vunpack.c.0.s8 %v6796
    %v6798 = vlaneseq
    %v6799 = vshrl.u32 %v6798, 7
    %v6800 = vsub.s32 %v6797, %v6799
    %v6801 = vrot.slane %v6794, %v6800
    %v6803 = vunpack.c.l.s4 1966171168
    %v6804 = vunpack.c.0.s8 %v6803
    %v6805 = vlaneseq
    %v6806 = vshrl.u32 %v6805, 7
    %v6807 = vsub.s32 %v6804, %v6806
    %v6808 = vrot.slane %v6801, %v6807
    %v6811 = vpack.c.bf16 %v6808, %v6793
    %v6812 = vld [vmem:[%s73] sm:$0xf]
    %v6813 = vld [vmem:[%s73 + $0x4] sm:$0xf]
    %v6814 = vld [vmem:[%s73 + $0x8] sm:$0xf]
    %v6815 = vld [vmem:[%s73 + $0xc] sm:$0xf]
    %v6816 = vld [vmem:[%s73 + $0x10] sm:$0xf]
    %v6817 = vld [vmem:[%s73 + $0x14] sm:$0xf]
    %v6818 = vld [vmem:[%s73 + $0x18] sm:$0xf]
    %v6819 = vld [vmem:[%s73 + $0x1c] sm:$0xf]
    %v6820 = vld [vmem:[%s73 + $0x20] sm:$0xf]
    %v6821 = vld [vmem:[%s73 + $0x24] sm:$0xf]
    %v6822 = vld [vmem:[%s73 + $0x28] sm:$0xf]
    %v6823 = vld [vmem:[%s73 + $0x2c] sm:$0xf]
    %v6824 = vld [vmem:[%s73 + $0x30] sm:$0xf]
    %v6825 = vld [vmem:[%s73 + $0x34] sm:$0xf]
    %v6826 = vld [vmem:[%s73 + $0x38] sm:$0xf]
    %v6827 = vld [vmem:[%s73 + $0x3c] sm:$0xf]
    %v6828 = vld [vmem:[%s75] sm:$0x1]
    %v6830 = vlaneseq
    %v6831 = vshrl.u32 %v6830, 7
    %v6832 = vsub.s32 0, %v6831
    %v6833 = vrot.slane %v6828, %v6832
    %v6851 = vunpack.c.l.b16 %v6812
    %v6852 = vunpack.c.l.b16 %v6813
    %v6853 = vunpack.c.l.b16 %v6814
    %v6854 = vunpack.c.l.b16 %v6815
    %v6855 = vunpack.c.l.b16 %v6816
    %v6856 = vunpack.c.l.b16 %v6817
    %v6857 = vunpack.c.l.b16 %v6818
    %v6858 = vunpack.c.l.b16 %v6819
    %v6859 = vunpack.c.l.b16 %v6820
    %v6860 = vunpack.c.l.b16 %v6821
    %v6861 = vunpack.c.l.b16 %v6822
    %v6862 = vunpack.c.l.b16 %v6823
    %v6863 = vunpack.c.l.b16 %v6824
    %v6864 = vunpack.c.l.b16 %v6825
    %v6865 = vunpack.c.l.b16 %v6826
    %v6866 = vunpack.c.l.b16 %v6827
    %v6867 = vpack.c.b16 %v6852, %v6851
    %v6868 = vpack.c.b16 %v6854, %v6853
    %v6869 = vpack.c.b16 %v6856, %v6855
    %v6870 = vpack.c.b16 %v6858, %v6857
    %v6871 = vpack.c.b16 %v6860, %v6859
    %v6872 = vpack.c.b16 %v6862, %v6861
    %v6873 = vpack.c.b16 %v6864, %v6863
    %v6874 = vpack.c.b16 %v6866, %v6865
    %6883 = vmatprep.subr.bf16.mxu0 0
    %6884 = vmatpush1.bf16.msra.mxu0 %v6867
    %6885 = vmatprep.subr.bf16.mxu0 0
    %6886 = vmatpush1.bf16.msra.mxu0 %v6868
    %6887 = vmatprep.subr.bf16.mxu0 0
    %6888 = vmatpush1.bf16.msra.mxu0 %v6869
    %6889 = vmatprep.subr.bf16.mxu0 0
    %6890 = vmatpush1.bf16.msra.mxu0 %v6870
    %6891 = vmatprep.subr.bf16.mxu0 0
    %6892 = vmatpush1.bf16.msra.mxu0 %v6871
    %6893 = vmatprep.subr.bf16.mxu0 0
    %6894 = vmatpush1.bf16.msra.mxu0 %v6872
    %6895 = vmatprep.subr.bf16.mxu0 0
    %6896 = vmatpush1.bf16.msra.mxu0 %v6873
    %6897 = vmatprep.subr.bf16.mxu0 0
    %6898 = vmatpush1.bf16.msra.mxu0 %v6874
    %6899 = vmatprep.subr.bf16.mxu0 0
    %6900 = vmatpush1.bf16.msra.mxu0 0
    %6901 = vmatprep.subr.bf16.mxu0 0
    %6902 = vmatpush1.bf16.msra.mxu0 0
    %6903 = vmatprep.subr.bf16.mxu0 0
    %6904 = vmatpush1.bf16.msra.mxu0 0
    %6905 = vmatprep.subr.bf16.mxu0 0
    %6906 = vmatpush1.bf16.msra.mxu0 0
    %6907 = vmatprep.subr.bf16.mxu0 0
    %6908 = vmatpush1.bf16.msra.mxu0 0
    %6909 = vmatprep.subr.bf16.mxu0 0
    %6910 = vmatpush1.bf16.msra.mxu0 0
    %6911 = vmatprep.subr.bf16.mxu0 0
    %6912 = vmatpush1.bf16.msra.mxu0 0
    %6913 = vmatprep.subr.bf16.mxu0 0
    %6914 = vmatpush1.bf16.msra.mxu0 0
    %6915 = vmatprep.mubr.bf16.mxu0 0
    %6916 = vmatmul.mubr.bf16.gmra.mrb[0].mxu0 %v6811
    %v6917 = vpop.f32.mrb[0].mxu0
    %v6918 = vadd.f32 %v6833, %v6917
    %v6919 = vpop.f32.mrb[0].mxu0
    %v6920 = vpop.f32.mrb[0].mxu0
    %v6921 = vadd.f32 %v6833, %v6920
    %v6922 = vpop.f32.mrb[0].mxu0
    %6923 = vdwg.mxu0
    %v6926 = vcombine.high %v6918, %v6918
    %v6928 = vunpack.c.l.s4 1966171168
    %v6929 = vunpack.c.0.s8 %v6928
    %v6930 = vlaneseq
    %v6931 = vshrl.u32 %v6930, 7
    %v6932 = vsub.s32 %v6929, %v6931
    %v6933 = vrot.slane %v6918, %v6932
    %v6935 = vunpack.c.l.s4 1966171168
    %v6936 = vunpack.c.0.s8 %v6935
    %v6937 = vlaneseq
    %v6938 = vshrl.u32 %v6937, 7
    %v6939 = vsub.s32 %v6936, %v6938
    %v6940 = vrot.slane %v6926, %v6939
    %v6941 = vcombine.high %v6933, %v6933
    %v6942 = vcombine.high %v6940, %v6940
    %v6944 = vunpack.c.l.s4 1966171168
    %v6945 = vunpack.c.0.s8 %v6944
    %v6946 = vlaneseq
    %v6947 = vshrl.u32 %v6946, 7
    %v6948 = vsub.s32 %v6945, %v6947
    %v6949 = vrot.slane %v6933, %v6948
    %v6951 = vunpack.c.l.s4 1966171168
    %v6952 = vunpack.c.0.s8 %v6951
    %v6953 = vlaneseq
    %v6954 = vshrl.u32 %v6953, 7
    %v6955 = vsub.s32 %v6952, %v6954
    %v6956 = vrot.slane %v6940, %v6955
    %v6958 = vunpack.c.l.s4 1966171168
    %v6959 = vunpack.c.0.s8 %v6958
    %v6960 = vlaneseq
    %v6961 = vshrl.u32 %v6960, 7
    %v6962 = vsub.s32 %v6959, %v6961
    %v6963 = vrot.slane %v6941, %v6962
    %v6965 = vunpack.c.l.s4 1966171168
    %v6966 = vunpack.c.0.s8 %v6965
    %v6967 = vlaneseq
    %v6968 = vshrl.u32 %v6967, 7
    %v6969 = vsub.s32 %v6966, %v6968
    %v6970 = vrot.slane %v6942, %v6969
    %v6971 = vcombine.high %v6949, %v6949
    %v6972 = vcombine.high %v6956, %v6956
    %v6973 = vcombine.high %v6963, %v6963
    %v6974 = vcombine.high %v6970, %v6970
    %v6976 = vunpack.c.l.s4 1966171168
    %v6977 = vunpack.c.0.s8 %v6976
    %v6978 = vlaneseq
    %v6979 = vshrl.u32 %v6978, 7
    %v6980 = vsub.s32 %v6977, %v6979
    %v6981 = vrot.slane %v6921, %v6980
    %v6982 = vcombine.high %v6981, %v6981
    %v6984 = vunpack.c.l.s4 1966171168
    %v6985 = vunpack.c.0.s8 %v6984
    %v6986 = vlaneseq
    %v6987 = vshrl.u32 %v6986, 7
    %v6988 = vsub.s32 %v6985, %v6987
    %v6989 = vrot.slane %v6981, %v6988
    %v6991 = vunpack.c.l.s4 1966171168
    %v6992 = vunpack.c.0.s8 %v6991
    %v6993 = vlaneseq
    %v6994 = vshrl.u32 %v6993, 7
    %v6995 = vsub.s32 %v6992, %v6994
    %v6996 = vrot.slane %v6982, %v6995
    %v7007 = vcombine.low %v6949, %v6963
    %v7008 = vcombine.low %v6971, %v6973
    %v7010 = vunpack.c.l.s4 1966171168
    %v7011 = vunpack.c.0.s8 %v7010
    %v7012 = vlaneseq
    %v7013 = vshrl.u32 %v7012, 7
    %v7014 = vsub.s32 %v7011, %v7013
    %v7015 = vrot.slane %v7007, %v7014
    %v7017 = vunpack.c.l.s4 1966171168
    %v7018 = vunpack.c.0.s8 %v7017
    %v7019 = vlaneseq
    %v7020 = vshrl.u32 %v7019, 7
    %v7021 = vsub.s32 %v7018, %v7020
    %v7022 = vrot.slane %v7008, %v7021
    %v7024 = vunpack.c.l.s4 1966171168
    %v7025 = vunpack.c.0.s8 %v7024
    %v7026 = vlaneseq
    %v7027 = vshrl.u32 %v7026, 7
    %v7028 = vsub.s32 %v7025, %v7027
    %v7029 = vrot.slane %v6956, %v7028
    %v7030 = vcombine.low %v7015, %v7022
    %v7032 = vunpack.c.l.s4 1966171168
    %v7033 = vunpack.c.0.s8 %v7032
    %v7034 = vlaneseq
    %v7035 = vshrl.u32 %v7034, 7
    %v7036 = vsub.s32 %v7033, %v7035
    %v7037 = vrot.slane %v7030, %v7036
    %v7039 = vunpack.c.l.s4 1966171168
    %v7040 = vunpack.c.0.s8 %v7039
    %v7041 = vlaneseq
    %v7042 = vshrl.u32 %v7041, 7
    %v7043 = vsub.s32 %v7040, %v7042
    %v7044 = vrot.slane %v7029, %v7043
    %v7045 = vcombine.low %v7037, %v7044
    %v7046 = vcombine.low %v6970, %v6972
    %v7047 = vcombine.low %v6974, %v6989
    %v7049 = vunpack.c.l.s4 1966171168
    %v7050 = vunpack.c.0.s8 %v7049
    %v7051 = vlaneseq
    %v7052 = vshrl.u32 %v7051, 7
    %v7053 = vsub.s32 %v7050, %v7052
    %v7054 = vrot.slane %v7046, %v7053
    %v7056 = vunpack.c.l.s4 1966171168
    %v7057 = vunpack.c.0.s8 %v7056
    %v7058 = vlaneseq
    %v7059 = vshrl.u32 %v7058, 7
    %v7060 = vsub.s32 %v7057, %v7059
    %v7061 = vrot.slane %v7047, %v7060
    %v7063 = vunpack.c.l.s4 1966171168
    %v7064 = vunpack.c.0.s8 %v7063
    %v7065 = vlaneseq
    %v7066 = vshrl.u32 %v7065, 7
    %v7067 = vsub.s32 %v7064, %v7066
    %v7068 = vrot.slane %v6996, %v7067
    %v7069 = vcombine.low %v7054, %v7061
    %v7071 = vunpack.c.l.s4 1966171168
    %v7072 = vunpack.c.0.s8 %v7071
    %v7073 = vlaneseq
    %v7074 = vshrl.u32 %v7073, 7
    %v7075 = vsub.s32 %v7072, %v7074
    %v7076 = vrot.slane %v7069, %v7075
    %v7078 = vunpack.c.l.s4 1966171168
    %v7079 = vunpack.c.0.s8 %v7078
    %v7080 = vlaneseq
    %v7081 = vshrl.u32 %v7080, 7
    %v7082 = vsub.s32 %v7079, %v7081
    %v7083 = vrot.slane %v7068, %v7082
    %v7084 = vcombine.low %v7076, %v7083
    %vm7087 = vcmask 520192
    %7088 = vst.msk [vmem:[%s77] sm:$0x1f] %vm7087, %v7045
    %7089 = vst.msk [vmem:[%s77 + $0x8] sm:$0x1f] %vm7087, %v7084
    %v7090 = vld [vmem:[%s7] sm:$0x1f]
    %v7091 = vld [vmem:[%s7 + $0x8] sm:$0x1f]
    %v7094 = vcombine.high %v7090, %v7090
    %v7096 = vunpack.c.l.s4 1966171168
    %v7097 = vunpack.c.0.s8 %v7096
    %v7098 = vlaneseq
    %v7099 = vshrl.u32 %v7098, 7
    %v7100 = vsub.s32 %v7097, %v7099
    %v7101 = vrot.slane %v7090, %v7100
    %v7103 = vunpack.c.l.s4 1966171168
    %v7104 = vunpack.c.0.s8 %v7103
    %v7105 = vlaneseq
    %v7106 = vshrl.u32 %v7105, 7
    %v7107 = vsub.s32 %v7104, %v7106
    %v7108 = vrot.slane %v7094, %v7107
    %v7109 = vcombine.high %v7101, %v7101
    %v7111 = vunpack.c.l.s4 1966171168
    %v7112 = vunpack.c.0.s8 %v7111
    %v7113 = vlaneseq
    %v7114 = vshrl.u32 %v7113, 7
    %v7115 = vsub.s32 %v7112, %v7114
    %v7116 = vrot.slane %v7101, %v7115
    %v7118 = vunpack.c.l.s4 1966171168
    %v7119 = vunpack.c.0.s8 %v7118
    %v7120 = vlaneseq
    %v7121 = vshrl.u32 %v7120, 7
    %v7122 = vsub.s32 %v7119, %v7121
    %v7123 = vrot.slane %v7108, %v7122
    %v7125 = vunpack.c.l.s4 1966171168
    %v7126 = vunpack.c.0.s8 %v7125
    %v7127 = vlaneseq
    %v7128 = vshrl.u32 %v7127, 7
    %v7129 = vsub.s32 %v7126, %v7128
    %v7130 = vrot.slane %v7109, %v7129
    %v7131 = vcombine.high %v7116, %v7116
    %v7132 = vcombine.high %v7130, %v7130
    %v7133 = vcombine.high %v7091, %v7091
    %v7135 = vunpack.c.l.s4 1966171168
    %v7136 = vunpack.c.0.s8 %v7135
    %v7137 = vlaneseq
    %v7138 = vshrl.u32 %v7137, 7
    %v7139 = vsub.s32 %v7136, %v7138
    %v7140 = vrot.slane %v7091, %v7139
    %v7142 = vunpack.c.l.s4 1966171168
    %v7143 = vunpack.c.0.s8 %v7142
    %v7144 = vlaneseq
    %v7145 = vshrl.u32 %v7144, 7
    %v7146 = vsub.s32 %v7143, %v7145
    %v7147 = vrot.slane %v7133, %v7146
    %v7148 = vcombine.high %v7140, %v7140
    %v7150 = vunpack.c.l.s4 1966171168
    %v7151 = vunpack.c.0.s8 %v7150
    %v7152 = vlaneseq
    %v7153 = vshrl.u32 %v7152, 7
    %v7154 = vsub.s32 %v7151, %v7153
    %v7155 = vrot.slane %v7140, %v7154
    %v7157 = vunpack.c.l.s4 1966171168
    %v7158 = vunpack.c.0.s8 %v7157
    %v7159 = vlaneseq
    %v7160 = vshrl.u32 %v7159, 7
    %v7161 = vsub.s32 %v7158, %v7160
    %v7162 = vrot.slane %v7147, %v7161
    %v7164 = vunpack.c.l.s4 1966171168
    %v7165 = vunpack.c.0.s8 %v7164
    %v7166 = vlaneseq
    %v7167 = vshrl.u32 %v7166, 7
    %v7168 = vsub.s32 %v7165, %v7167
    %v7169 = vrot.slane %v7148, %v7168
    %v7170 = vcombine.high %v7155, %v7155
    %v7171 = vcombine.high %v7169, %v7169
    %v7182 = vsub.f32 %v6949, %v7116
    %v7183 = vsub.f32 %v6963, %v7130
    %v7184 = vsub.f32 %v6971, %v7131
    %v7185 = vsub.f32 %v6973, %v7132
    %v7186 = vsub.f32 %v6956, %v7123
    %v7187 = vsub.f32 %v6970, %v7155
    %v7188 = vsub.f32 %v6972, %v7169
    %v7189 = vsub.f32 %v6974, %v7170
    %v7190 = vsub.f32 %v6989, %v7171
    %v7191 = vsub.f32 %v6996, %v7162
    %v7192 = vmul.f32 %v7182, %v7182
    %v7193 = vmul.f32 %v7183, %v7183
    %v7194 = vmul.f32 %v7184, %v7184
    %v7195 = vmul.f32 %v7185, %v7185
    %v7196 = vmul.f32 %v7186, %v7186
    %v7197 = vmul.f32 %v7187, %v7187
    %v7198 = vmul.f32 %v7188, %v7188
    %v7199 = vmul.f32 %v7189, %v7189
    %v7200 = vmul.f32 %v7190, %v7190
    %v7201 = vmul.f32 %v7191, %v7191
    %v7212 = vcombine.low %v7192, %v7193
    %v7213 = vcombine.low %v7194, %v7195
    %v7215 = vunpack.c.l.s4 1966171168
    %v7216 = vunpack.c.0.s8 %v7215
    %v7217 = vlaneseq
    %v7218 = vshrl.u32 %v7217, 7
    %v7219 = vsub.s32 %v7216, %v7218
    %v7220 = vrot.slane %v7212, %v7219
    %v7222 = vunpack.c.l.s4 1966171168
    %v7223 = vunpack.c.0.s8 %v7222
    %v7224 = vlaneseq
    %v7225 = vshrl.u32 %v7224, 7
    %v7226 = vsub.s32 %v7223, %v7225
    %v7227 = vrot.slane %v7213, %v7226
    %v7229 = vunpack.c.l.s4 1966171168
    %v7230 = vunpack.c.0.s8 %v7229
    %v7231 = vlaneseq
    %v7232 = vshrl.u32 %v7231, 7
    %v7233 = vsub.s32 %v7230, %v7232
    %v7234 = vrot.slane %v7196, %v7233
    %v7235 = vcombine.low %v7220, %v7227
    %v7237 = vunpack.c.l.s4 1966171168
    %v7238 = vunpack.c.0.s8 %v7237
    %v7239 = vlaneseq
    %v7240 = vshrl.u32 %v7239, 7
    %v7241 = vsub.s32 %v7238, %v7240
    %v7242 = vrot.slane %v7235, %v7241
    %v7244 = vunpack.c.l.s4 1966171168
    %v7245 = vunpack.c.0.s8 %v7244
    %v7246 = vlaneseq
    %v7247 = vshrl.u32 %v7246, 7
    %v7248 = vsub.s32 %v7245, %v7247
    %v7249 = vrot.slane %v7234, %v7248
    %v7250 = vcombine.low %v7242, %v7249
    %v7251 = vcombine.low %v7197, %v7198
    %v7252 = vcombine.low %v7199, %v7200
    %v7254 = vunpack.c.l.s4 1966171168
    %v7255 = vunpack.c.0.s8 %v7254
    %v7256 = vlaneseq
    %v7257 = vshrl.u32 %v7256, 7
    %v7258 = vsub.s32 %v7255, %v7257
    %v7259 = vrot.slane %v7251, %v7258
    %v7261 = vunpack.c.l.s4 1966171168
    %v7262 = vunpack.c.0.s8 %v7261
    %v7263 = vlaneseq
    %v7264 = vshrl.u32 %v7263, 7
    %v7265 = vsub.s32 %v7262, %v7264
    %v7266 = vrot.slane %v7252, %v7265
    %v7268 = vunpack.c.l.s4 1966171168
    %v7269 = vunpack.c.0.s8 %v7268
    %v7270 = vlaneseq
    %v7271 = vshrl.u32 %v7270, 7
    %v7272 = vsub.s32 %v7269, %v7271
    %v7273 = vrot.slane %v7201, %v7272
    %v7274 = vcombine.low %v7259, %v7266
    %v7276 = vunpack.c.l.s4 1966171168
    %v7277 = vunpack.c.0.s8 %v7276
    %v7278 = vlaneseq
    %v7279 = vshrl.u32 %v7278, 7
    %v7280 = vsub.s32 %v7277, %v7279
    %v7281 = vrot.slane %v7274, %v7280
    %v7283 = vunpack.c.l.s4 1966171168
    %v7284 = vunpack.c.0.s8 %v7283
    %v7285 = vlaneseq
    %v7286 = vshrl.u32 %v7285, 7
    %v7287 = vsub.s32 %v7284, %v7286
    %v7288 = vrot.slane %v7273, %v7287
    %v7289 = vcombine.low %v7281, %v7288
    %v7292 = vsel %vm7087, %v7250, 0.0
    %7293 = vadd.xlane.f32.xlu0 %v7292
    %v7294 = vpop.xlane.xlu0 %7293
    %v7295 = vsel %vm7087, %v7289, 0.0
    %7296 = vadd.xlane.f32.xlu0 %v7295
    %v7297 = vpop.xlane.xlu0 %7296
    %v7298 = vrcp.pop 64.0
    %v7299 = vmul.f32 %v7294, %v7298
    %v7300 = vmul.f32 %v7297, %v7298
    %v7301 = vld [vmem:[%s5] sm:$0x3]
    %v7303 = vlaneseq
    %v7304 = vshrl.u32 %v7303, 7
    %v7305 = vsub.s32 0, %v7304
    %v7306 = vrot.slane %v7301, %v7305
    %7308 = vbcast.lane.b32.xlu0 %v7306, 256
    %v7309 = vpop.permute.xlu0 %7308
    %v7310 = vlaneseq
    %v7311 = vshrl.u32 %v7310, 7
    %v7312 = vsub.s32 1, %v7311
    %v7313 = vrot.slane %v7301, %v7312
    %7315 = vbcast.lane.b32.xlu0 %v7313, 256
    %v7316 = vpop.permute.xlu0 %7315
    %v7319 = vmul.f32 %v7299, %v7309
    %v7320 = vmul.f32 %v7300, %v7316
    %7323 = vset.pattern.permute.xlu0 0
    %7324 = vperm.xlu0 %7323, %v7319
    %v7325 = vpop.permute.xlu0 %7324
    %7326 = vset.pattern.permute.xlu0 0
    %7327 = vperm.xlu0 %7326, %v7320
    %v7328 = vpop.permute.xlu0 %7327
    %v7329 = vlaneseq
    %v7330 = vand.u32 %v7329, 127
    %v7331 = vlaneseq
    %v7332 = vshrl.u32 %v7331, 7
    %v7333 = vsub.s32 %v7330, %v7332
    %v7334 = vrot.slane %v7325, %v7333
    %v7335 = vlaneseq
    %v7336 = vshrl.u32 %v7335, 7
    %v7337 = vsub.s32 %v7330, %v7336
    %v7338 = vrot.slane %v7328, %v7337
    %vm7339 = vcmask 1041409
    %v7340 = vsel %vm7339, %v7338, %v7334
    %vm7342 = vcmask 33792
    %v7343 = vsel %vm7342, %v7340, 0.0
    %7344 = vadd.xlane.f32.xlu0 %v7343
    %v7345 = vpop.xlane.xlu0 %7344
    %v7346 = vrot.slane %v7345, 4
    %v7347 = vadd.f32 %v7345, %v7346
    %v7348 = vrot.slane %v7347, 2
    %v7349 = vadd.f32 %v7347, %v7348
    %v7350 = vrot.slane %v7349, 1
    %v7351 = vadd.f32 %v7349, %v7350
    %s7352 = vtos %v7351
    %v7353 = vstv %s7352
    %v7354 = vsel %vm7342, %v7301, 0.0
    %7355 = vadd.xlane.f32.xlu0 %v7354
    %v7356 = vpop.xlane.xlu0 %7355
    %v7357 = vrot.slane %v7356, 4
    %v7358 = vadd.f32 %v7356, %v7357
    %v7359 = vrot.slane %v7358, 2
    %v7360 = vadd.f32 %v7358, %v7359
    %v7361 = vrot.slane %v7360, 1
    %v7362 = vadd.f32 %v7360, %v7361
    %s7363 = vtos %v7362
    %v7364 = vstv %s7363
    %v7365 = vrcp.pop %v7364
    %v7366 = vmul.f32 %v7353, %v7365
    %vm7367 = vcmask 0
    %7368 = vst.msk [vmem:[#allocation5] sm:$0x1] %vm7367, %v7366
    // Predicated region
    $region150: #{autoencoder_forward.1} parent=1 // pred_check
      _
    $region151: #{autoencoder_forward.1} parent=1 // pred_check_branch
      %7370 = sbr.rel (0) target = $region153
    $region152: #{autoencoder_forward.1} parent=1 // pred_region
      _
    $region153: #{autoencoder_forward.1} parent=1 // pred_fallthru
      _
    // Predicated region
    $region154: #{autoencoder_forward.1} parent=1 // pred_check
      _
    $region155: #{autoencoder_forward.1} parent=1 // pred_check_branch
      %7372 = sbr.rel (0) target = $region157
    $region156: #{autoencoder_forward.1} parent=1 // pred_region
      %s7374 = ssub.s32 16, 16
      %7375 = vsyncadd [#allocation6], %s7374
      %s7377 = sshll.u32 [#allocation5], 4
      %s7378 = int_to_ptr.vmem [resolvable:$true] %s7377
      %7380 = dma.vmem_to_hbm [thread:$0]  %s7378, 16, %s79, [#allocation6]
    $region157: #{autoencoder_forward.1} parent=1 // pred_fallthru
      _
    // Predicated region
    $region158: #{autoencoder_forward.1} parent=1 // pred_check
      _
    $region159: #{autoencoder_forward.1} parent=1 // pred_check_branch
      %7382 = sbr.rel (0) target = $region161
    $region160: #{autoencoder_forward.1} parent=1 // pred_region
      _
    $region161: #{autoencoder_forward.1} parent=1 // pred_fallthru
      _
    // Predicated region
    $region162: #{autoencoder_forward.1} parent=1 // pred_check
      _
    $region163: #{autoencoder_forward.1} parent=1 // pred_check_branch
      %7384 = sbr.rel (0) target = $region165
    $region164: #{autoencoder_forward.1} parent=1 // pred_region
      %7385 = dma.done [#allocation6], 16
    $region165: #{autoencoder_forward.1} parent=1 // pred_fallthru
      _
    %7386 = vsyncpa [#allocation6], 1

</llo_original>
